<compile_context>
chip_gen: v5e
topology: v5e:2x2
jax: 0.10.0
libtpu: 0.0.40
codegen_flags: <defaults>
</compile_context>

<pallas_src>
import jax
import jax.numpy as jnp
from jax.experimental import pallas as pl
from jax.experimental.pallas import tpu as pltpu

_SUBLANE = 8        # f32 sublane tile
_LANE = 128         # lane tile
_TIME_BLOCK = 16    # LSTM steps unrolled per serial grid iteration (kernel B)
_ROW_TARGET = 512   # target M-tile rows for the parallel matmuls (kernels A, C)
_VOCAB_TILE = 1024  # target lane-dense N tile for the projection (kernel C)


def _round_up(x, m):
    return (x + m - 1) // m * m


def _cdiv(a, b):
    return (a + b - 1) // b


def _usable_vmem_cap():
    """Per-generation scoped-VMEM ceiling: ~48 MiB on v7x (64 MiB physical),
    ~100 MiB on v5e/v6e (128 MiB physical)."""
    try:
        phys = int(getattr(pltpu.get_tpu_info(), "vmem_capacity_bytes", 64 << 20))
    except Exception:   # defensive: emulator / older runtimes
        phys = 64 << 20
    return (48 << 20) if phys <= (64 << 20) else (100 << 20)


def _vmem_budget(*nbytes):
    # blocks are (up to) double-buffered; add headroom, respect the per-gen cap.
    need = 2 * sum(nbytes) + (2 << 20)
    return int(min(max(need, 4 << 20), _usable_vmem_cap()))


# --------------------------------------------------------------------------- #
# Kernel A: parallel input-to-hidden gate pre-activations (no recurrence).
# --------------------------------------------------------------------------- #
def _input_gates_kernel(x_ref, wih_ref, b_ref, xg_ref):
    acc = jnp.dot(x_ref[...], wih_ref[...], preferred_element_type=jnp.float32)
    # bf16 writeback halves kernel A's dominant HBM write and kernel B's input DMA.
    xg_ref[...] = (acc + b_ref[...]).astype(xg_ref.dtype)


# --------------------------------------------------------------------------- #
# Kernel B: serial LSTM recurrence. Only the unavoidable h @ W_hh matmul and
# the gate/cell elementwise math stay on this sequential critical path.
# --------------------------------------------------------------------------- #
def _lstm_recurrence_kernel(xg_ref, whh_ref, hs_ref, h_sc, c_sc):
    # grid = (batch_block [parallel], time_block [arbitrary]); carries must be
    # re-initialized at the start of every batch block's time sweep.
    @pl.when(pl.program_id(1) == 0)
    def _():
        h_sc[...] = jnp.zeros_like(h_sc)
        c_sc[...] = jnp.zeros_like(c_sc)

    n_steps = xg_ref.shape[0]            # = _TIME_BLOCK (static)
    Hp = h_sc.shape[1]

    def _sig(x):                         # sigmoid as a single EUP tanh
        return 0.5 * jnp.tanh(0.5 * x) + 0.5

    # Statically unrolled time loop; all slices are static and tile-aligned.
    for i in range(n_steps):
        # W_hh streams from VMEM inside the loop (no multi-MiB live hoist).
        gates = xg_ref[i].astype(jnp.float32) + jnp.dot(
            h_sc[...].astype(jnp.bfloat16), whh_ref[...],
            preferred_element_type=jnp.float32)              # (Bt, 4Hp) f32
        i_g = _sig(gates[:, 0 * Hp:1 * Hp])
        f_g = _sig(gates[:, 1 * Hp:2 * Hp])
        g_g = jnp.tanh(gates[:, 2 * Hp:3 * Hp])
        o_g = _sig(gates[:, 3 * Hp:4 * Hp])
        c_new = f_g * c_sc[...] + i_g * g_g
        h_new = o_g * jnp.tanh(c_new)
        c_sc[...] = c_new
        h_sc[...] = h_new
        hs_ref[i] = h_new.astype(hs_ref.dtype)               # bf16 hidden states


# --------------------------------------------------------------------------- #
# Kernel C: parallel, lane-dense output projection over all (b, t) rows.
# --------------------------------------------------------------------------- #
def _projection_kernel(hs_ref, wl_ref, bl_ref, out_ref):
    out_ref[...] = (
        jnp.dot(hs_ref[...], wl_ref[...], preferred_element_type=jnp.float32)
        + bl_ref[...]
    )


@jax.jit
def decoder_rnn_forward(features, captions, params):
    """Pallas implementation of DecoderRNN.forward.

    features : (B, E) float32
    captions : (B, S) int32 token ids
    returns  : (B, S, V) float32 logits (T = S: captions[:, :-1] + 1 feature step)
    """
    emb_table = params["embedding"]          # (V, E)
    w_ih = params["w_ih"]                    # (4H, E)  PyTorch layout, gates i,f,g,o
    w_hh = params["w_hh"]                    # (4H, H)
    bias = params["b_ih"] + params["b_hh"]   # (4H,)
    w_lin = params["w_linear"]               # (V, H)
    b_lin = params["b_linear"]               # (V,)

    B, E = features.shape
    H = w_hh.shape[1]
    V = emb_table.shape[0]

    # ---- glue: embedding gather + prepend image features (not the hot path) ----
    # TODO(synk): fuse this gather into kernel A via scalar-prefetched token ids
    # and a pl.Element row-gather in_spec to skip one HBM round trip over x.
    caps = captions[:, :-1]                                          # (B, S-1)
    embedded = jnp.take(emb_table, caps, axis=0)                     # (B, S-1, E)
    x = jnp.concatenate([features[:, None, :], embedded], axis=1)    # (B, T, E)
    T = x.shape[1]

    # ---- hardware-native padded sizes ----
    Bp = _round_up(B, _SUBLANE)
    Ep = _round_up(E, _LANE)
    Hp = _round_up(H, _LANE)
    G = 4 * Hp
    Tb = _TIME_BLOCK
    Tp = _round_up(T, Tb)                    # time extent seen by the recurrence

    # kernel-A time tile: aim for ~_ROW_TARGET-row M tiles, keep Tpa % Tb == 0.
    Ta = max(1, _cdiv(_ROW_TARGET, Bp))
    if Ta > Tb:
        Ta = _round_up(Ta, Tb)
    else:
        while Tb % Ta:
            Ta += 1
    Tpa = _round_up(Tp, Ta)
    rows_a = Ta * Bp

    # recurrence batch split: independent rows -> megacore-shardable on 2-TC parts.
    n_bblk = 2 if (Bp >= 32 and (Bp // 2) % _SUBLANE == 0) else 1
    Bt = Bp // n_bblk
    n_tblk = Tp // Tb

    # vocab tiling: large lane-dense tile; round Vp UP to the tile width.
    Vp0 = _round_up(V, _LANE)
    Vb = _VOCAB_TILE if Vp0 >= _VOCAB_TILE else Vp0
    Vp = _round_up(Vp0, Vb)

    # projection row tile: largest convenient divisor of Bp*Tp (>= 128 by construction).
    rows_c_total = Bp * Tp
    Rc = next(r for r in (512, 256, 128, 64, 32, 16, 8) if rows_c_total % r == 0)

    # ---- operand packing (bf16 matmul operands; zero padding is inert) ----
    x_tm = jnp.transpose(x, (1, 0, 2)).astype(jnp.float32)           # (T, B, E)
    x_pad = jnp.zeros((Tpa, Bp, Ep), jnp.float32).at[:T, :B, :E].set(x_tm)
    x2 = x_pad.reshape(Tpa * Bp, Ep).astype(jnp.bfloat16)

    # weights: transpose + per-gate padding of the 4H axis so gate k occupies
    # lanes [k*Hp, k*Hp + H); padded lanes/rows are zero => padded h/c stay zero.
    def _pad_gate_weight(w, in_dim, in_pad):     # (4H, in_dim) -> (in_pad, 4Hp) bf16
        w4 = w.reshape(4, H, in_dim)
        wp = jnp.zeros((4, Hp, in_pad), jnp.float32).at[:, :H, :in_dim].set(w4)
        return jnp.transpose(wp.reshape(4 * Hp, in_pad)).astype(jnp.bfloat16)

    wih_p = _pad_gate_weight(w_ih, E, Ep)            # (Ep, 4Hp) bf16
    whh_p = _pad_gate_weight(w_hh, H, Hp)            # (Hp, 4Hp) bf16
    b_p = (jnp.zeros((4, Hp), jnp.float32).at[:, :H].set(bias.reshape(4, H))
           .reshape(1, G))                           # (1, 4Hp) f32, padded lanes = 0

    wl_p = jnp.zeros((Hp, Vp), jnp.bfloat16).at[:H, :V].set(
        jnp.transpose(w_lin).astype(jnp.bfloat16))   # (Hp, Vp) bf16
    bl_p = jnp.zeros((1, Vp), jnp.float32).at[0, :V].set(b_lin)   # (1, Vp) f32

    # ---- kernel A: parallel x @ W_ih^T + b for all time steps ----
    xg2 = pl.pallas_call(
        _input_gates_kernel,
        out_shape=jax.ShapeDtypeStruct((Tpa * Bp, G), jnp.bfloat16),
        grid_spec=pltpu.PrefetchScalarGridSpec(
            num_scalar_prefetch=0,
            grid=(Tpa // Ta,),
            in_specs=[
                pl.BlockSpec((rows_a, Ep), lambda r: (r, 0)),
                pl.BlockSpec((Ep, G), lambda r: (0, 0)),      # resident weight
                pl.BlockSpec((1, G), lambda r: (0, 0)),       # folded LSTM bias
            ],
            out_specs=pl.BlockSpec((rows_a, G), lambda r: (r, 0)),
        ),
        compiler_params=pltpu.CompilerParams(
            dimension_semantics=("parallel",),
            vmem_limit_bytes=_vmem_budget(rows_a * Ep * 2, Ep * G * 2, G * 4,
                                          rows_a * G * 2),
        ),
    )(x2, wih_p, b_p)

    xg3 = xg2.reshape(Tpa, Bp, G)     # free reshape (time-major, contiguous)

    # ---- kernel B: serial recurrence (h/c scratch carried across time blocks) ----
    hs3 = pl.pallas_call(
        _lstm_recurrence_kernel,
        out_shape=jax.ShapeDtypeStruct((Tp, Bp, Hp), jnp.bfloat16),
        grid_spec=pltpu.PrefetchScalarGridSpec(
            num_scalar_prefetch=0,
            grid=(n_bblk, n_tblk),
            in_specs=[
                pl.BlockSpec((Tb, Bt, G), lambda b, t: (t, b, 0)),
                pl.BlockSpec((Hp, G), lambda b, t: (0, 0)),   # only weight on serial path
            ],
            out_specs=pl.BlockSpec((Tb, Bt, Hp), lambda b, t: (t, b, 0)),
            scratch_shapes=[
                pltpu.VMEM((Bt, Hp), jnp.float32),   # h carry (f32)
                pltpu.VMEM((Bt, Hp), jnp.float32),   # c carry (f32)
            ],
        ),
        compiler_params=pltpu.CompilerParams(
            # batch blocks are independent (shardable across TensorCores);
            # the time axis carries state and must stay sequential.
            dimension_semantics=("parallel", "arbitrary"),
            vmem_limit_bytes=_vmem_budget(Tb * Bt * G * 2, Hp * G * 2,
                                          Tb * Bt * Hp * 2, 2 * Bt * Hp * 4),
        ),
    )(xg3, whh_p)

    # Reorder the SMALL bf16 hidden-state tensor to batch-major so the projection
    # emits logits directly in (B, T, V) layout — no transpose of the big logits.
    hs_bm = hs3.transpose(1, 0, 2).reshape(Bp * Tp, Hp)      # (Bp*Tp, Hp) bf16

    # ---- kernel C: parallel, lane-dense output projection ----
    logits2 = pl.pallas_call(
        _projection_kernel,
        out_shape=jax.ShapeDtypeStruct((Bp * Tp, Vp), jnp.float32),
        grid_spec=pltpu.PrefetchScalarGridSpec(
            num_scalar_prefetch=0,
            # vocab axis OUTER: each W_lin tile is streamed from HBM exactly once
            # and stays resident across the inner row sweep.
            grid=(Vp // Vb, rows_c_total // Rc),
            in_specs=[
                pl.BlockSpec((Rc, Hp), lambda v, r: (r, 0)),
                pl.BlockSpec((Hp, Vb), lambda v, r: (0, v)),
                pl.BlockSpec((1, Vb), lambda v, r: (0, v)),
            ],
            out_specs=pl.BlockSpec((Rc, Vb), lambda v, r: (r, v)),
        ),
        compiler_params=pltpu.CompilerParams(
            dimension_semantics=("parallel", "parallel"),
            vmem_limit_bytes=_vmem_budget(Rc * Hp * 2, Hp * Vb * 2, Vb * 4,
                                          Rc * Vb * 4),
        ),
    )(hs_bm, wl_p, bl_p)

    # batch-major flattened -> (Bp, Tp, Vp) is a pure reshape; slice off padding.
    return logits2.reshape(Bp, Tp, Vp)[:B, :T, :V]


# --------------------------------------------------------------------------- #
# Reference (PyTorch LSTM semantics, same bf16-operand / bf16-intermediate /
# f32-accumulate numerics policy as the kernels).
# --------------------------------------------------------------------------- #
def _bf16_round(x):
    return x.astype(jnp.bfloat16).astype(jnp.float32)


def _reference_forward(features, captions, params):
    emb_table = params["embedding"]
    w_ih, w_hh = params["w_ih"], params["w_hh"]
    b = params["b_ih"] + params["b_hh"]
    w_lin, b_lin = params["w_linear"], params["b_linear"]
    H = w_hh.shape[1]

    caps = captions[:, :-1]
    embedded = jnp.take(emb_table, caps, axis=0)
    x = jnp.concatenate([features[:, None, :], embedded], axis=1)    # (B, T, E)
    B = x.shape[0]

    xr = _bf16_round(x)
    wih_r, whh_r, wl_r = _bf16_round(w_ih), _bf16_round(w_hh), _bf16_round(w_lin)

    # kernel A stores the input-gate pre-activations (incl. bias) in bf16
    xg = _bf16_round(jnp.einsum("bte,ge->btg", xr, wih_r) + b)       # (B, T, 4H)

    def step(carry, xg_t):
        h, c = carry
        gates = xg_t + _bf16_round(h) @ whh_r.T
        i_g = jax.nn.sigmoid(gates[:, 0 * H:1 * H])
        f_g = jax.nn.sigmoid(gates[:, 1 * H:2 * H])
        g_g = jnp.tanh(gates[:, 2 * H:3 * H])
        o_g = jax.nn.sigmoid(gates[:, 3 * H:4 * H])
        c_new = f_g * c + i_g * g_g
        h_new = o_g * jnp.tanh(c_new)
        return (h_new, c_new), h_new

    h0 = jnp.zeros((B, H), jnp.float32)
    c0 = jnp.zeros((B, H), jnp.float32)
    _, hs = jax.lax.scan(step, (h0, c0), jnp.transpose(xg, (1, 0, 2)))
    hs = jnp.transpose(hs, (1, 0, 2))                                # (B, T, H)
    return _bf16_round(hs) @ wl_r.T + b_lin                          # (B, T, V)


def init_params(key, vocab_size, embed_size, hidden_size):
    ks = jax.random.split(key, 7)
    s = 1.0 / jnp.sqrt(hidden_size)
    return {
        "embedding": jax.random.normal(ks[0], (vocab_size, embed_size), jnp.float32) * 0.1,
        "w_ih": jax.random.uniform(ks[1], (4 * hidden_size, embed_size), jnp.float32, -s, s),
        "w_hh": jax.random.uniform(ks[2], (4 * hidden_size, hidden_size), jnp.float32, -s, s),
        "b_ih": jax.random.uniform(ks[3], (4 * hidden_size,), jnp.float32, -s, s),
        "b_hh": jax.random.uniform(ks[4], (4 * hidden_size,), jnp.float32, -s, s),
        "w_linear": jax.random.uniform(ks[5], (vocab_size, hidden_size), jnp.float32, -s, s),
        "b_linear": jax.random.uniform(ks[6], (vocab_size,), jnp.float32, -s, s),
    }


if __name__ == "__main__":
    VOCAB, EMBED, HIDDEN = 64, 32, 32
    BATCH, SEQ = 2, 9          # captions length 9 -> trimmed to 8 -> T = 9 with features

    key = jax.random.PRNGKey(0)
    k_par, k_feat, k_cap = jax.random.split(key, 3)

    params = init_params(k_par, VOCAB, EMBED, HIDDEN)
    features = jax.random.normal(k_feat, (BATCH, EMBED), jnp.float32)
    captions = jax.random.randint(k_cap, (BATCH, SEQ), 0, VOCAB, jnp.int32)

    out = decoder_rnn_forward(features, captions, params)
    out = jax.block_until_ready(out)

    ref = _reference_forward(features, captions, params)
    assert out.shape == (BATCH, SEQ, VOCAB), out.shape
    max_err = float(jnp.max(jnp.abs(out - ref)))
    assert jnp.allclose(out, ref, rtol=1e-2, atol=1e-2), (
        "mismatch vs reference, max abs err = %g" % max_err)

    print("KERNEL_OK")
</pallas_src>

<mosaic_0001>
module attributes {stable_mosaic.version = 11 : i64} {
  func.func @_input_gates_kernel(%arg0: i32, %arg1: memref<512x128xbf16, #tpu.memory_space<vmem>>, %arg2: memref<128x512xbf16, #tpu.memory_space<vmem>>, %arg3: memref<1x512xf32, #tpu.memory_space<vmem>>, %arg4: memref<512x512xbf16, #tpu.memory_space<vmem>>) attributes {dimension_semantics = [#tpu.dimension_semantics<parallel>], iteration_bounds = array<i64: 1>, scalar_prefetch = 0 : i64, scratch_operands = 0 : i64, tpu.core_type = #tpu.core_type<tc>, window_params = [{transform_indices = @transform_0, window_bounds = array<i64: 512, 128>}, {pipeline_mode = #tpu.pipeline_mode<synchronous>, transform_indices = @transform_1, window_bounds = array<i64: 128, 512>}, {pipeline_mode = #tpu.pipeline_mode<synchronous>, transform_indices = @transform_2, window_bounds = array<i64: 1, 512>}, {transform_indices = @transform_3, window_bounds = array<i64: 512, 512>}]} {
    %c0 = arith.constant 0 : index
    %c0_0 = arith.constant 0 : index
    %0 = vector.load %arg1[%c0, %c0_0] : memref<512x128xbf16, #tpu.memory_space<vmem>>, vector<512x128xbf16>
    %c0_1 = arith.constant 0 : index
    %c0_2 = arith.constant 0 : index
    %1 = vector.load %arg2[%c0_1, %c0_2] : memref<128x512xbf16, #tpu.memory_space<vmem>>, vector<128x512xbf16>
    %cst = arith.constant dense<0.000000e+00> : vector<512x512xf32>
    %2 = tpu.matmul %0, %1, %cst {dimension_numbers = #tpu.dot_dimension_numbers<[1], [0], [0], [1], [0, 0, 1, 1], [], []>} : vector<512x128xbf16>, vector<128x512xbf16>, vector<512x512xf32> -> vector<512x512xf32>
    %c0_3 = arith.constant 0 : index
    %c0_4 = arith.constant 0 : index
    %3 = vector.load %arg3[%c0_3, %c0_4] : memref<1x512xf32, #tpu.memory_space<vmem>>, vector<1x512xf32>
    %4 = vector.broadcast %3 : vector<1x512xf32> to vector<512x512xf32>
    %5 = arith.addf %2, %4 : vector<512x512xf32>
    %6 = arith.truncf %5 : vector<512x512xf32> to vector<512x512xbf16>
    %c0_5 = arith.constant 0 : index
    %c0_6 = arith.constant 0 : index
    %7 = vector.load %arg4[%c0_5, %c0_6] : memref<512x512xbf16, #tpu.memory_space<vmem>>, vector<512x512xbf16>
    tpu.vector_store %arg4[%c0_5, %c0_6], %6 {strides = array<i32>} : memref<512x512xbf16, #tpu.memory_space<vmem>>, vector<512x512xbf16>,
    return
  }
  func.func @transform_0(%arg0: i32) -> (i32, i32) {
    %c0_i32 = arith.constant 0 : i32
    %c0_i32_0 = arith.constant 0 : i32
    return %arg0, %c0_i32 : i32, i32
  }
  func.func @transform_1(%arg0: i32) -> (i32, i32) {
    %c0_i32 = arith.constant 0 : i32
    %c0_i32_0 = arith.constant 0 : i32
    %c0_i32_1 = arith.constant 0 : i32
    return %c0_i32, %c0_i32_0 : i32, i32
  }
  func.func @transform_2(%arg0: i32) -> (i32, i32) {
    %c0_i32 = arith.constant 0 : i32
    %c0_i32_0 = arith.constant 0 : i32
    %c0_i32_1 = arith.constant 0 : i32
    return %c0_i32, %c0_i32_0 : i32, i32
  }
  func.func @transform_3(%arg0: i32) -> (i32, i32) {
    %c0_i32 = arith.constant 0 : i32
    %c0_i32_0 = arith.constant 0 : i32
    return %arg0, %c0_i32 : i32, i32
  }
}

module attributes {stable_mosaic.version = 11 : i64} {
  func.func @_projection_kernel(%arg0: i32, %arg1: i32, %arg2: memref<128x128xbf16, #tpu.memory_space<vmem>>, %arg3: memref<128x128xbf16, #tpu.memory_space<vmem>>, %arg4: memref<1x128xf32, #tpu.memory_space<vmem>>, %arg5: memref<128x128xf32, #tpu.memory_space<vmem>>) attributes {dimension_semantics = [#tpu.dimension_semantics<parallel>, #tpu.dimension_semantics<parallel>], iteration_bounds = array<i64: 1, 1>, scalar_prefetch = 0 : i64, scratch_operands = 0 : i64, tpu.core_type = #tpu.core_type<tc>, window_params = [{transform_indices = @transform_0, window_bounds = array<i64: 128, 128>}, {transform_indices = @transform_1, window_bounds = array<i64: 128, 128>}, {transform_indices = @transform_2, window_bounds = array<i64: 1, 128>}, {transform_indices = @transform_3, window_bounds = array<i64: 128, 128>}]} {
    %c0 = arith.constant 0 : index
    %c0_0 = arith.constant 0 : index
    %0 = vector.load %arg2[%c0, %c0_0] : memref<128x128xbf16, #tpu.memory_space<vmem>>, vector<128x128xbf16>
    %c0_1 = arith.constant 0 : index
    %c0_2 = arith.constant 0 : index
    %1 = vector.load %arg3[%c0_1, %c0_2] : memref<128x128xbf16, #tpu.memory_space<vmem>>, vector<128x128xbf16>
    %cst = arith.constant dense<0.000000e+00> : vector<128x128xf32>
    %2 = tpu.matmul %0, %1, %cst {dimension_numbers = #tpu.dot_dimension_numbers<[1], [0], [0], [1], [0, 0, 1, 1], [], []>} : vector<128x128xbf16>, vector<128x128xbf16>, vector<128x128xf32> -> vector<128x128xf32>
    %c0_3 = arith.constant 0 : index
    %c0_4 = arith.constant 0 : index
    %3 = vector.load %arg4[%c0_3, %c0_4] : memref<1x128xf32, #tpu.memory_space<vmem>>, vector<1x128xf32>
    %4 = vector.broadcast %3 : vector<1x128xf32> to vector<128x128xf32>
    %5 = arith.addf %2, %4 : vector<128x128xf32>
    %c0_5 = arith.constant 0 : index
    %c0_6 = arith.constant 0 : index
    %6 = vector.load %arg5[%c0_5, %c0_6] : memref<128x128xf32, #tpu.memory_space<vmem>>, vector<128x128xf32>
    tpu.vector_store %arg5[%c0_5, %c0_6], %5 {strides = array<i32>} : memref<128x128xf32, #tpu.memory_space<vmem>>, vector<128x128xf32>,
    return
  }
  func.func @transform_0(%arg0: i32, %arg1: i32) -> (i32, i32) {
    %c0_i32 = arith.constant 0 : i32
    %c0_i32_0 = arith.constant 0 : i32
    return %arg1, %c0_i32 : i32, i32
  }
  func.func @transform_1(%arg0: i32, %arg1: i32) -> (i32, i32) {
    %c0_i32 = arith.constant 0 : i32
    %c0_i32_0 = arith.constant 0 : i32
    return %c0_i32, %arg0 : i32, i32
  }
  func.func @transform_2(%arg0: i32, %arg1: i32) -> (i32, i32) {
    %c0_i32 = arith.constant 0 : i32
    %c0_i32_0 = arith.constant 0 : i32
    return %c0_i32, %arg0 : i32, i32
  }
  func.func @transform_3(%arg0: i32, %arg1: i32) -> (i32, i32) {
    %c0_i32 = arith.constant 0 : i32
    return %arg1, %arg0 : i32, i32
  }
}

module attributes {stable_mosaic.version = 11 : i64} {
  func.func @_lstm_recurrence_kernel(%arg0: i32, %arg1: i32, %arg2: memref<16x8x512xbf16, #tpu.memory_space<vmem>>, %arg3: memref<128x512xbf16, #tpu.memory_space<vmem>>, %arg4: memref<16x8x128xbf16, #tpu.memory_space<vmem>>, %arg5: memref<8x128xf32, #tpu.memory_space<vmem>>, %arg6: memref<8x128xf32, #tpu.memory_space<vmem>>) attributes {dimension_semantics = [#tpu.dimension_semantics<parallel>, #tpu.dimension_semantics<arbitrary>], iteration_bounds = array<i64: 1, 1>, scalar_prefetch = 0 : i64, scratch_operands = 2 : i64, tpu.core_type = #tpu.core_type<tc>, window_params = [{transform_indices = @transform_0, window_bounds = array<i64: 16, 8, 512>}, {pipeline_mode = #tpu.pipeline_mode<synchronous>, transform_indices = @transform_1, window_bounds = array<i64: 128, 512>}, {transform_indices = @transform_2, window_bounds = array<i64: 16, 8, 128>}]} {
    %c0_i32 = arith.constant 0 : i32
    %0 = arith.cmpi eq, %arg1, %c0_i32 : i32
    %1 = arith.extui %0 : i1 to i32
    %c0_i32_0 = arith.constant 0 : i32
    %2 = arith.cmpi ne, %1, %c0_i32_0 : i32
    scf.if %2 {
      %cst_400 = arith.constant 0.000000e+00 : f32
      %739 = vector.broadcast %cst_400 : f32 to vector<8x128xf32>
      %c0_401 = arith.constant 0 : index
      %c0_402 = arith.constant 0 : index
      %740 = vector.load %arg5[%c0_401, %c0_402] : memref<8x128xf32, #tpu.memory_space<vmem>>, vector<8x128xf32>
      tpu.vector_store %arg5[%c0_401, %c0_402], %739 {strides = array<i32>} : memref<8x128xf32, #tpu.memory_space<vmem>>, vector<8x128xf32>,
      %cst_403 = arith.constant 0.000000e+00 : f32
      %741 = vector.broadcast %cst_403 : f32 to vector<8x128xf32>
      %c0_404 = arith.constant 0 : index
      %c0_405 = arith.constant 0 : index
      %742 = vector.load %arg6[%c0_404, %c0_405] : memref<8x128xf32, #tpu.memory_space<vmem>>, vector<8x128xf32>
      tpu.vector_store %arg6[%c0_404, %c0_405], %741 {strides = array<i32>} : memref<8x128xf32, #tpu.memory_space<vmem>>, vector<8x128xf32>,
    } else {
    }
    %c0 = arith.constant 0 : index
    %c0_1 = arith.constant 0 : index
    %c0_2 = arith.constant 0 : index
    %3 = vector.load %arg2[%c0, %c0_1, %c0_2] : memref<16x8x512xbf16, #tpu.memory_space<vmem>>, vector<1x8x512xbf16>
    %4 = vector.shape_cast %3 : vector<1x8x512xbf16> to vector<8x512xbf16>
    %5 = arith.extf %4 : vector<8x512xbf16> to vector<8x512xf32>
    %c0_3 = arith.constant 0 : index
    %c0_4 = arith.constant 0 : index
    %6 = vector.load %arg5[%c0_3, %c0_4] : memref<8x128xf32, #tpu.memory_space<vmem>>, vector<8x128xf32>
    %7 = arith.truncf %6 : vector<8x128xf32> to vector<8x128xbf16>
    %c0_5 = arith.constant 0 : index
    %c0_6 = arith.constant 0 : index
    %8 = vector.load %arg3[%c0_5, %c0_6] : memref<128x512xbf16, #tpu.memory_space<vmem>>, vector<128x512xbf16>
    %cst = arith.constant dense<0.000000e+00> : vector<8x512xf32>
    %9 = tpu.matmul %7, %8, %cst {dimension_numbers = #tpu.dot_dimension_numbers<[1], [0], [0], [1], [0, 0, 1, 1], [], []>} : vector<8x128xbf16>, vector<128x512xbf16>, vector<8x512xf32> -> vector<8x512xf32>
    %10 = arith.addf %5, %9 : vector<8x512xf32>
    %11 = vector.extract_strided_slice %10 {offsets = [0, 0], sizes = [8, 128], strides = [1, 1]} : vector<8x512xf32> to vector<8x128xf32>
    %cst_7 = arith.constant 5.000000e-01 : f32
    %12 = vector.broadcast %cst_7 : f32 to vector<8x128xf32>
    %13 = arith.mulf %12, %11 : vector<8x128xf32>
    %14 = math.tanh %13 : vector<8x128xf32>
    %cst_8 = arith.constant 5.000000e-01 : f32
    %15 = vector.broadcast %cst_8 : f32 to vector<8x128xf32>
    %16 = arith.mulf %15, %14 : vector<8x128xf32>
    %cst_9 = arith.constant 5.000000e-01 : f32
    %17 = vector.broadcast %cst_9 : f32 to vector<8x128xf32>
    %18 = arith.addf %16, %17 : vector<8x128xf32>
    %19 = vector.extract_strided_slice %10 {offsets = [0, 128], sizes = [8, 128], strides = [1, 1]} : vector<8x512xf32> to vector<8x128xf32>
    %cst_10 = arith.constant 5.000000e-01 : f32
    %20 = vector.broadcast %cst_10 : f32 to vector<8x128xf32>
    %21 = arith.mulf %20, %19 : vector<8x128xf32>
    %22 = math.tanh %21 : vector<8x128xf32>
    %cst_11 = arith.constant 5.000000e-01 : f32
    %23 = vector.broadcast %cst_11 : f32 to vector<8x128xf32>
    %24 = arith.mulf %23, %22 : vector<8x128xf32>
    %cst_12 = arith.constant 5.000000e-01 : f32
    %25 = vector.broadcast %cst_12 : f32 to vector<8x128xf32>
    %26 = arith.addf %24, %25 : vector<8x128xf32>
    %27 = vector.extract_strided_slice %10 {offsets = [0, 256], sizes = [8, 128], strides = [1, 1]} : vector<8x512xf32> to vector<8x128xf32>
    %28 = math.tanh %27 : vector<8x128xf32>
    %29 = vector.extract_strided_slice %10 {offsets = [0, 384], sizes = [8, 128], strides = [1, 1]} : vector<8x512xf32> to vector<8x128xf32>
    %cst_13 = arith.constant 5.000000e-01 : f32
    %30 = vector.broadcast %cst_13 : f32 to vector<8x128xf32>
    %31 = arith.mulf %30, %29 : vector<8x128xf32>
    %32 = math.tanh %31 : vector<8x128xf32>
    %cst_14 = arith.constant 5.000000e-01 : f32
    %33 = vector.broadcast %cst_14 : f32 to vector<8x128xf32>
    %34 = arith.mulf %33, %32 : vector<8x128xf32>
    %cst_15 = arith.constant 5.000000e-01 : f32
    %35 = vector.broadcast %cst_15 : f32 to vector<8x128xf32>
    %36 = arith.addf %34, %35 : vector<8x128xf32>
    %c0_16 = arith.constant 0 : index
    %c0_17 = arith.constant 0 : index
    %37 = vector.load %arg6[%c0_16, %c0_17] : memref<8x128xf32, #tpu.memory_space<vmem>>, vector<8x128xf32>
    %38 = arith.mulf %26, %37 : vector<8x128xf32>
    %39 = arith.mulf %18, %28 : vector<8x128xf32>
    %40 = arith.addf %38, %39 : vector<8x128xf32>
    %41 = math.tanh %40 : vector<8x128xf32>
    %42 = arith.mulf %36, %41 : vector<8x128xf32>
    %c0_18 = arith.constant 0 : index
    %c0_19 = arith.constant 0 : index
    %43 = vector.load %arg6[%c0_18, %c0_19] : memref<8x128xf32, #tpu.memory_space<vmem>>, vector<8x128xf32>
    tpu.vector_store %arg6[%c0_18, %c0_19], %40 {strides = array<i32>} : memref<8x128xf32, #tpu.memory_space<vmem>>, vector<8x128xf32>,
    %c0_20 = arith.constant 0 : index
    %c0_21 = arith.constant 0 : index
    %44 = vector.load %arg5[%c0_20, %c0_21] : memref<8x128xf32, #tpu.memory_space<vmem>>, vector<8x128xf32>
    tpu.vector_store %arg5[%c0_20, %c0_21], %42 {strides = array<i32>} : memref<8x128xf32, #tpu.memory_space<vmem>>, vector<8x128xf32>,
    %45 = arith.truncf %42 : vector<8x128xf32> to vector<8x128xbf16>
    %c0_22 = arith.constant 0 : index
    %c0_23 = arith.constant 0 : index
    %c0_24 = arith.constant 0 : index
    %46 = vector.load %arg4[%c0_22, %c0_23, %c0_24] : memref<16x8x128xbf16, #tpu.memory_space<vmem>>, vector<1x8x128xbf16>
    %47 = vector.shape_cast %46 : vector<1x8x128xbf16> to vector<8x128xbf16>
    %48 = vector.shape_cast %45 : vector<8x128xbf16> to vector<1x8x128xbf16>
    tpu.vector_store %arg4[%c0_22, %c0_23, %c0_24], %48 {strides = array<i32>} : memref<16x8x128xbf16, #tpu.memory_space<vmem>>, vector<1x8x128xbf16>,
    %c1 = arith.constant 1 : index
    %c0_25 = arith.constant 0 : index
    %c0_26 = arith.constant 0 : index
    %49 = vector.load %arg2[%c1, %c0_25, %c0_26] : memref<16x8x512xbf16, #tpu.memory_space<vmem>>, vector<1x8x512xbf16>
    %50 = vector.shape_cast %49 : vector<1x8x512xbf16> to vector<8x512xbf16>
    %51 = arith.extf %50 : vector<8x512xbf16> to vector<8x512xf32>
    %c0_27 = arith.constant 0 : index
    %c0_28 = arith.constant 0 : index
    %52 = vector.load %arg5[%c0_27, %c0_28] : memref<8x128xf32, #tpu.memory_space<vmem>>, vector<8x128xf32>
    %53 = arith.truncf %52 : vector<8x128xf32> to vector<8x128xbf16>
    %c0_29 = arith.constant 0 : index
    %c0_30 = arith.constant 0 : index
    %54 = vector.load %arg3[%c0_29, %c0_30] : memref<128x512xbf16, #tpu.memory_space<vmem>>, vector<128x512xbf16>
    %cst_31 = arith.constant dense<0.000000e+00> : vector<8x512xf32>
    %55 = tpu.matmul %53, %54, %cst_31 {dimension_numbers = #tpu.dot_dimension_numbers<[1], [0], [0], [1], [0, 0, 1, 1], [], []>} : vector<8x128xbf16>, vector<128x512xbf16>, vector<8x512xf32> -> vector<8x512xf32>
    %56 = arith.addf %51, %55 : vector<8x512xf32>
    %57 = vector.extract_strided_slice %56 {offsets = [0, 0], sizes = [8, 128], strides = [1, 1]} : vector<8x512xf32> to vector<8x128xf32>
    %cst_32 = arith.constant 5.000000e-01 : f32
    %58 = vector.broadcast %cst_32 : f32 to vector<8x128xf32>
    %59 = arith.mulf %58, %57 : vector<8x128xf32>
    %60 = math.tanh %59 : vector<8x128xf32>
    %cst_33 = arith.constant 5.000000e-01 : f32
    %61 = vector.broadcast %cst_33 : f32 to vector<8x128xf32>
    %62 = arith.mulf %61, %60 : vector<8x128xf32>
    %cst_34 = arith.constant 5.000000e-01 : f32
    %63 = vector.broadcast %cst_34 : f32 to vector<8x128xf32>
    %64 = arith.addf %62, %63 : vector<8x128xf32>
    %65 = vector.extract_strided_slice %56 {offsets = [0, 128], sizes = [8, 128], strides = [1, 1]} : vector<8x512xf32> to vector<8x128xf32>
    %cst_35 = arith.constant 5.000000e-01 : f32
    %66 = vector.broadcast %cst_35 : f32 to vector<8x128xf32>
    %67 = arith.mulf %66, %65 : vector<8x128xf32>
    %68 = math.tanh %67 : vector<8x128xf32>
    %cst_36 = arith.constant 5.000000e-01 : f32
    %69 = vector.broadcast %cst_36 : f32 to vector<8x128xf32>
    %70 = arith.mulf %69, %68 : vector<8x128xf32>
    %cst_37 = arith.constant 5.000000e-01 : f32
    %71 = vector.broadcast %cst_37 : f32 to vector<8x128xf32>
    %72 = arith.addf %70, %71 : vector<8x128xf32>
    %73 = vector.extract_strided_slice %56 {offsets = [0, 256], sizes = [8, 128], strides = [1, 1]} : vector<8x512xf32> to vector<8x128xf32>
    %74 = math.tanh %73 : vector<8x128xf32>
    %75 = vector.extract_strided_slice %56 {offsets = [0, 384], sizes = [8, 128], strides = [1, 1]} : vector<8x512xf32> to vector<8x128xf32>
    %cst_38 = arith.constant 5.000000e-01 : f32
    %76 = vector.broadcast %cst_38 : f32 to vector<8x128xf32>
    %77 = arith.mulf %76, %75 : vector<8x128xf32>
    %78 = math.tanh %77 : vector<8x128xf32>
    %cst_39 = arith.constant 5.000000e-01 : f32
    %79 = vector.broadcast %cst_39 : f32 to vector<8x128xf32>
    %80 = arith.mulf %79, %78 : vector<8x128xf32>
    %cst_40 = arith.constant 5.000000e-01 : f32
    %81 = vector.broadcast %cst_40 : f32 to vector<8x128xf32>
    %82 = arith.addf %80, %81 : vector<8x128xf32>
    %c0_41 = arith.constant 0 : index
    %c0_42 = arith.constant 0 : index
    %83 = vector.load %arg6[%c0_41, %c0_42] : memref<8x128xf32, #tpu.memory_space<vmem>>, vector<8x128xf32>
    %84 = arith.mulf %72, %83 : vector<8x128xf32>
    %85 = arith.mulf %64, %74 : vector<8x128xf32>
    %86 = arith.addf %84, %85 : vector<8x128xf32>
    %87 = math.tanh %86 : vector<8x128xf32>
    %88 = arith.mulf %82, %87 : vector<8x128xf32>
    %c0_43 = arith.constant 0 : index
    %c0_44 = arith.constant 0 : index
    %89 = vector.load %arg6[%c0_43, %c0_44] : memref<8x128xf32, #tpu.memory_space<vmem>>, vector<8x128xf32>
    tpu.vector_store %arg6[%c0_43, %c0_44], %86 {strides = array<i32>} : memref<8x128xf32, #tpu.memory_space<vmem>>, vector<8x128xf32>,
    %c0_45 = arith.constant 0 : index
    %c0_46 = arith.constant 0 : index
    %90 = vector.load %arg5[%c0_45, %c0_46] : memref<8x128xf32, #tpu.memory_space<vmem>>, vector<8x128xf32>
    tpu.vector_store %arg5[%c0_45, %c0_46], %88 {strides = array<i32>} : memref<8x128xf32, #tpu.memory_space<vmem>>, vector<8x128xf32>,
    %91 = arith.truncf %88 : vector<8x128xf32> to vector<8x128xbf16>
    %c1_47 = arith.constant 1 : index
    %c0_48 = arith.constant 0 : index
    %c0_49 = arith.constant 0 : index
    %92 = vector.load %arg4[%c1_47, %c0_48, %c0_49] : memref<16x8x128xbf16, #tpu.memory_space<vmem>>, vector<1x8x128xbf16>
    %93 = vector.shape_cast %92 : vector<1x8x128xbf16> to vector<8x128xbf16>
    %94 = vector.shape_cast %91 : vector<8x128xbf16> to vector<1x8x128xbf16>
    tpu.vector_store %arg4[%c1_47, %c0_48, %c0_49], %94 {strides = array<i32>} : memref<16x8x128xbf16, #tpu.memory_space<vmem>>, vector<1x8x128xbf16>,
    %c2 = arith.constant 2 : index
    %c0_50 = arith.constant 0 : index
    %c0_51 = arith.constant 0 : index
    %95 = vector.load %arg2[%c2, %c0_50, %c0_51] : memref<16x8x512xbf16, #tpu.memory_space<vmem>>, vector<1x8x512xbf16>
    %96 = vector.shape_cast %95 : vector<1x8x512xbf16> to vector<8x512xbf16>
    %97 = arith.extf %96 : vector<8x512xbf16> to vector<8x512xf32>
    %c0_52 = arith.constant 0 : index
    %c0_53 = arith.constant 0 : index
    %98 = vector.load %arg5[%c0_52, %c0_53] : memref<8x128xf32, #tpu.memory_space<vmem>>, vector<8x128xf32>
    %99 = arith.truncf %98 : vector<8x128xf32> to vector<8x128xbf16>
    %c0_54 = arith.constant 0 : index
    %c0_55 = arith.constant 0 : index
    %100 = vector.load %arg3[%c0_54, %c0_55] : memref<128x512xbf16, #tpu.memory_space<vmem>>, vector<128x512xbf16>
    %cst_56 = arith.constant dense<0.000000e+00> : vector<8x512xf32>
    %101 = tpu.matmul %99, %100, %cst_56 {dimension_numbers = #tpu.dot_dimension_numbers<[1], [0], [0], [1], [0, 0, 1, 1], [], []>} : vector<8x128xbf16>, vector<128x512xbf16>, vector<8x512xf32> -> vector<8x512xf32>
    %102 = arith.addf %97, %101 : vector<8x512xf32>
    %103 = vector.extract_strided_slice %102 {offsets = [0, 0], sizes = [8, 128], strides = [1, 1]} : vector<8x512xf32> to vector<8x128xf32>
    %cst_57 = arith.constant 5.000000e-01 : f32
    %104 = vector.broadcast %cst_57 : f32 to vector<8x128xf32>
    %105 = arith.mulf %104, %103 : vector<8x128xf32>
    %106 = math.tanh %105 : vector<8x128xf32>
    %cst_58 = arith.constant 5.000000e-01 : f32
    %107 = vector.broadcast %cst_58 : f32 to vector<8x128xf32>
    %108 = arith.mulf %107, %106 : vector<8x128xf32>
    %cst_59 = arith.constant 5.000000e-01 : f32
    %109 = vector.broadcast %cst_59 : f32 to vector<8x128xf32>
    %110 = arith.addf %108, %109 : vector<8x128xf32>
    %111 = vector.extract_strided_slice %102 {offsets = [0, 128], sizes = [8, 128], strides = [1, 1]} : vector<8x512xf32> to vector<8x128xf32>
    %cst_60 = arith.constant 5.000000e-01 : f32
    %112 = vector.broadcast %cst_60 : f32 to vector<8x128xf32>
    %113 = arith.mulf %112, %111 : vector<8x128xf32>
    %114 = math.tanh %113 : vector<8x128xf32>
    %cst_61 = arith.constant 5.000000e-01 : f32
    %115 = vector.broadcast %cst_61 : f32 to vector<8x128xf32>
    %116 = arith.mulf %115, %114 : vector<8x128xf32>
    %cst_62 = arith.constant 5.000000e-01 : f32
    %117 = vector.broadcast %cst_62 : f32 to vector<8x128xf32>
    %118 = arith.addf %116, %117 : vector<8x128xf32>
    %119 = vector.extract_strided_slice %102 {offsets = [0, 256], sizes = [8, 128], strides = [1, 1]} : vector<8x512xf32> to vector<8x128xf32>
    %120 = math.tanh %119 : vector<8x128xf32>
    %121 = vector.extract_strided_slice %102 {offsets = [0, 384], sizes = [8, 128], strides = [1, 1]} : vector<8x512xf32> to vector<8x128xf32>
    %cst_63 = arith.constant 5.000000e-01 : f32
    %122 = vector.broadcast %cst_63 : f32 to vector<8x128xf32>
    %123 = arith.mulf %122, %121 : vector<8x128xf32>
    %124 = math.tanh %123 : vector<8x128xf32>
    %cst_64 = arith.constant 5.000000e-01 : f32
    %125 = vector.broadcast %cst_64 : f32 to vector<8x128xf32>
    %126 = arith.mulf %125, %124 : vector<8x128xf32>
    %cst_65 = arith.constant 5.000000e-01 : f32
    %127 = vector.broadcast %cst_65 : f32 to vector<8x128xf32>
    %128 = arith.addf %126, %127 : vector<8x128xf32>
    %c0_66 = arith.constant 0 : index
    %c0_67 = arith.constant 0 : index
    %129 = vector.load %arg6[%c0_66, %c0_67] : memref<8x128xf32, #tpu.memory_space<vmem>>, vector<8x128xf32>
    %130 = arith.mulf %118, %129 : vector<8x128xf32>
    %131 = arith.mulf %110, %120 : vector<8x128xf32>
    %132 = arith.addf %130, %131 : vector<8x128xf32>
    %133 = math.tanh %132 : vector<8x128xf32>
    %134 = arith.mulf %128, %133 : vector<8x128xf32>
    %c0_68 = arith.constant 0 : index
    %c0_69 = arith.constant 0 : index
    %135 = vector.load %arg6[%c0_68, %c0_69] : memref<8x128xf32, #tpu.memory_space<vmem>>, vector<8x128xf32>
    tpu.vector_store %arg6[%c0_68, %c0_69], %132 {strides = array<i32>} : memref<8x128xf32, #tpu.memory_space<vmem>>, vector<8x128xf32>,
    %c0_70 = arith.constant 0 : index
    %c0_71 = arith.constant 0 : index
    %136 = vector.load %arg5[%c0_70, %c0_71] : memref<8x128xf32, #tpu.memory_space<vmem>>, vector<8x128xf32>
    tpu.vector_store %arg5[%c0_70, %c0_71], %134 {strides = array<i32>} : memref<8x128xf32, #tpu.memory_space<vmem>>, vector<8x128xf32>,
    %137 = arith.truncf %134 : vector<8x128xf32> to vector<8x128xbf16>
    %c2_72 = arith.constant 2 : index
    %c0_73 = arith.constant 0 : index
    %c0_74 = arith.constant 0 : index
    %138 = vector.load %arg4[%c2_72, %c0_73, %c0_74] : memref<16x8x128xbf16, #tpu.memory_space<vmem>>, vector<1x8x128xbf16>
    %139 = vector.shape_cast %138 : vector<1x8x128xbf16> to vector<8x128xbf16>
    %140 = vector.shape_cast %137 : vector<8x128xbf16> to vector<1x8x128xbf16>
    tpu.vector_store %arg4[%c2_72, %c0_73, %c0_74], %140 {strides = array<i32>} : memref<16x8x128xbf16, #tpu.memory_space<vmem>>, vector<1x8x128xbf16>,
    %c3 = arith.constant 3 : index
    %c0_75 = arith.constant 0 : index
    %c0_76 = arith.constant 0 : index
    %141 = vector.load %arg2[%c3, %c0_75, %c0_76] : memref<16x8x512xbf16, #tpu.memory_space<vmem>>, vector<1x8x512xbf16>
    %142 = vector.shape_cast %141 : vector<1x8x512xbf16> to vector<8x512xbf16>
    %143 = arith.extf %142 : vector<8x512xbf16> to vector<8x512xf32>
    %c0_77 = arith.constant 0 : index
    %c0_78 = arith.constant 0 : index
    %144 = vector.load %arg5[%c0_77, %c0_78] : memref<8x128xf32, #tpu.memory_space<vmem>>, vector<8x128xf32>
    %145 = arith.truncf %144 : vector<8x128xf32> to vector<8x128xbf16>
    %c0_79 = arith.constant 0 : index
    %c0_80 = arith.constant 0 : index
    %146 = vector.load %arg3[%c0_79, %c0_80] : memref<128x512xbf16, #tpu.memory_space<vmem>>, vector<128x512xbf16>
    %cst_81 = arith.constant dense<0.000000e+00> : vector<8x512xf32>
    %147 = tpu.matmul %145, %146, %cst_81 {dimension_numbers = #tpu.dot_dimension_numbers<[1], [0], [0], [1], [0, 0, 1, 1], [], []>} : vector<8x128xbf16>, vector<128x512xbf16>, vector<8x512xf32> -> vector<8x512xf32>
    %148 = arith.addf %143, %147 : vector<8x512xf32>
    %149 = vector.extract_strided_slice %148 {offsets = [0, 0], sizes = [8, 128], strides = [1, 1]} : vector<8x512xf32> to vector<8x128xf32>
    %cst_82 = arith.constant 5.000000e-01 : f32
    %150 = vector.broadcast %cst_82 : f32 to vector<8x128xf32>
    %151 = arith.mulf %150, %149 : vector<8x128xf32>
    %152 = math.tanh %151 : vector<8x128xf32>
    %cst_83 = arith.constant 5.000000e-01 : f32
    %153 = vector.broadcast %cst_83 : f32 to vector<8x128xf32>
    %154 = arith.mulf %153, %152 : vector<8x128xf32>
    %cst_84 = arith.constant 5.000000e-01 : f32
    %155 = vector.broadcast %cst_84 : f32 to vector<8x128xf32>
    %156 = arith.addf %154, %155 : vector<8x128xf32>
    %157 = vector.extract_strided_slice %148 {offsets = [0, 128], sizes = [8, 128], strides = [1, 1]} : vector<8x512xf32> to vector<8x128xf32>
    %cst_85 = arith.constant 5.000000e-01 : f32
    %158 = vector.broadcast %cst_85 : f32 to vector<8x128xf32>
    %159 = arith.mulf %158, %157 : vector<8x128xf32>
    %160 = math.tanh %159 : vector<8x128xf32>
    %cst_86 = arith.constant 5.000000e-01 : f32
    %161 = vector.broadcast %cst_86 : f32 to vector<8x128xf32>
    %162 = arith.mulf %161, %160 : vector<8x128xf32>
    %cst_87 = arith.constant 5.000000e-01 : f32
    %163 = vector.broadcast %cst_87 : f32 to vector<8x128xf32>
    %164 = arith.addf %162, %163 : vector<8x128xf32>
    %165 = vector.extract_strided_slice %148 {offsets = [0, 256], sizes = [8, 128], strides = [1, 1]} : vector<8x512xf32> to vector<8x128xf32>
    %166 = math.tanh %165 : vector<8x128xf32>
    %167 = vector.extract_strided_slice %148 {offsets = [0, 384], sizes = [8, 128], strides = [1, 1]} : vector<8x512xf32> to vector<8x128xf32>
    %cst_88 = arith.constant 5.000000e-01 : f32
    %168 = vector.broadcast %cst_88 : f32 to vector<8x128xf32>
    %169 = arith.mulf %168, %167 : vector<8x128xf32>
    %170 = math.tanh %169 : vector<8x128xf32>
    %cst_89 = arith.constant 5.000000e-01 : f32
    %171 = vector.broadcast %cst_89 : f32 to vector<8x128xf32>
    %172 = arith.mulf %171, %170 : vector<8x128xf32>
    %cst_90 = arith.constant 5.000000e-01 : f32
    %173 = vector.broadcast %cst_90 : f32 to vector<8x128xf32>
    %174 = arith.addf %172, %173 : vector<8x128xf32>
    %c0_91 = arith.constant 0 : index
    %c0_92 = arith.constant 0 : index
    %175 = vector.load %arg6[%c0_91, %c0_92] : memref<8x128xf32, #tpu.memory_space<vmem>>, vector<8x128xf32>
    %176 = arith.mulf %164, %175 : vector<8x128xf32>
    %177 = arith.mulf %156, %166 : vector<8x128xf32>
    %178 = arith.addf %176, %177 : vector<8x128xf32>
    %179 = math.tanh %178 : vector<8x128xf32>
    %180 = arith.mulf %174, %179 : vector<8x128xf32>
    %c0_93 = arith.constant 0 : index
    %c0_94 = arith.constant 0 : index
    %181 = vector.load %arg6[%c0_93, %c0_94] : memref<8x128xf32, #tpu.memory_space<vmem>>, vector<8x128xf32>
    tpu.vector_store %arg6[%c0_93, %c0_94], %178 {strides = array<i32>} : memref<8x128xf32, #tpu.memory_space<vmem>>, vector<8x128xf32>,
    %c0_95 = arith.constant 0 : index
    %c0_96 = arith.constant 0 : index
    %182 = vector.load %arg5[%c0_95, %c0_96] : memref<8x128xf32, #tpu.memory_space<vmem>>, vector<8x128xf32>
    tpu.vector_store %arg5[%c0_95, %c0_96], %180 {strides = array<i32>} : memref<8x128xf32, #tpu.memory_space<vmem>>, vector<8x128xf32>,
    %183 = arith.truncf %180 : vector<8x128xf32> to vector<8x128xbf16>
    %c3_97 = arith.constant 3 : index
    %c0_98 = arith.constant 0 : index
    %c0_99 = arith.constant 0 : index
    %184 = vector.load %arg4[%c3_97, %c0_98, %c0_99] : memref<16x8x128xbf16, #tpu.memory_space<vmem>>, vector<1x8x128xbf16>
    %185 = vector.shape_cast %184 : vector<1x8x128xbf16> to vector<8x128xbf16>
    %186 = vector.shape_cast %183 : vector<8x128xbf16> to vector<1x8x128xbf16>
    tpu.vector_store %arg4[%c3_97, %c0_98, %c0_99], %186 {strides = array<i32>} : memref<16x8x128xbf16, #tpu.memory_space<vmem>>, vector<1x8x128xbf16>,
    %c4 = arith.constant 4 : index
    %c0_100 = arith.constant 0 : index
    %c0_101 = arith.constant 0 : index
    %187 = vector.load %arg2[%c4, %c0_100, %c0_101] : memref<16x8x512xbf16, #tpu.memory_space<vmem>>, vector<1x8x512xbf16>
    %188 = vector.shape_cast %187 : vector<1x8x512xbf16> to vector<8x512xbf16>
    %189 = arith.extf %188 : vector<8x512xbf16> to vector<8x512xf32>
    %c0_102 = arith.constant 0 : index
    %c0_103 = arith.constant 0 : index
    %190 = vector.load %arg5[%c0_102, %c0_103] : memref<8x128xf32, #tpu.memory_space<vmem>>, vector<8x128xf32>
    %191 = arith.truncf %190 : vector<8x128xf32> to vector<8x128xbf16>
    %c0_104 = arith.constant 0 : index
    %c0_105 = arith.constant 0 : index
    %192 = vector.load %arg3[%c0_104, %c0_105] : memref<128x512xbf16, #tpu.memory_space<vmem>>, vector<128x512xbf16>
    %cst_106 = arith.constant dense<0.000000e+00> : vector<8x512xf32>
    %193 = tpu.matmul %191, %192, %cst_106 {dimension_numbers = #tpu.dot_dimension_numbers<[1], [0], [0], [1], [0, 0, 1, 1], [], []>} : vector<8x128xbf16>, vector<128x512xbf16>, vector<8x512xf32> -> vector<8x512xf32>
    %194 = arith.addf %189, %193 : vector<8x512xf32>
    %195 = vector.extract_strided_slice %194 {offsets = [0, 0], sizes = [8, 128], strides = [1, 1]} : vector<8x512xf32> to vector<8x128xf32>
    %cst_107 = arith.constant 5.000000e-01 : f32
    %196 = vector.broadcast %cst_107 : f32 to vector<8x128xf32>
    %197 = arith.mulf %196, %195 : vector<8x128xf32>
    %198 = math.tanh %197 : vector<8x128xf32>
    %cst_108 = arith.constant 5.000000e-01 : f32
    %199 = vector.broadcast %cst_108 : f32 to vector<8x128xf32>
    %200 = arith.mulf %199, %198 : vector<8x128xf32>
    %cst_109 = arith.constant 5.000000e-01 : f32
    %201 = vector.broadcast %cst_109 : f32 to vector<8x128xf32>
    %202 = arith.addf %200, %201 : vector<8x128xf32>
    %203 = vector.extract_strided_slice %194 {offsets = [0, 128], sizes = [8, 128], strides = [1, 1]} : vector<8x512xf32> to vector<8x128xf32>
    %cst_110 = arith.constant 5.000000e-01 : f32
    %204 = vector.broadcast %cst_110 : f32 to vector<8x128xf32>
    %205 = arith.mulf %204, %203 : vector<8x128xf32>
    %206 = math.tanh %205 : vector<8x128xf32>
    %cst_111 = arith.constant 5.000000e-01 : f32
    %207 = vector.broadcast %cst_111 : f32 to vector<8x128xf32>
    %208 = arith.mulf %207, %206 : vector<8x128xf32>
    %cst_112 = arith.constant 5.000000e-01 : f32
    %209 = vector.broadcast %cst_112 : f32 to vector<8x128xf32>
    %210 = arith.addf %208, %209 : vector<8x128xf32>
    %211 = vector.extract_strided_slice %194 {offsets = [0, 256], sizes = [8, 128], strides = [1, 1]} : vector<8x512xf32> to vector<8x128xf32>
    %212 = math.tanh %211 : vector<8x128xf32>
    %213 = vector.extract_strided_slice %194 {offsets = [0, 384], sizes = [8, 128], strides = [1, 1]} : vector<8x512xf32> to vector<8x128xf32>
    %cst_113 = arith.constant 5.000000e-01 : f32
    %214 = vector.broadcast %cst_113 : f32 to vector<8x128xf32>
    %215 = arith.mulf %214, %213 : vector<8x128xf32>
    %216 = math.tanh %215 : vector<8x128xf32>
    %cst_114 = arith.constant 5.000000e-01 : f32
    %217 = vector.broadcast %cst_114 : f32 to vector<8x128xf32>
    %218 = arith.mulf %217, %216 : vector<8x128xf32>
    %cst_115 = arith.constant 5.000000e-01 : f32
    %219 = vector.broadcast %cst_115 : f32 to vector<8x128xf32>
    %220 = arith.addf %218, %219 : vector<8x128xf32>
    %c0_116 = arith.constant 0 : index
    %c0_117 = arith.constant 0 : index
    %221 = vector.load %arg6[%c0_116, %c0_117] : memref<8x128xf32, #tpu.memory_space<vmem>>, vector<8x128xf32>
    %222 = arith.mulf %210, %221 : vector<8x128xf32>
    %223 = arith.mulf %202, %212 : vector<8x128xf32>
    %224 = arith.addf %222, %223 : vector<8x128xf32>
    %225 = math.tanh %224 : vector<8x128xf32>
    %226 = arith.mulf %220, %225 : vector<8x128xf32>
    %c0_118 = arith.constant 0 : index
    %c0_119 = arith.constant 0 : index
    %227 = vector.load %arg6[%c0_118, %c0_119] : memref<8x128xf32, #tpu.memory_space<vmem>>, vector<8x128xf32>
    tpu.vector_store %arg6[%c0_118, %c0_119], %224 {strides = array<i32>} : memref<8x128xf32, #tpu.memory_space<vmem>>, vector<8x128xf32>,
    %c0_120 = arith.constant 0 : index
    %c0_121 = arith.constant 0 : index
    %228 = vector.load %arg5[%c0_120, %c0_121] : memref<8x128xf32, #tpu.memory_space<vmem>>, vector<8x128xf32>
    tpu.vector_store %arg5[%c0_120, %c0_121], %226 {strides = array<i32>} : memref<8x128xf32, #tpu.memory_space<vmem>>, vector<8x128xf32>,
    %229 = arith.truncf %226 : vector<8x128xf32> to vector<8x128xbf16>
    %c4_122 = arith.constant 4 : index
    %c0_123 = arith.constant 0 : index
    %c0_124 = arith.constant 0 : index
    %230 = vector.load %arg4[%c4_122, %c0_123, %c0_124] : memref<16x8x128xbf16, #tpu.memory_space<vmem>>, vector<1x8x128xbf16>
    %231 = vector.shape_cast %230 : vector<1x8x128xbf16> to vector<8x128xbf16>
    %232 = vector.shape_cast %229 : vector<8x128xbf16> to vector<1x8x128xbf16>
    tpu.vector_store %arg4[%c4_122, %c0_123, %c0_124], %232 {strides = array<i32>} : memref<16x8x128xbf16, #tpu.memory_space<vmem>>, vector<1x8x128xbf16>,
    %c5 = arith.constant 5 : index
    %c0_125 = arith.constant 0 : index
    %c0_126 = arith.constant 0 : index
    %233 = vector.load %arg2[%c5, %c0_125, %c0_126] : memref<16x8x512xbf16, #tpu.memory_space<vmem>>, vector<1x8x512xbf16>
    %234 = vector.shape_cast %233 : vector<1x8x512xbf16> to vector<8x512xbf16>
    %235 = arith.extf %234 : vector<8x512xbf16> to vector<8x512xf32>
    %c0_127 = arith.constant 0 : index
    %c0_128 = arith.constant 0 : index
    %236 = vector.load %arg5[%c0_127, %c0_128] : memref<8x128xf32, #tpu.memory_space<vmem>>, vector<8x128xf32>
    %237 = arith.truncf %236 : vector<8x128xf32> to vector<8x128xbf16>
    %c0_129 = arith.constant 0 : index
    %c0_130 = arith.constant 0 : index
    %238 = vector.load %arg3[%c0_129, %c0_130] : memref<128x512xbf16, #tpu.memory_space<vmem>>, vector<128x512xbf16>
    %cst_131 = arith.constant dense<0.000000e+00> : vector<8x512xf32>
    %239 = tpu.matmul %237, %238, %cst_131 {dimension_numbers = #tpu.dot_dimension_numbers<[1], [0], [0], [1], [0, 0, 1, 1], [], []>} : vector<8x128xbf16>, vector<128x512xbf16>, vector<8x512xf32> -> vector<8x512xf32>
    %240 = arith.addf %235, %239 : vector<8x512xf32>
    %241 = vector.extract_strided_slice %240 {offsets = [0, 0], sizes = [8, 128], strides = [1, 1]} : vector<8x512xf32> to vector<8x128xf32>
    %cst_132 = arith.constant 5.000000e-01 : f32
    %242 = vector.broadcast %cst_132 : f32 to vector<8x128xf32>
    %243 = arith.mulf %242, %241 : vector<8x128xf32>
    %244 = math.tanh %243 : vector<8x128xf32>
    %cst_133 = arith.constant 5.000000e-01 : f32
    %245 = vector.broadcast %cst_133 : f32 to vector<8x128xf32>
    %246 = arith.mulf %245, %244 : vector<8x128xf32>
    %cst_134 = arith.constant 5.000000e-01 : f32
    %247 = vector.broadcast %cst_134 : f32 to vector<8x128xf32>
    %248 = arith.addf %246, %247 : vector<8x128xf32>
    %249 = vector.extract_strided_slice %240 {offsets = [0, 128], sizes = [8, 128], strides = [1, 1]} : vector<8x512xf32> to vector<8x128xf32>
    %cst_135 = arith.constant 5.000000e-01 : f32
    %250 = vector.broadcast %cst_135 : f32 to vector<8x128xf32>
    %251 = arith.mulf %250, %249 : vector<8x128xf32>
    %252 = math.tanh %251 : vector<8x128xf32>
    %cst_136 = arith.constant 5.000000e-01 : f32
    %253 = vector.broadcast %cst_136 : f32 to vector<8x128xf32>
    %254 = arith.mulf %253, %252 : vector<8x128xf32>
    %cst_137 = arith.constant 5.000000e-01 : f32
    %255 = vector.broadcast %cst_137 : f32 to vector<8x128xf32>
    %256 = arith.addf %254, %255 : vector<8x128xf32>
    %257 = vector.extract_strided_slice %240 {offsets = [0, 256], sizes = [8, 128], strides = [1, 1]} : vector<8x512xf32> to vector<8x128xf32>
    %258 = math.tanh %257 : vector<8x128xf32>
    %259 = vector.extract_strided_slice %240 {offsets = [0, 384], sizes = [8, 128], strides = [1, 1]} : vector<8x512xf32> to vector<8x128xf32>
    %cst_138 = arith.constant 5.000000e-01 : f32
    %260 = vector.broadcast %cst_138 : f32 to vector<8x128xf32>
    %261 = arith.mulf %260, %259 : vector<8x128xf32>
    %262 = math.tanh %261 : vector<8x128xf32>
    %cst_139 = arith.constant 5.000000e-01 : f32
    %263 = vector.broadcast %cst_139 : f32 to vector<8x128xf32>
    %264 = arith.mulf %263, %262 : vector<8x128xf32>
    %cst_140 = arith.constant 5.000000e-01 : f32
    %265 = vector.broadcast %cst_140 : f32 to vector<8x128xf32>
    %266 = arith.addf %264, %265 : vector<8x128xf32>
    %c0_141 = arith.constant 0 : index
    %c0_142 = arith.constant 0 : index
    %267 = vector.load %arg6[%c0_141, %c0_142] : memref<8x128xf32, #tpu.memory_space<vmem>>, vector<8x128xf32>
    %268 = arith.mulf %256, %267 : vector<8x128xf32>
    %269 = arith.mulf %248, %258 : vector<8x128xf32>
    %270 = arith.addf %268, %269 : vector<8x128xf32>
    %271 = math.tanh %270 : vector<8x128xf32>
    %272 = arith.mulf %266, %271 : vector<8x128xf32>
    %c0_143 = arith.constant 0 : index
    %c0_144 = arith.constant 0 : index
    %273 = vector.load %arg6[%c0_143, %c0_144] : memref<8x128xf32, #tpu.memory_space<vmem>>, vector<8x128xf32>
    tpu.vector_store %arg6[%c0_143, %c0_144], %270 {strides = array<i32>} : memref<8x128xf32, #tpu.memory_space<vmem>>, vector<8x128xf32>,
    %c0_145 = arith.constant 0 : index
    %c0_146 = arith.constant 0 : index
    %274 = vector.load %arg5[%c0_145, %c0_146] : memref<8x128xf32, #tpu.memory_space<vmem>>, vector<8x128xf32>
    tpu.vector_store %arg5[%c0_145, %c0_146], %272 {strides = array<i32>} : memref<8x128xf32, #tpu.memory_space<vmem>>, vector<8x128xf32>,
    %275 = arith.truncf %272 : vector<8x128xf32> to vector<8x128xbf16>
    %c5_147 = arith.constant 5 : index
    %c0_148 = arith.constant 0 : index
    %c0_149 = arith.constant 0 : index
    %276 = vector.load %arg4[%c5_147, %c0_148, %c0_149] : memref<16x8x128xbf16, #tpu.memory_space<vmem>>, vector<1x8x128xbf16>
    %277 = vector.shape_cast %276 : vector<1x8x128xbf16> to vector<8x128xbf16>
    %278 = vector.shape_cast %275 : vector<8x128xbf16> to vector<1x8x128xbf16>
    tpu.vector_store %arg4[%c5_147, %c0_148, %c0_149], %278 {strides = array<i32>} : memref<16x8x128xbf16, #tpu.memory_space<vmem>>, vector<1x8x128xbf16>,
    %c6 = arith.constant 6 : index
    %c0_150 = arith.constant 0 : index
    %c0_151 = arith.constant 0 : index
    %279 = vector.load %arg2[%c6, %c0_150, %c0_151] : memref<16x8x512xbf16, #tpu.memory_space<vmem>>, vector<1x8x512xbf16>
    %280 = vector.shape_cast %279 : vector<1x8x512xbf16> to vector<8x512xbf16>
    %281 = arith.extf %280 : vector<8x512xbf16> to vector<8x512xf32>
    %c0_152 = arith.constant 0 : index
    %c0_153 = arith.constant 0 : index
    %282 = vector.load %arg5[%c0_152, %c0_153] : memref<8x128xf32, #tpu.memory_space<vmem>>, vector<8x128xf32>
    %283 = arith.truncf %282 : vector<8x128xf32> to vector<8x128xbf16>
    %c0_154 = arith.constant 0 : index
    %c0_155 = arith.constant 0 : index
    %284 = vector.load %arg3[%c0_154, %c0_155] : memref<128x512xbf16, #tpu.memory_space<vmem>>, vector<128x512xbf16>
    %cst_156 = arith.constant dense<0.000000e+00> : vector<8x512xf32>
    %285 = tpu.matmul %283, %284, %cst_156 {dimension_numbers = #tpu.dot_dimension_numbers<[1], [0], [0], [1], [0, 0, 1, 1], [], []>} : vector<8x128xbf16>, vector<128x512xbf16>, vector<8x512xf32> -> vector<8x512xf32>
    %286 = arith.addf %281, %285 : vector<8x512xf32>
    %287 = vector.extract_strided_slice %286 {offsets = [0, 0], sizes = [8, 128], strides = [1, 1]} : vector<8x512xf32> to vector<8x128xf32>
    %cst_157 = arith.constant 5.000000e-01 : f32
    %288 = vector.broadcast %cst_157 : f32 to vector<8x128xf32>
    %289 = arith.mulf %288, %287 : vector<8x128xf32>
    %290 = math.tanh %289 : vector<8x128xf32>
    %cst_158 = arith.constant 5.000000e-01 : f32
    %291 = vector.broadcast %cst_158 : f32 to vector<8x128xf32>
    %292 = arith.mulf %291, %290 : vector<8x128xf32>
    %cst_159 = arith.constant 5.000000e-01 : f32
    %293 = vector.broadcast %cst_159 : f32 to vector<8x128xf32>
    %294 = arith.addf %292, %293 : vector<8x128xf32>
    %295 = vector.extract_strided_slice %286 {offsets = [0, 128], sizes = [8, 128], strides = [1, 1]} : vector<8x512xf32> to vector<8x128xf32>
    %cst_160 = arith.constant 5.000000e-01 : f32
    %296 = vector.broadcast %cst_160 : f32 to vector<8x128xf32>
    %297 = arith.mulf %296, %295 : vector<8x128xf32>
    %298 = math.tanh %297 : vector<8x128xf32>
    %cst_161 = arith.constant 5.000000e-01 : f32
    %299 = vector.broadcast %cst_161 : f32 to vector<8x128xf32>
    %300 = arith.mulf %299, %298 : vector<8x128xf32>
    %cst_162 = arith.constant 5.000000e-01 : f32
    %301 = vector.broadcast %cst_162 : f32 to vector<8x128xf32>
    %302 = arith.addf %300, %301 : vector<8x128xf32>
    %303 = vector.extract_strided_slice %286 {offsets = [0, 256], sizes = [8, 128], strides = [1, 1]} : vector<8x512xf32> to vector<8x128xf32>
    %304 = math.tanh %303 : vector<8x128xf32>
    %305 = vector.extract_strided_slice %286 {offsets = [0, 384], sizes = [8, 128], strides = [1, 1]} : vector<8x512xf32> to vector<8x128xf32>
    %cst_163 = arith.constant 5.000000e-01 : f32
    %306 = vector.broadcast %cst_163 : f32 to vector<8x128xf32>
    %307 = arith.mulf %306, %305 : vector<8x128xf32>
    %308 = math.tanh %307 : vector<8x128xf32>
    %cst_164 = arith.constant 5.000000e-01 : f32
    %309 = vector.broadcast %cst_164 : f32 to vector<8x128xf32>
    %310 = arith.mulf %309, %308 : vector<8x128xf32>
    %cst_165 = arith.constant 5.000000e-01 : f32
    %311 = vector.broadcast %cst_165 : f32 to vector<8x128xf32>
    %312 = arith.addf %310, %311 : vector<8x128xf32>
    %c0_166 = arith.constant 0 : index
    %c0_167 = arith.constant 0 : index
    %313 = vector.load %arg6[%c0_166, %c0_167] : memref<8x128xf32, #tpu.memory_space<vmem>>, vector<8x128xf32>
    %314 = arith.mulf %302, %313 : vector<8x128xf32>
    %315 = arith.mulf %294, %304 : vector<8x128xf32>
    %316 = arith.addf %314, %315 : vector<8x128xf32>
    %317 = math.tanh %316 : vector<8x128xf32>
    %318 = arith.mulf %312, %317 : vector<8x128xf32>
    %c0_168 = arith.constant 0 : index
    %c0_169 = arith.constant 0 : index
    %319 = vector.load %arg6[%c0_168, %c0_169] : memref<8x128xf32, #tpu.memory_space<vmem>>, vector<8x128xf32>
    tpu.vector_store %arg6[%c0_168, %c0_169], %316 {strides = array<i32>} : memref<8x128xf32, #tpu.memory_space<vmem>>, vector<8x128xf32>,
    %c0_170 = arith.constant 0 : index
    %c0_171 = arith.constant 0 : index
    %320 = vector.load %arg5[%c0_170, %c0_171] : memref<8x128xf32, #tpu.memory_space<vmem>>, vector<8x128xf32>
    tpu.vector_store %arg5[%c0_170, %c0_171], %318 {strides = array<i32>} : memref<8x128xf32, #tpu.memory_space<vmem>>, vector<8x128xf32>,
    %321 = arith.truncf %318 : vector<8x128xf32> to vector<8x128xbf16>
    %c6_172 = arith.constant 6 : index
    %c0_173 = arith.constant 0 : index
    %c0_174 = arith.constant 0 : index
    %322 = vector.load %arg4[%c6_172, %c0_173, %c0_174] : memref<16x8x128xbf16, #tpu.memory_space<vmem>>, vector<1x8x128xbf16>
    %323 = vector.shape_cast %322 : vector<1x8x128xbf16> to vector<8x128xbf16>
    %324 = vector.shape_cast %321 : vector<8x128xbf16> to vector<1x8x128xbf16>
    tpu.vector_store %arg4[%c6_172, %c0_173, %c0_174], %324 {strides = array<i32>} : memref<16x8x128xbf16, #tpu.memory_space<vmem>>, vector<1x8x128xbf16>,
    %c7 = arith.constant 7 : index
    %c0_175 = arith.constant 0 : index
    %c0_176 = arith.constant 0 : index
    %325 = vector.load %arg2[%c7, %c0_175, %c0_176] : memref<16x8x512xbf16, #tpu.memory_space<vmem>>, vector<1x8x512xbf16>
    %326 = vector.shape_cast %325 : vector<1x8x512xbf16> to vector<8x512xbf16>
    %327 = arith.extf %326 : vector<8x512xbf16> to vector<8x512xf32>
    %c0_177 = arith.constant 0 : index
    %c0_178 = arith.constant 0 : index
    %328 = vector.load %arg5[%c0_177, %c0_178] : memref<8x128xf32, #tpu.memory_space<vmem>>, vector<8x128xf32>
    %329 = arith.truncf %328 : vector<8x128xf32> to vector<8x128xbf16>
    %c0_179 = arith.constant 0 : index
    %c0_180 = arith.constant 0 : index
    %330 = vector.load %arg3[%c0_179, %c0_180] : memref<128x512xbf16, #tpu.memory_space<vmem>>, vector<128x512xbf16>
    %cst_181 = arith.constant dense<0.000000e+00> : vector<8x512xf32>
    %331 = tpu.matmul %329, %330, %cst_181 {dimension_numbers = #tpu.dot_dimension_numbers<[1], [0], [0], [1], [0, 0, 1, 1], [], []>} : vector<8x128xbf16>, vector<128x512xbf16>, vector<8x512xf32> -> vector<8x512xf32>
    %332 = arith.addf %327, %331 : vector<8x512xf32>
    %333 = vector.extract_strided_slice %332 {offsets = [0, 0], sizes = [8, 128], strides = [1, 1]} : vector<8x512xf32> to vector<8x128xf32>
    %cst_182 = arith.constant 5.000000e-01 : f32
    %334 = vector.broadcast %cst_182 : f32 to vector<8x128xf32>
    %335 = arith.mulf %334, %333 : vector<8x128xf32>
    %336 = math.tanh %335 : vector<8x128xf32>
    %cst_183 = arith.constant 5.000000e-01 : f32
    %337 = vector.broadcast %cst_183 : f32 to vector<8x128xf32>
    %338 = arith.mulf %337, %336 : vector<8x128xf32>
    %cst_184 = arith.constant 5.000000e-01 : f32
    %339 = vector.broadcast %cst_184 : f32 to vector<8x128xf32>
    %340 = arith.addf %338, %339 : vector<8x128xf32>
    %341 = vector.extract_strided_slice %332 {offsets = [0, 128], sizes = [8, 128], strides = [1, 1]} : vector<8x512xf32> to vector<8x128xf32>
    %cst_185 = arith.constant 5.000000e-01 : f32
    %342 = vector.broadcast %cst_185 : f32 to vector<8x128xf32>
    %343 = arith.mulf %342, %341 : vector<8x128xf32>
    %344 = math.tanh %343 : vector<8x128xf32>
    %cst_186 = arith.constant 5.000000e-01 : f32
    %345 = vector.broadcast %cst_186 : f32 to vector<8x128xf32>
    %346 = arith.mulf %345, %344 : vector<8x128xf32>
    %cst_187 = arith.constant 5.000000e-01 : f32
    %347 = vector.broadcast %cst_187 : f32 to vector<8x128xf32>
    %348 = arith.addf %346, %347 : vector<8x128xf32>
    %349 = vector.extract_strided_slice %332 {offsets = [0, 256], sizes = [8, 128], strides = [1, 1]} : vector<8x512xf32> to vector<8x128xf32>
    %350 = math.tanh %349 : vector<8x128xf32>
    %351 = vector.extract_strided_slice %332 {offsets = [0, 384], sizes = [8, 128], strides = [1, 1]} : vector<8x512xf32> to vector<8x128xf32>
    %cst_188 = arith.constant 5.000000e-01 : f32
    %352 = vector.broadcast %cst_188 : f32 to vector<8x128xf32>
    %353 = arith.mulf %352, %351 : vector<8x128xf32>
    %354 = math.tanh %353 : vector<8x128xf32>
    %cst_189 = arith.constant 5.000000e-01 : f32
    %355 = vector.broadcast %cst_189 : f32 to vector<8x128xf32>
    %356 = arith.mulf %355, %354 : vector<8x128xf32>
    %cst_190 = arith.constant 5.000000e-01 : f32
    %357 = vector.broadcast %cst_190 : f32 to vector<8x128xf32>
    %358 = arith.addf %356, %357 : vector<8x128xf32>
    %c0_191 = arith.constant 0 : index
    %c0_192 = arith.constant 0 : index
    %359 = vector.load %arg6[%c0_191, %c0_192] : memref<8x128xf32, #tpu.memory_space<vmem>>, vector<8x128xf32>
    %360 = arith.mulf %348, %359 : vector<8x128xf32>
    %361 = arith.mulf %340, %350 : vector<8x128xf32>
    %362 = arith.addf %360, %361 : vector<8x128xf32>
    %363 = math.tanh %362 : vector<8x128xf32>
    %364 = arith.mulf %358, %363 : vector<8x128xf32>
    %c0_193 = arith.constant 0 : index
    %c0_194 = arith.constant 0 : index
    %365 = vector.load %arg6[%c0_193, %c0_194] : memref<8x128xf32, #tpu.memory_space<vmem>>, vector<8x128xf32>
    tpu.vector_store %arg6[%c0_193, %c0_194], %362 {strides = array<i32>} : memref<8x128xf32, #tpu.memory_space<vmem>>, vector<8x128xf32>,
    %c0_195 = arith.constant 0 : index
    %c0_196 = arith.constant 0 : index
    %366 = vector.load %arg5[%c0_195, %c0_196] : memref<8x128xf32, #tpu.memory_space<vmem>>, vector<8x128xf32>
    tpu.vector_store %arg5[%c0_195, %c0_196], %364 {strides = array<i32>} : memref<8x128xf32, #tpu.memory_space<vmem>>, vector<8x128xf32>,
    %367 = arith.truncf %364 : vector<8x128xf32> to vector<8x128xbf16>
    %c7_197 = arith.constant 7 : index
    %c0_198 = arith.constant 0 : index
    %c0_199 = arith.constant 0 : index
    %368 = vector.load %arg4[%c7_197, %c0_198, %c0_199] : memref<16x8x128xbf16, #tpu.memory_space<vmem>>, vector<1x8x128xbf16>
    %369 = vector.shape_cast %368 : vector<1x8x128xbf16> to vector<8x128xbf16>
    %370 = vector.shape_cast %367 : vector<8x128xbf16> to vector<1x8x128xbf16>
    tpu.vector_store %arg4[%c7_197, %c0_198, %c0_199], %370 {strides = array<i32>} : memref<16x8x128xbf16, #tpu.memory_space<vmem>>, vector<1x8x128xbf16>,
    %c8 = arith.constant 8 : index
    %c0_200 = arith.constant 0 : index
    %c0_201 = arith.constant 0 : index
    %371 = vector.load %arg2[%c8, %c0_200, %c0_201] : memref<16x8x512xbf16, #tpu.memory_space<vmem>>, vector<1x8x512xbf16>
    %372 = vector.shape_cast %371 : vector<1x8x512xbf16> to vector<8x512xbf16>
    %373 = arith.extf %372 : vector<8x512xbf16> to vector<8x512xf32>
    %c0_202 = arith.constant 0 : index
    %c0_203 = arith.constant 0 : index
    %374 = vector.load %arg5[%c0_202, %c0_203] : memref<8x128xf32, #tpu.memory_space<vmem>>, vector<8x128xf32>
    %375 = arith.truncf %374 : vector<8x128xf32> to vector<8x128xbf16>
    %c0_204 = arith.constant 0 : index
    %c0_205 = arith.constant 0 : index
    %376 = vector.load %arg3[%c0_204, %c0_205] : memref<128x512xbf16, #tpu.memory_space<vmem>>, vector<128x512xbf16>
    %cst_206 = arith.constant dense<0.000000e+00> : vector<8x512xf32>
    %377 = tpu.matmul %375, %376, %cst_206 {dimension_numbers = #tpu.dot_dimension_numbers<[1], [0], [0], [1], [0, 0, 1, 1], [], []>} : vector<8x128xbf16>, vector<128x512xbf16>, vector<8x512xf32> -> vector<8x512xf32>
    %378 = arith.addf %373, %377 : vector<8x512xf32>
    %379 = vector.extract_strided_slice %378 {offsets = [0, 0], sizes = [8, 128], strides = [1, 1]} : vector<8x512xf32> to vector<8x128xf32>
    %cst_207 = arith.constant 5.000000e-01 : f32
    %380 = vector.broadcast %cst_207 : f32 to vector<8x128xf32>
    %381 = arith.mulf %380, %379 : vector<8x128xf32>
    %382 = math.tanh %381 : vector<8x128xf32>
    %cst_208 = arith.constant 5.000000e-01 : f32
    %383 = vector.broadcast %cst_208 : f32 to vector<8x128xf32>
    %384 = arith.mulf %383, %382 : vector<8x128xf32>
    %cst_209 = arith.constant 5.000000e-01 : f32
    %385 = vector.broadcast %cst_209 : f32 to vector<8x128xf32>
    %386 = arith.addf %384, %385 : vector<8x128xf32>
    %387 = vector.extract_strided_slice %378 {offsets = [0, 128], sizes = [8, 128], strides = [1, 1]} : vector<8x512xf32> to vector<8x128xf32>
    %cst_210 = arith.constant 5.000000e-01 : f32
    %388 = vector.broadcast %cst_210 : f32 to vector<8x128xf32>
    %389 = arith.mulf %388, %387 : vector<8x128xf32>
    %390 = math.tanh %389 : vector<8x128xf32>
    %cst_211 = arith.constant 5.000000e-01 : f32
    %391 = vector.broadcast %cst_211 : f32 to vector<8x128xf32>
    %392 = arith.mulf %391, %390 : vector<8x128xf32>
    %cst_212 = arith.constant 5.000000e-01 : f32
    %393 = vector.broadcast %cst_212 : f32 to vector<8x128xf32>
    %394 = arith.addf %392, %393 : vector<8x128xf32>
    %395 = vector.extract_strided_slice %378 {offsets = [0, 256], sizes = [8, 128], strides = [1, 1]} : vector<8x512xf32> to vector<8x128xf32>
    %396 = math.tanh %395 : vector<8x128xf32>
    %397 = vector.extract_strided_slice %378 {offsets = [0, 384], sizes = [8, 128], strides = [1, 1]} : vector<8x512xf32> to vector<8x128xf32>
    %cst_213 = arith.constant 5.000000e-01 : f32
    %398 = vector.broadcast %cst_213 : f32 to vector<8x128xf32>
    %399 = arith.mulf %398, %397 : vector<8x128xf32>
    %400 = math.tanh %399 : vector<8x128xf32>
    %cst_214 = arith.constant 5.000000e-01 : f32
    %401 = vector.broadcast %cst_214 : f32 to vector<8x128xf32>
    %402 = arith.mulf %401, %400 : vector<8x128xf32>
    %cst_215 = arith.constant 5.000000e-01 : f32
    %403 = vector.broadcast %cst_215 : f32 to vector<8x128xf32>
    %404 = arith.addf %402, %403 : vector<8x128xf32>
    %c0_216 = arith.constant 0 : index
    %c0_217 = arith.constant 0 : index
    %405 = vector.load %arg6[%c0_216, %c0_217] : memref<8x128xf32, #tpu.memory_space<vmem>>, vector<8x128xf32>
    %406 = arith.mulf %394, %405 : vector<8x128xf32>
    %407 = arith.mulf %386, %396 : vector<8x128xf32>
    %408 = arith.addf %406, %407 : vector<8x128xf32>
    %409 = math.tanh %408 : vector<8x128xf32>
    %410 = arith.mulf %404, %409 : vector<8x128xf32>
    %c0_218 = arith.constant 0 : index
    %c0_219 = arith.constant 0 : index
    %411 = vector.load %arg6[%c0_218, %c0_219] : memref<8x128xf32, #tpu.memory_space<vmem>>, vector<8x128xf32>
    tpu.vector_store %arg6[%c0_218, %c0_219], %408 {strides = array<i32>} : memref<8x128xf32, #tpu.memory_space<vmem>>, vector<8x128xf32>,
    %c0_220 = arith.constant 0 : index
    %c0_221 = arith.constant 0 : index
    %412 = vector.load %arg5[%c0_220, %c0_221] : memref<8x128xf32, #tpu.memory_space<vmem>>, vector<8x128xf32>
    tpu.vector_store %arg5[%c0_220, %c0_221], %410 {strides = array<i32>} : memref<8x128xf32, #tpu.memory_space<vmem>>, vector<8x128xf32>,
    %413 = arith.truncf %410 : vector<8x128xf32> to vector<8x128xbf16>
    %c8_222 = arith.constant 8 : index
    %c0_223 = arith.constant 0 : index
    %c0_224 = arith.constant 0 : index
    %414 = vector.load %arg4[%c8_222, %c0_223, %c0_224] : memref<16x8x128xbf16, #tpu.memory_space<vmem>>, vector<1x8x128xbf16>
    %415 = vector.shape_cast %414 : vector<1x8x128xbf16> to vector<8x128xbf16>
    %416 = vector.shape_cast %413 : vector<8x128xbf16> to vector<1x8x128xbf16>
    tpu.vector_store %arg4[%c8_222, %c0_223, %c0_224], %416 {strides = array<i32>} : memref<16x8x128xbf16, #tpu.memory_space<vmem>>, vector<1x8x128xbf16>,
    %c9 = arith.constant 9 : index
    %c0_225 = arith.constant 0 : index
    %c0_226 = arith.constant 0 : index
    %417 = vector.load %arg2[%c9, %c0_225, %c0_226] : memref<16x8x512xbf16, #tpu.memory_space<vmem>>, vector<1x8x512xbf16>
    %418 = vector.shape_cast %417 : vector<1x8x512xbf16> to vector<8x512xbf16>
    %419 = arith.extf %418 : vector<8x512xbf16> to vector<8x512xf32>
    %c0_227 = arith.constant 0 : index
    %c0_228 = arith.constant 0 : index
    %420 = vector.load %arg5[%c0_227, %c0_228] : memref<8x128xf32, #tpu.memory_space<vmem>>, vector<8x128xf32>
    %421 = arith.truncf %420 : vector<8x128xf32> to vector<8x128xbf16>
    %c0_229 = arith.constant 0 : index
    %c0_230 = arith.constant 0 : index
    %422 = vector.load %arg3[%c0_229, %c0_230] : memref<128x512xbf16, #tpu.memory_space<vmem>>, vector<128x512xbf16>
    %cst_231 = arith.constant dense<0.000000e+00> : vector<8x512xf32>
    %423 = tpu.matmul %421, %422, %cst_231 {dimension_numbers = #tpu.dot_dimension_numbers<[1], [0], [0], [1], [0, 0, 1, 1], [], []>} : vector<8x128xbf16>, vector<128x512xbf16>, vector<8x512xf32> -> vector<8x512xf32>
    %424 = arith.addf %419, %423 : vector<8x512xf32>
    %425 = vector.extract_strided_slice %424 {offsets = [0, 0], sizes = [8, 128], strides = [1, 1]} : vector<8x512xf32> to vector<8x128xf32>
    %cst_232 = arith.constant 5.000000e-01 : f32
    %426 = vector.broadcast %cst_232 : f32 to vector<8x128xf32>
    %427 = arith.mulf %426, %425 : vector<8x128xf32>
    %428 = math.tanh %427 : vector<8x128xf32>
    %cst_233 = arith.constant 5.000000e-01 : f32
    %429 = vector.broadcast %cst_233 : f32 to vector<8x128xf32>
    %430 = arith.mulf %429, %428 : vector<8x128xf32>
    %cst_234 = arith.constant 5.000000e-01 : f32
    %431 = vector.broadcast %cst_234 : f32 to vector<8x128xf32>
    %432 = arith.addf %430, %431 : vector<8x128xf32>
    %433 = vector.extract_strided_slice %424 {offsets = [0, 128], sizes = [8, 128], strides = [1, 1]} : vector<8x512xf32> to vector<8x128xf32>
    %cst_235 = arith.constant 5.000000e-01 : f32
    %434 = vector.broadcast %cst_235 : f32 to vector<8x128xf32>
    %435 = arith.mulf %434, %433 : vector<8x128xf32>
    %436 = math.tanh %435 : vector<8x128xf32>
    %cst_236 = arith.constant 5.000000e-01 : f32
    %437 = vector.broadcast %cst_236 : f32 to vector<8x128xf32>
    %438 = arith.mulf %437, %436 : vector<8x128xf32>
    %cst_237 = arith.constant 5.000000e-01 : f32
    %439 = vector.broadcast %cst_237 : f32 to vector<8x128xf32>
    %440 = arith.addf %438, %439 : vector<8x128xf32>
    %441 = vector.extract_strided_slice %424 {offsets = [0, 256], sizes = [8, 128], strides = [1, 1]} : vector<8x512xf32> to vector<8x128xf32>
    %442 = math.tanh %441 : vector<8x128xf32>
    %443 = vector.extract_strided_slice %424 {offsets = [0, 384], sizes = [8, 128], strides = [1, 1]} : vector<8x512xf32> to vector<8x128xf32>
    %cst_238 = arith.constant 5.000000e-01 : f32
    %444 = vector.broadcast %cst_238 : f32 to vector<8x128xf32>
    %445 = arith.mulf %444, %443 : vector<8x128xf32>
    %446 = math.tanh %445 : vector<8x128xf32>
    %cst_239 = arith.constant 5.000000e-01 : f32
    %447 = vector.broadcast %cst_239 : f32 to vector<8x128xf32>
    %448 = arith.mulf %447, %446 : vector<8x128xf32>
    %cst_240 = arith.constant 5.000000e-01 : f32
    %449 = vector.broadcast %cst_240 : f32 to vector<8x128xf32>
    %450 = arith.addf %448, %449 : vector<8x128xf32>
    %c0_241 = arith.constant 0 : index
    %c0_242 = arith.constant 0 : index
    %451 = vector.load %arg6[%c0_241, %c0_242] : memref<8x128xf32, #tpu.memory_space<vmem>>, vector<8x128xf32>
    %452 = arith.mulf %440, %451 : vector<8x128xf32>
    %453 = arith.mulf %432, %442 : vector<8x128xf32>
    %454 = arith.addf %452, %453 : vector<8x128xf32>
    %455 = math.tanh %454 : vector<8x128xf32>
    %456 = arith.mulf %450, %455 : vector<8x128xf32>
    %c0_243 = arith.constant 0 : index
    %c0_244 = arith.constant 0 : index
    %457 = vector.load %arg6[%c0_243, %c0_244] : memref<8x128xf32, #tpu.memory_space<vmem>>, vector<8x128xf32>
    tpu.vector_store %arg6[%c0_243, %c0_244], %454 {strides = array<i32>} : memref<8x128xf32, #tpu.memory_space<vmem>>, vector<8x128xf32>,
    %c0_245 = arith.constant 0 : index
    %c0_246 = arith.constant 0 : index
    %458 = vector.load %arg5[%c0_245, %c0_246] : memref<8x128xf32, #tpu.memory_space<vmem>>, vector<8x128xf32>
    tpu.vector_store %arg5[%c0_245, %c0_246], %456 {strides = array<i32>} : memref<8x128xf32, #tpu.memory_space<vmem>>, vector<8x128xf32>,
    %459 = arith.truncf %456 : vector<8x128xf32> to vector<8x128xbf16>
    %c9_247 = arith.constant 9 : index
    %c0_248 = arith.constant 0 : index
    %c0_249 = arith.constant 0 : index
    %460 = vector.load %arg4[%c9_247, %c0_248, %c0_249] : memref<16x8x128xbf16, #tpu.memory_space<vmem>>, vector<1x8x128xbf16>
    %461 = vector.shape_cast %460 : vector<1x8x128xbf16> to vector<8x128xbf16>
    %462 = vector.shape_cast %459 : vector<8x128xbf16> to vector<1x8x128xbf16>
    tpu.vector_store %arg4[%c9_247, %c0_248, %c0_249], %462 {strides = array<i32>} : memref<16x8x128xbf16, #tpu.memory_space<vmem>>, vector<1x8x128xbf16>,
    %c10 = arith.constant 10 : index
    %c0_250 = arith.constant 0 : index
    %c0_251 = arith.constant 0 : index
    %463 = vector.load %arg2[%c10, %c0_250, %c0_251] : memref<16x8x512xbf16, #tpu.memory_space<vmem>>, vector<1x8x512xbf16>
    %464 = vector.shape_cast %463 : vector<1x8x512xbf16> to vector<8x512xbf16>
    %465 = arith.extf %464 : vector<8x512xbf16> to vector<8x512xf32>
    %c0_252 = arith.constant 0 : index
    %c0_253 = arith.constant 0 : index
    %466 = vector.load %arg5[%c0_252, %c0_253] : memref<8x128xf32, #tpu.memory_space<vmem>>, vector<8x128xf32>
    %467 = arith.truncf %466 : vector<8x128xf32> to vector<8x128xbf16>
    %c0_254 = arith.constant 0 : index
    %c0_255 = arith.constant 0 : index
    %468 = vector.load %arg3[%c0_254, %c0_255] : memref<128x512xbf16, #tpu.memory_space<vmem>>, vector<128x512xbf16>
    %cst_256 = arith.constant dense<0.000000e+00> : vector<8x512xf32>
    %469 = tpu.matmul %467, %468, %cst_256 {dimension_numbers = #tpu.dot_dimension_numbers<[1], [0], [0], [1], [0, 0, 1, 1], [], []>} : vector<8x128xbf16>, vector<128x512xbf16>, vector<8x512xf32> -> vector<8x512xf32>
    %470 = arith.addf %465, %469 : vector<8x512xf32>
    %471 = vector.extract_strided_slice %470 {offsets = [0, 0], sizes = [8, 128], strides = [1, 1]} : vector<8x512xf32> to vector<8x128xf32>
    %cst_257 = arith.constant 5.000000e-01 : f32
    %472 = vector.broadcast %cst_257 : f32 to vector<8x128xf32>
    %473 = arith.mulf %472, %471 : vector<8x128xf32>
    %474 = math.tanh %473 : vector<8x128xf32>
    %cst_258 = arith.constant 5.000000e-01 : f32
    %475 = vector.broadcast %cst_258 : f32 to vector<8x128xf32>
    %476 = arith.mulf %475, %474 : vector<8x128xf32>
    %cst_259 = arith.constant 5.000000e-01 : f32
    %477 = vector.broadcast %cst_259 : f32 to vector<8x128xf32>
    %478 = arith.addf %476, %477 : vector<8x128xf32>
    %479 = vector.extract_strided_slice %470 {offsets = [0, 128], sizes = [8, 128], strides = [1, 1]} : vector<8x512xf32> to vector<8x128xf32>
    %cst_260 = arith.constant 5.000000e-01 : f32
    %480 = vector.broadcast %cst_260 : f32 to vector<8x128xf32>
    %481 = arith.mulf %480, %479 : vector<8x128xf32>
    %482 = math.tanh %481 : vector<8x128xf32>
    %cst_261 = arith.constant 5.000000e-01 : f32
    %483 = vector.broadcast %cst_261 : f32 to vector<8x128xf32>
    %484 = arith.mulf %483, %482 : vector<8x128xf32>
    %cst_262 = arith.constant 5.000000e-01 : f32
    %485 = vector.broadcast %cst_262 : f32 to vector<8x128xf32>
    %486 = arith.addf %484, %485 : vector<8x128xf32>
    %487 = vector.extract_strided_slice %470 {offsets = [0, 256], sizes = [8, 128], strides = [1, 1]} : vector<8x512xf32> to vector<8x128xf32>
    %488 = math.tanh %487 : vector<8x128xf32>
    %489 = vector.extract_strided_slice %470 {offsets = [0, 384], sizes = [8, 128], strides = [1, 1]} : vector<8x512xf32> to vector<8x128xf32>
    %cst_263 = arith.constant 5.000000e-01 : f32
    %490 = vector.broadcast %cst_263 : f32 to vector<8x128xf32>
    %491 = arith.mulf %490, %489 : vector<8x128xf32>
    %492 = math.tanh %491 : vector<8x128xf32>
    %cst_264 = arith.constant 5.000000e-01 : f32
    %493 = vector.broadcast %cst_264 : f32 to vector<8x128xf32>
    %494 = arith.mulf %493, %492 : vector<8x128xf32>
    %cst_265 = arith.constant 5.000000e-01 : f32
    %495 = vector.broadcast %cst_265 : f32 to vector<8x128xf32>
    %496 = arith.addf %494, %495 : vector<8x128xf32>
    %c0_266 = arith.constant 0 : index
    %c0_267 = arith.constant 0 : index
    %497 = vector.load %arg6[%c0_266, %c0_267] : memref<8x128xf32, #tpu.memory_space<vmem>>, vector<8x128xf32>
    %498 = arith.mulf %486, %497 : vector<8x128xf32>
    %499 = arith.mulf %478, %488 : vector<8x128xf32>
    %500 = arith.addf %498, %499 : vector<8x128xf32>
    %501 = math.tanh %500 : vector<8x128xf32>
    %502 = arith.mulf %496, %501 : vector<8x128xf32>
    %c0_268 = arith.constant 0 : index
    %c0_269 = arith.constant 0 : index
    %503 = vector.load %arg6[%c0_268, %c0_269] : memref<8x128xf32, #tpu.memory_space<vmem>>, vector<8x128xf32>
    tpu.vector_store %arg6[%c0_268, %c0_269], %500 {strides = array<i32>} : memref<8x128xf32, #tpu.memory_space<vmem>>, vector<8x128xf32>,
    %c0_270 = arith.constant 0 : index
    %c0_271 = arith.constant 0 : index
    %504 = vector.load %arg5[%c0_270, %c0_271] : memref<8x128xf32, #tpu.memory_space<vmem>>, vector<8x128xf32>
    tpu.vector_store %arg5[%c0_270, %c0_271], %502 {strides = array<i32>} : memref<8x128xf32, #tpu.memory_space<vmem>>, vector<8x128xf32>,
    %505 = arith.truncf %502 : vector<8x128xf32> to vector<8x128xbf16>
    %c10_272 = arith.constant 10 : index
    %c0_273 = arith.constant 0 : index
    %c0_274 = arith.constant 0 : index
    %506 = vector.load %arg4[%c10_272, %c0_273, %c0_274] : memref<16x8x128xbf16, #tpu.memory_space<vmem>>, vector<1x8x128xbf16>
    %507 = vector.shape_cast %506 : vector<1x8x128xbf16> to vector<8x128xbf16>
    %508 = vector.shape_cast %505 : vector<8x128xbf16> to vector<1x8x128xbf16>
    tpu.vector_store %arg4[%c10_272, %c0_273, %c0_274], %508 {strides = array<i32>} : memref<16x8x128xbf16, #tpu.memory_space<vmem>>, vector<1x8x128xbf16>,
    %c11 = arith.constant 11 : index
    %c0_275 = arith.constant 0 : index
    %c0_276 = arith.constant 0 : index
    %509 = vector.load %arg2[%c11, %c0_275, %c0_276] : memref<16x8x512xbf16, #tpu.memory_space<vmem>>, vector<1x8x512xbf16>
    %510 = vector.shape_cast %509 : vector<1x8x512xbf16> to vector<8x512xbf16>
    %511 = arith.extf %510 : vector<8x512xbf16> to vector<8x512xf32>
    %c0_277 = arith.constant 0 : index
    %c0_278 = arith.constant 0 : index
    %512 = vector.load %arg5[%c0_277, %c0_278] : memref<8x128xf32, #tpu.memory_space<vmem>>, vector<8x128xf32>
    %513 = arith.truncf %512 : vector<8x128xf32> to vector<8x128xbf16>
    %c0_279 = arith.constant 0 : index
    %c0_280 = arith.constant 0 : index
    %514 = vector.load %arg3[%c0_279, %c0_280] : memref<128x512xbf16, #tpu.memory_space<vmem>>, vector<128x512xbf16>
    %cst_281 = arith.constant dense<0.000000e+00> : vector<8x512xf32>
    %515 = tpu.matmul %513, %514, %cst_281 {dimension_numbers = #tpu.dot_dimension_numbers<[1], [0], [0], [1], [0, 0, 1, 1], [], []>} : vector<8x128xbf16>, vector<128x512xbf16>, vector<8x512xf32> -> vector<8x512xf32>
    %516 = arith.addf %511, %515 : vector<8x512xf32>
    %517 = vector.extract_strided_slice %516 {offsets = [0, 0], sizes = [8, 128], strides = [1, 1]} : vector<8x512xf32> to vector<8x128xf32>
    %cst_282 = arith.constant 5.000000e-01 : f32
    %518 = vector.broadcast %cst_282 : f32 to vector<8x128xf32>
    %519 = arith.mulf %518, %517 : vector<8x128xf32>
    %520 = math.tanh %519 : vector<8x128xf32>
    %cst_283 = arith.constant 5.000000e-01 : f32
    %521 = vector.broadcast %cst_283 : f32 to vector<8x128xf32>
    %522 = arith.mulf %521, %520 : vector<8x128xf32>
    %cst_284 = arith.constant 5.000000e-01 : f32
    %523 = vector.broadcast %cst_284 : f32 to vector<8x128xf32>
    %524 = arith.addf %522, %523 : vector<8x128xf32>
    %525 = vector.extract_strided_slice %516 {offsets = [0, 128], sizes = [8, 128], strides = [1, 1]} : vector<8x512xf32> to vector<8x128xf32>
    %cst_285 = arith.constant 5.000000e-01 : f32
    %526 = vector.broadcast %cst_285 : f32 to vector<8x128xf32>
    %527 = arith.mulf %526, %525 : vector<8x128xf32>
    %528 = math.tanh %527 : vector<8x128xf32>
    %cst_286 = arith.constant 5.000000e-01 : f32
    %529 = vector.broadcast %cst_286 : f32 to vector<8x128xf32>
    %530 = arith.mulf %529, %528 : vector<8x128xf32>
    %cst_287 = arith.constant 5.000000e-01 : f32
    %531 = vector.broadcast %cst_287 : f32 to vector<8x128xf32>
    %532 = arith.addf %530, %531 : vector<8x128xf32>
    %533 = vector.extract_strided_slice %516 {offsets = [0, 256], sizes = [8, 128], strides = [1, 1]} : vector<8x512xf32> to vector<8x128xf32>
    %534 = math.tanh %533 : vector<8x128xf32>
    %535 = vector.extract_strided_slice %516 {offsets = [0, 384], sizes = [8, 128], strides = [1, 1]} : vector<8x512xf32> to vector<8x128xf32>
    %cst_288 = arith.constant 5.000000e-01 : f32
    %536 = vector.broadcast %cst_288 : f32 to vector<8x128xf32>
    %537 = arith.mulf %536, %535 : vector<8x128xf32>
    %538 = math.tanh %537 : vector<8x128xf32>
    %cst_289 = arith.constant 5.000000e-01 : f32
    %539 = vector.broadcast %cst_289 : f32 to vector<8x128xf32>
    %540 = arith.mulf %539, %538 : vector<8x128xf32>
    %cst_290 = arith.constant 5.000000e-01 : f32
    %541 = vector.broadcast %cst_290 : f32 to vector<8x128xf32>
    %542 = arith.addf %540, %541 : vector<8x128xf32>
    %c0_291 = arith.constant 0 : index
    %c0_292 = arith.constant 0 : index
    %543 = vector.load %arg6[%c0_291, %c0_292] : memref<8x128xf32, #tpu.memory_space<vmem>>, vector<8x128xf32>
    %544 = arith.mulf %532, %543 : vector<8x128xf32>
    %545 = arith.mulf %524, %534 : vector<8x128xf32>
    %546 = arith.addf %544, %545 : vector<8x128xf32>
    %547 = math.tanh %546 : vector<8x128xf32>
    %548 = arith.mulf %542, %547 : vector<8x128xf32>
    %c0_293 = arith.constant 0 : index
    %c0_294 = arith.constant 0 : index
    %549 = vector.load %arg6[%c0_293, %c0_294] : memref<8x128xf32, #tpu.memory_space<vmem>>, vector<8x128xf32>
    tpu.vector_store %arg6[%c0_293, %c0_294], %546 {strides = array<i32>} : memref<8x128xf32, #tpu.memory_space<vmem>>, vector<8x128xf32>,
    %c0_295 = arith.constant 0 : index
    %c0_296 = arith.constant 0 : index
    %550 = vector.load %arg5[%c0_295, %c0_296] : memref<8x128xf32, #tpu.memory_space<vmem>>, vector<8x128xf32>
    tpu.vector_store %arg5[%c0_295, %c0_296], %548 {strides = array<i32>} : memref<8x128xf32, #tpu.memory_space<vmem>>, vector<8x128xf32>,
    %551 = arith.truncf %548 : vector<8x128xf32> to vector<8x128xbf16>
    %c11_297 = arith.constant 11 : index
    %c0_298 = arith.constant 0 : index
    %c0_299 = arith.constant 0 : index
    %552 = vector.load %arg4[%c11_297, %c0_298, %c0_299] : memref<16x8x128xbf16, #tpu.memory_space<vmem>>, vector<1x8x128xbf16>
    %553 = vector.shape_cast %552 : vector<1x8x128xbf16> to vector<8x128xbf16>
    %554 = vector.shape_cast %551 : vector<8x128xbf16> to vector<1x8x128xbf16>
    tpu.vector_store %arg4[%c11_297, %c0_298, %c0_299], %554 {strides = array<i32>} : memref<16x8x128xbf16, #tpu.memory_space<vmem>>, vector<1x8x128xbf16>,
    %c12 = arith.constant 12 : index
    %c0_300 = arith.constant 0 : index
    %c0_301 = arith.constant 0 : index
    %555 = vector.load %arg2[%c12, %c0_300, %c0_301] : memref<16x8x512xbf16, #tpu.memory_space<vmem>>, vector<1x8x512xbf16>
    %556 = vector.shape_cast %555 : vector<1x8x512xbf16> to vector<8x512xbf16>
    %557 = arith.extf %556 : vector<8x512xbf16> to vector<8x512xf32>
    %c0_302 = arith.constant 0 : index
    %c0_303 = arith.constant 0 : index
    %558 = vector.load %arg5[%c0_302, %c0_303] : memref<8x128xf32, #tpu.memory_space<vmem>>, vector<8x128xf32>
    %559 = arith.truncf %558 : vector<8x128xf32> to vector<8x128xbf16>
    %c0_304 = arith.constant 0 : index
    %c0_305 = arith.constant 0 : index
    %560 = vector.load %arg3[%c0_304, %c0_305] : memref<128x512xbf16, #tpu.memory_space<vmem>>, vector<128x512xbf16>
    %cst_306 = arith.constant dense<0.000000e+00> : vector<8x512xf32>
    %561 = tpu.matmul %559, %560, %cst_306 {dimension_numbers = #tpu.dot_dimension_numbers<[1], [0], [0], [1], [0, 0, 1, 1], [], []>} : vector<8x128xbf16>, vector<128x512xbf16>, vector<8x512xf32> -> vector<8x512xf32>
    %562 = arith.addf %557, %561 : vector<8x512xf32>
    %563 = vector.extract_strided_slice %562 {offsets = [0, 0], sizes = [8, 128], strides = [1, 1]} : vector<8x512xf32> to vector<8x128xf32>
    %cst_307 = arith.constant 5.000000e-01 : f32
    %564 = vector.broadcast %cst_307 : f32 to vector<8x128xf32>
    %565 = arith.mulf %564, %563 : vector<8x128xf32>
    %566 = math.tanh %565 : vector<8x128xf32>
    %cst_308 = arith.constant 5.000000e-01 : f32
    %567 = vector.broadcast %cst_308 : f32 to vector<8x128xf32>
    %568 = arith.mulf %567, %566 : vector<8x128xf32>
    %cst_309 = arith.constant 5.000000e-01 : f32
    %569 = vector.broadcast %cst_309 : f32 to vector<8x128xf32>
    %570 = arith.addf %568, %569 : vector<8x128xf32>
    %571 = vector.extract_strided_slice %562 {offsets = [0, 128], sizes = [8, 128], strides = [1, 1]} : vector<8x512xf32> to vector<8x128xf32>
    %cst_310 = arith.constant 5.000000e-01 : f32
    %572 = vector.broadcast %cst_310 : f32 to vector<8x128xf32>
    %573 = arith.mulf %572, %571 : vector<8x128xf32>
    %574 = math.tanh %573 : vector<8x128xf32>
    %cst_311 = arith.constant 5.000000e-01 : f32
    %575 = vector.broadcast %cst_311 : f32 to vector<8x128xf32>
    %576 = arith.mulf %575, %574 : vector<8x128xf32>
    %cst_312 = arith.constant 5.000000e-01 : f32
    %577 = vector.broadcast %cst_312 : f32 to vector<8x128xf32>
    %578 = arith.addf %576, %577 : vector<8x128xf32>
    %579 = vector.extract_strided_slice %562 {offsets = [0, 256], sizes = [8, 128], strides = [1, 1]} : vector<8x512xf32> to vector<8x128xf32>
    %580 = math.tanh %579 : vector<8x128xf32>
    %581 = vector.extract_strided_slice %562 {offsets = [0, 384], sizes = [8, 128], strides = [1, 1]} : vector<8x512xf32> to vector<8x128xf32>
    %cst_313 = arith.constant 5.000000e-01 : f32
    %582 = vector.broadcast %cst_313 : f32 to vector<8x128xf32>
    %583 = arith.mulf %582, %581 : vector<8x128xf32>
    %584 = math.tanh %583 : vector<8x128xf32>
    %cst_314 = arith.constant 5.000000e-01 : f32
    %585 = vector.broadcast %cst_314 : f32 to vector<8x128xf32>
    %586 = arith.mulf %585, %584 : vector<8x128xf32>
    %cst_315 = arith.constant 5.000000e-01 : f32
    %587 = vector.broadcast %cst_315 : f32 to vector<8x128xf32>
    %588 = arith.addf %586, %587 : vector<8x128xf32>
    %c0_316 = arith.constant 0 : index
    %c0_317 = arith.constant 0 : index
    %589 = vector.load %arg6[%c0_316, %c0_317] : memref<8x128xf32, #tpu.memory_space<vmem>>, vector<8x128xf32>
    %590 = arith.mulf %578, %589 : vector<8x128xf32>
    %591 = arith.mulf %570, %580 : vector<8x128xf32>
    %592 = arith.addf %590, %591 : vector<8x128xf32>
    %593 = math.tanh %592 : vector<8x128xf32>
    %594 = arith.mulf %588, %593 : vector<8x128xf32>
    %c0_318 = arith.constant 0 : index
    %c0_319 = arith.constant 0 : index
    %595 = vector.load %arg6[%c0_318, %c0_319] : memref<8x128xf32, #tpu.memory_space<vmem>>, vector<8x128xf32>
    tpu.vector_store %arg6[%c0_318, %c0_319], %592 {strides = array<i32>} : memref<8x128xf32, #tpu.memory_space<vmem>>, vector<8x128xf32>,
    %c0_320 = arith.constant 0 : index
    %c0_321 = arith.constant 0 : index
    %596 = vector.load %arg5[%c0_320, %c0_321] : memref<8x128xf32, #tpu.memory_space<vmem>>, vector<8x128xf32>
    tpu.vector_store %arg5[%c0_320, %c0_321], %594 {strides = array<i32>} : memref<8x128xf32, #tpu.memory_space<vmem>>, vector<8x128xf32>,
    %597 = arith.truncf %594 : vector<8x128xf32> to vector<8x128xbf16>
    %c12_322 = arith.constant 12 : index
    %c0_323 = arith.constant 0 : index
    %c0_324 = arith.constant 0 : index
    %598 = vector.load %arg4[%c12_322, %c0_323, %c0_324] : memref<16x8x128xbf16, #tpu.memory_space<vmem>>, vector<1x8x128xbf16>
    %599 = vector.shape_cast %598 : vector<1x8x128xbf16> to vector<8x128xbf16>
    %600 = vector.shape_cast %597 : vector<8x128xbf16> to vector<1x8x128xbf16>
    tpu.vector_store %arg4[%c12_322, %c0_323, %c0_324], %600 {strides = array<i32>} : memref<16x8x128xbf16, #tpu.memory_space<vmem>>, vector<1x8x128xbf16>,
    %c13 = arith.constant 13 : index
    %c0_325 = arith.constant 0 : index
    %c0_326 = arith.constant 0 : index
    %601 = vector.load %arg2[%c13, %c0_325, %c0_326] : memref<16x8x512xbf16, #tpu.memory_space<vmem>>, vector<1x8x512xbf16>
    %602 = vector.shape_cast %601 : vector<1x8x512xbf16> to vector<8x512xbf16>
    %603 = arith.extf %602 : vector<8x512xbf16> to vector<8x512xf32>
    %c0_327 = arith.constant 0 : index
    %c0_328 = arith.constant 0 : index
    %604 = vector.load %arg5[%c0_327, %c0_328] : memref<8x128xf32, #tpu.memory_space<vmem>>, vector<8x128xf32>
    %605 = arith.truncf %604 : vector<8x128xf32> to vector<8x128xbf16>
    %c0_329 = arith.constant 0 : index
    %c0_330 = arith.constant 0 : index
    %606 = vector.load %arg3[%c0_329, %c0_330] : memref<128x512xbf16, #tpu.memory_space<vmem>>, vector<128x512xbf16>
    %cst_331 = arith.constant dense<0.000000e+00> : vector<8x512xf32>
    %607 = tpu.matmul %605, %606, %cst_331 {dimension_numbers = #tpu.dot_dimension_numbers<[1], [0], [0], [1], [0, 0, 1, 1], [], []>} : vector<8x128xbf16>, vector<128x512xbf16>, vector<8x512xf32> -> vector<8x512xf32>
    %608 = arith.addf %603, %607 : vector<8x512xf32>
    %609 = vector.extract_strided_slice %608 {offsets = [0, 0], sizes = [8, 128], strides = [1, 1]} : vector<8x512xf32> to vector<8x128xf32>
    %cst_332 = arith.constant 5.000000e-01 : f32
    %610 = vector.broadcast %cst_332 : f32 to vector<8x128xf32>
    %611 = arith.mulf %610, %609 : vector<8x128xf32>
    %612 = math.tanh %611 : vector<8x128xf32>
    %cst_333 = arith.constant 5.000000e-01 : f32
    %613 = vector.broadcast %cst_333 : f32 to vector<8x128xf32>
    %614 = arith.mulf %613, %612 : vector<8x128xf32>
    %cst_334 = arith.constant 5.000000e-01 : f32
    %615 = vector.broadcast %cst_334 : f32 to vector<8x128xf32>
    %616 = arith.addf %614, %615 : vector<8x128xf32>
    %617 = vector.extract_strided_slice %608 {offsets = [0, 128], sizes = [8, 128], strides = [1, 1]} : vector<8x512xf32> to vector<8x128xf32>
    %cst_335 = arith.constant 5.000000e-01 : f32
    %618 = vector.broadcast %cst_335 : f32 to vector<8x128xf32>
    %619 = arith.mulf %618, %617 : vector<8x128xf32>
    %620 = math.tanh %619 : vector<8x128xf32>
    %cst_336 = arith.constant 5.000000e-01 : f32
    %621 = vector.broadcast %cst_336 : f32 to vector<8x128xf32>
    %622 = arith.mulf %621, %620 : vector<8x128xf32>
    %cst_337 = arith.constant 5.000000e-01 : f32
    %623 = vector.broadcast %cst_337 : f32 to vector<8x128xf32>
    %624 = arith.addf %622, %623 : vector<8x128xf32>
    %625 = vector.extract_strided_slice %608 {offsets = [0, 256], sizes = [8, 128], strides = [1, 1]} : vector<8x512xf32> to vector<8x128xf32>
    %626 = math.tanh %625 : vector<8x128xf32>
    %627 = vector.extract_strided_slice %608 {offsets = [0, 384], sizes = [8, 128], strides = [1, 1]} : vector<8x512xf32> to vector<8x128xf32>
    %cst_338 = arith.constant 5.000000e-01 : f32
    %628 = vector.broadcast %cst_338 : f32 to vector<8x128xf32>
    %629 = arith.mulf %628, %627 : vector<8x128xf32>
    %630 = math.tanh %629 : vector<8x128xf32>
    %cst_339 = arith.constant 5.000000e-01 : f32
    %631 = vector.broadcast %cst_339 : f32 to vector<8x128xf32>
    %632 = arith.mulf %631, %630 : vector<8x128xf32>
    %cst_340 = arith.constant 5.000000e-01 : f32
    %633 = vector.broadcast %cst_340 : f32 to vector<8x128xf32>
    %634 = arith.addf %632, %633 : vector<8x128xf32>
    %c0_341 = arith.constant 0 : index
    %c0_342 = arith.constant 0 : index
    %635 = vector.load %arg6[%c0_341, %c0_342] : memref<8x128xf32, #tpu.memory_space<vmem>>, vector<8x128xf32>
    %636 = arith.mulf %624, %635 : vector<8x128xf32>
    %637 = arith.mulf %616, %626 : vector<8x128xf32>
    %638 = arith.addf %636, %637 : vector<8x128xf32>
    %639 = math.tanh %638 : vector<8x128xf32>
    %640 = arith.mulf %634, %639 : vector<8x128xf32>
    %c0_343 = arith.constant 0 : index
    %c0_344 = arith.constant 0 : index
    %641 = vector.load %arg6[%c0_343, %c0_344] : memref<8x128xf32, #tpu.memory_space<vmem>>, vector<8x128xf32>
    tpu.vector_store %arg6[%c0_343, %c0_344], %638 {strides = array<i32>} : memref<8x128xf32, #tpu.memory_space<vmem>>, vector<8x128xf32>,
    %c0_345 = arith.constant 0 : index
    %c0_346 = arith.constant 0 : index
    %642 = vector.load %arg5[%c0_345, %c0_346] : memref<8x128xf32, #tpu.memory_space<vmem>>, vector<8x128xf32>
    tpu.vector_store %arg5[%c0_345, %c0_346], %640 {strides = array<i32>} : memref<8x128xf32, #tpu.memory_space<vmem>>, vector<8x128xf32>,
    %643 = arith.truncf %640 : vector<8x128xf32> to vector<8x128xbf16>
    %c13_347 = arith.constant 13 : index
    %c0_348 = arith.constant 0 : index
    %c0_349 = arith.constant 0 : index
    %644 = vector.load %arg4[%c13_347, %c0_348, %c0_349] : memref<16x8x128xbf16, #tpu.memory_space<vmem>>, vector<1x8x128xbf16>
    %645 = vector.shape_cast %644 : vector<1x8x128xbf16> to vector<8x128xbf16>
    %646 = vector.shape_cast %643 : vector<8x128xbf16> to vector<1x8x128xbf16>
    tpu.vector_store %arg4[%c13_347, %c0_348, %c0_349], %646 {strides = array<i32>} : memref<16x8x128xbf16, #tpu.memory_space<vmem>>, vector<1x8x128xbf16>,
    %c14 = arith.constant 14 : index
    %c0_350 = arith.constant 0 : index
    %c0_351 = arith.constant 0 : index
    %647 = vector.load %arg2[%c14, %c0_350, %c0_351] : memref<16x8x512xbf16, #tpu.memory_space<vmem>>, vector<1x8x512xbf16>
    %648 = vector.shape_cast %647 : vector<1x8x512xbf16> to vector<8x512xbf16>
    %649 = arith.extf %648 : vector<8x512xbf16> to vector<8x512xf32>
    %c0_352 = arith.constant 0 : index
    %c0_353 = arith.constant 0 : index
    %650 = vector.load %arg5[%c0_352, %c0_353] : memref<8x128xf32, #tpu.memory_space<vmem>>, vector<8x128xf32>
    %651 = arith.truncf %650 : vector<8x128xf32> to vector<8x128xbf16>
    %c0_354 = arith.constant 0 : index
    %c0_355 = arith.constant 0 : index
    %652 = vector.load %arg3[%c0_354, %c0_355] : memref<128x512xbf16, #tpu.memory_space<vmem>>, vector<128x512xbf16>
    %cst_356 = arith.constant dense<0.000000e+00> : vector<8x512xf32>
    %653 = tpu.matmul %651, %652, %cst_356 {dimension_numbers = #tpu.dot_dimension_numbers<[1], [0], [0], [1], [0, 0, 1, 1], [], []>} : vector<8x128xbf16>, vector<128x512xbf16>, vector<8x512xf32> -> vector<8x512xf32>
    %654 = arith.addf %649, %653 : vector<8x512xf32>
    %655 = vector.extract_strided_slice %654 {offsets = [0, 0], sizes = [8, 128], strides = [1, 1]} : vector<8x512xf32> to vector<8x128xf32>
    %cst_357 = arith.constant 5.000000e-01 : f32
    %656 = vector.broadcast %cst_357 : f32 to vector<8x128xf32>
    %657 = arith.mulf %656, %655 : vector<8x128xf32>
    %658 = math.tanh %657 : vector<8x128xf32>
    %cst_358 = arith.constant 5.000000e-01 : f32
    %659 = vector.broadcast %cst_358 : f32 to vector<8x128xf32>
    %660 = arith.mulf %659, %658 : vector<8x128xf32>
    %cst_359 = arith.constant 5.000000e-01 : f32
    %661 = vector.broadcast %cst_359 : f32 to vector<8x128xf32>
    %662 = arith.addf %660, %661 : vector<8x128xf32>
    %663 = vector.extract_strided_slice %654 {offsets = [0, 128], sizes = [8, 128], strides = [1, 1]} : vector<8x512xf32> to vector<8x128xf32>
    %cst_360 = arith.constant 5.000000e-01 : f32
    %664 = vector.broadcast %cst_360 : f32 to vector<8x128xf32>
    %665 = arith.mulf %664, %663 : vector<8x128xf32>
    %666 = math.tanh %665 : vector<8x128xf32>
    %cst_361 = arith.constant 5.000000e-01 : f32
    %667 = vector.broadcast %cst_361 : f32 to vector<8x128xf32>
    %668 = arith.mulf %667, %666 : vector<8x128xf32>
    %cst_362 = arith.constant 5.000000e-01 : f32
    %669 = vector.broadcast %cst_362 : f32 to vector<8x128xf32>
    %670 = arith.addf %668, %669 : vector<8x128xf32>
    %671 = vector.extract_strided_slice %654 {offsets = [0, 256], sizes = [8, 128], strides = [1, 1]} : vector<8x512xf32> to vector<8x128xf32>
    %672 = math.tanh %671 : vector<8x128xf32>
    %673 = vector.extract_strided_slice %654 {offsets = [0, 384], sizes = [8, 128], strides = [1, 1]} : vector<8x512xf32> to vector<8x128xf32>
    %cst_363 = arith.constant 5.000000e-01 : f32
    %674 = vector.broadcast %cst_363 : f32 to vector<8x128xf32>
    %675 = arith.mulf %674, %673 : vector<8x128xf32>
    %676 = math.tanh %675 : vector<8x128xf32>
    %cst_364 = arith.constant 5.000000e-01 : f32
    %677 = vector.broadcast %cst_364 : f32 to vector<8x128xf32>
    %678 = arith.mulf %677, %676 : vector<8x128xf32>
    %cst_365 = arith.constant 5.000000e-01 : f32
    %679 = vector.broadcast %cst_365 : f32 to vector<8x128xf32>
    %680 = arith.addf %678, %679 : vector<8x128xf32>
    %c0_366 = arith.constant 0 : index
    %c0_367 = arith.constant 0 : index
    %681 = vector.load %arg6[%c0_366, %c0_367] : memref<8x128xf32, #tpu.memory_space<vmem>>, vector<8x128xf32>
    %682 = arith.mulf %670, %681 : vector<8x128xf32>
    %683 = arith.mulf %662, %672 : vector<8x128xf32>
    %684 = arith.addf %682, %683 : vector<8x128xf32>
    %685 = math.tanh %684 : vector<8x128xf32>
    %686 = arith.mulf %680, %685 : vector<8x128xf32>
    %c0_368 = arith.constant 0 : index
    %c0_369 = arith.constant 0 : index
    %687 = vector.load %arg6[%c0_368, %c0_369] : memref<8x128xf32, #tpu.memory_space<vmem>>, vector<8x128xf32>
    tpu.vector_store %arg6[%c0_368, %c0_369], %684 {strides = array<i32>} : memref<8x128xf32, #tpu.memory_space<vmem>>, vector<8x128xf32>,
    %c0_370 = arith.constant 0 : index
    %c0_371 = arith.constant 0 : index
    %688 = vector.load %arg5[%c0_370, %c0_371] : memref<8x128xf32, #tpu.memory_space<vmem>>, vector<8x128xf32>
    tpu.vector_store %arg5[%c0_370, %c0_371], %686 {strides = array<i32>} : memref<8x128xf32, #tpu.memory_space<vmem>>, vector<8x128xf32>,
    %689 = arith.truncf %686 : vector<8x128xf32> to vector<8x128xbf16>
    %c14_372 = arith.constant 14 : index
    %c0_373 = arith.constant 0 : index
    %c0_374 = arith.constant 0 : index
    %690 = vector.load %arg4[%c14_372, %c0_373, %c0_374] : memref<16x8x128xbf16, #tpu.memory_space<vmem>>, vector<1x8x128xbf16>
    %691 = vector.shape_cast %690 : vector<1x8x128xbf16> to vector<8x128xbf16>
    %692 = vector.shape_cast %689 : vector<8x128xbf16> to vector<1x8x128xbf16>
    tpu.vector_store %arg4[%c14_372, %c0_373, %c0_374], %692 {strides = array<i32>} : memref<16x8x128xbf16, #tpu.memory_space<vmem>>, vector<1x8x128xbf16>,
    %c15 = arith.constant 15 : index
    %c0_375 = arith.constant 0 : index
    %c0_376 = arith.constant 0 : index
    %693 = vector.load %arg2[%c15, %c0_375, %c0_376] : memref<16x8x512xbf16, #tpu.memory_space<vmem>>, vector<1x8x512xbf16>
    %694 = vector.shape_cast %693 : vector<1x8x512xbf16> to vector<8x512xbf16>
    %695 = arith.extf %694 : vector<8x512xbf16> to vector<8x512xf32>
    %c0_377 = arith.constant 0 : index
    %c0_378 = arith.constant 0 : index
    %696 = vector.load %arg5[%c0_377, %c0_378] : memref<8x128xf32, #tpu.memory_space<vmem>>, vector<8x128xf32>
    %697 = arith.truncf %696 : vector<8x128xf32> to vector<8x128xbf16>
    %c0_379 = arith.constant 0 : index
    %c0_380 = arith.constant 0 : index
    %698 = vector.load %arg3[%c0_379, %c0_380] : memref<128x512xbf16, #tpu.memory_space<vmem>>, vector<128x512xbf16>
    %cst_381 = arith.constant dense<0.000000e+00> : vector<8x512xf32>
    %699 = tpu.matmul %697, %698, %cst_381 {dimension_numbers = #tpu.dot_dimension_numbers<[1], [0], [0], [1], [0, 0, 1, 1], [], []>} : vector<8x128xbf16>, vector<128x512xbf16>, vector<8x512xf32> -> vector<8x512xf32>
    %700 = arith.addf %695, %699 : vector<8x512xf32>
    %701 = vector.extract_strided_slice %700 {offsets = [0, 0], sizes = [8, 128], strides = [1, 1]} : vector<8x512xf32> to vector<8x128xf32>
    %cst_382 = arith.constant 5.000000e-01 : f32
    %702 = vector.broadcast %cst_382 : f32 to vector<8x128xf32>
    %703 = arith.mulf %702, %701 : vector<8x128xf32>
    %704 = math.tanh %703 : vector<8x128xf32>
    %cst_383 = arith.constant 5.000000e-01 : f32
    %705 = vector.broadcast %cst_383 : f32 to vector<8x128xf32>
    %706 = arith.mulf %705, %704 : vector<8x128xf32>
    %cst_384 = arith.constant 5.000000e-01 : f32
    %707 = vector.broadcast %cst_384 : f32 to vector<8x128xf32>
    %708 = arith.addf %706, %707 : vector<8x128xf32>
    %709 = vector.extract_strided_slice %700 {offsets = [0, 128], sizes = [8, 128], strides = [1, 1]} : vector<8x512xf32> to vector<8x128xf32>
    %cst_385 = arith.constant 5.000000e-01 : f32
    %710 = vector.broadcast %cst_385 : f32 to vector<8x128xf32>
    %711 = arith.mulf %710, %709 : vector<8x128xf32>
    %712 = math.tanh %711 : vector<8x128xf32>
    %cst_386 = arith.constant 5.000000e-01 : f32
    %713 = vector.broadcast %cst_386 : f32 to vector<8x128xf32>
    %714 = arith.mulf %713, %712 : vector<8x128xf32>
    %cst_387 = arith.constant 5.000000e-01 : f32
    %715 = vector.broadcast %cst_387 : f32 to vector<8x128xf32>
    %716 = arith.addf %714, %715 : vector<8x128xf32>
    %717 = vector.extract_strided_slice %700 {offsets = [0, 256], sizes = [8, 128], strides = [1, 1]} : vector<8x512xf32> to vector<8x128xf32>
    %718 = math.tanh %717 : vector<8x128xf32>
    %719 = vector.extract_strided_slice %700 {offsets = [0, 384], sizes = [8, 128], strides = [1, 1]} : vector<8x512xf32> to vector<8x128xf32>
    %cst_388 = arith.constant 5.000000e-01 : f32
    %720 = vector.broadcast %cst_388 : f32 to vector<8x128xf32>
    %721 = arith.mulf %720, %719 : vector<8x128xf32>
    %722 = math.tanh %721 : vector<8x128xf32>
    %cst_389 = arith.constant 5.000000e-01 : f32
    %723 = vector.broadcast %cst_389 : f32 to vector<8x128xf32>
    %724 = arith.mulf %723, %722 : vector<8x128xf32>
    %cst_390 = arith.constant 5.000000e-01 : f32
    %725 = vector.broadcast %cst_390 : f32 to vector<8x128xf32>
    %726 = arith.addf %724, %725 : vector<8x128xf32>
    %c0_391 = arith.constant 0 : index
    %c0_392 = arith.constant 0 : index
    %727 = vector.load %arg6[%c0_391, %c0_392] : memref<8x128xf32, #tpu.memory_space<vmem>>, vector<8x128xf32>
    %728 = arith.mulf %716, %727 : vector<8x128xf32>
    %729 = arith.mulf %708, %718 : vector<8x128xf32>
    %730 = arith.addf %728, %729 : vector<8x128xf32>
    %731 = math.tanh %730 : vector<8x128xf32>
    %732 = arith.mulf %726, %731 : vector<8x128xf32>
    %c0_393 = arith.constant 0 : index
    %c0_394 = arith.constant 0 : index
    %733 = vector.load %arg6[%c0_393, %c0_394] : memref<8x128xf32, #tpu.memory_space<vmem>>, vector<8x128xf32>
    tpu.vector_store %arg6[%c0_393, %c0_394], %730 {strides = array<i32>} : memref<8x128xf32, #tpu.memory_space<vmem>>, vector<8x128xf32>,
    %c0_395 = arith.constant 0 : index
    %c0_396 = arith.constant 0 : index
    %734 = vector.load %arg5[%c0_395, %c0_396] : memref<8x128xf32, #tpu.memory_space<vmem>>, vector<8x128xf32>
    tpu.vector_store %arg5[%c0_395, %c0_396], %732 {strides = array<i32>} : memref<8x128xf32, #tpu.memory_space<vmem>>, vector<8x128xf32>,
    %735 = arith.truncf %732 : vector<8x128xf32> to vector<8x128xbf16>
    %c15_397 = arith.constant 15 : index
    %c0_398 = arith.constant 0 : index
    %c0_399 = arith.constant 0 : index
    %736 = vector.load %arg4[%c15_397, %c0_398, %c0_399] : memref<16x8x128xbf16, #tpu.memory_space<vmem>>, vector<1x8x128xbf16>
    %737 = vector.shape_cast %736 : vector<1x8x128xbf16> to vector<8x128xbf16>
    %738 = vector.shape_cast %735 : vector<8x128xbf16> to vector<1x8x128xbf16>
    tpu.vector_store %arg4[%c15_397, %c0_398, %c0_399], %738 {strides = array<i32>} : memref<16x8x128xbf16, #tpu.memory_space<vmem>>, vector<1x8x128xbf16>,
    return
  }
  func.func @transform_0(%arg0: i32, %arg1: i32) -> (i32, i32, i32) {
    %c0_i32 = arith.constant 0 : i32
    %c0_i32_0 = arith.constant 0 : i32
    return %arg1, %arg0, %c0_i32 : i32, i32, i32
  }
  func.func @transform_1(%arg0: i32, %arg1: i32) -> (i32, i32) {
    %c0_i32 = arith.constant 0 : i32
    %c0_i32_0 = arith.constant 0 : i32
    %c0_i32_1 = arith.constant 0 : i32
    return %c0_i32, %c0_i32_0 : i32, i32
  }
  func.func @transform_2(%arg0: i32, %arg1: i32) -> (i32, i32, i32) {
    %c0_i32 = arith.constant 0 : i32
    %c0_i32_0 = arith.constant 0 : i32
    return %arg1, %arg0, %c0_i32 : i32, i32, i32
  }
}

</mosaic_0001>

<llo_original>
// kernel: decoder_rnn_forward.5
$region0: #{decoder_rnn_forward.5}
  #allocation0 [shape = 'u32[]', space=smem, size = 0x4, offset = 0x4, fixed_abs, tag = 'smem constant byte address 0x4 - core index']
  #allocation1 [shape = 'u32[72,128]{1,0:T(1,128)}', space=vmem, size = 0x9000, scoped, tag = 'internal scratch']
  %s0 = inlined_call_operand.vmem [shape: bf16[128,128], index: 0, kind: input, shape index: {}]
  %s1 = inlined_call_operand.vmem [shape: bf16[128,128], index: 1, kind: input, shape index: {}]
  %s2 = inlined_call_operand.vmem [shape: f32[1,128], index: 2, kind: input, shape index: {}]
  %s3 = inlined_call_operand.vmem [shape: f32[128,128], index: 3, kind: output, shape index: {}]
  %s4 = sld [smem:[#allocation0]]
  $region22: #{decoder_rnn_forward.5} parent=0
    _
  %s6 = ssub.s32 1, %s4
  %s7 = scalar_select 0, %s6, %s4
  // Predicated region
  $region2: #{decoder_rnn_forward.5} parent=0 // pred_check
    _
  $region3: #{decoder_rnn_forward.5} parent=0 // pred_check_branch
    %9 = sbr.rel (0) target = $region5
  $region4: #{decoder_rnn_forward.5} parent=0 // pred_region
    _
  $region5: #{decoder_rnn_forward.5} parent=0 // pred_fallthru
    _
  // Predicated region
  $region6: #{decoder_rnn_forward.5} parent=0 // pred_check
    _
  $region7: #{decoder_rnn_forward.5} parent=0 // pred_check_branch
    %11 = sbr.rel (0) target = $region9
  $region8: #{decoder_rnn_forward.5} parent=0 // pred_region
    _
  $region9: #{decoder_rnn_forward.5} parent=0 // pred_fallthru
    _
  // Predicated region
  $region10: #{decoder_rnn_forward.5} parent=0 // pred_check
    _
  $region11: #{decoder_rnn_forward.5} parent=0 // pred_check_branch
    %13 = sbr.rel (0) target = $region13
  $region12: #{decoder_rnn_forward.5} parent=0 // pred_region
    _
  $region13: #{decoder_rnn_forward.5} parent=0 // pred_fallthru
    _
  %v14 = vld [vmem:[%s0] sm:$0xf]
  %v15 = vld [vmem:[%s0 + $0x4] sm:$0xf]
  %v16 = vld [vmem:[%s0 + $0x8] sm:$0xf]
  %v17 = vld [vmem:[%s0 + $0xc] sm:$0xf]
  %v18 = vld [vmem:[%s0 + $0x10] sm:$0xf]
  %v19 = vld [vmem:[%s0 + $0x14] sm:$0xf]
  %v20 = vld [vmem:[%s0 + $0x18] sm:$0xf]
  %v21 = vld [vmem:[%s0 + $0x1c] sm:$0xf]
  %v22 = vld [vmem:[%s0 + $0x20] sm:$0xf]
  %v23 = vld [vmem:[%s0 + $0x24] sm:$0xf]
  %v24 = vld [vmem:[%s0 + $0x28] sm:$0xf]
  %v25 = vld [vmem:[%s0 + $0x2c] sm:$0xf]
  %v26 = vld [vmem:[%s0 + $0x30] sm:$0xf]
  %v27 = vld [vmem:[%s0 + $0x34] sm:$0xf]
  %v28 = vld [vmem:[%s0 + $0x38] sm:$0xf]
  %v29 = vld [vmem:[%s0 + $0x3c] sm:$0xf]
  %v30 = vld [vmem:[%s1] sm:$0xf]
  %v31 = vld [vmem:[%s1 + $0x4] sm:$0xf]
  %v32 = vld [vmem:[%s1 + $0x8] sm:$0xf]
  %v33 = vld [vmem:[%s1 + $0xc] sm:$0xf]
  %v34 = vld [vmem:[%s1 + $0x10] sm:$0xf]
  %v35 = vld [vmem:[%s1 + $0x14] sm:$0xf]
  %v36 = vld [vmem:[%s1 + $0x18] sm:$0xf]
  %v37 = vld [vmem:[%s1 + $0x1c] sm:$0xf]
  %v38 = vld [vmem:[%s1 + $0x20] sm:$0xf]
  %v39 = vld [vmem:[%s1 + $0x24] sm:$0xf]
  %v40 = vld [vmem:[%s1 + $0x28] sm:$0xf]
  %v41 = vld [vmem:[%s1 + $0x2c] sm:$0xf]
  %v42 = vld [vmem:[%s1 + $0x30] sm:$0xf]
  %v43 = vld [vmem:[%s1 + $0x34] sm:$0xf]
  %v44 = vld [vmem:[%s1 + $0x38] sm:$0xf]
  %v45 = vld [vmem:[%s1 + $0x3c] sm:$0xf]
  %v46 = vld [vmem:[%s2] sm:$0x1]
  %v48 = vperm.slane %v46, 0
  %v66 = vunpack.c.l.b16 %v14
  %v67 = vunpack.c.l.b16 %v15
  %v68 = vunpack.c.l.b16 %v16
  %v69 = vunpack.c.l.b16 %v17
  %v70 = vunpack.c.l.b16 %v18
  %v71 = vunpack.c.l.b16 %v19
  %v72 = vunpack.c.l.b16 %v20
  %v73 = vunpack.c.l.b16 %v21
  %v74 = vunpack.c.l.b16 %v22
  %v75 = vunpack.c.l.b16 %v23
  %v76 = vunpack.c.l.b16 %v24
  %v77 = vunpack.c.l.b16 %v25
  %v78 = vunpack.c.l.b16 %v26
  %v79 = vunpack.c.l.b16 %v27
  %v80 = vunpack.c.l.b16 %v28
  %v81 = vunpack.c.l.b16 %v29
  %v82 = vpack.c.b16 %v67, %v66
  %v83 = vpack.c.b16 %v69, %v68
  %v84 = vpack.c.b16 %v71, %v70
  %v85 = vpack.c.b16 %v73, %v72
  %v86 = vpack.c.b16 %v75, %v74
  %v87 = vpack.c.b16 %v77, %v76
  %v88 = vpack.c.b16 %v79, %v78
  %v89 = vpack.c.b16 %v81, %v80
  %v114 = vunpack.c.l.b16 %v30
  %v115 = vunpack.c.l.b16 %v31
  %v116 = vunpack.c.l.b16 %v32
  %v117 = vunpack.c.l.b16 %v33
  %v118 = vunpack.c.l.b16 %v34
  %v119 = vunpack.c.l.b16 %v35
  %v120 = vunpack.c.l.b16 %v36
  %v121 = vunpack.c.l.b16 %v37
  %v122 = vunpack.c.l.b16 %v38
  %v123 = vunpack.c.l.b16 %v39
  %v124 = vunpack.c.l.b16 %v40
  %v125 = vunpack.c.l.b16 %v41
  %v126 = vunpack.c.l.b16 %v42
  %v127 = vunpack.c.l.b16 %v43
  %v128 = vunpack.c.l.b16 %v44
  %v129 = vunpack.c.l.b16 %v45
  %v130 = vpack.c.b16 %v115, %v114
  %v131 = vpack.c.b16 %v117, %v116
  %v132 = vpack.c.b16 %v119, %v118
  %v133 = vpack.c.b16 %v121, %v120
  %v134 = vpack.c.b16 %v123, %v122
  %v135 = vpack.c.b16 %v125, %v124
  %v136 = vpack.c.b16 %v127, %v126
  %v137 = vpack.c.b16 %v129, %v128
  %146 = vmatpush.bf16.msra.mxu0 %v137
  %147 = vmatpush.bf16.msra.mxu0 %v136
  %148 = vmatpush.bf16.msra.mxu0 %v135
  %149 = vmatpush.bf16.msra.mxu0 %v134
  %150 = vmatpush.bf16.msra.mxu0 %v133
  %151 = vmatpush.bf16.msra.mxu0 %v132
  %152 = vmatpush.bf16.msra.mxu0 %v131
  %153 = vmatpush.bf16.msra.mxu0 %v130
  %154 = vmatmul.bf16.gmra.mxu0 %v82
  %v155 = vpop.f32.mrf.mxu0
  %v156 = vadd.f32 %v48, %v155
  %v157 = vpop.f32.mrf.mxu0
  %v158 = vadd.f32 %v48, %v157
  %159 = vmatmul.bf16.gmra.mxu0 %v83
  %v160 = vpop.f32.mrf.mxu0
  %v161 = vadd.f32 %v48, %v160
  %v162 = vpop.f32.mrf.mxu0
  %v163 = vadd.f32 %v48, %v162
  %164 = vmatmul.bf16.gmra.mxu0 %v84
  %v165 = vpop.f32.mrf.mxu0
  %v166 = vadd.f32 %v48, %v165
  %v167 = vpop.f32.mrf.mxu0
  %v168 = vadd.f32 %v48, %v167
  %169 = vmatmul.bf16.gmra.mxu0 %v85
  %v170 = vpop.f32.mrf.mxu0
  %v171 = vadd.f32 %v48, %v170
  %v172 = vpop.f32.mrf.mxu0
  %v173 = vadd.f32 %v48, %v172
  %174 = vmatmul.bf16.gmra.mxu0 %v86
  %v175 = vpop.f32.mrf.mxu0
  %v176 = vadd.f32 %v48, %v175
  %v177 = vpop.f32.mrf.mxu0
  %v178 = vadd.f32 %v48, %v177
  %179 = vmatmul.bf16.gmra.mxu0 %v87
  %v180 = vpop.f32.mrf.mxu0
  %v181 = vadd.f32 %v48, %v180
  %v182 = vpop.f32.mrf.mxu0
  %v183 = vadd.f32 %v48, %v182
  %184 = vmatmul.bf16.gmra.mxu0 %v88
  %v185 = vpop.f32.mrf.mxu0
  %v186 = vadd.f32 %v48, %v185
  %v187 = vpop.f32.mrf.mxu0
  %v188 = vadd.f32 %v48, %v187
  %189 = vmatmul.bf16.gmra.mxu0 %v89
  %v190 = vpop.f32.mrf.mxu0
  %v191 = vadd.f32 %v48, %v190
  %v192 = vpop.f32.mrf.mxu0
  %v193 = vadd.f32 %v48, %v192
  %194 = vdwg.mxu0
  %195 = vst [vmem:[%s3] sm:$0xff] %v156
  %196 = vst [vmem:[%s3 + $0x8] sm:$0xff] %v158
  %197 = vst [vmem:[%s3 + $0x10] sm:$0xff] %v161
  %198 = vst [vmem:[%s3 + $0x18] sm:$0xff] %v163
  %199 = vst [vmem:[%s3 + $0x20] sm:$0xff] %v166
  %200 = vst [vmem:[%s3 + $0x28] sm:$0xff] %v168
  %201 = vst [vmem:[%s3 + $0x30] sm:$0xff] %v171
  %202 = vst [vmem:[%s3 + $0x38] sm:$0xff] %v173
  %203 = vst [vmem:[%s3 + $0x40] sm:$0xff] %v176
  %204 = vst [vmem:[%s3 + $0x48] sm:$0xff] %v178
  %205 = vst [vmem:[%s3 + $0x50] sm:$0xff] %v181
  %206 = vst [vmem:[%s3 + $0x58] sm:$0xff] %v183
  %207 = vst [vmem:[%s3 + $0x60] sm:$0xff] %v186
  %208 = vst [vmem:[%s3 + $0x68] sm:$0xff] %v188
  %209 = vst [vmem:[%s3 + $0x70] sm:$0xff] %v191
  %210 = vst [vmem:[%s3 + $0x78] sm:$0xff] %v193
  // Predicated region
  $region14: #{decoder_rnn_forward.5} parent=0 // pred_check
    _
  $region15: #{decoder_rnn_forward.5} parent=0 // pred_check_branch
    %212 = sbr.rel (0) target = $region17
  $region16: #{decoder_rnn_forward.5} parent=0 // pred_region
    _
  $region17: #{decoder_rnn_forward.5} parent=0 // pred_fallthru
    _
  // Predicated region
  $region18: #{decoder_rnn_forward.5} parent=0 // pred_check
    _
  $region19: #{decoder_rnn_forward.5} parent=0 // pred_check_branch
    %214 = sbr.rel (0) target = $region21
  $region20: #{decoder_rnn_forward.5} parent=0 // pred_region
    _
  $region21: #{decoder_rnn_forward.5} parent=0 // pred_fallthru
    _

// kernel: decoder_rnn_forward.3
$region0: #{decoder_rnn_forward.3}
  #allocation0 [shape = 'u32[]', space=smem, size = 0x4, offset = 0x4, fixed_abs, tag = 'smem constant byte address 0x4 - core index']
  #allocation1 [shape = 'u32[72,128]{1,0:T(1,128)}', space=vmem, size = 0x9000, scoped, tag = 'internal scratch']
  %s0 = inlined_call_operand.vmem [shape: bf16[512,128], index: 0, kind: input, shape index: {}]
  %s1 = inlined_call_operand.vmem [shape: bf16[128,512], index: 1, kind: input, shape index: {}]
  %s2 = inlined_call_operand.vmem [shape: f32[1,512], index: 2, kind: input, shape index: {}]
  %s3 = inlined_call_operand.vmem [shape: bf16[512,512], index: 3, kind: output, shape index: {}]
  %s4 = sld [smem:[#allocation0]]
  $region22: #{decoder_rnn_forward.3} parent=0
    _
  %s6 = ssub.s32 1, %s4
  %s7 = scalar_select 0, %s6, %s4
  // Predicated region
  $region2: #{decoder_rnn_forward.3} parent=0 // pred_check
    _
  $region3: #{decoder_rnn_forward.3} parent=0 // pred_check_branch
    %9 = sbr.rel (0) target = $region5
  $region4: #{decoder_rnn_forward.3} parent=0 // pred_region
    _
  $region5: #{decoder_rnn_forward.3} parent=0 // pred_fallthru
    _
  // Predicated region
  $region6: #{decoder_rnn_forward.3} parent=0 // pred_check
    _
  $region7: #{decoder_rnn_forward.3} parent=0 // pred_check_branch
    %11 = sbr.rel (0) target = $region9
  $region8: #{decoder_rnn_forward.3} parent=0 // pred_region
    _
  $region9: #{decoder_rnn_forward.3} parent=0 // pred_fallthru
    _
  // Predicated region
  $region10: #{decoder_rnn_forward.3} parent=0 // pred_check
    _
  $region11: #{decoder_rnn_forward.3} parent=0 // pred_check_branch
    %13 = sbr.rel (0) target = $region13
  $region12: #{decoder_rnn_forward.3} parent=0 // pred_region
    _
  $region13: #{decoder_rnn_forward.3} parent=0 // pred_fallthru
    _
  %v14 = vld [vmem:[%s0] sm:$0xf]
  %v15 = vld [vmem:[%s0 + $0x4] sm:$0xf]
  %v16 = vld [vmem:[%s0 + $0x8] sm:$0xf]
  %v17 = vld [vmem:[%s0 + $0xc] sm:$0xf]
  %v18 = vld [vmem:[%s0 + $0x10] sm:$0xf]
  %v19 = vld [vmem:[%s0 + $0x14] sm:$0xf]
  %v20 = vld [vmem:[%s0 + $0x18] sm:$0xf]
  %v21 = vld [vmem:[%s0 + $0x1c] sm:$0xf]
  %v22 = vld [vmem:[%s0 + $0x20] sm:$0xf]
  %v23 = vld [vmem:[%s0 + $0x24] sm:$0xf]
  %v24 = vld [vmem:[%s0 + $0x28] sm:$0xf]
  %v25 = vld [vmem:[%s0 + $0x2c] sm:$0xf]
  %v26 = vld [vmem:[%s0 + $0x30] sm:$0xf]
  %v27 = vld [vmem:[%s0 + $0x34] sm:$0xf]
  %v28 = vld [vmem:[%s0 + $0x38] sm:$0xf]
  %v29 = vld [vmem:[%s0 + $0x3c] sm:$0xf]
  %v30 = vld [vmem:[%s0 + $0x40] sm:$0xf]
  %v31 = vld [vmem:[%s0 + $0x44] sm:$0xf]
  %v32 = vld [vmem:[%s0 + $0x48] sm:$0xf]
  %v33 = vld [vmem:[%s0 + $0x4c] sm:$0xf]
  %v34 = vld [vmem:[%s0 + $0x50] sm:$0xf]
  %v35 = vld [vmem:[%s0 + $0x54] sm:$0xf]
  %v36 = vld [vmem:[%s0 + $0x58] sm:$0xf]
  %v37 = vld [vmem:[%s0 + $0x5c] sm:$0xf]
  %v38 = vld [vmem:[%s0 + $0x60] sm:$0xf]
  %v39 = vld [vmem:[%s0 + $0x64] sm:$0xf]
  %v40 = vld [vmem:[%s0 + $0x68] sm:$0xf]
  %v41 = vld [vmem:[%s0 + $0x6c] sm:$0xf]
  %v42 = vld [vmem:[%s0 + $0x70] sm:$0xf]
  %v43 = vld [vmem:[%s0 + $0x74] sm:$0xf]
  %v44 = vld [vmem:[%s0 + $0x78] sm:$0xf]
  %v45 = vld [vmem:[%s0 + $0x7c] sm:$0xf]
  %v46 = vld [vmem:[%s0 + $0x80] sm:$0xf]
  %v47 = vld [vmem:[%s0 + $0x84] sm:$0xf]
  %v48 = vld [vmem:[%s0 + $0x88] sm:$0xf]
  %v49 = vld [vmem:[%s0 + $0x8c] sm:$0xf]
  %v50 = vld [vmem:[%s0 + $0x90] sm:$0xf]
  %v51 = vld [vmem:[%s0 + $0x94] sm:$0xf]
  %v52 = vld [vmem:[%s0 + $0x98] sm:$0xf]
  %v53 = vld [vmem:[%s0 + $0x9c] sm:$0xf]
  %v54 = vld [vmem:[%s0 + $0xa0] sm:$0xf]
  %v55 = vld [vmem:[%s0 + $0xa4] sm:$0xf]
  %v56 = vld [vmem:[%s0 + $0xa8] sm:$0xf]
  %v57 = vld [vmem:[%s0 + $0xac] sm:$0xf]
  %v58 = vld [vmem:[%s0 + $0xb0] sm:$0xf]
  %v59 = vld [vmem:[%s0 + $0xb4] sm:$0xf]
  %v60 = vld [vmem:[%s0 + $0xb8] sm:$0xf]
  %v61 = vld [vmem:[%s0 + $0xbc] sm:$0xf]
  %v62 = vld [vmem:[%s0 + $0xc0] sm:$0xf]
  %v63 = vld [vmem:[%s0 + $0xc4] sm:$0xf]
  %v64 = vld [vmem:[%s0 + $0xc8] sm:$0xf]
  %v65 = vld [vmem:[%s0 + $0xcc] sm:$0xf]
  %v66 = vld [vmem:[%s0 + $0xd0] sm:$0xf]
  %v67 = vld [vmem:[%s0 + $0xd4] sm:$0xf]
  %v68 = vld [vmem:[%s0 + $0xd8] sm:$0xf]
  %v69 = vld [vmem:[%s0 + $0xdc] sm:$0xf]
  %v70 = vld [vmem:[%s0 + $0xe0] sm:$0xf]
  %v71 = vld [vmem:[%s0 + $0xe4] sm:$0xf]
  %v72 = vld [vmem:[%s0 + $0xe8] sm:$0xf]
  %v73 = vld [vmem:[%s0 + $0xec] sm:$0xf]
  %v74 = vld [vmem:[%s0 + $0xf0] sm:$0xf]
  %v75 = vld [vmem:[%s0 + $0xf4] sm:$0xf]
  %v76 = vld [vmem:[%s0 + $0xf8] sm:$0xf]
  %v77 = vld [vmem:[%s0 + $0xfc] sm:$0xf]
  %v78 = vld [vmem:[%s1] sm:$0xff]
  %v79 = vld [vmem:[%s1 + $0x8] sm:$0xff]
  %v80 = vld [vmem:[%s1 + $0x10] sm:$0xff]
  %v81 = vld [vmem:[%s1 + $0x18] sm:$0xff]
  %v82 = vld [vmem:[%s1 + $0x20] sm:$0xff]
  %v83 = vld [vmem:[%s1 + $0x28] sm:$0xff]
  %v84 = vld [vmem:[%s1 + $0x30] sm:$0xff]
  %v85 = vld [vmem:[%s1 + $0x38] sm:$0xff]
  %v86 = vld [vmem:[%s1 + $0x40] sm:$0xff]
  %v87 = vld [vmem:[%s1 + $0x48] sm:$0xff]
  %v88 = vld [vmem:[%s1 + $0x50] sm:$0xff]
  %v89 = vld [vmem:[%s1 + $0x58] sm:$0xff]
  %v90 = vld [vmem:[%s1 + $0x60] sm:$0xff]
  %v91 = vld [vmem:[%s1 + $0x68] sm:$0xff]
  %v92 = vld [vmem:[%s1 + $0x70] sm:$0xff]
  %v93 = vld [vmem:[%s1 + $0x78] sm:$0xff]
  %v94 = vld [vmem:[%s1 + $0x80] sm:$0xff]
  %v95 = vld [vmem:[%s1 + $0x88] sm:$0xff]
  %v96 = vld [vmem:[%s1 + $0x90] sm:$0xff]
  %v97 = vld [vmem:[%s1 + $0x98] sm:$0xff]
  %v98 = vld [vmem:[%s1 + $0xa0] sm:$0xff]
  %v99 = vld [vmem:[%s1 + $0xa8] sm:$0xff]
  %v100 = vld [vmem:[%s1 + $0xb0] sm:$0xff]
  %v101 = vld [vmem:[%s1 + $0xb8] sm:$0xff]
  %v102 = vld [vmem:[%s1 + $0xc0] sm:$0xff]
  %v103 = vld [vmem:[%s1 + $0xc8] sm:$0xff]
  %v104 = vld [vmem:[%s1 + $0xd0] sm:$0xff]
  %v105 = vld [vmem:[%s1 + $0xd8] sm:$0xff]
  %v106 = vld [vmem:[%s1 + $0xe0] sm:$0xff]
  %v107 = vld [vmem:[%s1 + $0xe8] sm:$0xff]
  %v108 = vld [vmem:[%s1 + $0xf0] sm:$0xff]
  %v109 = vld [vmem:[%s1 + $0xf8] sm:$0xff]
  %v110 = vld [vmem:[%s2] sm:$0xf]
  %v112 = vperm.slane %v110, 0
  %v113 = vperm.slane %v110, 1
  %v114 = vperm.slane %v110, 2
  %v115 = vperm.slane %v110, 3
  %v184 = vunpack.c.l.b16 %v14
  %v185 = vunpack.c.l.b16 %v15
  %v186 = vunpack.c.l.b16 %v16
  %v187 = vunpack.c.l.b16 %v17
  %v188 = vunpack.c.l.b16 %v18
  %v189 = vunpack.c.l.b16 %v19
  %v190 = vunpack.c.l.b16 %v20
  %v191 = vunpack.c.l.b16 %v21
  %v192 = vunpack.c.l.b16 %v22
  %v193 = vunpack.c.l.b16 %v23
  %v194 = vunpack.c.l.b16 %v24
  %v195 = vunpack.c.l.b16 %v25
  %v196 = vunpack.c.l.b16 %v26
  %v197 = vunpack.c.l.b16 %v27
  %v198 = vunpack.c.l.b16 %v28
  %v199 = vunpack.c.l.b16 %v29
  %v200 = vunpack.c.l.b16 %v30
  %v201 = vunpack.c.l.b16 %v31
  %v202 = vunpack.c.l.b16 %v32
  %v203 = vunpack.c.l.b16 %v33
  %v204 = vunpack.c.l.b16 %v34
  %v205 = vunpack.c.l.b16 %v35
  %v206 = vunpack.c.l.b16 %v36
  %v207 = vunpack.c.l.b16 %v37
  %v208 = vunpack.c.l.b16 %v38
  %v209 = vunpack.c.l.b16 %v39
  %v210 = vunpack.c.l.b16 %v40
  %v211 = vunpack.c.l.b16 %v41
  %v212 = vunpack.c.l.b16 %v42
  %v213 = vunpack.c.l.b16 %v43
  %v214 = vunpack.c.l.b16 %v44
  %v215 = vunpack.c.l.b16 %v45
  %v216 = vunpack.c.l.b16 %v46
  %v217 = vunpack.c.l.b16 %v47
  %v218 = vunpack.c.l.b16 %v48
  %v219 = vunpack.c.l.b16 %v49
  %v220 = vunpack.c.l.b16 %v50
  %v221 = vunpack.c.l.b16 %v51
  %v222 = vunpack.c.l.b16 %v52
  %v223 = vunpack.c.l.b16 %v53
  %v224 = vunpack.c.l.b16 %v54
  %v225 = vunpack.c.l.b16 %v55
  %v226 = vunpack.c.l.b16 %v56
  %v227 = vunpack.c.l.b16 %v57
  %v228 = vunpack.c.l.b16 %v58
  %v229 = vunpack.c.l.b16 %v59
  %v230 = vunpack.c.l.b16 %v60
  %v231 = vunpack.c.l.b16 %v61
  %v232 = vunpack.c.l.b16 %v62
  %v233 = vunpack.c.l.b16 %v63
  %v234 = vunpack.c.l.b16 %v64
  %v235 = vunpack.c.l.b16 %v65
  %v236 = vunpack.c.l.b16 %v66
  %v237 = vunpack.c.l.b16 %v67
  %v238 = vunpack.c.l.b16 %v68
  %v239 = vunpack.c.l.b16 %v69
  %v240 = vunpack.c.l.b16 %v70
  %v241 = vunpack.c.l.b16 %v71
  %v242 = vunpack.c.l.b16 %v72
  %v243 = vunpack.c.l.b16 %v73
  %v244 = vunpack.c.l.b16 %v74
  %v245 = vunpack.c.l.b16 %v75
  %v246 = vunpack.c.l.b16 %v76
  %v247 = vunpack.c.l.b16 %v77
  %v248 = vpack.c.b16 %v185, %v184
  %v249 = vpack.c.b16 %v187, %v186
  %v250 = vpack.c.b16 %v189, %v188
  %v251 = vpack.c.b16 %v191, %v190
  %v252 = vpack.c.b16 %v193, %v192
  %v253 = vpack.c.b16 %v195, %v194
  %v254 = vpack.c.b16 %v197, %v196
  %v255 = vpack.c.b16 %v199, %v198
  %v256 = vpack.c.b16 %v201, %v200
  %v257 = vpack.c.b16 %v203, %v202
  %v258 = vpack.c.b16 %v205, %v204
  %v259 = vpack.c.b16 %v207, %v206
  %v260 = vpack.c.b16 %v209, %v208
  %v261 = vpack.c.b16 %v211, %v210
  %v262 = vpack.c.b16 %v213, %v212
  %v263 = vpack.c.b16 %v215, %v214
  %v264 = vpack.c.b16 %v217, %v216
  %v265 = vpack.c.b16 %v219, %v218
  %v266 = vpack.c.b16 %v221, %v220
  %v267 = vpack.c.b16 %v223, %v222
  %v268 = vpack.c.b16 %v225, %v224
  %v269 = vpack.c.b16 %v227, %v226
  %v270 = vpack.c.b16 %v229, %v228
  %v271 = vpack.c.b16 %v231, %v230
  %v272 = vpack.c.b16 %v233, %v232
  %v273 = vpack.c.b16 %v235, %v234
  %v274 = vpack.c.b16 %v237, %v236
  %v275 = vpack.c.b16 %v239, %v238
  %v276 = vpack.c.b16 %v241, %v240
  %v277 = vpack.c.b16 %v243, %v242
  %v278 = vpack.c.b16 %v245, %v244
  %v279 = vpack.c.b16 %v247, %v246
  %v344 = vunpack.c.l.b16 %v78
  %v345 = vunpack.c.h.b16 %v78
  %v346 = vunpack.c.l.b16 %v79
  %v347 = vunpack.c.h.b16 %v79
  %v348 = vunpack.c.l.b16 %v80
  %v349 = vunpack.c.h.b16 %v80
  %v350 = vunpack.c.l.b16 %v81
  %v351 = vunpack.c.h.b16 %v81
  %v352 = vunpack.c.l.b16 %v82
  %v353 = vunpack.c.h.b16 %v82
  %v354 = vunpack.c.l.b16 %v83
  %v355 = vunpack.c.h.b16 %v83
  %v356 = vunpack.c.l.b16 %v84
  %v357 = vunpack.c.h.b16 %v84
  %v358 = vunpack.c.l.b16 %v85
  %v359 = vunpack.c.h.b16 %v85
  %v360 = vunpack.c.l.b16 %v86
  %v361 = vunpack.c.h.b16 %v86
  %v362 = vunpack.c.l.b16 %v87
  %v363 = vunpack.c.h.b16 %v87
  %v364 = vunpack.c.l.b16 %v88
  %v365 = vunpack.c.h.b16 %v88
  %v366 = vunpack.c.l.b16 %v89
  %v367 = vunpack.c.h.b16 %v89
  %v368 = vunpack.c.l.b16 %v90
  %v369 = vunpack.c.h.b16 %v90
  %v370 = vunpack.c.l.b16 %v91
  %v371 = vunpack.c.h.b16 %v91
  %v372 = vunpack.c.l.b16 %v92
  %v373 = vunpack.c.h.b16 %v92
  %v374 = vunpack.c.l.b16 %v93
  %v375 = vunpack.c.h.b16 %v93
  %v376 = vunpack.c.l.b16 %v94
  %v377 = vunpack.c.h.b16 %v94
  %v378 = vunpack.c.l.b16 %v95
  %v379 = vunpack.c.h.b16 %v95
  %v380 = vunpack.c.l.b16 %v96
  %v381 = vunpack.c.h.b16 %v96
  %v382 = vunpack.c.l.b16 %v97
  %v383 = vunpack.c.h.b16 %v97
  %v384 = vunpack.c.l.b16 %v98
  %v385 = vunpack.c.h.b16 %v98
  %v386 = vunpack.c.l.b16 %v99
  %v387 = vunpack.c.h.b16 %v99
  %v388 = vunpack.c.l.b16 %v100
  %v389 = vunpack.c.h.b16 %v100
  %v390 = vunpack.c.l.b16 %v101
  %v391 = vunpack.c.h.b16 %v101
  %v392 = vunpack.c.l.b16 %v102
  %v393 = vunpack.c.h.b16 %v102
  %v394 = vunpack.c.l.b16 %v103
  %v395 = vunpack.c.h.b16 %v103
  %v396 = vunpack.c.l.b16 %v104
  %v397 = vunpack.c.h.b16 %v104
  %v398 = vunpack.c.l.b16 %v105
  %v399 = vunpack.c.h.b16 %v105
  %v400 = vunpack.c.l.b16 %v106
  %v401 = vunpack.c.h.b16 %v106
  %v402 = vunpack.c.l.b16 %v107
  %v403 = vunpack.c.h.b16 %v107
  %v404 = vunpack.c.l.b16 %v108
  %v405 = vunpack.c.h.b16 %v108
  %v406 = vunpack.c.l.b16 %v109
  %v407 = vunpack.c.h.b16 %v109
  %v408 = vpack.c.b16 %v348, %v344
  %v409 = vpack.c.b16 %v349, %v345
  %v410 = vpack.c.b16 %v350, %v346
  %v411 = vpack.c.b16 %v351, %v347
  %v412 = vpack.c.b16 %v356, %v352
  %v413 = vpack.c.b16 %v357, %v353
  %v414 = vpack.c.b16 %v358, %v354
  %v415 = vpack.c.b16 %v359, %v355
  %v416 = vpack.c.b16 %v364, %v360
  %v417 = vpack.c.b16 %v365, %v361
  %v418 = vpack.c.b16 %v366, %v362
  %v419 = vpack.c.b16 %v367, %v363
  %v420 = vpack.c.b16 %v372, %v368
  %v421 = vpack.c.b16 %v373, %v369
  %v422 = vpack.c.b16 %v374, %v370
  %v423 = vpack.c.b16 %v375, %v371
  %v424 = vpack.c.b16 %v380, %v376
  %v425 = vpack.c.b16 %v381, %v377
  %v426 = vpack.c.b16 %v382, %v378
  %v427 = vpack.c.b16 %v383, %v379
  %v428 = vpack.c.b16 %v388, %v384
  %v429 = vpack.c.b16 %v389, %v385
  %v430 = vpack.c.b16 %v390, %v386
  %v431 = vpack.c.b16 %v391, %v387
  %v432 = vpack.c.b16 %v396, %v392
  %v433 = vpack.c.b16 %v397, %v393
  %v434 = vpack.c.b16 %v398, %v394
  %v435 = vpack.c.b16 %v399, %v395
  %v436 = vpack.c.b16 %v404, %v400
  %v437 = vpack.c.b16 %v405, %v401
  %v438 = vpack.c.b16 %v406, %v402
  %v439 = vpack.c.b16 %v407, %v403
  %472 = vmatpush.bf16.msra.mxu0 %v436
  %473 = vmatpush.bf16.msra.mxu0 %v432
  %474 = vmatpush.bf16.msra.mxu0 %v428
  %475 = vmatpush.bf16.msra.mxu0 %v424
  %476 = vmatpush.bf16.msra.mxu0 %v420
  %477 = vmatpush.bf16.msra.mxu0 %v416
  %478 = vmatpush.bf16.msra.mxu0 %v412
  %479 = vmatpush.bf16.msra.mxu0 %v408
  %480 = vmatmul.bf16.gmra.mxu0 %v248
  %v481 = vpop.f32.mrf.mxu0
  %v482 = vadd.f32 %v112, %v481
  %v483 = vpop.f32.mrf.mxu0
  %v484 = vadd.f32 %v112, %v483
  %485 = vmatmul.bf16.gmra.mxu0 %v249
  %v486 = vpop.f32.mrf.mxu0
  %v487 = vadd.f32 %v112, %v486
  %v488 = vpop.f32.mrf.mxu0
  %v489 = vadd.f32 %v112, %v488
  %490 = vmatmul.bf16.gmra.mxu0 %v250
  %v491 = vpop.f32.mrf.mxu0
  %v492 = vadd.f32 %v112, %v491
  %v493 = vpop.f32.mrf.mxu0
  %v494 = vadd.f32 %v112, %v493
  %495 = vmatmul.bf16.gmra.mxu0 %v251
  %v496 = vpop.f32.mrf.mxu0
  %v497 = vadd.f32 %v112, %v496
  %v498 = vpop.f32.mrf.mxu0
  %v499 = vadd.f32 %v112, %v498
  %500 = vmatmul.bf16.gmra.mxu0 %v252
  %v501 = vpop.f32.mrf.mxu0
  %v502 = vadd.f32 %v112, %v501
  %v503 = vpop.f32.mrf.mxu0
  %v504 = vadd.f32 %v112, %v503
  %505 = vmatmul.bf16.gmra.mxu0 %v253
  %v506 = vpop.f32.mrf.mxu0
  %v507 = vadd.f32 %v112, %v506
  %v508 = vpop.f32.mrf.mxu0
  %v509 = vadd.f32 %v112, %v508
  %510 = vmatmul.bf16.gmra.mxu0 %v254
  %v511 = vpop.f32.mrf.mxu0
  %v512 = vadd.f32 %v112, %v511
  %v513 = vpop.f32.mrf.mxu0
  %v514 = vadd.f32 %v112, %v513
  %515 = vmatmul.bf16.gmra.mxu0 %v255
  %v516 = vpop.f32.mrf.mxu0
  %v517 = vadd.f32 %v112, %v516
  %v518 = vpop.f32.mrf.mxu0
  %v519 = vadd.f32 %v112, %v518
  %520 = vmatmul.bf16.gmra.mxu0 %v256
  %v521 = vpop.f32.mrf.mxu0
  %v522 = vadd.f32 %v112, %v521
  %v523 = vpop.f32.mrf.mxu0
  %v524 = vadd.f32 %v112, %v523
  %525 = vmatmul.bf16.gmra.mxu0 %v257
  %v526 = vpop.f32.mrf.mxu0
  %v527 = vadd.f32 %v112, %v526
  %v528 = vpop.f32.mrf.mxu0
  %v529 = vadd.f32 %v112, %v528
  %530 = vmatmul.bf16.gmra.mxu0 %v258
  %v531 = vpop.f32.mrf.mxu0
  %v532 = vadd.f32 %v112, %v531
  %v533 = vpop.f32.mrf.mxu0
  %v534 = vadd.f32 %v112, %v533
  %535 = vmatmul.bf16.gmra.mxu0 %v259
  %v536 = vpop.f32.mrf.mxu0
  %v537 = vadd.f32 %v112, %v536
  %v538 = vpop.f32.mrf.mxu0
  %v539 = vadd.f32 %v112, %v538
  %540 = vmatmul.bf16.gmra.mxu0 %v260
  %v541 = vpop.f32.mrf.mxu0
  %v542 = vadd.f32 %v112, %v541
  %v543 = vpop.f32.mrf.mxu0
  %v544 = vadd.f32 %v112, %v543
  %545 = vmatmul.bf16.gmra.mxu0 %v261
  %v546 = vpop.f32.mrf.mxu0
  %v547 = vadd.f32 %v112, %v546
  %v548 = vpop.f32.mrf.mxu0
  %v549 = vadd.f32 %v112, %v548
  %550 = vmatmul.bf16.gmra.mxu0 %v262
  %v551 = vpop.f32.mrf.mxu0
  %v552 = vadd.f32 %v112, %v551
  %v553 = vpop.f32.mrf.mxu0
  %v554 = vadd.f32 %v112, %v553
  %555 = vmatmul.bf16.gmra.mxu0 %v263
  %v556 = vpop.f32.mrf.mxu0
  %v557 = vadd.f32 %v112, %v556
  %v558 = vpop.f32.mrf.mxu0
  %v559 = vadd.f32 %v112, %v558
  %560 = vmatmul.bf16.gmra.mxu0 %v264
  %v561 = vpop.f32.mrf.mxu0
  %v562 = vadd.f32 %v112, %v561
  %v563 = vpop.f32.mrf.mxu0
  %v564 = vadd.f32 %v112, %v563
  %565 = vmatmul.bf16.gmra.mxu0 %v265
  %v566 = vpop.f32.mrf.mxu0
  %v567 = vadd.f32 %v112, %v566
  %v568 = vpop.f32.mrf.mxu0
  %v569 = vadd.f32 %v112, %v568
  %570 = vmatmul.bf16.gmra.mxu0 %v266
  %v571 = vpop.f32.mrf.mxu0
  %v572 = vadd.f32 %v112, %v571
  %v573 = vpop.f32.mrf.mxu0
  %v574 = vadd.f32 %v112, %v573
  %575 = vmatmul.bf16.gmra.mxu0 %v267
  %v576 = vpop.f32.mrf.mxu0
  %v577 = vadd.f32 %v112, %v576
  %v578 = vpop.f32.mrf.mxu0
  %v579 = vadd.f32 %v112, %v578
  %580 = vmatmul.bf16.gmra.mxu0 %v268
  %v581 = vpop.f32.mrf.mxu0
  %v582 = vadd.f32 %v112, %v581
  %v583 = vpop.f32.mrf.mxu0
  %v584 = vadd.f32 %v112, %v583
  %585 = vmatmul.bf16.gmra.mxu0 %v269
  %v586 = vpop.f32.mrf.mxu0
  %v587 = vadd.f32 %v112, %v586
  %v588 = vpop.f32.mrf.mxu0
  %v589 = vadd.f32 %v112, %v588
  %590 = vmatmul.bf16.gmra.mxu0 %v270
  %v591 = vpop.f32.mrf.mxu0
  %v592 = vadd.f32 %v112, %v591
  %v593 = vpop.f32.mrf.mxu0
  %v594 = vadd.f32 %v112, %v593
  %595 = vmatmul.bf16.gmra.mxu0 %v271
  %v596 = vpop.f32.mrf.mxu0
  %v597 = vadd.f32 %v112, %v596
  %v598 = vpop.f32.mrf.mxu0
  %v599 = vadd.f32 %v112, %v598
  %600 = vmatmul.bf16.gmra.mxu0 %v272
  %v601 = vpop.f32.mrf.mxu0
  %v602 = vadd.f32 %v112, %v601
  %v603 = vpop.f32.mrf.mxu0
  %v604 = vadd.f32 %v112, %v603
  %605 = vmatmul.bf16.gmra.mxu0 %v273
  %v606 = vpop.f32.mrf.mxu0
  %v607 = vadd.f32 %v112, %v606
  %v608 = vpop.f32.mrf.mxu0
  %v609 = vadd.f32 %v112, %v608
  %610 = vmatmul.bf16.gmra.mxu0 %v274
  %v611 = vpop.f32.mrf.mxu0
  %v612 = vadd.f32 %v112, %v611
  %v613 = vpop.f32.mrf.mxu0
  %v614 = vadd.f32 %v112, %v613
  %615 = vmatmul.bf16.gmra.mxu0 %v275
  %v616 = vpop.f32.mrf.mxu0
  %v617 = vadd.f32 %v112, %v616
  %v618 = vpop.f32.mrf.mxu0
  %v619 = vadd.f32 %v112, %v618
  %620 = vmatmul.bf16.gmra.mxu0 %v276
  %v621 = vpop.f32.mrf.mxu0
  %v622 = vadd.f32 %v112, %v621
  %v623 = vpop.f32.mrf.mxu0
  %v624 = vadd.f32 %v112, %v623
  %625 = vmatmul.bf16.gmra.mxu0 %v277
  %v626 = vpop.f32.mrf.mxu0
  %v627 = vadd.f32 %v112, %v626
  %v628 = vpop.f32.mrf.mxu0
  %v629 = vadd.f32 %v112, %v628
  %630 = vmatmul.bf16.gmra.mxu0 %v278
  %v631 = vpop.f32.mrf.mxu0
  %v632 = vadd.f32 %v112, %v631
  %v633 = vpop.f32.mrf.mxu0
  %v634 = vadd.f32 %v112, %v633
  %635 = vmatmul.bf16.gmra.mxu0 %v279
  %v636 = vpop.f32.mrf.mxu0
  %v637 = vadd.f32 %v112, %v636
  %v638 = vpop.f32.mrf.mxu0
  %v639 = vadd.f32 %v112, %v638
  %640 = vdwg.mxu0
  %641 = vmatpush.bf16.msra.mxu0 %v437
  %642 = vmatpush.bf16.msra.mxu0 %v433
  %643 = vmatpush.bf16.msra.mxu0 %v429
  %644 = vmatpush.bf16.msra.mxu0 %v425
  %645 = vmatpush.bf16.msra.mxu0 %v421
  %646 = vmatpush.bf16.msra.mxu0 %v417
  %647 = vmatpush.bf16.msra.mxu0 %v413
  %648 = vmatpush.bf16.msra.mxu0 %v409
  %649 = vmatmul.bf16.gmra.mxu0 %v248
  %v650 = vpop.f32.mrf.mxu0
  %v651 = vadd.f32 %v113, %v650
  %v652 = vpop.f32.mrf.mxu0
  %v653 = vadd.f32 %v113, %v652
  %654 = vmatmul.bf16.gmra.mxu0 %v249
  %v655 = vpop.f32.mrf.mxu0
  %v656 = vadd.f32 %v113, %v655
  %v657 = vpop.f32.mrf.mxu0
  %v658 = vadd.f32 %v113, %v657
  %659 = vmatmul.bf16.gmra.mxu0 %v250
  %v660 = vpop.f32.mrf.mxu0
  %v661 = vadd.f32 %v113, %v660
  %v662 = vpop.f32.mrf.mxu0
  %v663 = vadd.f32 %v113, %v662
  %664 = vmatmul.bf16.gmra.mxu0 %v251
  %v665 = vpop.f32.mrf.mxu0
  %v666 = vadd.f32 %v113, %v665
  %v667 = vpop.f32.mrf.mxu0
  %v668 = vadd.f32 %v113, %v667
  %669 = vmatmul.bf16.gmra.mxu0 %v252
  %v670 = vpop.f32.mrf.mxu0
  %v671 = vadd.f32 %v113, %v670
  %v672 = vpop.f32.mrf.mxu0
  %v673 = vadd.f32 %v113, %v672
  %674 = vmatmul.bf16.gmra.mxu0 %v253
  %v675 = vpop.f32.mrf.mxu0
  %v676 = vadd.f32 %v113, %v675
  %v677 = vpop.f32.mrf.mxu0
  %v678 = vadd.f32 %v113, %v677
  %679 = vmatmul.bf16.gmra.mxu0 %v254
  %v680 = vpop.f32.mrf.mxu0
  %v681 = vadd.f32 %v113, %v680
  %v682 = vpop.f32.mrf.mxu0
  %v683 = vadd.f32 %v113, %v682
  %684 = vmatmul.bf16.gmra.mxu0 %v255
  %v685 = vpop.f32.mrf.mxu0
  %v686 = vadd.f32 %v113, %v685
  %v687 = vpop.f32.mrf.mxu0
  %v688 = vadd.f32 %v113, %v687
  %689 = vmatmul.bf16.gmra.mxu0 %v256
  %v690 = vpop.f32.mrf.mxu0
  %v691 = vadd.f32 %v113, %v690
  %v692 = vpop.f32.mrf.mxu0
  %v693 = vadd.f32 %v113, %v692
  %694 = vmatmul.bf16.gmra.mxu0 %v257
  %v695 = vpop.f32.mrf.mxu0
  %v696 = vadd.f32 %v113, %v695
  %v697 = vpop.f32.mrf.mxu0
  %v698 = vadd.f32 %v113, %v697
  %699 = vmatmul.bf16.gmra.mxu0 %v258
  %v700 = vpop.f32.mrf.mxu0
  %v701 = vadd.f32 %v113, %v700
  %v702 = vpop.f32.mrf.mxu0
  %v703 = vadd.f32 %v113, %v702
  %704 = vmatmul.bf16.gmra.mxu0 %v259
  %v705 = vpop.f32.mrf.mxu0
  %v706 = vadd.f32 %v113, %v705
  %v707 = vpop.f32.mrf.mxu0
  %v708 = vadd.f32 %v113, %v707
  %709 = vmatmul.bf16.gmra.mxu0 %v260
  %v710 = vpop.f32.mrf.mxu0
  %v711 = vadd.f32 %v113, %v710
  %v712 = vpop.f32.mrf.mxu0
  %v713 = vadd.f32 %v113, %v712
  %714 = vmatmul.bf16.gmra.mxu0 %v261
  %v715 = vpop.f32.mrf.mxu0
  %v716 = vadd.f32 %v113, %v715
  %v717 = vpop.f32.mrf.mxu0
  %v718 = vadd.f32 %v113, %v717
  %719 = vmatmul.bf16.gmra.mxu0 %v262
  %v720 = vpop.f32.mrf.mxu0
  %v721 = vadd.f32 %v113, %v720
  %v722 = vpop.f32.mrf.mxu0
  %v723 = vadd.f32 %v113, %v722
  %724 = vmatmul.bf16.gmra.mxu0 %v263
  %v725 = vpop.f32.mrf.mxu0
  %v726 = vadd.f32 %v113, %v725
  %v727 = vpop.f32.mrf.mxu0
  %v728 = vadd.f32 %v113, %v727
  %729 = vmatmul.bf16.gmra.mxu0 %v264
  %v730 = vpop.f32.mrf.mxu0
  %v731 = vadd.f32 %v113, %v730
  %v732 = vpop.f32.mrf.mxu0
  %v733 = vadd.f32 %v113, %v732
  %734 = vmatmul.bf16.gmra.mxu0 %v265
  %v735 = vpop.f32.mrf.mxu0
  %v736 = vadd.f32 %v113, %v735
  %v737 = vpop.f32.mrf.mxu0
  %v738 = vadd.f32 %v113, %v737
  %739 = vmatmul.bf16.gmra.mxu0 %v266
  %v740 = vpop.f32.mrf.mxu0
  %v741 = vadd.f32 %v113, %v740
  %v742 = vpop.f32.mrf.mxu0
  %v743 = vadd.f32 %v113, %v742
  %744 = vmatmul.bf16.gmra.mxu0 %v267
  %v745 = vpop.f32.mrf.mxu0
  %v746 = vadd.f32 %v113, %v745
  %v747 = vpop.f32.mrf.mxu0
  %v748 = vadd.f32 %v113, %v747
  %749 = vmatmul.bf16.gmra.mxu0 %v268
  %v750 = vpop.f32.mrf.mxu0
  %v751 = vadd.f32 %v113, %v750
  %v752 = vpop.f32.mrf.mxu0
  %v753 = vadd.f32 %v113, %v752
  %754 = vmatmul.bf16.gmra.mxu0 %v269
  %v755 = vpop.f32.mrf.mxu0
  %v756 = vadd.f32 %v113, %v755
  %v757 = vpop.f32.mrf.mxu0
  %v758 = vadd.f32 %v113, %v757
  %759 = vmatmul.bf16.gmra.mxu0 %v270
  %v760 = vpop.f32.mrf.mxu0
  %v761 = vadd.f32 %v113, %v760
  %v762 = vpop.f32.mrf.mxu0
  %v763 = vadd.f32 %v113, %v762
  %764 = vmatmul.bf16.gmra.mxu0 %v271
  %v765 = vpop.f32.mrf.mxu0
  %v766 = vadd.f32 %v113, %v765
  %v767 = vpop.f32.mrf.mxu0
  %v768 = vadd.f32 %v113, %v767
  %769 = vmatmul.bf16.gmra.mxu0 %v272
  %v770 = vpop.f32.mrf.mxu0
  %v771 = vadd.f32 %v113, %v770
  %v772 = vpop.f32.mrf.mxu0
  %v773 = vadd.f32 %v113, %v772
  %774 = vmatmul.bf16.gmra.mxu0 %v273
  %v775 = vpop.f32.mrf.mxu0
  %v776 = vadd.f32 %v113, %v775
  %v777 = vpop.f32.mrf.mxu0
  %v778 = vadd.f32 %v113, %v777
  %779 = vmatmul.bf16.gmra.mxu0 %v274
  %v780 = vpop.f32.mrf.mxu0
  %v781 = vadd.f32 %v113, %v780
  %v782 = vpop.f32.mrf.mxu0
  %v783 = vadd.f32 %v113, %v782
  %784 = vmatmul.bf16.gmra.mxu0 %v275
  %v785 = vpop.f32.mrf.mxu0
  %v786 = vadd.f32 %v113, %v785
  %v787 = vpop.f32.mrf.mxu0
  %v788 = vadd.f32 %v113, %v787
  %789 = vmatmul.bf16.gmra.mxu0 %v276
  %v790 = vpop.f32.mrf.mxu0
  %v791 = vadd.f32 %v113, %v790
  %v792 = vpop.f32.mrf.mxu0
  %v793 = vadd.f32 %v113, %v792
  %794 = vmatmul.bf16.gmra.mxu0 %v277
  %v795 = vpop.f32.mrf.mxu0
  %v796 = vadd.f32 %v113, %v795
  %v797 = vpop.f32.mrf.mxu0
  %v798 = vadd.f32 %v113, %v797
  %799 = vmatmul.bf16.gmra.mxu0 %v278
  %v800 = vpop.f32.mrf.mxu0
  %v801 = vadd.f32 %v113, %v800
  %v802 = vpop.f32.mrf.mxu0
  %v803 = vadd.f32 %v113, %v802
  %804 = vmatmul.bf16.gmra.mxu0 %v279
  %v805 = vpop.f32.mrf.mxu0
  %v806 = vadd.f32 %v113, %v805
  %v807 = vpop.f32.mrf.mxu0
  %v808 = vadd.f32 %v113, %v807
  %809 = vdwg.mxu0
  %810 = vmatpush.bf16.msra.mxu0 %v438
  %811 = vmatpush.bf16.msra.mxu0 %v434
  %812 = vmatpush.bf16.msra.mxu0 %v430
  %813 = vmatpush.bf16.msra.mxu0 %v426
  %814 = vmatpush.bf16.msra.mxu0 %v422
  %815 = vmatpush.bf16.msra.mxu0 %v418
  %816 = vmatpush.bf16.msra.mxu0 %v414
  %817 = vmatpush.bf16.msra.mxu0 %v410
  %818 = vmatmul.bf16.gmra.mxu0 %v248
  %v819 = vpop.f32.mrf.mxu0
  %v820 = vadd.f32 %v114, %v819
  %v821 = vpop.f32.mrf.mxu0
  %v822 = vadd.f32 %v114, %v821
  %823 = vmatmul.bf16.gmra.mxu0 %v249
  %v824 = vpop.f32.mrf.mxu0
  %v825 = vadd.f32 %v114, %v824
  %v826 = vpop.f32.mrf.mxu0
  %v827 = vadd.f32 %v114, %v826
  %828 = vmatmul.bf16.gmra.mxu0 %v250
  %v829 = vpop.f32.mrf.mxu0
  %v830 = vadd.f32 %v114, %v829
  %v831 = vpop.f32.mrf.mxu0
  %v832 = vadd.f32 %v114, %v831
  %833 = vmatmul.bf16.gmra.mxu0 %v251
  %v834 = vpop.f32.mrf.mxu0
  %v835 = vadd.f32 %v114, %v834
  %v836 = vpop.f32.mrf.mxu0
  %v837 = vadd.f32 %v114, %v836
  %838 = vmatmul.bf16.gmra.mxu0 %v252
  %v839 = vpop.f32.mrf.mxu0
  %v840 = vadd.f32 %v114, %v839
  %v841 = vpop.f32.mrf.mxu0
  %v842 = vadd.f32 %v114, %v841
  %843 = vmatmul.bf16.gmra.mxu0 %v253
  %v844 = vpop.f32.mrf.mxu0
  %v845 = vadd.f32 %v114, %v844
  %v846 = vpop.f32.mrf.mxu0
  %v847 = vadd.f32 %v114, %v846
  %848 = vmatmul.bf16.gmra.mxu0 %v254
  %v849 = vpop.f32.mrf.mxu0
  %v850 = vadd.f32 %v114, %v849
  %v851 = vpop.f32.mrf.mxu0
  %v852 = vadd.f32 %v114, %v851
  %853 = vmatmul.bf16.gmra.mxu0 %v255
  %v854 = vpop.f32.mrf.mxu0
  %v855 = vadd.f32 %v114, %v854
  %v856 = vpop.f32.mrf.mxu0
  %v857 = vadd.f32 %v114, %v856
  %858 = vmatmul.bf16.gmra.mxu0 %v256
  %v859 = vpop.f32.mrf.mxu0
  %v860 = vadd.f32 %v114, %v859
  %v861 = vpop.f32.mrf.mxu0
  %v862 = vadd.f32 %v114, %v861
  %863 = vmatmul.bf16.gmra.mxu0 %v257
  %v864 = vpop.f32.mrf.mxu0
  %v865 = vadd.f32 %v114, %v864
  %v866 = vpop.f32.mrf.mxu0
  %v867 = vadd.f32 %v114, %v866
  %868 = vmatmul.bf16.gmra.mxu0 %v258
  %v869 = vpop.f32.mrf.mxu0
  %v870 = vadd.f32 %v114, %v869
  %v871 = vpop.f32.mrf.mxu0
  %v872 = vadd.f32 %v114, %v871
  %873 = vmatmul.bf16.gmra.mxu0 %v259
  %v874 = vpop.f32.mrf.mxu0
  %v875 = vadd.f32 %v114, %v874
  %v876 = vpop.f32.mrf.mxu0
  %v877 = vadd.f32 %v114, %v876
  %878 = vmatmul.bf16.gmra.mxu0 %v260
  %v879 = vpop.f32.mrf.mxu0
  %v880 = vadd.f32 %v114, %v879
  %v881 = vpop.f32.mrf.mxu0
  %v882 = vadd.f32 %v114, %v881
  %883 = vmatmul.bf16.gmra.mxu0 %v261
  %v884 = vpop.f32.mrf.mxu0
  %v885 = vadd.f32 %v114, %v884
  %v886 = vpop.f32.mrf.mxu0
  %v887 = vadd.f32 %v114, %v886
  %888 = vmatmul.bf16.gmra.mxu0 %v262
  %v889 = vpop.f32.mrf.mxu0
  %v890 = vadd.f32 %v114, %v889
  %v891 = vpop.f32.mrf.mxu0
  %v892 = vadd.f32 %v114, %v891
  %893 = vmatmul.bf16.gmra.mxu0 %v263
  %v894 = vpop.f32.mrf.mxu0
  %v895 = vadd.f32 %v114, %v894
  %v896 = vpop.f32.mrf.mxu0
  %v897 = vadd.f32 %v114, %v896
  %898 = vmatmul.bf16.gmra.mxu0 %v264
  %v899 = vpop.f32.mrf.mxu0
  %v900 = vadd.f32 %v114, %v899
  %v901 = vpop.f32.mrf.mxu0
  %v902 = vadd.f32 %v114, %v901
  %903 = vmatmul.bf16.gmra.mxu0 %v265
  %v904 = vpop.f32.mrf.mxu0
  %v905 = vadd.f32 %v114, %v904
  %v906 = vpop.f32.mrf.mxu0
  %v907 = vadd.f32 %v114, %v906
  %908 = vmatmul.bf16.gmra.mxu0 %v266
  %v909 = vpop.f32.mrf.mxu0
  %v910 = vadd.f32 %v114, %v909
  %v911 = vpop.f32.mrf.mxu0
  %v912 = vadd.f32 %v114, %v911
  %913 = vmatmul.bf16.gmra.mxu0 %v267
  %v914 = vpop.f32.mrf.mxu0
  %v915 = vadd.f32 %v114, %v914
  %v916 = vpop.f32.mrf.mxu0
  %v917 = vadd.f32 %v114, %v916
  %918 = vmatmul.bf16.gmra.mxu0 %v268
  %v919 = vpop.f32.mrf.mxu0
  %v920 = vadd.f32 %v114, %v919
  %v921 = vpop.f32.mrf.mxu0
  %v922 = vadd.f32 %v114, %v921
  %923 = vmatmul.bf16.gmra.mxu0 %v269
  %v924 = vpop.f32.mrf.mxu0
  %v925 = vadd.f32 %v114, %v924
  %v926 = vpop.f32.mrf.mxu0
  %v927 = vadd.f32 %v114, %v926
  %928 = vmatmul.bf16.gmra.mxu0 %v270
  %v929 = vpop.f32.mrf.mxu0
  %v930 = vadd.f32 %v114, %v929
  %v931 = vpop.f32.mrf.mxu0
  %v932 = vadd.f32 %v114, %v931
  %933 = vmatmul.bf16.gmra.mxu0 %v271
  %v934 = vpop.f32.mrf.mxu0
  %v935 = vadd.f32 %v114, %v934
  %v936 = vpop.f32.mrf.mxu0
  %v937 = vadd.f32 %v114, %v936
  %938 = vmatmul.bf16.gmra.mxu0 %v272
  %v939 = vpop.f32.mrf.mxu0
  %v940 = vadd.f32 %v114, %v939
  %v941 = vpop.f32.mrf.mxu0
  %v942 = vadd.f32 %v114, %v941
  %943 = vmatmul.bf16.gmra.mxu0 %v273
  %v944 = vpop.f32.mrf.mxu0
  %v945 = vadd.f32 %v114, %v944
  %v946 = vpop.f32.mrf.mxu0
  %v947 = vadd.f32 %v114, %v946
  %948 = vmatmul.bf16.gmra.mxu0 %v274
  %v949 = vpop.f32.mrf.mxu0
  %v950 = vadd.f32 %v114, %v949
  %v951 = vpop.f32.mrf.mxu0
  %v952 = vadd.f32 %v114, %v951
  %953 = vmatmul.bf16.gmra.mxu0 %v275
  %v954 = vpop.f32.mrf.mxu0
  %v955 = vadd.f32 %v114, %v954
  %v956 = vpop.f32.mrf.mxu0
  %v957 = vadd.f32 %v114, %v956
  %958 = vmatmul.bf16.gmra.mxu0 %v276
  %v959 = vpop.f32.mrf.mxu0
  %v960 = vadd.f32 %v114, %v959
  %v961 = vpop.f32.mrf.mxu0
  %v962 = vadd.f32 %v114, %v961
  %963 = vmatmul.bf16.gmra.mxu0 %v277
  %v964 = vpop.f32.mrf.mxu0
  %v965 = vadd.f32 %v114, %v964
  %v966 = vpop.f32.mrf.mxu0
  %v967 = vadd.f32 %v114, %v966
  %968 = vmatmul.bf16.gmra.mxu0 %v278
  %v969 = vpop.f32.mrf.mxu0
  %v970 = vadd.f32 %v114, %v969
  %v971 = vpop.f32.mrf.mxu0
  %v972 = vadd.f32 %v114, %v971
  %973 = vmatmul.bf16.gmra.mxu0 %v279
  %v974 = vpop.f32.mrf.mxu0
  %v975 = vadd.f32 %v114, %v974
  %v976 = vpop.f32.mrf.mxu0
  %v977 = vadd.f32 %v114, %v976
  %978 = vdwg.mxu0
  %979 = vmatpush.bf16.msra.mxu0 %v439
  %980 = vmatpush.bf16.msra.mxu0 %v435
  %981 = vmatpush.bf16.msra.mxu0 %v431
  %982 = vmatpush.bf16.msra.mxu0 %v427
  %983 = vmatpush.bf16.msra.mxu0 %v423
  %984 = vmatpush.bf16.msra.mxu0 %v419
  %985 = vmatpush.bf16.msra.mxu0 %v415
  %986 = vmatpush.bf16.msra.mxu0 %v411
  %987 = vmatmul.bf16.gmra.mxu0 %v248
  %v988 = vpop.f32.mrf.mxu0
  %v989 = vadd.f32 %v115, %v988
  %v990 = vpop.f32.mrf.mxu0
  %v991 = vadd.f32 %v115, %v990
  %992 = vmatmul.bf16.gmra.mxu0 %v249
  %v993 = vpop.f32.mrf.mxu0
  %v994 = vadd.f32 %v115, %v993
  %v995 = vpop.f32.mrf.mxu0
  %v996 = vadd.f32 %v115, %v995
  %997 = vmatmul.bf16.gmra.mxu0 %v250
  %v998 = vpop.f32.mrf.mxu0
  %v999 = vadd.f32 %v115, %v998
  %v1000 = vpop.f32.mrf.mxu0
  %v1001 = vadd.f32 %v115, %v1000
  %1002 = vmatmul.bf16.gmra.mxu0 %v251
  %v1003 = vpop.f32.mrf.mxu0
  %v1004 = vadd.f32 %v115, %v1003
  %v1005 = vpop.f32.mrf.mxu0
  %v1006 = vadd.f32 %v115, %v1005
  %1007 = vmatmul.bf16.gmra.mxu0 %v252
  %v1008 = vpop.f32.mrf.mxu0
  %v1009 = vadd.f32 %v115, %v1008
  %v1010 = vpop.f32.mrf.mxu0
  %v1011 = vadd.f32 %v115, %v1010
  %1012 = vmatmul.bf16.gmra.mxu0 %v253
  %v1013 = vpop.f32.mrf.mxu0
  %v1014 = vadd.f32 %v115, %v1013
  %v1015 = vpop.f32.mrf.mxu0
  %v1016 = vadd.f32 %v115, %v1015
  %1017 = vmatmul.bf16.gmra.mxu0 %v254
  %v1018 = vpop.f32.mrf.mxu0
  %v1019 = vadd.f32 %v115, %v1018
  %v1020 = vpop.f32.mrf.mxu0
  %v1021 = vadd.f32 %v115, %v1020
  %1022 = vmatmul.bf16.gmra.mxu0 %v255
  %v1023 = vpop.f32.mrf.mxu0
  %v1024 = vadd.f32 %v115, %v1023
  %v1025 = vpop.f32.mrf.mxu0
  %v1026 = vadd.f32 %v115, %v1025
  %1027 = vmatmul.bf16.gmra.mxu0 %v256
  %v1028 = vpop.f32.mrf.mxu0
  %v1029 = vadd.f32 %v115, %v1028
  %v1030 = vpop.f32.mrf.mxu0
  %v1031 = vadd.f32 %v115, %v1030
  %1032 = vmatmul.bf16.gmra.mxu0 %v257
  %v1033 = vpop.f32.mrf.mxu0
  %v1034 = vadd.f32 %v115, %v1033
  %v1035 = vpop.f32.mrf.mxu0
  %v1036 = vadd.f32 %v115, %v1035
  %1037 = vmatmul.bf16.gmra.mxu0 %v258
  %v1038 = vpop.f32.mrf.mxu0
  %v1039 = vadd.f32 %v115, %v1038
  %v1040 = vpop.f32.mrf.mxu0
  %v1041 = vadd.f32 %v115, %v1040
  %1042 = vmatmul.bf16.gmra.mxu0 %v259
  %v1043 = vpop.f32.mrf.mxu0
  %v1044 = vadd.f32 %v115, %v1043
  %v1045 = vpop.f32.mrf.mxu0
  %v1046 = vadd.f32 %v115, %v1045
  %1047 = vmatmul.bf16.gmra.mxu0 %v260
  %v1048 = vpop.f32.mrf.mxu0
  %v1049 = vadd.f32 %v115, %v1048
  %v1050 = vpop.f32.mrf.mxu0
  %v1051 = vadd.f32 %v115, %v1050
  %1052 = vmatmul.bf16.gmra.mxu0 %v261
  %v1053 = vpop.f32.mrf.mxu0
  %v1054 = vadd.f32 %v115, %v1053
  %v1055 = vpop.f32.mrf.mxu0
  %v1056 = vadd.f32 %v115, %v1055
  %1057 = vmatmul.bf16.gmra.mxu0 %v262
  %v1058 = vpop.f32.mrf.mxu0
  %v1059 = vadd.f32 %v115, %v1058
  %v1060 = vpop.f32.mrf.mxu0
  %v1061 = vadd.f32 %v115, %v1060
  %1062 = vmatmul.bf16.gmra.mxu0 %v263
  %v1063 = vpop.f32.mrf.mxu0
  %v1064 = vadd.f32 %v115, %v1063
  %v1065 = vpop.f32.mrf.mxu0
  %v1066 = vadd.f32 %v115, %v1065
  %1067 = vmatmul.bf16.gmra.mxu0 %v264
  %v1068 = vpop.f32.mrf.mxu0
  %v1069 = vadd.f32 %v115, %v1068
  %v1070 = vpop.f32.mrf.mxu0
  %v1071 = vadd.f32 %v115, %v1070
  %1072 = vmatmul.bf16.gmra.mxu0 %v265
  %v1073 = vpop.f32.mrf.mxu0
  %v1074 = vadd.f32 %v115, %v1073
  %v1075 = vpop.f32.mrf.mxu0
  %v1076 = vadd.f32 %v115, %v1075
  %1077 = vmatmul.bf16.gmra.mxu0 %v266
  %v1078 = vpop.f32.mrf.mxu0
  %v1079 = vadd.f32 %v115, %v1078
  %v1080 = vpop.f32.mrf.mxu0
  %v1081 = vadd.f32 %v115, %v1080
  %1082 = vmatmul.bf16.gmra.mxu0 %v267
  %v1083 = vpop.f32.mrf.mxu0
  %v1084 = vadd.f32 %v115, %v1083
  %v1085 = vpop.f32.mrf.mxu0
  %v1086 = vadd.f32 %v115, %v1085
  %1087 = vmatmul.bf16.gmra.mxu0 %v268
  %v1088 = vpop.f32.mrf.mxu0
  %v1089 = vadd.f32 %v115, %v1088
  %v1090 = vpop.f32.mrf.mxu0
  %v1091 = vadd.f32 %v115, %v1090
  %1092 = vmatmul.bf16.gmra.mxu0 %v269
  %v1093 = vpop.f32.mrf.mxu0
  %v1094 = vadd.f32 %v115, %v1093
  %v1095 = vpop.f32.mrf.mxu0
  %v1096 = vadd.f32 %v115, %v1095
  %1097 = vmatmul.bf16.gmra.mxu0 %v270
  %v1098 = vpop.f32.mrf.mxu0
  %v1099 = vadd.f32 %v115, %v1098
  %v1100 = vpop.f32.mrf.mxu0
  %v1101 = vadd.f32 %v115, %v1100
  %1102 = vmatmul.bf16.gmra.mxu0 %v271
  %v1103 = vpop.f32.mrf.mxu0
  %v1104 = vadd.f32 %v115, %v1103
  %v1105 = vpop.f32.mrf.mxu0
  %v1106 = vadd.f32 %v115, %v1105
  %1107 = vmatmul.bf16.gmra.mxu0 %v272
  %v1108 = vpop.f32.mrf.mxu0
  %v1109 = vadd.f32 %v115, %v1108
  %v1110 = vpop.f32.mrf.mxu0
  %v1111 = vadd.f32 %v115, %v1110
  %1112 = vmatmul.bf16.gmra.mxu0 %v273
  %v1113 = vpop.f32.mrf.mxu0
  %v1114 = vadd.f32 %v115, %v1113
  %v1115 = vpop.f32.mrf.mxu0
  %v1116 = vadd.f32 %v115, %v1115
  %1117 = vmatmul.bf16.gmra.mxu0 %v274
  %v1118 = vpop.f32.mrf.mxu0
  %v1119 = vadd.f32 %v115, %v1118
  %v1120 = vpop.f32.mrf.mxu0
  %v1121 = vadd.f32 %v115, %v1120
  %1122 = vmatmul.bf16.gmra.mxu0 %v275
  %v1123 = vpop.f32.mrf.mxu0
  %v1124 = vadd.f32 %v115, %v1123
  %v1125 = vpop.f32.mrf.mxu0
  %v1126 = vadd.f32 %v115, %v1125
  %1127 = vmatmul.bf16.gmra.mxu0 %v276
  %v1128 = vpop.f32.mrf.mxu0
  %v1129 = vadd.f32 %v115, %v1128
  %v1130 = vpop.f32.mrf.mxu0
  %v1131 = vadd.f32 %v115, %v1130
  %1132 = vmatmul.bf16.gmra.mxu0 %v277
  %v1133 = vpop.f32.mrf.mxu0
  %v1134 = vadd.f32 %v115, %v1133
  %v1135 = vpop.f32.mrf.mxu0
  %v1136 = vadd.f32 %v115, %v1135
  %1137 = vmatmul.bf16.gmra.mxu0 %v278
  %v1138 = vpop.f32.mrf.mxu0
  %v1139 = vadd.f32 %v115, %v1138
  %v1140 = vpop.f32.mrf.mxu0
  %v1141 = vadd.f32 %v115, %v1140
  %1142 = vmatmul.bf16.gmra.mxu0 %v279
  %v1143 = vpop.f32.mrf.mxu0
  %v1144 = vadd.f32 %v115, %v1143
  %v1145 = vpop.f32.mrf.mxu0
  %v1146 = vadd.f32 %v115, %v1145
  %1147 = vdwg.mxu0
  %v1148 = vpack.c.bf16 %v651, %v482
  %v1149 = vpack.c.bf16 %v989, %v820
  %v1150 = vpack.c.bf16 %v653, %v484
  %v1151 = vpack.c.bf16 %v991, %v822
  %v1152 = vpack.c.bf16 %v656, %v487
  %v1153 = vpack.c.bf16 %v994, %v825
  %v1154 = vpack.c.bf16 %v658, %v489
  %v1155 = vpack.c.bf16 %v996, %v827
  %v1156 = vpack.c.bf16 %v661, %v492
  %v1157 = vpack.c.bf16 %v999, %v830
  %v1158 = vpack.c.bf16 %v663, %v494
  %v1159 = vpack.c.bf16 %v1001, %v832
  %v1160 = vpack.c.bf16 %v666, %v497
  %v1161 = vpack.c.bf16 %v1004, %v835
  %v1162 = vpack.c.bf16 %v668, %v499
  %v1163 = vpack.c.bf16 %v1006, %v837
  %v1164 = vpack.c.bf16 %v671, %v502
  %v1165 = vpack.c.bf16 %v1009, %v840
  %v1166 = vpack.c.bf16 %v673, %v504
  %v1167 = vpack.c.bf16 %v1011, %v842
  %v1168 = vpack.c.bf16 %v676, %v507
  %v1169 = vpack.c.bf16 %v1014, %v845
  %v1170 = vpack.c.bf16 %v678, %v509
  %v1171 = vpack.c.bf16 %v1016, %v847
  %v1172 = vpack.c.bf16 %v681, %v512
  %v1173 = vpack.c.bf16 %v1019, %v850
  %v1174 = vpack.c.bf16 %v683, %v514
  %v1175 = vpack.c.bf16 %v1021, %v852
  %v1176 = vpack.c.bf16 %v686, %v517
  %v1177 = vpack.c.bf16 %v1024, %v855
  %v1178 = vpack.c.bf16 %v688, %v519
  %v1179 = vpack.c.bf16 %v1026, %v857
  %v1180 = vpack.c.bf16 %v691, %v522
  %v1181 = vpack.c.bf16 %v1029, %v860
  %v1182 = vpack.c.bf16 %v693, %v524
  %v1183 = vpack.c.bf16 %v1031, %v862
  %v1184 = vpack.c.bf16 %v696, %v527
  %v1185 = vpack.c.bf16 %v1034, %v865
  %v1186 = vpack.c.bf16 %v698, %v529
  %v1187 = vpack.c.bf16 %v1036, %v867
  %v1188 = vpack.c.bf16 %v701, %v532
  %v1189 = vpack.c.bf16 %v1039, %v870
  %v1190 = vpack.c.bf16 %v703, %v534
  %v1191 = vpack.c.bf16 %v1041, %v872
  %v1192 = vpack.c.bf16 %v706, %v537
  %v1193 = vpack.c.bf16 %v1044, %v875
  %v1194 = vpack.c.bf16 %v708, %v539
  %v1195 = vpack.c.bf16 %v1046, %v877
  %v1196 = vpack.c.bf16 %v711, %v542
  %v1197 = vpack.c.bf16 %v1049, %v880
  %v1198 = vpack.c.bf16 %v713, %v544
  %v1199 = vpack.c.bf16 %v1051, %v882
  %v1200 = vpack.c.bf16 %v716, %v547
  %v1201 = vpack.c.bf16 %v1054, %v885
  %v1202 = vpack.c.bf16 %v718, %v549
  %v1203 = vpack.c.bf16 %v1056, %v887
  %v1204 = vpack.c.bf16 %v721, %v552
  %v1205 = vpack.c.bf16 %v1059, %v890
  %v1206 = vpack.c.bf16 %v723, %v554
  %v1207 = vpack.c.bf16 %v1061, %v892
  %v1208 = vpack.c.bf16 %v726, %v557
  %v1209 = vpack.c.bf16 %v1064, %v895
  %v1210 = vpack.c.bf16 %v728, %v559
  %v1211 = vpack.c.bf16 %v1066, %v897
  %v1212 = vpack.c.bf16 %v731, %v562
  %v1213 = vpack.c.bf16 %v1069, %v900
  %v1214 = vpack.c.bf16 %v733, %v564
  %v1215 = vpack.c.bf16 %v1071, %v902
  %v1216 = vpack.c.bf16 %v736, %v567
  %v1217 = vpack.c.bf16 %v1074, %v905
  %v1218 = vpack.c.bf16 %v738, %v569
  %v1219 = vpack.c.bf16 %v1076, %v907
  %v1220 = vpack.c.bf16 %v741, %v572
  %v1221 = vpack.c.bf16 %v1079, %v910
  %v1222 = vpack.c.bf16 %v743, %v574
  %v1223 = vpack.c.bf16 %v1081, %v912
  %v1224 = vpack.c.bf16 %v746, %v577
  %v1225 = vpack.c.bf16 %v1084, %v915
  %v1226 = vpack.c.bf16 %v748, %v579
  %v1227 = vpack.c.bf16 %v1086, %v917
  %v1228 = vpack.c.bf16 %v751, %v582
  %v1229 = vpack.c.bf16 %v1089, %v920
  %v1230 = vpack.c.bf16 %v753, %v584
  %v1231 = vpack.c.bf16 %v1091, %v922
  %v1232 = vpack.c.bf16 %v756, %v587
  %v1233 = vpack.c.bf16 %v1094, %v925
  %v1234 = vpack.c.bf16 %v758, %v589
  %v1235 = vpack.c.bf16 %v1096, %v927
  %v1236 = vpack.c.bf16 %v761, %v592
  %v1237 = vpack.c.bf16 %v1099, %v930
  %v1238 = vpack.c.bf16 %v763, %v594
  %v1239 = vpack.c.bf16 %v1101, %v932
  %v1240 = vpack.c.bf16 %v766, %v597
  %v1241 = vpack.c.bf16 %v1104, %v935
  %v1242 = vpack.c.bf16 %v768, %v599
  %v1243 = vpack.c.bf16 %v1106, %v937
  %v1244 = vpack.c.bf16 %v771, %v602
  %v1245 = vpack.c.bf16 %v1109, %v940
  %v1246 = vpack.c.bf16 %v773, %v604
  %v1247 = vpack.c.bf16 %v1111, %v942
  %v1248 = vpack.c.bf16 %v776, %v607
  %v1249 = vpack.c.bf16 %v1114, %v945
  %v1250 = vpack.c.bf16 %v778, %v609
  %v1251 = vpack.c.bf16 %v1116, %v947
  %v1252 = vpack.c.bf16 %v781, %v612
  %v1253 = vpack.c.bf16 %v1119, %v950
  %v1254 = vpack.c.bf16 %v783, %v614
  %v1255 = vpack.c.bf16 %v1121, %v952
  %v1256 = vpack.c.bf16 %v786, %v617
  %v1257 = vpack.c.bf16 %v1124, %v955
  %v1258 = vpack.c.bf16 %v788, %v619
  %v1259 = vpack.c.bf16 %v1126, %v957
  %v1260 = vpack.c.bf16 %v791, %v622
  %v1261 = vpack.c.bf16 %v1129, %v960
  %v1262 = vpack.c.bf16 %v793, %v624
  %v1263 = vpack.c.bf16 %v1131, %v962
  %v1264 = vpack.c.bf16 %v796, %v627
  %v1265 = vpack.c.bf16 %v1134, %v965
  %v1266 = vpack.c.bf16 %v798, %v629
  %v1267 = vpack.c.bf16 %v1136, %v967
  %v1268 = vpack.c.bf16 %v801, %v632
  %v1269 = vpack.c.bf16 %v1139, %v970
  %v1270 = vpack.c.bf16 %v803, %v634
  %v1271 = vpack.c.bf16 %v1141, %v972
  %v1272 = vpack.c.bf16 %v806, %v637
  %v1273 = vpack.c.bf16 %v1144, %v975
  %v1274 = vpack.c.bf16 %v808, %v639
  %v1275 = vpack.c.bf16 %v1146, %v977
  %1276 = vst [vmem:[%s3] sm:$0xff] %v1148
  %1277 = vst [vmem:[%s3 + $0x8] sm:$0xff] %v1149
  %1278 = vst [vmem:[%s3 + $0x10] sm:$0xff] %v1150
  %1279 = vst [vmem:[%s3 + $0x18] sm:$0xff] %v1151
  %1280 = vst [vmem:[%s3 + $0x20] sm:$0xff] %v1152
  %1281 = vst [vmem:[%s3 + $0x28] sm:$0xff] %v1153
  %1282 = vst [vmem:[%s3 + $0x30] sm:$0xff] %v1154
  %1283 = vst [vmem:[%s3 + $0x38] sm:$0xff] %v1155
  %1284 = vst [vmem:[%s3 + $0x40] sm:$0xff] %v1156
  %1285 = vst [vmem:[%s3 + $0x48] sm:$0xff] %v1157
  %1286 = vst [vmem:[%s3 + $0x50] sm:$0xff] %v1158
  %1287 = vst [vmem:[%s3 + $0x58] sm:$0xff] %v1159
  %1288 = vst [vmem:[%s3 + $0x60] sm:$0xff] %v1160
  %1289 = vst [vmem:[%s3 + $0x68] sm:$0xff] %v1161
  %1290 = vst [vmem:[%s3 + $0x70] sm:$0xff] %v1162
  %1291 = vst [vmem:[%s3 + $0x78] sm:$0xff] %v1163
  %1292 = vst [vmem:[%s3 + $0x80] sm:$0xff] %v1164
  %1293 = vst [vmem:[%s3 + $0x88] sm:$0xff] %v1165
  %1294 = vst [vmem:[%s3 + $0x90] sm:$0xff] %v1166
  %1295 = vst [vmem:[%s3 + $0x98] sm:$0xff] %v1167
  %1296 = vst [vmem:[%s3 + $0xa0] sm:$0xff] %v1168
  %1297 = vst [vmem:[%s3 + $0xa8] sm:$0xff] %v1169
  %1298 = vst [vmem:[%s3 + $0xb0] sm:$0xff] %v1170
  %1299 = vst [vmem:[%s3 + $0xb8] sm:$0xff] %v1171
  %1300 = vst [vmem:[%s3 + $0xc0] sm:$0xff] %v1172
  %1301 = vst [vmem:[%s3 + $0xc8] sm:$0xff] %v1173
  %1302 = vst [vmem:[%s3 + $0xd0] sm:$0xff] %v1174
  %1303 = vst [vmem:[%s3 + $0xd8] sm:$0xff] %v1175
  %1304 = vst [vmem:[%s3 + $0xe0] sm:$0xff] %v1176
  %1305 = vst [vmem:[%s3 + $0xe8] sm:$0xff] %v1177
  %1306 = vst [vmem:[%s3 + $0xf0] sm:$0xff] %v1178
  %1307 = vst [vmem:[%s3 + $0xf8] sm:$0xff] %v1179
  %1308 = vst [vmem:[%s3 + $0x100] sm:$0xff] %v1180
  %1309 = vst [vmem:[%s3 + $0x108] sm:$0xff] %v1181
  %1310 = vst [vmem:[%s3 + $0x110] sm:$0xff] %v1182
  %1311 = vst [vmem:[%s3 + $0x118] sm:$0xff] %v1183
  %1312 = vst [vmem:[%s3 + $0x120] sm:$0xff] %v1184
  %1313 = vst [vmem:[%s3 + $0x128] sm:$0xff] %v1185
  %1314 = vst [vmem:[%s3 + $0x130] sm:$0xff] %v1186
  %1315 = vst [vmem:[%s3 + $0x138] sm:$0xff] %v1187
  %1316 = vst [vmem:[%s3 + $0x140] sm:$0xff] %v1188
  %1317 = vst [vmem:[%s3 + $0x148] sm:$0xff] %v1189
  %1318 = vst [vmem:[%s3 + $0x150] sm:$0xff] %v1190
  %1319 = vst [vmem:[%s3 + $0x158] sm:$0xff] %v1191
  %1320 = vst [vmem:[%s3 + $0x160] sm:$0xff] %v1192
  %1321 = vst [vmem:[%s3 + $0x168] sm:$0xff] %v1193
  %1322 = vst [vmem:[%s3 + $0x170] sm:$0xff] %v1194
  %1323 = vst [vmem:[%s3 + $0x178] sm:$0xff] %v1195
  %1324 = vst [vmem:[%s3 + $0x180] sm:$0xff] %v1196
  %1325 = vst [vmem:[%s3 + $0x188] sm:$0xff] %v1197
  %1326 = vst [vmem:[%s3 + $0x190] sm:$0xff] %v1198
  %1327 = vst [vmem:[%s3 + $0x198] sm:$0xff] %v1199
  %1328 = vst [vmem:[%s3 + $0x1a0] sm:$0xff] %v1200
  %1329 = vst [vmem:[%s3 + $0x1a8] sm:$0xff] %v1201
  %1330 = vst [vmem:[%s3 + $0x1b0] sm:$0xff] %v1202
  %1331 = vst [vmem:[%s3 + $0x1b8] sm:$0xff] %v1203
  %1332 = vst [vmem:[%s3 + $0x1c0] sm:$0xff] %v1204
  %1333 = vst [vmem:[%s3 + $0x1c8] sm:$0xff] %v1205
  %1334 = vst [vmem:[%s3 + $0x1d0] sm:$0xff] %v1206
  %1335 = vst [vmem:[%s3 + $0x1d8] sm:$0xff] %v1207
  %1336 = vst [vmem:[%s3 + $0x1e0] sm:$0xff] %v1208
  %1337 = vst [vmem:[%s3 + $0x1e8] sm:$0xff] %v1209
  %1338 = vst [vmem:[%s3 + $0x1f0] sm:$0xff] %v1210
  %1339 = vst [vmem:[%s3 + $0x1f8] sm:$0xff] %v1211
  %1340 = vst [vmem:[%s3 + $0x200] sm:$0xff] %v1212
  %1341 = vst [vmem:[%s3 + $0x208] sm:$0xff] %v1213
  %1342 = vst [vmem:[%s3 + $0x210] sm:$0xff] %v1214
  %1343 = vst [vmem:[%s3 + $0x218] sm:$0xff] %v1215
  %1344 = vst [vmem:[%s3 + $0x220] sm:$0xff] %v1216
  %1345 = vst [vmem:[%s3 + $0x228] sm:$0xff] %v1217
  %1346 = vst [vmem:[%s3 + $0x230] sm:$0xff] %v1218
  %1347 = vst [vmem:[%s3 + $0x238] sm:$0xff] %v1219
  %1348 = vst [vmem:[%s3 + $0x240] sm:$0xff] %v1220
  %1349 = vst [vmem:[%s3 + $0x248] sm:$0xff] %v1221
  %1350 = vst [vmem:[%s3 + $0x250] sm:$0xff] %v1222
  %1351 = vst [vmem:[%s3 + $0x258] sm:$0xff] %v1223
  %1352 = vst [vmem:[%s3 + $0x260] sm:$0xff] %v1224
  %1353 = vst [vmem:[%s3 + $0x268] sm:$0xff] %v1225
  %1354 = vst [vmem:[%s3 + $0x270] sm:$0xff] %v1226
  %1355 = vst [vmem:[%s3 + $0x278] sm:$0xff] %v1227
  %1356 = vst [vmem:[%s3 + $0x280] sm:$0xff] %v1228
  %1357 = vst [vmem:[%s3 + $0x288] sm:$0xff] %v1229
  %1358 = vst [vmem:[%s3 + $0x290] sm:$0xff] %v1230
  %1359 = vst [vmem:[%s3 + $0x298] sm:$0xff] %v1231
  %1360 = vst [vmem:[%s3 + $0x2a0] sm:$0xff] %v1232
  %1361 = vst [vmem:[%s3 + $0x2a8] sm:$0xff] %v1233
  %1362 = vst [vmem:[%s3 + $0x2b0] sm:$0xff] %v1234
  %1363 = vst [vmem:[%s3 + $0x2b8] sm:$0xff] %v1235
  %1364 = vst [vmem:[%s3 + $0x2c0] sm:$0xff] %v1236
  %1365 = vst [vmem:[%s3 + $0x2c8] sm:$0xff] %v1237
  %1366 = vst [vmem:[%s3 + $0x2d0] sm:$0xff] %v1238
  %1367 = vst [vmem:[%s3 + $0x2d8] sm:$0xff] %v1239
  %1368 = vst [vmem:[%s3 + $0x2e0] sm:$0xff] %v1240
  %1369 = vst [vmem:[%s3 + $0x2e8] sm:$0xff] %v1241
  %1370 = vst [vmem:[%s3 + $0x2f0] sm:$0xff] %v1242
  %1371 = vst [vmem:[%s3 + $0x2f8] sm:$0xff] %v1243
  %1372 = vst [vmem:[%s3 + $0x300] sm:$0xff] %v1244
  %1373 = vst [vmem:[%s3 + $0x308] sm:$0xff] %v1245
  %1374 = vst [vmem:[%s3 + $0x310] sm:$0xff] %v1246
  %1375 = vst [vmem:[%s3 + $0x318] sm:$0xff] %v1247
  %1376 = vst [vmem:[%s3 + $0x320] sm:$0xff] %v1248
  %1377 = vst [vmem:[%s3 + $0x328] sm:$0xff] %v1249
  %1378 = vst [vmem:[%s3 + $0x330] sm:$0xff] %v1250
  %1379 = vst [vmem:[%s3 + $0x338] sm:$0xff] %v1251
  %1380 = vst [vmem:[%s3 + $0x340] sm:$0xff] %v1252
  %1381 = vst [vmem:[%s3 + $0x348] sm:$0xff] %v1253
  %1382 = vst [vmem:[%s3 + $0x350] sm:$0xff] %v1254
  %1383 = vst [vmem:[%s3 + $0x358] sm:$0xff] %v1255
  %1384 = vst [vmem:[%s3 + $0x360] sm:$0xff] %v1256
  %1385 = vst [vmem:[%s3 + $0x368] sm:$0xff] %v1257
  %1386 = vst [vmem:[%s3 + $0x370] sm:$0xff] %v1258
  %1387 = vst [vmem:[%s3 + $0x378] sm:$0xff] %v1259
  %1388 = vst [vmem:[%s3 + $0x380] sm:$0xff] %v1260
  %1389 = vst [vmem:[%s3 + $0x388] sm:$0xff] %v1261
  %1390 = vst [vmem:[%s3 + $0x390] sm:$0xff] %v1262
  %1391 = vst [vmem:[%s3 + $0x398] sm:$0xff] %v1263
  %1392 = vst [vmem:[%s3 + $0x3a0] sm:$0xff] %v1264
  %1393 = vst [vmem:[%s3 + $0x3a8] sm:$0xff] %v1265
  %1394 = vst [vmem:[%s3 + $0x3b0] sm:$0xff] %v1266
  %1395 = vst [vmem:[%s3 + $0x3b8] sm:$0xff] %v1267
  %1396 = vst [vmem:[%s3 + $0x3c0] sm:$0xff] %v1268
  %1397 = vst [vmem:[%s3 + $0x3c8] sm:$0xff] %v1269
  %1398 = vst [vmem:[%s3 + $0x3d0] sm:$0xff] %v1270
  %1399 = vst [vmem:[%s3 + $0x3d8] sm:$0xff] %v1271
  %1400 = vst [vmem:[%s3 + $0x3e0] sm:$0xff] %v1272
  %1401 = vst [vmem:[%s3 + $0x3e8] sm:$0xff] %v1273
  %1402 = vst [vmem:[%s3 + $0x3f0] sm:$0xff] %v1274
  %1403 = vst [vmem:[%s3 + $0x3f8] sm:$0xff] %v1275
  // Predicated region
  $region14: #{decoder_rnn_forward.3} parent=0 // pred_check
    _
  $region15: #{decoder_rnn_forward.3} parent=0 // pred_check_branch
    %1405 = sbr.rel (0) target = $region17
  $region16: #{decoder_rnn_forward.3} parent=0 // pred_region
    _
  $region17: #{decoder_rnn_forward.3} parent=0 // pred_fallthru
    _
  // Predicated region
  $region18: #{decoder_rnn_forward.3} parent=0 // pred_check
    _
  $region19: #{decoder_rnn_forward.3} parent=0 // pred_check_branch
    %1407 = sbr.rel (0) target = $region21
  $region20: #{decoder_rnn_forward.3} parent=0 // pred_region
    _
  $region21: #{decoder_rnn_forward.3} parent=0 // pred_fallthru
    _

// kernel: decoder_rnn_forward.4
$region0: #{decoder_rnn_forward.4}
  #allocation0 [shape = 'u32[]', space=smem, size = 0x4, offset = 0x4, fixed_abs, tag = 'smem constant byte address 0x4 - core index']
  #allocation1 [shape = 'u32[72,128]{1,0:T(1,128)}', space=vmem, size = 0x9000, scoped, tag = 'internal scratch']
  #allocation2 [shape = 'f32[8,128]{1,0:T(8,128)}', space=vmem, size = 0x1000, scoped, tag = 'scratch operand']
  #allocation3 [shape = 'f32[8,128]{1,0:T(8,128)}', space=vmem, size = 0x1000, scoped, tag = 'scratch operand']
  %s0 = inlined_call_operand.vmem [shape: bf16[64,8,512], index: 0, kind: input, shape index: {}]
  %s1 = inlined_call_operand.vmem [shape: bf16[128,512], index: 1, kind: input, shape index: {}]
  %s2 = inlined_call_operand.vmem [shape: bf16[16,8,128], index: 2, kind: output, shape index: {}]
  %s3 = sld [smem:[#allocation0]]
  $region22: #{decoder_rnn_forward.4} parent=0
    _
  %s5 = ssub.s32 1, %s3
  %s6 = scalar_select 0, %s5, %s3
  // Predicated region
  $region2: #{decoder_rnn_forward.4} parent=0 // pred_check
    _
  $region3: #{decoder_rnn_forward.4} parent=0 // pred_check_branch
    %8 = sbr.rel (0) target = $region5
  $region4: #{decoder_rnn_forward.4} parent=0 // pred_region
    _
  $region5: #{decoder_rnn_forward.4} parent=0 // pred_fallthru
    _
  // Predicated region
  $region6: #{decoder_rnn_forward.4} parent=0 // pred_check
    _
  $region7: #{decoder_rnn_forward.4} parent=0 // pred_check_branch
    %10 = sbr.rel (0) target = $region9
  $region8: #{decoder_rnn_forward.4} parent=0 // pred_region
    _
  $region9: #{decoder_rnn_forward.4} parent=0 // pred_fallthru
    _
  %p11 = scmp.eq.s32.totalorder 0, 0
  // Predicated region
  $region10: #{decoder_rnn_forward.4} parent=0 // pred_check
    %p12 = pneg %p11
  $region11: #{decoder_rnn_forward.4} parent=0 // pred_check_branch
    %14 = sbr.rel (%p12) target = $region13
  $region12: #{decoder_rnn_forward.4} parent=0 // pred_region
    %15 = vst [vmem:[#allocation2] sm:$0xff] 0.0
    %16 = vst [vmem:[#allocation3] sm:$0xff] 0.0
  $region13: #{decoder_rnn_forward.4} parent=0 // pred_fallthru
    _
  %v17 = vld [vmem:[%s0] sm:$0xff]
  %v18 = vld [vmem:[%s0 + $0x8] sm:$0xff]
  %v19 = vunpack.c.l.bf16 %v17
  %v20 = vunpack.c.h.bf16 %v17
  %v21 = vunpack.c.l.bf16 %v18
  %v22 = vunpack.c.h.bf16 %v18
  %v23 = vld [vmem:[#allocation2] sm:$0xff]
  %v24 = vpack.c.bf16 %v23, %v23
  %v25 = vld [vmem:[%s1] sm:$0xff]
  %v26 = vld [vmem:[%s1 + $0x8] sm:$0xff]
  %v27 = vld [vmem:[%s1 + $0x10] sm:$0xff]
  %v28 = vld [vmem:[%s1 + $0x18] sm:$0xff]
  %v29 = vld [vmem:[%s1 + $0x20] sm:$0xff]
  %v30 = vld [vmem:[%s1 + $0x28] sm:$0xff]
  %v31 = vld [vmem:[%s1 + $0x30] sm:$0xff]
  %v32 = vld [vmem:[%s1 + $0x38] sm:$0xff]
  %v33 = vld [vmem:[%s1 + $0x40] sm:$0xff]
  %v34 = vld [vmem:[%s1 + $0x48] sm:$0xff]
  %v35 = vld [vmem:[%s1 + $0x50] sm:$0xff]
  %v36 = vld [vmem:[%s1 + $0x58] sm:$0xff]
  %v37 = vld [vmem:[%s1 + $0x60] sm:$0xff]
  %v38 = vld [vmem:[%s1 + $0x68] sm:$0xff]
  %v39 = vld [vmem:[%s1 + $0x70] sm:$0xff]
  %v40 = vld [vmem:[%s1 + $0x78] sm:$0xff]
  %v41 = vld [vmem:[%s1 + $0x80] sm:$0xff]
  %v42 = vld [vmem:[%s1 + $0x88] sm:$0xff]
  %v43 = vld [vmem:[%s1 + $0x90] sm:$0xff]
  %v44 = vld [vmem:[%s1 + $0x98] sm:$0xff]
  %v45 = vld [vmem:[%s1 + $0xa0] sm:$0xff]
  %v46 = vld [vmem:[%s1 + $0xa8] sm:$0xff]
  %v47 = vld [vmem:[%s1 + $0xb0] sm:$0xff]
  %v48 = vld [vmem:[%s1 + $0xb8] sm:$0xff]
  %v49 = vld [vmem:[%s1 + $0xc0] sm:$0xff]
  %v50 = vld [vmem:[%s1 + $0xc8] sm:$0xff]
  %v51 = vld [vmem:[%s1 + $0xd0] sm:$0xff]
  %v52 = vld [vmem:[%s1 + $0xd8] sm:$0xff]
  %v53 = vld [vmem:[%s1 + $0xe0] sm:$0xff]
  %v54 = vld [vmem:[%s1 + $0xe8] sm:$0xff]
  %v55 = vld [vmem:[%s1 + $0xf0] sm:$0xff]
  %v56 = vld [vmem:[%s1 + $0xf8] sm:$0xff]
  %v89 = vunpack.c.l.b16 %v25
  %v90 = vunpack.c.h.b16 %v25
  %v91 = vunpack.c.l.b16 %v26
  %v92 = vunpack.c.h.b16 %v26
  %v93 = vunpack.c.l.b16 %v27
  %v94 = vunpack.c.h.b16 %v27
  %v95 = vunpack.c.l.b16 %v28
  %v96 = vunpack.c.h.b16 %v28
  %v97 = vunpack.c.l.b16 %v29
  %v98 = vunpack.c.h.b16 %v29
  %v99 = vunpack.c.l.b16 %v30
  %v100 = vunpack.c.h.b16 %v30
  %v101 = vunpack.c.l.b16 %v31
  %v102 = vunpack.c.h.b16 %v31
  %v103 = vunpack.c.l.b16 %v32
  %v104 = vunpack.c.h.b16 %v32
  %v105 = vunpack.c.l.b16 %v33
  %v106 = vunpack.c.h.b16 %v33
  %v107 = vunpack.c.l.b16 %v34
  %v108 = vunpack.c.h.b16 %v34
  %v109 = vunpack.c.l.b16 %v35
  %v110 = vunpack.c.h.b16 %v35
  %v111 = vunpack.c.l.b16 %v36
  %v112 = vunpack.c.h.b16 %v36
  %v113 = vunpack.c.l.b16 %v37
  %v114 = vunpack.c.h.b16 %v37
  %v115 = vunpack.c.l.b16 %v38
  %v116 = vunpack.c.h.b16 %v38
  %v117 = vunpack.c.l.b16 %v39
  %v118 = vunpack.c.h.b16 %v39
  %v119 = vunpack.c.l.b16 %v40
  %v120 = vunpack.c.h.b16 %v40
  %v121 = vunpack.c.l.b16 %v41
  %v122 = vunpack.c.h.b16 %v41
  %v123 = vunpack.c.l.b16 %v42
  %v124 = vunpack.c.h.b16 %v42
  %v125 = vunpack.c.l.b16 %v43
  %v126 = vunpack.c.h.b16 %v43
  %v127 = vunpack.c.l.b16 %v44
  %v128 = vunpack.c.h.b16 %v44
  %v129 = vunpack.c.l.b16 %v45
  %v130 = vunpack.c.h.b16 %v45
  %v131 = vunpack.c.l.b16 %v46
  %v132 = vunpack.c.h.b16 %v46
  %v133 = vunpack.c.l.b16 %v47
  %v134 = vunpack.c.h.b16 %v47
  %v135 = vunpack.c.l.b16 %v48
  %v136 = vunpack.c.h.b16 %v48
  %v137 = vunpack.c.l.b16 %v49
  %v138 = vunpack.c.h.b16 %v49
  %v139 = vunpack.c.l.b16 %v50
  %v140 = vunpack.c.h.b16 %v50
  %v141 = vunpack.c.l.b16 %v51
  %v142 = vunpack.c.h.b16 %v51
  %v143 = vunpack.c.l.b16 %v52
  %v144 = vunpack.c.h.b16 %v52
  %v145 = vunpack.c.l.b16 %v53
  %v146 = vunpack.c.h.b16 %v53
  %v147 = vunpack.c.l.b16 %v54
  %v148 = vunpack.c.h.b16 %v54
  %v149 = vunpack.c.l.b16 %v55
  %v150 = vunpack.c.h.b16 %v55
  %v151 = vunpack.c.l.b16 %v56
  %v152 = vunpack.c.h.b16 %v56
  %v153 = vpack.c.b16 %v93, %v89
  %v154 = vpack.c.b16 %v94, %v90
  %v155 = vpack.c.b16 %v95, %v91
  %v156 = vpack.c.b16 %v96, %v92
  %v157 = vpack.c.b16 %v101, %v97
  %v158 = vpack.c.b16 %v102, %v98
  %v159 = vpack.c.b16 %v103, %v99
  %v160 = vpack.c.b16 %v104, %v100
  %v161 = vpack.c.b16 %v109, %v105
  %v162 = vpack.c.b16 %v110, %v106
  %v163 = vpack.c.b16 %v111, %v107
  %v164 = vpack.c.b16 %v112, %v108
  %v165 = vpack.c.b16 %v117, %v113
  %v166 = vpack.c.b16 %v118, %v114
  %v167 = vpack.c.b16 %v119, %v115
  %v168 = vpack.c.b16 %v120, %v116
  %v169 = vpack.c.b16 %v125, %v121
  %v170 = vpack.c.b16 %v126, %v122
  %v171 = vpack.c.b16 %v127, %v123
  %v172 = vpack.c.b16 %v128, %v124
  %v173 = vpack.c.b16 %v133, %v129
  %v174 = vpack.c.b16 %v134, %v130
  %v175 = vpack.c.b16 %v135, %v131
  %v176 = vpack.c.b16 %v136, %v132
  %v177 = vpack.c.b16 %v141, %v137
  %v178 = vpack.c.b16 %v142, %v138
  %v179 = vpack.c.b16 %v143, %v139
  %v180 = vpack.c.b16 %v144, %v140
  %v181 = vpack.c.b16 %v149, %v145
  %v182 = vpack.c.b16 %v150, %v146
  %v183 = vpack.c.b16 %v151, %v147
  %v184 = vpack.c.b16 %v152, %v148
  %217 = vmatpush.bf16.msra.mxu0 %v181
  %218 = vmatpush.bf16.msra.mxu0 %v177
  %219 = vmatpush.bf16.msra.mxu0 %v173
  %220 = vmatpush.bf16.msra.mxu0 %v169
  %221 = vmatpush.bf16.msra.mxu0 %v165
  %222 = vmatpush.bf16.msra.mxu0 %v161
  %223 = vmatpush.bf16.msra.mxu0 %v157
  %224 = vmatpush.bf16.msra.mxu0 %v153
  %225 = vmatmul.bf16.gmra.mxu0 %v24
  %v226 = vpop.f32.mrf.mxu0
  %v227 = vadd.f32 0.0, %v226
  %v228 = vpop.f32.mrf.mxu0
  %229 = vdwg.mxu0
  %230 = vmatpush.bf16.msra.mxu0 %v182
  %231 = vmatpush.bf16.msra.mxu0 %v178
  %232 = vmatpush.bf16.msra.mxu0 %v174
  %233 = vmatpush.bf16.msra.mxu0 %v170
  %234 = vmatpush.bf16.msra.mxu0 %v166
  %235 = vmatpush.bf16.msra.mxu0 %v162
  %236 = vmatpush.bf16.msra.mxu0 %v158
  %237 = vmatpush.bf16.msra.mxu0 %v154
  %238 = vmatmul.bf16.gmra.mxu0 %v24
  %v239 = vpop.f32.mrf.mxu0
  %v240 = vadd.f32 0.0, %v239
  %v241 = vpop.f32.mrf.mxu0
  %242 = vdwg.mxu0
  %243 = vmatpush.bf16.msra.mxu0 %v183
  %244 = vmatpush.bf16.msra.mxu0 %v179
  %245 = vmatpush.bf16.msra.mxu0 %v175
  %246 = vmatpush.bf16.msra.mxu0 %v171
  %247 = vmatpush.bf16.msra.mxu0 %v167
  %248 = vmatpush.bf16.msra.mxu0 %v163
  %249 = vmatpush.bf16.msra.mxu0 %v159
  %250 = vmatpush.bf16.msra.mxu0 %v155
  %251 = vmatmul.bf16.gmra.mxu0 %v24
  %v252 = vpop.f32.mrf.mxu0
  %v253 = vadd.f32 0.0, %v252
  %v254 = vpop.f32.mrf.mxu0
  %255 = vdwg.mxu0
  %256 = vmatpush.bf16.msra.mxu0 %v184
  %257 = vmatpush.bf16.msra.mxu0 %v180
  %258 = vmatpush.bf16.msra.mxu0 %v176
  %259 = vmatpush.bf16.msra.mxu0 %v172
  %260 = vmatpush.bf16.msra.mxu0 %v168
  %261 = vmatpush.bf16.msra.mxu0 %v164
  %262 = vmatpush.bf16.msra.mxu0 %v160
  %263 = vmatpush.bf16.msra.mxu0 %v156
  %264 = vmatmul.bf16.gmra.mxu0 %v24
  %v265 = vpop.f32.mrf.mxu0
  %v266 = vadd.f32 0.0, %v265
  %v267 = vpop.f32.mrf.mxu0
  %268 = vdwg.mxu0
  %v269 = vadd.f32 %v19, %v227
  %v270 = vadd.f32 %v20, %v240
  %v271 = vadd.f32 %v21, %v253
  %v272 = vadd.f32 %v22, %v266
  %v273 = vmul.f32 %v269, 0.5
  %v274 = vtanh.pop %v273
  %v275 = vmul.f32 %v274, 0.5
  %v276 = vadd.f32 %v275, 0.5
  %v277 = vmul.f32 %v270, 0.5
  %v278 = vtanh.pop %v277
  %v279 = vmul.f32 %v278, 0.5
  %v280 = vadd.f32 %v279, 0.5
  %v281 = vtanh.pop %v271
  %v282 = vmul.f32 %v272, 0.5
  %v283 = vtanh.pop %v282
  %v284 = vmul.f32 %v283, 0.5
  %v285 = vadd.f32 %v284, 0.5
  %v286 = vld [vmem:[#allocation3] sm:$0xff]
  %v287 = vmul.f32 %v280, %v286
  %v288 = vmul.f32 %v276, %v281
  %v289 = vadd.f32 %v287, %v288
  %v290 = vtanh.pop %v289
  %v291 = vmul.f32 %v285, %v290
  %292 = vst [vmem:[#allocation3] sm:$0xff] %v289
  %293 = vst [vmem:[#allocation2] sm:$0xff] %v291
  %v294 = vpack.c.bf16 %v291, %v291
  %295 = vst [vmem:[%s2] sm:$0xf] %v294
  %s296 = scalar_lea.vmem %s0, 16
  %v297 = vld [vmem:[%s296] sm:$0xff]
  %v298 = vld [vmem:[%s296 + $0x8] sm:$0xff]
  %v299 = vunpack.c.l.bf16 %v297
  %v300 = vunpack.c.h.bf16 %v297
  %v301 = vunpack.c.l.bf16 %v298
  %v302 = vunpack.c.h.bf16 %v298
  %v303 = vld [vmem:[#allocation2] sm:$0xff]
  %v304 = vpack.c.bf16 %v303, %v303
  %v305 = vld [vmem:[%s1] sm:$0xff]
  %v306 = vld [vmem:[%s1 + $0x8] sm:$0xff]
  %v307 = vld [vmem:[%s1 + $0x10] sm:$0xff]
  %v308 = vld [vmem:[%s1 + $0x18] sm:$0xff]
  %v309 = vld [vmem:[%s1 + $0x20] sm:$0xff]
  %v310 = vld [vmem:[%s1 + $0x28] sm:$0xff]
  %v311 = vld [vmem:[%s1 + $0x30] sm:$0xff]
  %v312 = vld [vmem:[%s1 + $0x38] sm:$0xff]
  %v313 = vld [vmem:[%s1 + $0x40] sm:$0xff]
  %v314 = vld [vmem:[%s1 + $0x48] sm:$0xff]
  %v315 = vld [vmem:[%s1 + $0x50] sm:$0xff]
  %v316 = vld [vmem:[%s1 + $0x58] sm:$0xff]
  %v317 = vld [vmem:[%s1 + $0x60] sm:$0xff]
  %v318 = vld [vmem:[%s1 + $0x68] sm:$0xff]
  %v319 = vld [vmem:[%s1 + $0x70] sm:$0xff]
  %v320 = vld [vmem:[%s1 + $0x78] sm:$0xff]
  %v321 = vld [vmem:[%s1 + $0x80] sm:$0xff]
  %v322 = vld [vmem:[%s1 + $0x88] sm:$0xff]
  %v323 = vld [vmem:[%s1 + $0x90] sm:$0xff]
  %v324 = vld [vmem:[%s1 + $0x98] sm:$0xff]
  %v325 = vld [vmem:[%s1 + $0xa0] sm:$0xff]
  %v326 = vld [vmem:[%s1 + $0xa8] sm:$0xff]
  %v327 = vld [vmem:[%s1 + $0xb0] sm:$0xff]
  %v328 = vld [vmem:[%s1 + $0xb8] sm:$0xff]
  %v329 = vld [vmem:[%s1 + $0xc0] sm:$0xff]
  %v330 = vld [vmem:[%s1 + $0xc8] sm:$0xff]
  %v331 = vld [vmem:[%s1 + $0xd0] sm:$0xff]
  %v332 = vld [vmem:[%s1 + $0xd8] sm:$0xff]
  %v333 = vld [vmem:[%s1 + $0xe0] sm:$0xff]
  %v334 = vld [vmem:[%s1 + $0xe8] sm:$0xff]
  %v335 = vld [vmem:[%s1 + $0xf0] sm:$0xff]
  %v336 = vld [vmem:[%s1 + $0xf8] sm:$0xff]
  %v369 = vunpack.c.l.b16 %v305
  %v370 = vunpack.c.h.b16 %v305
  %v371 = vunpack.c.l.b16 %v306
  %v372 = vunpack.c.h.b16 %v306
  %v373 = vunpack.c.l.b16 %v307
  %v374 = vunpack.c.h.b16 %v307
  %v375 = vunpack.c.l.b16 %v308
  %v376 = vunpack.c.h.b16 %v308
  %v377 = vunpack.c.l.b16 %v309
  %v378 = vunpack.c.h.b16 %v309
  %v379 = vunpack.c.l.b16 %v310
  %v380 = vunpack.c.h.b16 %v310
  %v381 = vunpack.c.l.b16 %v311
  %v382 = vunpack.c.h.b16 %v311
  %v383 = vunpack.c.l.b16 %v312
  %v384 = vunpack.c.h.b16 %v312
  %v385 = vunpack.c.l.b16 %v313
  %v386 = vunpack.c.h.b16 %v313
  %v387 = vunpack.c.l.b16 %v314
  %v388 = vunpack.c.h.b16 %v314
  %v389 = vunpack.c.l.b16 %v315
  %v390 = vunpack.c.h.b16 %v315
  %v391 = vunpack.c.l.b16 %v316
  %v392 = vunpack.c.h.b16 %v316
  %v393 = vunpack.c.l.b16 %v317
  %v394 = vunpack.c.h.b16 %v317
  %v395 = vunpack.c.l.b16 %v318
  %v396 = vunpack.c.h.b16 %v318
  %v397 = vunpack.c.l.b16 %v319
  %v398 = vunpack.c.h.b16 %v319
  %v399 = vunpack.c.l.b16 %v320
  %v400 = vunpack.c.h.b16 %v320
  %v401 = vunpack.c.l.b16 %v321
  %v402 = vunpack.c.h.b16 %v321
  %v403 = vunpack.c.l.b16 %v322
  %v404 = vunpack.c.h.b16 %v322
  %v405 = vunpack.c.l.b16 %v323
  %v406 = vunpack.c.h.b16 %v323
  %v407 = vunpack.c.l.b16 %v324
  %v408 = vunpack.c.h.b16 %v324
  %v409 = vunpack.c.l.b16 %v325
  %v410 = vunpack.c.h.b16 %v325
  %v411 = vunpack.c.l.b16 %v326
  %v412 = vunpack.c.h.b16 %v326
  %v413 = vunpack.c.l.b16 %v327
  %v414 = vunpack.c.h.b16 %v327
  %v415 = vunpack.c.l.b16 %v328
  %v416 = vunpack.c.h.b16 %v328
  %v417 = vunpack.c.l.b16 %v329
  %v418 = vunpack.c.h.b16 %v329
  %v419 = vunpack.c.l.b16 %v330
  %v420 = vunpack.c.h.b16 %v330
  %v421 = vunpack.c.l.b16 %v331
  %v422 = vunpack.c.h.b16 %v331
  %v423 = vunpack.c.l.b16 %v332
  %v424 = vunpack.c.h.b16 %v332
  %v425 = vunpack.c.l.b16 %v333
  %v426 = vunpack.c.h.b16 %v333
  %v427 = vunpack.c.l.b16 %v334
  %v428 = vunpack.c.h.b16 %v334
  %v429 = vunpack.c.l.b16 %v335
  %v430 = vunpack.c.h.b16 %v335
  %v431 = vunpack.c.l.b16 %v336
  %v432 = vunpack.c.h.b16 %v336
  %v433 = vpack.c.b16 %v373, %v369
  %v434 = vpack.c.b16 %v374, %v370
  %v435 = vpack.c.b16 %v375, %v371
  %v436 = vpack.c.b16 %v376, %v372
  %v437 = vpack.c.b16 %v381, %v377
  %v438 = vpack.c.b16 %v382, %v378
  %v439 = vpack.c.b16 %v383, %v379
  %v440 = vpack.c.b16 %v384, %v380
  %v441 = vpack.c.b16 %v389, %v385
  %v442 = vpack.c.b16 %v390, %v386
  %v443 = vpack.c.b16 %v391, %v387
  %v444 = vpack.c.b16 %v392, %v388
  %v445 = vpack.c.b16 %v397, %v393
  %v446 = vpack.c.b16 %v398, %v394
  %v447 = vpack.c.b16 %v399, %v395
  %v448 = vpack.c.b16 %v400, %v396
  %v449 = vpack.c.b16 %v405, %v401
  %v450 = vpack.c.b16 %v406, %v402
  %v451 = vpack.c.b16 %v407, %v403
  %v452 = vpack.c.b16 %v408, %v404
  %v453 = vpack.c.b16 %v413, %v409
  %v454 = vpack.c.b16 %v414, %v410
  %v455 = vpack.c.b16 %v415, %v411
  %v456 = vpack.c.b16 %v416, %v412
  %v457 = vpack.c.b16 %v421, %v417
  %v458 = vpack.c.b16 %v422, %v418
  %v459 = vpack.c.b16 %v423, %v419
  %v460 = vpack.c.b16 %v424, %v420
  %v461 = vpack.c.b16 %v429, %v425
  %v462 = vpack.c.b16 %v430, %v426
  %v463 = vpack.c.b16 %v431, %v427
  %v464 = vpack.c.b16 %v432, %v428
  %497 = vmatpush.bf16.msra.mxu0 %v461
  %498 = vmatpush.bf16.msra.mxu0 %v457
  %499 = vmatpush.bf16.msra.mxu0 %v453
  %500 = vmatpush.bf16.msra.mxu0 %v449
  %501 = vmatpush.bf16.msra.mxu0 %v445
  %502 = vmatpush.bf16.msra.mxu0 %v441
  %503 = vmatpush.bf16.msra.mxu0 %v437
  %504 = vmatpush.bf16.msra.mxu0 %v433
  %505 = vmatmul.bf16.gmra.mxu0 %v304
  %v506 = vpop.f32.mrf.mxu0
  %v507 = vadd.f32 0.0, %v506
  %v508 = vpop.f32.mrf.mxu0
  %509 = vdwg.mxu0
  %510 = vmatpush.bf16.msra.mxu0 %v462
  %511 = vmatpush.bf16.msra.mxu0 %v458
  %512 = vmatpush.bf16.msra.mxu0 %v454
  %513 = vmatpush.bf16.msra.mxu0 %v450
  %514 = vmatpush.bf16.msra.mxu0 %v446
  %515 = vmatpush.bf16.msra.mxu0 %v442
  %516 = vmatpush.bf16.msra.mxu0 %v438
  %517 = vmatpush.bf16.msra.mxu0 %v434
  %518 = vmatmul.bf16.gmra.mxu0 %v304
  %v519 = vpop.f32.mrf.mxu0
  %v520 = vadd.f32 0.0, %v519
  %v521 = vpop.f32.mrf.mxu0
  %522 = vdwg.mxu0
  %523 = vmatpush.bf16.msra.mxu0 %v463
  %524 = vmatpush.bf16.msra.mxu0 %v459
  %525 = vmatpush.bf16.msra.mxu0 %v455
  %526 = vmatpush.bf16.msra.mxu0 %v451
  %527 = vmatpush.bf16.msra.mxu0 %v447
  %528 = vmatpush.bf16.msra.mxu0 %v443
  %529 = vmatpush.bf16.msra.mxu0 %v439
  %530 = vmatpush.bf16.msra.mxu0 %v435
  %531 = vmatmul.bf16.gmra.mxu0 %v304
  %v532 = vpop.f32.mrf.mxu0
  %v533 = vadd.f32 0.0, %v532
  %v534 = vpop.f32.mrf.mxu0
  %535 = vdwg.mxu0
  %536 = vmatpush.bf16.msra.mxu0 %v464
  %537 = vmatpush.bf16.msra.mxu0 %v460
  %538 = vmatpush.bf16.msra.mxu0 %v456
  %539 = vmatpush.bf16.msra.mxu0 %v452
  %540 = vmatpush.bf16.msra.mxu0 %v448
  %541 = vmatpush.bf16.msra.mxu0 %v444
  %542 = vmatpush.bf16.msra.mxu0 %v440
  %543 = vmatpush.bf16.msra.mxu0 %v436
  %544 = vmatmul.bf16.gmra.mxu0 %v304
  %v545 = vpop.f32.mrf.mxu0
  %v546 = vadd.f32 0.0, %v545
  %v547 = vpop.f32.mrf.mxu0
  %548 = vdwg.mxu0
  %v549 = vadd.f32 %v299, %v507
  %v550 = vadd.f32 %v300, %v520
  %v551 = vadd.f32 %v301, %v533
  %v552 = vadd.f32 %v302, %v546
  %v553 = vmul.f32 %v549, 0.5
  %v554 = vtanh.pop %v553
  %v555 = vmul.f32 %v554, 0.5
  %v556 = vadd.f32 %v555, 0.5
  %v557 = vmul.f32 %v550, 0.5
  %v558 = vtanh.pop %v557
  %v559 = vmul.f32 %v558, 0.5
  %v560 = vadd.f32 %v559, 0.5
  %v561 = vtanh.pop %v551
  %v562 = vmul.f32 %v552, 0.5
  %v563 = vtanh.pop %v562
  %v564 = vmul.f32 %v563, 0.5
  %v565 = vadd.f32 %v564, 0.5
  %v566 = vld [vmem:[#allocation3] sm:$0xff]
  %v567 = vmul.f32 %v560, %v566
  %v568 = vmul.f32 %v556, %v561
  %v569 = vadd.f32 %v567, %v568
  %v570 = vtanh.pop %v569
  %v571 = vmul.f32 %v565, %v570
  %572 = vst [vmem:[#allocation3] sm:$0xff] %v569
  %573 = vst [vmem:[#allocation2] sm:$0xff] %v571
  %v574 = vpack.c.bf16 %v571, %v571
  %s575 = scalar_lea.vmem %s2, 4
  %576 = vst [vmem:[%s575] sm:$0xf] %v574
  %s577 = scalar_lea.vmem %s0, 32
  %v578 = vld [vmem:[%s577] sm:$0xff]
  %v579 = vld [vmem:[%s577 + $0x8] sm:$0xff]
  %v580 = vunpack.c.l.bf16 %v578
  %v581 = vunpack.c.h.bf16 %v578
  %v582 = vunpack.c.l.bf16 %v579
  %v583 = vunpack.c.h.bf16 %v579
  %v584 = vld [vmem:[#allocation2] sm:$0xff]
  %v585 = vpack.c.bf16 %v584, %v584
  %v586 = vld [vmem:[%s1] sm:$0xff]
  %v587 = vld [vmem:[%s1 + $0x8] sm:$0xff]
  %v588 = vld [vmem:[%s1 + $0x10] sm:$0xff]
  %v589 = vld [vmem:[%s1 + $0x18] sm:$0xff]
  %v590 = vld [vmem:[%s1 + $0x20] sm:$0xff]
  %v591 = vld [vmem:[%s1 + $0x28] sm:$0xff]
  %v592 = vld [vmem:[%s1 + $0x30] sm:$0xff]
  %v593 = vld [vmem:[%s1 + $0x38] sm:$0xff]
  %v594 = vld [vmem:[%s1 + $0x40] sm:$0xff]
  %v595 = vld [vmem:[%s1 + $0x48] sm:$0xff]
  %v596 = vld [vmem:[%s1 + $0x50] sm:$0xff]
  %v597 = vld [vmem:[%s1 + $0x58] sm:$0xff]
  %v598 = vld [vmem:[%s1 + $0x60] sm:$0xff]
  %v599 = vld [vmem:[%s1 + $0x68] sm:$0xff]
  %v600 = vld [vmem:[%s1 + $0x70] sm:$0xff]
  %v601 = vld [vmem:[%s1 + $0x78] sm:$0xff]
  %v602 = vld [vmem:[%s1 + $0x80] sm:$0xff]
  %v603 = vld [vmem:[%s1 + $0x88] sm:$0xff]
  %v604 = vld [vmem:[%s1 + $0x90] sm:$0xff]
  %v605 = vld [vmem:[%s1 + $0x98] sm:$0xff]
  %v606 = vld [vmem:[%s1 + $0xa0] sm:$0xff]
  %v607 = vld [vmem:[%s1 + $0xa8] sm:$0xff]
  %v608 = vld [vmem:[%s1 + $0xb0] sm:$0xff]
  %v609 = vld [vmem:[%s1 + $0xb8] sm:$0xff]
  %v610 = vld [vmem:[%s1 + $0xc0] sm:$0xff]
  %v611 = vld [vmem:[%s1 + $0xc8] sm:$0xff]
  %v612 = vld [vmem:[%s1 + $0xd0] sm:$0xff]
  %v613 = vld [vmem:[%s1 + $0xd8] sm:$0xff]
  %v614 = vld [vmem:[%s1 + $0xe0] sm:$0xff]
  %v615 = vld [vmem:[%s1 + $0xe8] sm:$0xff]
  %v616 = vld [vmem:[%s1 + $0xf0] sm:$0xff]
  %v617 = vld [vmem:[%s1 + $0xf8] sm:$0xff]
  %v650 = vunpack.c.l.b16 %v586
  %v651 = vunpack.c.h.b16 %v586
  %v652 = vunpack.c.l.b16 %v587
  %v653 = vunpack.c.h.b16 %v587
  %v654 = vunpack.c.l.b16 %v588
  %v655 = vunpack.c.h.b16 %v588
  %v656 = vunpack.c.l.b16 %v589
  %v657 = vunpack.c.h.b16 %v589
  %v658 = vunpack.c.l.b16 %v590
  %v659 = vunpack.c.h.b16 %v590
  %v660 = vunpack.c.l.b16 %v591
  %v661 = vunpack.c.h.b16 %v591
  %v662 = vunpack.c.l.b16 %v592
  %v663 = vunpack.c.h.b16 %v592
  %v664 = vunpack.c.l.b16 %v593
  %v665 = vunpack.c.h.b16 %v593
  %v666 = vunpack.c.l.b16 %v594
  %v667 = vunpack.c.h.b16 %v594
  %v668 = vunpack.c.l.b16 %v595
  %v669 = vunpack.c.h.b16 %v595
  %v670 = vunpack.c.l.b16 %v596
  %v671 = vunpack.c.h.b16 %v596
  %v672 = vunpack.c.l.b16 %v597
  %v673 = vunpack.c.h.b16 %v597
  %v674 = vunpack.c.l.b16 %v598
  %v675 = vunpack.c.h.b16 %v598
  %v676 = vunpack.c.l.b16 %v599
  %v677 = vunpack.c.h.b16 %v599
  %v678 = vunpack.c.l.b16 %v600
  %v679 = vunpack.c.h.b16 %v600
  %v680 = vunpack.c.l.b16 %v601
  %v681 = vunpack.c.h.b16 %v601
  %v682 = vunpack.c.l.b16 %v602
  %v683 = vunpack.c.h.b16 %v602
  %v684 = vunpack.c.l.b16 %v603
  %v685 = vunpack.c.h.b16 %v603
  %v686 = vunpack.c.l.b16 %v604
  %v687 = vunpack.c.h.b16 %v604
  %v688 = vunpack.c.l.b16 %v605
  %v689 = vunpack.c.h.b16 %v605
  %v690 = vunpack.c.l.b16 %v606
  %v691 = vunpack.c.h.b16 %v606
  %v692 = vunpack.c.l.b16 %v607
  %v693 = vunpack.c.h.b16 %v607
  %v694 = vunpack.c.l.b16 %v608
  %v695 = vunpack.c.h.b16 %v608
  %v696 = vunpack.c.l.b16 %v609
  %v697 = vunpack.c.h.b16 %v609
  %v698 = vunpack.c.l.b16 %v610
  %v699 = vunpack.c.h.b16 %v610
  %v700 = vunpack.c.l.b16 %v611
  %v701 = vunpack.c.h.b16 %v611
  %v702 = vunpack.c.l.b16 %v612
  %v703 = vunpack.c.h.b16 %v612
  %v704 = vunpack.c.l.b16 %v613
  %v705 = vunpack.c.h.b16 %v613
  %v706 = vunpack.c.l.b16 %v614
  %v707 = vunpack.c.h.b16 %v614
  %v708 = vunpack.c.l.b16 %v615
  %v709 = vunpack.c.h.b16 %v615
  %v710 = vunpack.c.l.b16 %v616
  %v711 = vunpack.c.h.b16 %v616
  %v712 = vunpack.c.l.b16 %v617
  %v713 = vunpack.c.h.b16 %v617
  %v714 = vpack.c.b16 %v654, %v650
  %v715 = vpack.c.b16 %v655, %v651
  %v716 = vpack.c.b16 %v656, %v652
  %v717 = vpack.c.b16 %v657, %v653
  %v718 = vpack.c.b16 %v662, %v658
  %v719 = vpack.c.b16 %v663, %v659
  %v720 = vpack.c.b16 %v664, %v660
  %v721 = vpack.c.b16 %v665, %v661
  %v722 = vpack.c.b16 %v670, %v666
  %v723 = vpack.c.b16 %v671, %v667
  %v724 = vpack.c.b16 %v672, %v668
  %v725 = vpack.c.b16 %v673, %v669
  %v726 = vpack.c.b16 %v678, %v674
  %v727 = vpack.c.b16 %v679, %v675
  %v728 = vpack.c.b16 %v680, %v676
  %v729 = vpack.c.b16 %v681, %v677
  %v730 = vpack.c.b16 %v686, %v682
  %v731 = vpack.c.b16 %v687, %v683
  %v732 = vpack.c.b16 %v688, %v684
  %v733 = vpack.c.b16 %v689, %v685
  %v734 = vpack.c.b16 %v694, %v690
  %v735 = vpack.c.b16 %v695, %v691
  %v736 = vpack.c.b16 %v696, %v692
  %v737 = vpack.c.b16 %v697, %v693
  %v738 = vpack.c.b16 %v702, %v698
  %v739 = vpack.c.b16 %v703, %v699
  %v740 = vpack.c.b16 %v704, %v700
  %v741 = vpack.c.b16 %v705, %v701
  %v742 = vpack.c.b16 %v710, %v706
  %v743 = vpack.c.b16 %v711, %v707
  %v744 = vpack.c.b16 %v712, %v708
  %v745 = vpack.c.b16 %v713, %v709
  %778 = vmatpush.bf16.msra.mxu0 %v742
  %779 = vmatpush.bf16.msra.mxu0 %v738
  %780 = vmatpush.bf16.msra.mxu0 %v734
  %781 = vmatpush.bf16.msra.mxu0 %v730
  %782 = vmatpush.bf16.msra.mxu0 %v726
  %783 = vmatpush.bf16.msra.mxu0 %v722
  %784 = vmatpush.bf16.msra.mxu0 %v718
  %785 = vmatpush.bf16.msra.mxu0 %v714
  %786 = vmatmul.bf16.gmra.mxu0 %v585
  %v787 = vpop.f32.mrf.mxu0
  %v788 = vadd.f32 0.0, %v787
  %v789 = vpop.f32.mrf.mxu0
  %790 = vdwg.mxu0
  %791 = vmatpush.bf16.msra.mxu0 %v743
  %792 = vmatpush.bf16.msra.mxu0 %v739
  %793 = vmatpush.bf16.msra.mxu0 %v735
  %794 = vmatpush.bf16.msra.mxu0 %v731
  %795 = vmatpush.bf16.msra.mxu0 %v727
  %796 = vmatpush.bf16.msra.mxu0 %v723
  %797 = vmatpush.bf16.msra.mxu0 %v719
  %798 = vmatpush.bf16.msra.mxu0 %v715
  %799 = vmatmul.bf16.gmra.mxu0 %v585
  %v800 = vpop.f32.mrf.mxu0
  %v801 = vadd.f32 0.0, %v800
  %v802 = vpop.f32.mrf.mxu0
  %803 = vdwg.mxu0
  %804 = vmatpush.bf16.msra.mxu0 %v744
  %805 = vmatpush.bf16.msra.mxu0 %v740
  %806 = vmatpush.bf16.msra.mxu0 %v736
  %807 = vmatpush.bf16.msra.mxu0 %v732
  %808 = vmatpush.bf16.msra.mxu0 %v728
  %809 = vmatpush.bf16.msra.mxu0 %v724
  %810 = vmatpush.bf16.msra.mxu0 %v720
  %811 = vmatpush.bf16.msra.mxu0 %v716
  %812 = vmatmul.bf16.gmra.mxu0 %v585
  %v813 = vpop.f32.mrf.mxu0
  %v814 = vadd.f32 0.0, %v813
  %v815 = vpop.f32.mrf.mxu0
  %816 = vdwg.mxu0
  %817 = vmatpush.bf16.msra.mxu0 %v745
  %818 = vmatpush.bf16.msra.mxu0 %v741
  %819 = vmatpush.bf16.msra.mxu0 %v737
  %820 = vmatpush.bf16.msra.mxu0 %v733
  %821 = vmatpush.bf16.msra.mxu0 %v729
  %822 = vmatpush.bf16.msra.mxu0 %v725
  %823 = vmatpush.bf16.msra.mxu0 %v721
  %824 = vmatpush.bf16.msra.mxu0 %v717
  %825 = vmatmul.bf16.gmra.mxu0 %v585
  %v826 = vpop.f32.mrf.mxu0
  %v827 = vadd.f32 0.0, %v826
  %v828 = vpop.f32.mrf.mxu0
  %829 = vdwg.mxu0
  %v830 = vadd.f32 %v580, %v788
  %v831 = vadd.f32 %v581, %v801
  %v832 = vadd.f32 %v582, %v814
  %v833 = vadd.f32 %v583, %v827
  %v834 = vmul.f32 %v830, 0.5
  %v835 = vtanh.pop %v834
  %v836 = vmul.f32 %v835, 0.5
  %v837 = vadd.f32 %v836, 0.5
  %v838 = vmul.f32 %v831, 0.5
  %v839 = vtanh.pop %v838
  %v840 = vmul.f32 %v839, 0.5
  %v841 = vadd.f32 %v840, 0.5
  %v842 = vtanh.pop %v832
  %v843 = vmul.f32 %v833, 0.5
  %v844 = vtanh.pop %v843
  %v845 = vmul.f32 %v844, 0.5
  %v846 = vadd.f32 %v845, 0.5
  %v847 = vld [vmem:[#allocation3] sm:$0xff]
  %v848 = vmul.f32 %v841, %v847
  %v849 = vmul.f32 %v837, %v842
  %v850 = vadd.f32 %v848, %v849
  %v851 = vtanh.pop %v850
  %v852 = vmul.f32 %v846, %v851
  %853 = vst [vmem:[#allocation3] sm:$0xff] %v850
  %854 = vst [vmem:[#allocation2] sm:$0xff] %v852
  %v855 = vpack.c.bf16 %v852, %v852
  %s856 = scalar_lea.vmem %s2, 8
  %857 = vst [vmem:[%s856] sm:$0xf] %v855
  %s858 = scalar_lea.vmem %s0, 48
  %v859 = vld [vmem:[%s858] sm:$0xff]
  %v860 = vld [vmem:[%s858 + $0x8] sm:$0xff]
  %v861 = vunpack.c.l.bf16 %v859
  %v862 = vunpack.c.h.bf16 %v859
  %v863 = vunpack.c.l.bf16 %v860
  %v864 = vunpack.c.h.bf16 %v860
  %v865 = vld [vmem:[#allocation2] sm:$0xff]
  %v866 = vpack.c.bf16 %v865, %v865
  %v867 = vld [vmem:[%s1] sm:$0xff]
  %v868 = vld [vmem:[%s1 + $0x8] sm:$0xff]
  %v869 = vld [vmem:[%s1 + $0x10] sm:$0xff]
  %v870 = vld [vmem:[%s1 + $0x18] sm:$0xff]
  %v871 = vld [vmem:[%s1 + $0x20] sm:$0xff]
  %v872 = vld [vmem:[%s1 + $0x28] sm:$0xff]
  %v873 = vld [vmem:[%s1 + $0x30] sm:$0xff]
  %v874 = vld [vmem:[%s1 + $0x38] sm:$0xff]
  %v875 = vld [vmem:[%s1 + $0x40] sm:$0xff]
  %v876 = vld [vmem:[%s1 + $0x48] sm:$0xff]
  %v877 = vld [vmem:[%s1 + $0x50] sm:$0xff]
  %v878 = vld [vmem:[%s1 + $0x58] sm:$0xff]
  %v879 = vld [vmem:[%s1 + $0x60] sm:$0xff]
  %v880 = vld [vmem:[%s1 + $0x68] sm:$0xff]
  %v881 = vld [vmem:[%s1 + $0x70] sm:$0xff]
  %v882 = vld [vmem:[%s1 + $0x78] sm:$0xff]
  %v883 = vld [vmem:[%s1 + $0x80] sm:$0xff]
  %v884 = vld [vmem:[%s1 + $0x88] sm:$0xff]
  %v885 = vld [vmem:[%s1 + $0x90] sm:$0xff]
  %v886 = vld [vmem:[%s1 + $0x98] sm:$0xff]
  %v887 = vld [vmem:[%s1 + $0xa0] sm:$0xff]
  %v888 = vld [vmem:[%s1 + $0xa8] sm:$0xff]
  %v889 = vld [vmem:[%s1 + $0xb0] sm:$0xff]
  %v890 = vld [vmem:[%s1 + $0xb8] sm:$0xff]
  %v891 = vld [vmem:[%s1 + $0xc0] sm:$0xff]
  %v892 = vld [vmem:[%s1 + $0xc8] sm:$0xff]
  %v893 = vld [vmem:[%s1 + $0xd0] sm:$0xff]
  %v894 = vld [vmem:[%s1 + $0xd8] sm:$0xff]
  %v895 = vld [vmem:[%s1 + $0xe0] sm:$0xff]
  %v896 = vld [vmem:[%s1 + $0xe8] sm:$0xff]
  %v897 = vld [vmem:[%s1 + $0xf0] sm:$0xff]
  %v898 = vld [vmem:[%s1 + $0xf8] sm:$0xff]
  %v931 = vunpack.c.l.b16 %v867
  %v932 = vunpack.c.h.b16 %v867
  %v933 = vunpack.c.l.b16 %v868
  %v934 = vunpack.c.h.b16 %v868
  %v935 = vunpack.c.l.b16 %v869
  %v936 = vunpack.c.h.b16 %v869
  %v937 = vunpack.c.l.b16 %v870
  %v938 = vunpack.c.h.b16 %v870
  %v939 = vunpack.c.l.b16 %v871
  %v940 = vunpack.c.h.b16 %v871
  %v941 = vunpack.c.l.b16 %v872
  %v942 = vunpack.c.h.b16 %v872
  %v943 = vunpack.c.l.b16 %v873
  %v944 = vunpack.c.h.b16 %v873
  %v945 = vunpack.c.l.b16 %v874
  %v946 = vunpack.c.h.b16 %v874
  %v947 = vunpack.c.l.b16 %v875
  %v948 = vunpack.c.h.b16 %v875
  %v949 = vunpack.c.l.b16 %v876
  %v950 = vunpack.c.h.b16 %v876
  %v951 = vunpack.c.l.b16 %v877
  %v952 = vunpack.c.h.b16 %v877
  %v953 = vunpack.c.l.b16 %v878
  %v954 = vunpack.c.h.b16 %v878
  %v955 = vunpack.c.l.b16 %v879
  %v956 = vunpack.c.h.b16 %v879
  %v957 = vunpack.c.l.b16 %v880
  %v958 = vunpack.c.h.b16 %v880
  %v959 = vunpack.c.l.b16 %v881
  %v960 = vunpack.c.h.b16 %v881
  %v961 = vunpack.c.l.b16 %v882
  %v962 = vunpack.c.h.b16 %v882
  %v963 = vunpack.c.l.b16 %v883
  %v964 = vunpack.c.h.b16 %v883
  %v965 = vunpack.c.l.b16 %v884
  %v966 = vunpack.c.h.b16 %v884
  %v967 = vunpack.c.l.b16 %v885
  %v968 = vunpack.c.h.b16 %v885
  %v969 = vunpack.c.l.b16 %v886
  %v970 = vunpack.c.h.b16 %v886
  %v971 = vunpack.c.l.b16 %v887
  %v972 = vunpack.c.h.b16 %v887
  %v973 = vunpack.c.l.b16 %v888
  %v974 = vunpack.c.h.b16 %v888
  %v975 = vunpack.c.l.b16 %v889
  %v976 = vunpack.c.h.b16 %v889
  %v977 = vunpack.c.l.b16 %v890
  %v978 = vunpack.c.h.b16 %v890
  %v979 = vunpack.c.l.b16 %v891
  %v980 = vunpack.c.h.b16 %v891
  %v981 = vunpack.c.l.b16 %v892
  %v982 = vunpack.c.h.b16 %v892
  %v983 = vunpack.c.l.b16 %v893
  %v984 = vunpack.c.h.b16 %v893
  %v985 = vunpack.c.l.b16 %v894
  %v986 = vunpack.c.h.b16 %v894
  %v987 = vunpack.c.l.b16 %v895
  %v988 = vunpack.c.h.b16 %v895
  %v989 = vunpack.c.l.b16 %v896
  %v990 = vunpack.c.h.b16 %v896
  %v991 = vunpack.c.l.b16 %v897
  %v992 = vunpack.c.h.b16 %v897
  %v993 = vunpack.c.l.b16 %v898
  %v994 = vunpack.c.h.b16 %v898
  %v995 = vpack.c.b16 %v935, %v931
  %v996 = vpack.c.b16 %v936, %v932
  %v997 = vpack.c.b16 %v937, %v933
  %v998 = vpack.c.b16 %v938, %v934
  %v999 = vpack.c.b16 %v943, %v939
  %v1000 = vpack.c.b16 %v944, %v940
  %v1001 = vpack.c.b16 %v945, %v941
  %v1002 = vpack.c.b16 %v946, %v942
  %v1003 = vpack.c.b16 %v951, %v947
  %v1004 = vpack.c.b16 %v952, %v948
  %v1005 = vpack.c.b16 %v953, %v949
  %v1006 = vpack.c.b16 %v954, %v950
  %v1007 = vpack.c.b16 %v959, %v955
  %v1008 = vpack.c.b16 %v960, %v956
  %v1009 = vpack.c.b16 %v961, %v957
  %v1010 = vpack.c.b16 %v962, %v958
  %v1011 = vpack.c.b16 %v967, %v963
  %v1012 = vpack.c.b16 %v968, %v964
  %v1013 = vpack.c.b16 %v969, %v965
  %v1014 = vpack.c.b16 %v970, %v966
  %v1015 = vpack.c.b16 %v975, %v971
  %v1016 = vpack.c.b16 %v976, %v972
  %v1017 = vpack.c.b16 %v977, %v973
  %v1018 = vpack.c.b16 %v978, %v974
  %v1019 = vpack.c.b16 %v983, %v979
  %v1020 = vpack.c.b16 %v984, %v980
  %v1021 = vpack.c.b16 %v985, %v981
  %v1022 = vpack.c.b16 %v986, %v982
  %v1023 = vpack.c.b16 %v991, %v987
  %v1024 = vpack.c.b16 %v992, %v988
  %v1025 = vpack.c.b16 %v993, %v989
  %v1026 = vpack.c.b16 %v994, %v990
  %1059 = vmatpush.bf16.msra.mxu0 %v1023
  %1060 = vmatpush.bf16.msra.mxu0 %v1019
  %1061 = vmatpush.bf16.msra.mxu0 %v1015
  %1062 = vmatpush.bf16.msra.mxu0 %v1011
  %1063 = vmatpush.bf16.msra.mxu0 %v1007
  %1064 = vmatpush.bf16.msra.mxu0 %v1003
  %1065 = vmatpush.bf16.msra.mxu0 %v999
  %1066 = vmatpush.bf16.msra.mxu0 %v995
  %1067 = vmatmul.bf16.gmra.mxu0 %v866
  %v1068 = vpop.f32.mrf.mxu0
  %v1069 = vadd.f32 0.0, %v1068
  %v1070 = vpop.f32.mrf.mxu0
  %1071 = vdwg.mxu0
  %1072 = vmatpush.bf16.msra.mxu0 %v1024
  %1073 = vmatpush.bf16.msra.mxu0 %v1020
  %1074 = vmatpush.bf16.msra.mxu0 %v1016
  %1075 = vmatpush.bf16.msra.mxu0 %v1012
  %1076 = vmatpush.bf16.msra.mxu0 %v1008
  %1077 = vmatpush.bf16.msra.mxu0 %v1004
  %1078 = vmatpush.bf16.msra.mxu0 %v1000
  %1079 = vmatpush.bf16.msra.mxu0 %v996
  %1080 = vmatmul.bf16.gmra.mxu0 %v866
  %v1081 = vpop.f32.mrf.mxu0
  %v1082 = vadd.f32 0.0, %v1081
  %v1083 = vpop.f32.mrf.mxu0
  %1084 = vdwg.mxu0
  %1085 = vmatpush.bf16.msra.mxu0 %v1025
  %1086 = vmatpush.bf16.msra.mxu0 %v1021
  %1087 = vmatpush.bf16.msra.mxu0 %v1017
  %1088 = vmatpush.bf16.msra.mxu0 %v1013
  %1089 = vmatpush.bf16.msra.mxu0 %v1009
  %1090 = vmatpush.bf16.msra.mxu0 %v1005
  %1091 = vmatpush.bf16.msra.mxu0 %v1001
  %1092 = vmatpush.bf16.msra.mxu0 %v997
  %1093 = vmatmul.bf16.gmra.mxu0 %v866
  %v1094 = vpop.f32.mrf.mxu0
  %v1095 = vadd.f32 0.0, %v1094
  %v1096 = vpop.f32.mrf.mxu0
  %1097 = vdwg.mxu0
  %1098 = vmatpush.bf16.msra.mxu0 %v1026
  %1099 = vmatpush.bf16.msra.mxu0 %v1022
  %1100 = vmatpush.bf16.msra.mxu0 %v1018
  %1101 = vmatpush.bf16.msra.mxu0 %v1014
  %1102 = vmatpush.bf16.msra.mxu0 %v1010
  %1103 = vmatpush.bf16.msra.mxu0 %v1006
  %1104 = vmatpush.bf16.msra.mxu0 %v1002
  %1105 = vmatpush.bf16.msra.mxu0 %v998
  %1106 = vmatmul.bf16.gmra.mxu0 %v866
  %v1107 = vpop.f32.mrf.mxu0
  %v1108 = vadd.f32 0.0, %v1107
  %v1109 = vpop.f32.mrf.mxu0
  %1110 = vdwg.mxu0
  %v1111 = vadd.f32 %v861, %v1069
  %v1112 = vadd.f32 %v862, %v1082
  %v1113 = vadd.f32 %v863, %v1095
  %v1114 = vadd.f32 %v864, %v1108
  %v1115 = vmul.f32 %v1111, 0.5
  %v1116 = vtanh.pop %v1115
  %v1117 = vmul.f32 %v1116, 0.5
  %v1118 = vadd.f32 %v1117, 0.5
  %v1119 = vmul.f32 %v1112, 0.5
  %v1120 = vtanh.pop %v1119
  %v1121 = vmul.f32 %v1120, 0.5
  %v1122 = vadd.f32 %v1121, 0.5
  %v1123 = vtanh.pop %v1113
  %v1124 = vmul.f32 %v1114, 0.5
  %v1125 = vtanh.pop %v1124
  %v1126 = vmul.f32 %v1125, 0.5
  %v1127 = vadd.f32 %v1126, 0.5
  %v1128 = vld [vmem:[#allocation3] sm:$0xff]
  %v1129 = vmul.f32 %v1122, %v1128
  %v1130 = vmul.f32 %v1118, %v1123
  %v1131 = vadd.f32 %v1129, %v1130
  %v1132 = vtanh.pop %v1131
  %v1133 = vmul.f32 %v1127, %v1132
  %1134 = vst [vmem:[#allocation3] sm:$0xff] %v1131
  %1135 = vst [vmem:[#allocation2] sm:$0xff] %v1133
  %v1136 = vpack.c.bf16 %v1133, %v1133
  %s1137 = scalar_lea.vmem %s2, 12
  %1138 = vst [vmem:[%s1137] sm:$0xf] %v1136
  %s1139 = scalar_lea.vmem %s0, 64
  %v1140 = vld [vmem:[%s1139] sm:$0xff]
  %v1141 = vld [vmem:[%s1139 + $0x8] sm:$0xff]
  %v1142 = vunpack.c.l.bf16 %v1140
  %v1143 = vunpack.c.h.bf16 %v1140
  %v1144 = vunpack.c.l.bf16 %v1141
  %v1145 = vunpack.c.h.bf16 %v1141
  %v1146 = vld [vmem:[#allocation2] sm:$0xff]
  %v1147 = vpack.c.bf16 %v1146, %v1146
  %v1148 = vld [vmem:[%s1] sm:$0xff]
  %v1149 = vld [vmem:[%s1 + $0x8] sm:$0xff]
  %v1150 = vld [vmem:[%s1 + $0x10] sm:$0xff]
  %v1151 = vld [vmem:[%s1 + $0x18] sm:$0xff]
  %v1152 = vld [vmem:[%s1 + $0x20] sm:$0xff]
  %v1153 = vld [vmem:[%s1 + $0x28] sm:$0xff]
  %v1154 = vld [vmem:[%s1 + $0x30] sm:$0xff]
  %v1155 = vld [vmem:[%s1 + $0x38] sm:$0xff]
  %v1156 = vld [vmem:[%s1 + $0x40] sm:$0xff]
  %v1157 = vld [vmem:[%s1 + $0x48] sm:$0xff]
  %v1158 = vld [vmem:[%s1 + $0x50] sm:$0xff]
  %v1159 = vld [vmem:[%s1 + $0x58] sm:$0xff]
  %v1160 = vld [vmem:[%s1 + $0x60] sm:$0xff]
  %v1161 = vld [vmem:[%s1 + $0x68] sm:$0xff]
  %v1162 = vld [vmem:[%s1 + $0x70] sm:$0xff]
  %v1163 = vld [vmem:[%s1 + $0x78] sm:$0xff]
  %v1164 = vld [vmem:[%s1 + $0x80] sm:$0xff]
  %v1165 = vld [vmem:[%s1 + $0x88] sm:$0xff]
  %v1166 = vld [vmem:[%s1 + $0x90] sm:$0xff]
  %v1167 = vld [vmem:[%s1 + $0x98] sm:$0xff]
  %v1168 = vld [vmem:[%s1 + $0xa0] sm:$0xff]
  %v1169 = vld [vmem:[%s1 + $0xa8] sm:$0xff]
  %v1170 = vld [vmem:[%s1 + $0xb0] sm:$0xff]
  %v1171 = vld [vmem:[%s1 + $0xb8] sm:$0xff]
  %v1172 = vld [vmem:[%s1 + $0xc0] sm:$0xff]
  %v1173 = vld [vmem:[%s1 + $0xc8] sm:$0xff]
  %v1174 = vld [vmem:[%s1 + $0xd0] sm:$0xff]
  %v1175 = vld [vmem:[%s1 + $0xd8] sm:$0xff]
  %v1176 = vld [vmem:[%s1 + $0xe0] sm:$0xff]
  %v1177 = vld [vmem:[%s1 + $0xe8] sm:$0xff]
  %v1178 = vld [vmem:[%s1 + $0xf0] sm:$0xff]
  %v1179 = vld [vmem:[%s1 + $0xf8] sm:$0xff]
  %v1212 = vunpack.c.l.b16 %v1148
  %v1213 = vunpack.c.h.b16 %v1148
  %v1214 = vunpack.c.l.b16 %v1149
  %v1215 = vunpack.c.h.b16 %v1149
  %v1216 = vunpack.c.l.b16 %v1150
  %v1217 = vunpack.c.h.b16 %v1150
  %v1218 = vunpack.c.l.b16 %v1151
  %v1219 = vunpack.c.h.b16 %v1151
  %v1220 = vunpack.c.l.b16 %v1152
  %v1221 = vunpack.c.h.b16 %v1152
  %v1222 = vunpack.c.l.b16 %v1153
  %v1223 = vunpack.c.h.b16 %v1153
  %v1224 = vunpack.c.l.b16 %v1154
  %v1225 = vunpack.c.h.b16 %v1154
  %v1226 = vunpack.c.l.b16 %v1155
  %v1227 = vunpack.c.h.b16 %v1155
  %v1228 = vunpack.c.l.b16 %v1156
  %v1229 = vunpack.c.h.b16 %v1156
  %v1230 = vunpack.c.l.b16 %v1157
  %v1231 = vunpack.c.h.b16 %v1157
  %v1232 = vunpack.c.l.b16 %v1158
  %v1233 = vunpack.c.h.b16 %v1158
  %v1234 = vunpack.c.l.b16 %v1159
  %v1235 = vunpack.c.h.b16 %v1159
  %v1236 = vunpack.c.l.b16 %v1160
  %v1237 = vunpack.c.h.b16 %v1160
  %v1238 = vunpack.c.l.b16 %v1161
  %v1239 = vunpack.c.h.b16 %v1161
  %v1240 = vunpack.c.l.b16 %v1162
  %v1241 = vunpack.c.h.b16 %v1162
  %v1242 = vunpack.c.l.b16 %v1163
  %v1243 = vunpack.c.h.b16 %v1163
  %v1244 = vunpack.c.l.b16 %v1164
  %v1245 = vunpack.c.h.b16 %v1164
  %v1246 = vunpack.c.l.b16 %v1165
  %v1247 = vunpack.c.h.b16 %v1165
  %v1248 = vunpack.c.l.b16 %v1166
  %v1249 = vunpack.c.h.b16 %v1166
  %v1250 = vunpack.c.l.b16 %v1167
  %v1251 = vunpack.c.h.b16 %v1167
  %v1252 = vunpack.c.l.b16 %v1168
  %v1253 = vunpack.c.h.b16 %v1168
  %v1254 = vunpack.c.l.b16 %v1169
  %v1255 = vunpack.c.h.b16 %v1169
  %v1256 = vunpack.c.l.b16 %v1170
  %v1257 = vunpack.c.h.b16 %v1170
  %v1258 = vunpack.c.l.b16 %v1171
  %v1259 = vunpack.c.h.b16 %v1171
  %v1260 = vunpack.c.l.b16 %v1172
  %v1261 = vunpack.c.h.b16 %v1172
  %v1262 = vunpack.c.l.b16 %v1173
  %v1263 = vunpack.c.h.b16 %v1173
  %v1264 = vunpack.c.l.b16 %v1174
  %v1265 = vunpack.c.h.b16 %v1174
  %v1266 = vunpack.c.l.b16 %v1175
  %v1267 = vunpack.c.h.b16 %v1175
  %v1268 = vunpack.c.l.b16 %v1176
  %v1269 = vunpack.c.h.b16 %v1176
  %v1270 = vunpack.c.l.b16 %v1177
  %v1271 = vunpack.c.h.b16 %v1177
  %v1272 = vunpack.c.l.b16 %v1178
  %v1273 = vunpack.c.h.b16 %v1178
  %v1274 = vunpack.c.l.b16 %v1179
  %v1275 = vunpack.c.h.b16 %v1179
  %v1276 = vpack.c.b16 %v1216, %v1212
  %v1277 = vpack.c.b16 %v1217, %v1213
  %v1278 = vpack.c.b16 %v1218, %v1214
  %v1279 = vpack.c.b16 %v1219, %v1215
  %v1280 = vpack.c.b16 %v1224, %v1220
  %v1281 = vpack.c.b16 %v1225, %v1221
  %v1282 = vpack.c.b16 %v1226, %v1222
  %v1283 = vpack.c.b16 %v1227, %v1223
  %v1284 = vpack.c.b16 %v1232, %v1228
  %v1285 = vpack.c.b16 %v1233, %v1229
  %v1286 = vpack.c.b16 %v1234, %v1230
  %v1287 = vpack.c.b16 %v1235, %v1231
  %v1288 = vpack.c.b16 %v1240, %v1236
  %v1289 = vpack.c.b16 %v1241, %v1237
  %v1290 = vpack.c.b16 %v1242, %v1238
  %v1291 = vpack.c.b16 %v1243, %v1239
  %v1292 = vpack.c.b16 %v1248, %v1244
  %v1293 = vpack.c.b16 %v1249, %v1245
  %v1294 = vpack.c.b16 %v1250, %v1246
  %v1295 = vpack.c.b16 %v1251, %v1247
  %v1296 = vpack.c.b16 %v1256, %v1252
  %v1297 = vpack.c.b16 %v1257, %v1253
  %v1298 = vpack.c.b16 %v1258, %v1254
  %v1299 = vpack.c.b16 %v1259, %v1255
  %v1300 = vpack.c.b16 %v1264, %v1260
  %v1301 = vpack.c.b16 %v1265, %v1261
  %v1302 = vpack.c.b16 %v1266, %v1262
  %v1303 = vpack.c.b16 %v1267, %v1263
  %v1304 = vpack.c.b16 %v1272, %v1268
  %v1305 = vpack.c.b16 %v1273, %v1269
  %v1306 = vpack.c.b16 %v1274, %v1270
  %v1307 = vpack.c.b16 %v1275, %v1271
  %1340 = vmatpush.bf16.msra.mxu0 %v1304
  %1341 = vmatpush.bf16.msra.mxu0 %v1300
  %1342 = vmatpush.bf16.msra.mxu0 %v1296
  %1343 = vmatpush.bf16.msra.mxu0 %v1292
  %1344 = vmatpush.bf16.msra.mxu0 %v1288
  %1345 = vmatpush.bf16.msra.mxu0 %v1284
  %1346 = vmatpush.bf16.msra.mxu0 %v1280
  %1347 = vmatpush.bf16.msra.mxu0 %v1276
  %1348 = vmatmul.bf16.gmra.mxu0 %v1147
  %v1349 = vpop.f32.mrf.mxu0
  %v1350 = vadd.f32 0.0, %v1349
  %v1351 = vpop.f32.mrf.mxu0
  %1352 = vdwg.mxu0
  %1353 = vmatpush.bf16.msra.mxu0 %v1305
  %1354 = vmatpush.bf16.msra.mxu0 %v1301
  %1355 = vmatpush.bf16.msra.mxu0 %v1297
  %1356 = vmatpush.bf16.msra.mxu0 %v1293
  %1357 = vmatpush.bf16.msra.mxu0 %v1289
  %1358 = vmatpush.bf16.msra.mxu0 %v1285
  %1359 = vmatpush.bf16.msra.mxu0 %v1281
  %1360 = vmatpush.bf16.msra.mxu0 %v1277
  %1361 = vmatmul.bf16.gmra.mxu0 %v1147
  %v1362 = vpop.f32.mrf.mxu0
  %v1363 = vadd.f32 0.0, %v1362
  %v1364 = vpop.f32.mrf.mxu0
  %1365 = vdwg.mxu0
  %1366 = vmatpush.bf16.msra.mxu0 %v1306
  %1367 = vmatpush.bf16.msra.mxu0 %v1302
  %1368 = vmatpush.bf16.msra.mxu0 %v1298
  %1369 = vmatpush.bf16.msra.mxu0 %v1294
  %1370 = vmatpush.bf16.msra.mxu0 %v1290
  %1371 = vmatpush.bf16.msra.mxu0 %v1286
  %1372 = vmatpush.bf16.msra.mxu0 %v1282
  %1373 = vmatpush.bf16.msra.mxu0 %v1278
  %1374 = vmatmul.bf16.gmra.mxu0 %v1147
  %v1375 = vpop.f32.mrf.mxu0
  %v1376 = vadd.f32 0.0, %v1375
  %v1377 = vpop.f32.mrf.mxu0
  %1378 = vdwg.mxu0
  %1379 = vmatpush.bf16.msra.mxu0 %v1307
  %1380 = vmatpush.bf16.msra.mxu0 %v1303
  %1381 = vmatpush.bf16.msra.mxu0 %v1299
  %1382 = vmatpush.bf16.msra.mxu0 %v1295
  %1383 = vmatpush.bf16.msra.mxu0 %v1291
  %1384 = vmatpush.bf16.msra.mxu0 %v1287
  %1385 = vmatpush.bf16.msra.mxu0 %v1283
  %1386 = vmatpush.bf16.msra.mxu0 %v1279
  %1387 = vmatmul.bf16.gmra.mxu0 %v1147
  %v1388 = vpop.f32.mrf.mxu0
  %v1389 = vadd.f32 0.0, %v1388
  %v1390 = vpop.f32.mrf.mxu0
  %1391 = vdwg.mxu0
  %v1392 = vadd.f32 %v1142, %v1350
  %v1393 = vadd.f32 %v1143, %v1363
  %v1394 = vadd.f32 %v1144, %v1376
  %v1395 = vadd.f32 %v1145, %v1389
  %v1396 = vmul.f32 %v1392, 0.5
  %v1397 = vtanh.pop %v1396
  %v1398 = vmul.f32 %v1397, 0.5
  %v1399 = vadd.f32 %v1398, 0.5
  %v1400 = vmul.f32 %v1393, 0.5
  %v1401 = vtanh.pop %v1400
  %v1402 = vmul.f32 %v1401, 0.5
  %v1403 = vadd.f32 %v1402, 0.5
  %v1404 = vtanh.pop %v1394
  %v1405 = vmul.f32 %v1395, 0.5
  %v1406 = vtanh.pop %v1405
  %v1407 = vmul.f32 %v1406, 0.5
  %v1408 = vadd.f32 %v1407, 0.5
  %v1409 = vld [vmem:[#allocation3] sm:$0xff]
  %v1410 = vmul.f32 %v1403, %v1409
  %v1411 = vmul.f32 %v1399, %v1404
  %v1412 = vadd.f32 %v1410, %v1411
  %v1413 = vtanh.pop %v1412
  %v1414 = vmul.f32 %v1408, %v1413
  %1415 = vst [vmem:[#allocation3] sm:$0xff] %v1412
  %1416 = vst [vmem:[#allocation2] sm:$0xff] %v1414
  %v1417 = vpack.c.bf16 %v1414, %v1414
  %s1418 = scalar_lea.vmem %s2, 16
  %1419 = vst [vmem:[%s1418] sm:$0xf] %v1417
  %s1420 = scalar_lea.vmem %s0, 80
  %v1421 = vld [vmem:[%s1420] sm:$0xff]
  %v1422 = vld [vmem:[%s1420 + $0x8] sm:$0xff]
  %v1423 = vunpack.c.l.bf16 %v1421
  %v1424 = vunpack.c.h.bf16 %v1421
  %v1425 = vunpack.c.l.bf16 %v1422
  %v1426 = vunpack.c.h.bf16 %v1422
  %v1427 = vld [vmem:[#allocation2] sm:$0xff]
  %v1428 = vpack.c.bf16 %v1427, %v1427
  %v1429 = vld [vmem:[%s1] sm:$0xff]
  %v1430 = vld [vmem:[%s1 + $0x8] sm:$0xff]
  %v1431 = vld [vmem:[%s1 + $0x10] sm:$0xff]
  %v1432 = vld [vmem:[%s1 + $0x18] sm:$0xff]
  %v1433 = vld [vmem:[%s1 + $0x20] sm:$0xff]
  %v1434 = vld [vmem:[%s1 + $0x28] sm:$0xff]
  %v1435 = vld [vmem:[%s1 + $0x30] sm:$0xff]
  %v1436 = vld [vmem:[%s1 + $0x38] sm:$0xff]
  %v1437 = vld [vmem:[%s1 + $0x40] sm:$0xff]
  %v1438 = vld [vmem:[%s1 + $0x48] sm:$0xff]
  %v1439 = vld [vmem:[%s1 + $0x50] sm:$0xff]
  %v1440 = vld [vmem:[%s1 + $0x58] sm:$0xff]
  %v1441 = vld [vmem:[%s1 + $0x60] sm:$0xff]
  %v1442 = vld [vmem:[%s1 + $0x68] sm:$0xff]
  %v1443 = vld [vmem:[%s1 + $0x70] sm:$0xff]
  %v1444 = vld [vmem:[%s1 + $0x78] sm:$0xff]
  %v1445 = vld [vmem:[%s1 + $0x80] sm:$0xff]
  %v1446 = vld [vmem:[%s1 + $0x88] sm:$0xff]
  %v1447 = vld [vmem:[%s1 + $0x90] sm:$0xff]
  %v1448 = vld [vmem:[%s1 + $0x98] sm:$0xff]
  %v1449 = vld [vmem:[%s1 + $0xa0] sm:$0xff]
  %v1450 = vld [vmem:[%s1 + $0xa8] sm:$0xff]
  %v1451 = vld [vmem:[%s1 + $0xb0] sm:$0xff]
  %v1452 = vld [vmem:[%s1 + $0xb8] sm:$0xff]
  %v1453 = vld [vmem:[%s1 + $0xc0] sm:$0xff]
  %v1454 = vld [vmem:[%s1 + $0xc8] sm:$0xff]
  %v1455 = vld [vmem:[%s1 + $0xd0] sm:$0xff]
  %v1456 = vld [vmem:[%s1 + $0xd8] sm:$0xff]
  %v1457 = vld [vmem:[%s1 + $0xe0] sm:$0xff]
  %v1458 = vld [vmem:[%s1 + $0xe8] sm:$0xff]
  %v1459 = vld [vmem:[%s1 + $0xf0] sm:$0xff]
  %v1460 = vld [vmem:[%s1 + $0xf8] sm:$0xff]
  %v1493 = vunpack.c.l.b16 %v1429
  %v1494 = vunpack.c.h.b16 %v1429
  %v1495 = vunpack.c.l.b16 %v1430
  %v1496 = vunpack.c.h.b16 %v1430
  %v1497 = vunpack.c.l.b16 %v1431
  %v1498 = vunpack.c.h.b16 %v1431
  %v1499 = vunpack.c.l.b16 %v1432
  %v1500 = vunpack.c.h.b16 %v1432
  %v1501 = vunpack.c.l.b16 %v1433
  %v1502 = vunpack.c.h.b16 %v1433
  %v1503 = vunpack.c.l.b16 %v1434
  %v1504 = vunpack.c.h.b16 %v1434
  %v1505 = vunpack.c.l.b16 %v1435
  %v1506 = vunpack.c.h.b16 %v1435
  %v1507 = vunpack.c.l.b16 %v1436
  %v1508 = vunpack.c.h.b16 %v1436
  %v1509 = vunpack.c.l.b16 %v1437
  %v1510 = vunpack.c.h.b16 %v1437
  %v1511 = vunpack.c.l.b16 %v1438
  %v1512 = vunpack.c.h.b16 %v1438
  %v1513 = vunpack.c.l.b16 %v1439
  %v1514 = vunpack.c.h.b16 %v1439
  %v1515 = vunpack.c.l.b16 %v1440
  %v1516 = vunpack.c.h.b16 %v1440
  %v1517 = vunpack.c.l.b16 %v1441
  %v1518 = vunpack.c.h.b16 %v1441
  %v1519 = vunpack.c.l.b16 %v1442
  %v1520 = vunpack.c.h.b16 %v1442
  %v1521 = vunpack.c.l.b16 %v1443
  %v1522 = vunpack.c.h.b16 %v1443
  %v1523 = vunpack.c.l.b16 %v1444
  %v1524 = vunpack.c.h.b16 %v1444
  %v1525 = vunpack.c.l.b16 %v1445
  %v1526 = vunpack.c.h.b16 %v1445
  %v1527 = vunpack.c.l.b16 %v1446
  %v1528 = vunpack.c.h.b16 %v1446
  %v1529 = vunpack.c.l.b16 %v1447
  %v1530 = vunpack.c.h.b16 %v1447
  %v1531 = vunpack.c.l.b16 %v1448
  %v1532 = vunpack.c.h.b16 %v1448
  %v1533 = vunpack.c.l.b16 %v1449
  %v1534 = vunpack.c.h.b16 %v1449
  %v1535 = vunpack.c.l.b16 %v1450
  %v1536 = vunpack.c.h.b16 %v1450
  %v1537 = vunpack.c.l.b16 %v1451
  %v1538 = vunpack.c.h.b16 %v1451
  %v1539 = vunpack.c.l.b16 %v1452
  %v1540 = vunpack.c.h.b16 %v1452
  %v1541 = vunpack.c.l.b16 %v1453
  %v1542 = vunpack.c.h.b16 %v1453
  %v1543 = vunpack.c.l.b16 %v1454
  %v1544 = vunpack.c.h.b16 %v1454
  %v1545 = vunpack.c.l.b16 %v1455
  %v1546 = vunpack.c.h.b16 %v1455
  %v1547 = vunpack.c.l.b16 %v1456
  %v1548 = vunpack.c.h.b16 %v1456
  %v1549 = vunpack.c.l.b16 %v1457
  %v1550 = vunpack.c.h.b16 %v1457
  %v1551 = vunpack.c.l.b16 %v1458
  %v1552 = vunpack.c.h.b16 %v1458
  %v1553 = vunpack.c.l.b16 %v1459
  %v1554 = vunpack.c.h.b16 %v1459
  %v1555 = vunpack.c.l.b16 %v1460
  %v1556 = vunpack.c.h.b16 %v1460
  %v1557 = vpack.c.b16 %v1497, %v1493
  %v1558 = vpack.c.b16 %v1498, %v1494
  %v1559 = vpack.c.b16 %v1499, %v1495
  %v1560 = vpack.c.b16 %v1500, %v1496
  %v1561 = vpack.c.b16 %v1505, %v1501
  %v1562 = vpack.c.b16 %v1506, %v1502
  %v1563 = vpack.c.b16 %v1507, %v1503
  %v1564 = vpack.c.b16 %v1508, %v1504
  %v1565 = vpack.c.b16 %v1513, %v1509
  %v1566 = vpack.c.b16 %v1514, %v1510
  %v1567 = vpack.c.b16 %v1515, %v1511
  %v1568 = vpack.c.b16 %v1516, %v1512
  %v1569 = vpack.c.b16 %v1521, %v1517
  %v1570 = vpack.c.b16 %v1522, %v1518
  %v1571 = vpack.c.b16 %v1523, %v1519
  %v1572 = vpack.c.b16 %v1524, %v1520
  %v1573 = vpack.c.b16 %v1529, %v1525
  %v1574 = vpack.c.b16 %v1530, %v1526
  %v1575 = vpack.c.b16 %v1531, %v1527
  %v1576 = vpack.c.b16 %v1532, %v1528
  %v1577 = vpack.c.b16 %v1537, %v1533
  %v1578 = vpack.c.b16 %v1538, %v1534
  %v1579 = vpack.c.b16 %v1539, %v1535
  %v1580 = vpack.c.b16 %v1540, %v1536
  %v1581 = vpack.c.b16 %v1545, %v1541
  %v1582 = vpack.c.b16 %v1546, %v1542
  %v1583 = vpack.c.b16 %v1547, %v1543
  %v1584 = vpack.c.b16 %v1548, %v1544
  %v1585 = vpack.c.b16 %v1553, %v1549
  %v1586 = vpack.c.b16 %v1554, %v1550
  %v1587 = vpack.c.b16 %v1555, %v1551
  %v1588 = vpack.c.b16 %v1556, %v1552
  %1621 = vmatpush.bf16.msra.mxu0 %v1585
  %1622 = vmatpush.bf16.msra.mxu0 %v1581
  %1623 = vmatpush.bf16.msra.mxu0 %v1577
  %1624 = vmatpush.bf16.msra.mxu0 %v1573
  %1625 = vmatpush.bf16.msra.mxu0 %v1569
  %1626 = vmatpush.bf16.msra.mxu0 %v1565
  %1627 = vmatpush.bf16.msra.mxu0 %v1561
  %1628 = vmatpush.bf16.msra.mxu0 %v1557
  %1629 = vmatmul.bf16.gmra.mxu0 %v1428
  %v1630 = vpop.f32.mrf.mxu0
  %v1631 = vadd.f32 0.0, %v1630
  %v1632 = vpop.f32.mrf.mxu0
  %1633 = vdwg.mxu0
  %1634 = vmatpush.bf16.msra.mxu0 %v1586
  %1635 = vmatpush.bf16.msra.mxu0 %v1582
  %1636 = vmatpush.bf16.msra.mxu0 %v1578
  %1637 = vmatpush.bf16.msra.mxu0 %v1574
  %1638 = vmatpush.bf16.msra.mxu0 %v1570
  %1639 = vmatpush.bf16.msra.mxu0 %v1566
  %1640 = vmatpush.bf16.msra.mxu0 %v1562
  %1641 = vmatpush.bf16.msra.mxu0 %v1558
  %1642 = vmatmul.bf16.gmra.mxu0 %v1428
  %v1643 = vpop.f32.mrf.mxu0
  %v1644 = vadd.f32 0.0, %v1643
  %v1645 = vpop.f32.mrf.mxu0
  %1646 = vdwg.mxu0
  %1647 = vmatpush.bf16.msra.mxu0 %v1587
  %1648 = vmatpush.bf16.msra.mxu0 %v1583
  %1649 = vmatpush.bf16.msra.mxu0 %v1579
  %1650 = vmatpush.bf16.msra.mxu0 %v1575
  %1651 = vmatpush.bf16.msra.mxu0 %v1571
  %1652 = vmatpush.bf16.msra.mxu0 %v1567
  %1653 = vmatpush.bf16.msra.mxu0 %v1563
  %1654 = vmatpush.bf16.msra.mxu0 %v1559
  %1655 = vmatmul.bf16.gmra.mxu0 %v1428
  %v1656 = vpop.f32.mrf.mxu0
  %v1657 = vadd.f32 0.0, %v1656
  %v1658 = vpop.f32.mrf.mxu0
  %1659 = vdwg.mxu0
  %1660 = vmatpush.bf16.msra.mxu0 %v1588
  %1661 = vmatpush.bf16.msra.mxu0 %v1584
  %1662 = vmatpush.bf16.msra.mxu0 %v1580
  %1663 = vmatpush.bf16.msra.mxu0 %v1576
  %1664 = vmatpush.bf16.msra.mxu0 %v1572
  %1665 = vmatpush.bf16.msra.mxu0 %v1568
  %1666 = vmatpush.bf16.msra.mxu0 %v1564
  %1667 = vmatpush.bf16.msra.mxu0 %v1560
  %1668 = vmatmul.bf16.gmra.mxu0 %v1428
  %v1669 = vpop.f32.mrf.mxu0
  %v1670 = vadd.f32 0.0, %v1669
  %v1671 = vpop.f32.mrf.mxu0
  %1672 = vdwg.mxu0
  %v1673 = vadd.f32 %v1423, %v1631
  %v1674 = vadd.f32 %v1424, %v1644
  %v1675 = vadd.f32 %v1425, %v1657
  %v1676 = vadd.f32 %v1426, %v1670
  %v1677 = vmul.f32 %v1673, 0.5
  %v1678 = vtanh.pop %v1677
  %v1679 = vmul.f32 %v1678, 0.5
  %v1680 = vadd.f32 %v1679, 0.5
  %v1681 = vmul.f32 %v1674, 0.5
  %v1682 = vtanh.pop %v1681
  %v1683 = vmul.f32 %v1682, 0.5
  %v1684 = vadd.f32 %v1683, 0.5
  %v1685 = vtanh.pop %v1675
  %v1686 = vmul.f32 %v1676, 0.5
  %v1687 = vtanh.pop %v1686
  %v1688 = vmul.f32 %v1687, 0.5
  %v1689 = vadd.f32 %v1688, 0.5
  %v1690 = vld [vmem:[#allocation3] sm:$0xff]
  %v1691 = vmul.f32 %v1684, %v1690
  %v1692 = vmul.f32 %v1680, %v1685
  %v1693 = vadd.f32 %v1691, %v1692
  %v1694 = vtanh.pop %v1693
  %v1695 = vmul.f32 %v1689, %v1694
  %1696 = vst [vmem:[#allocation3] sm:$0xff] %v1693
  %1697 = vst [vmem:[#allocation2] sm:$0xff] %v1695
  %v1698 = vpack.c.bf16 %v1695, %v1695
  %s1699 = scalar_lea.vmem %s2, 20
  %1700 = vst [vmem:[%s1699] sm:$0xf] %v1698
  %s1701 = scalar_lea.vmem %s0, 96
  %v1702 = vld [vmem:[%s1701] sm:$0xff]
  %v1703 = vld [vmem:[%s1701 + $0x8] sm:$0xff]
  %v1704 = vunpack.c.l.bf16 %v1702
  %v1705 = vunpack.c.h.bf16 %v1702
  %v1706 = vunpack.c.l.bf16 %v1703
  %v1707 = vunpack.c.h.bf16 %v1703
  %v1708 = vld [vmem:[#allocation2] sm:$0xff]
  %v1709 = vpack.c.bf16 %v1708, %v1708
  %v1710 = vld [vmem:[%s1] sm:$0xff]
  %v1711 = vld [vmem:[%s1 + $0x8] sm:$0xff]
  %v1712 = vld [vmem:[%s1 + $0x10] sm:$0xff]
  %v1713 = vld [vmem:[%s1 + $0x18] sm:$0xff]
  %v1714 = vld [vmem:[%s1 + $0x20] sm:$0xff]
  %v1715 = vld [vmem:[%s1 + $0x28] sm:$0xff]
  %v1716 = vld [vmem:[%s1 + $0x30] sm:$0xff]
  %v1717 = vld [vmem:[%s1 + $0x38] sm:$0xff]
  %v1718 = vld [vmem:[%s1 + $0x40] sm:$0xff]
  %v1719 = vld [vmem:[%s1 + $0x48] sm:$0xff]
  %v1720 = vld [vmem:[%s1 + $0x50] sm:$0xff]
  %v1721 = vld [vmem:[%s1 + $0x58] sm:$0xff]
  %v1722 = vld [vmem:[%s1 + $0x60] sm:$0xff]
  %v1723 = vld [vmem:[%s1 + $0x68] sm:$0xff]
  %v1724 = vld [vmem:[%s1 + $0x70] sm:$0xff]
  %v1725 = vld [vmem:[%s1 + $0x78] sm:$0xff]
  %v1726 = vld [vmem:[%s1 + $0x80] sm:$0xff]
  %v1727 = vld [vmem:[%s1 + $0x88] sm:$0xff]
  %v1728 = vld [vmem:[%s1 + $0x90] sm:$0xff]
  %v1729 = vld [vmem:[%s1 + $0x98] sm:$0xff]
  %v1730 = vld [vmem:[%s1 + $0xa0] sm:$0xff]
  %v1731 = vld [vmem:[%s1 + $0xa8] sm:$0xff]
  %v1732 = vld [vmem:[%s1 + $0xb0] sm:$0xff]
  %v1733 = vld [vmem:[%s1 + $0xb8] sm:$0xff]
  %v1734 = vld [vmem:[%s1 + $0xc0] sm:$0xff]
  %v1735 = vld [vmem:[%s1 + $0xc8] sm:$0xff]
  %v1736 = vld [vmem:[%s1 + $0xd0] sm:$0xff]
  %v1737 = vld [vmem:[%s1 + $0xd8] sm:$0xff]
  %v1738 = vld [vmem:[%s1 + $0xe0] sm:$0xff]
  %v1739 = vld [vmem:[%s1 + $0xe8] sm:$0xff]
  %v1740 = vld [vmem:[%s1 + $0xf0] sm:$0xff]
  %v1741 = vld [vmem:[%s1 + $0xf8] sm:$0xff]
  %v1774 = vunpack.c.l.b16 %v1710
  %v1775 = vunpack.c.h.b16 %v1710
  %v1776 = vunpack.c.l.b16 %v1711
  %v1777 = vunpack.c.h.b16 %v1711
  %v1778 = vunpack.c.l.b16 %v1712
  %v1779 = vunpack.c.h.b16 %v1712
  %v1780 = vunpack.c.l.b16 %v1713
  %v1781 = vunpack.c.h.b16 %v1713
  %v1782 = vunpack.c.l.b16 %v1714
  %v1783 = vunpack.c.h.b16 %v1714
  %v1784 = vunpack.c.l.b16 %v1715
  %v1785 = vunpack.c.h.b16 %v1715
  %v1786 = vunpack.c.l.b16 %v1716
  %v1787 = vunpack.c.h.b16 %v1716
  %v1788 = vunpack.c.l.b16 %v1717
  %v1789 = vunpack.c.h.b16 %v1717
  %v1790 = vunpack.c.l.b16 %v1718
  %v1791 = vunpack.c.h.b16 %v1718
  %v1792 = vunpack.c.l.b16 %v1719
  %v1793 = vunpack.c.h.b16 %v1719
  %v1794 = vunpack.c.l.b16 %v1720
  %v1795 = vunpack.c.h.b16 %v1720
  %v1796 = vunpack.c.l.b16 %v1721
  %v1797 = vunpack.c.h.b16 %v1721
  %v1798 = vunpack.c.l.b16 %v1722
  %v1799 = vunpack.c.h.b16 %v1722
  %v1800 = vunpack.c.l.b16 %v1723
  %v1801 = vunpack.c.h.b16 %v1723
  %v1802 = vunpack.c.l.b16 %v1724
  %v1803 = vunpack.c.h.b16 %v1724
  %v1804 = vunpack.c.l.b16 %v1725
  %v1805 = vunpack.c.h.b16 %v1725
  %v1806 = vunpack.c.l.b16 %v1726
  %v1807 = vunpack.c.h.b16 %v1726
  %v1808 = vunpack.c.l.b16 %v1727
  %v1809 = vunpack.c.h.b16 %v1727
  %v1810 = vunpack.c.l.b16 %v1728
  %v1811 = vunpack.c.h.b16 %v1728
  %v1812 = vunpack.c.l.b16 %v1729
  %v1813 = vunpack.c.h.b16 %v1729
  %v1814 = vunpack.c.l.b16 %v1730
  %v1815 = vunpack.c.h.b16 %v1730
  %v1816 = vunpack.c.l.b16 %v1731
  %v1817 = vunpack.c.h.b16 %v1731
  %v1818 = vunpack.c.l.b16 %v1732
  %v1819 = vunpack.c.h.b16 %v1732
  %v1820 = vunpack.c.l.b16 %v1733
  %v1821 = vunpack.c.h.b16 %v1733
  %v1822 = vunpack.c.l.b16 %v1734
  %v1823 = vunpack.c.h.b16 %v1734
  %v1824 = vunpack.c.l.b16 %v1735
  %v1825 = vunpack.c.h.b16 %v1735
  %v1826 = vunpack.c.l.b16 %v1736
  %v1827 = vunpack.c.h.b16 %v1736
  %v1828 = vunpack.c.l.b16 %v1737
  %v1829 = vunpack.c.h.b16 %v1737
  %v1830 = vunpack.c.l.b16 %v1738
  %v1831 = vunpack.c.h.b16 %v1738
  %v1832 = vunpack.c.l.b16 %v1739
  %v1833 = vunpack.c.h.b16 %v1739
  %v1834 = vunpack.c.l.b16 %v1740
  %v1835 = vunpack.c.h.b16 %v1740
  %v1836 = vunpack.c.l.b16 %v1741
  %v1837 = vunpack.c.h.b16 %v1741
  %v1838 = vpack.c.b16 %v1778, %v1774
  %v1839 = vpack.c.b16 %v1779, %v1775
  %v1840 = vpack.c.b16 %v1780, %v1776
  %v1841 = vpack.c.b16 %v1781, %v1777
  %v1842 = vpack.c.b16 %v1786, %v1782
  %v1843 = vpack.c.b16 %v1787, %v1783
  %v1844 = vpack.c.b16 %v1788, %v1784
  %v1845 = vpack.c.b16 %v1789, %v1785
  %v1846 = vpack.c.b16 %v1794, %v1790
  %v1847 = vpack.c.b16 %v1795, %v1791
  %v1848 = vpack.c.b16 %v1796, %v1792
  %v1849 = vpack.c.b16 %v1797, %v1793
  %v1850 = vpack.c.b16 %v1802, %v1798
  %v1851 = vpack.c.b16 %v1803, %v1799
  %v1852 = vpack.c.b16 %v1804, %v1800
  %v1853 = vpack.c.b16 %v1805, %v1801
  %v1854 = vpack.c.b16 %v1810, %v1806
  %v1855 = vpack.c.b16 %v1811, %v1807
  %v1856 = vpack.c.b16 %v1812, %v1808
  %v1857 = vpack.c.b16 %v1813, %v1809
  %v1858 = vpack.c.b16 %v1818, %v1814
  %v1859 = vpack.c.b16 %v1819, %v1815
  %v1860 = vpack.c.b16 %v1820, %v1816
  %v1861 = vpack.c.b16 %v1821, %v1817
  %v1862 = vpack.c.b16 %v1826, %v1822
  %v1863 = vpack.c.b16 %v1827, %v1823
  %v1864 = vpack.c.b16 %v1828, %v1824
  %v1865 = vpack.c.b16 %v1829, %v1825
  %v1866 = vpack.c.b16 %v1834, %v1830
  %v1867 = vpack.c.b16 %v1835, %v1831
  %v1868 = vpack.c.b16 %v1836, %v1832
  %v1869 = vpack.c.b16 %v1837, %v1833
  %1902 = vmatpush.bf16.msra.mxu0 %v1866
  %1903 = vmatpush.bf16.msra.mxu0 %v1862
  %1904 = vmatpush.bf16.msra.mxu0 %v1858
  %1905 = vmatpush.bf16.msra.mxu0 %v1854
  %1906 = vmatpush.bf16.msra.mxu0 %v1850
  %1907 = vmatpush.bf16.msra.mxu0 %v1846
  %1908 = vmatpush.bf16.msra.mxu0 %v1842
  %1909 = vmatpush.bf16.msra.mxu0 %v1838
  %1910 = vmatmul.bf16.gmra.mxu0 %v1709
  %v1911 = vpop.f32.mrf.mxu0
  %v1912 = vadd.f32 0.0, %v1911
  %v1913 = vpop.f32.mrf.mxu0
  %1914 = vdwg.mxu0
  %1915 = vmatpush.bf16.msra.mxu0 %v1867
  %1916 = vmatpush.bf16.msra.mxu0 %v1863
  %1917 = vmatpush.bf16.msra.mxu0 %v1859
  %1918 = vmatpush.bf16.msra.mxu0 %v1855
  %1919 = vmatpush.bf16.msra.mxu0 %v1851
  %1920 = vmatpush.bf16.msra.mxu0 %v1847
  %1921 = vmatpush.bf16.msra.mxu0 %v1843
  %1922 = vmatpush.bf16.msra.mxu0 %v1839
  %1923 = vmatmul.bf16.gmra.mxu0 %v1709
  %v1924 = vpop.f32.mrf.mxu0
  %v1925 = vadd.f32 0.0, %v1924
  %v1926 = vpop.f32.mrf.mxu0
  %1927 = vdwg.mxu0
  %1928 = vmatpush.bf16.msra.mxu0 %v1868
  %1929 = vmatpush.bf16.msra.mxu0 %v1864
  %1930 = vmatpush.bf16.msra.mxu0 %v1860
  %1931 = vmatpush.bf16.msra.mxu0 %v1856
  %1932 = vmatpush.bf16.msra.mxu0 %v1852
  %1933 = vmatpush.bf16.msra.mxu0 %v1848
  %1934 = vmatpush.bf16.msra.mxu0 %v1844
  %1935 = vmatpush.bf16.msra.mxu0 %v1840
  %1936 = vmatmul.bf16.gmra.mxu0 %v1709
  %v1937 = vpop.f32.mrf.mxu0
  %v1938 = vadd.f32 0.0, %v1937
  %v1939 = vpop.f32.mrf.mxu0
  %1940 = vdwg.mxu0
  %1941 = vmatpush.bf16.msra.mxu0 %v1869
  %1942 = vmatpush.bf16.msra.mxu0 %v1865
  %1943 = vmatpush.bf16.msra.mxu0 %v1861
  %1944 = vmatpush.bf16.msra.mxu0 %v1857
  %1945 = vmatpush.bf16.msra.mxu0 %v1853
  %1946 = vmatpush.bf16.msra.mxu0 %v1849
  %1947 = vmatpush.bf16.msra.mxu0 %v1845
  %1948 = vmatpush.bf16.msra.mxu0 %v1841
  %1949 = vmatmul.bf16.gmra.mxu0 %v1709
  %v1950 = vpop.f32.mrf.mxu0
  %v1951 = vadd.f32 0.0, %v1950
  %v1952 = vpop.f32.mrf.mxu0
  %1953 = vdwg.mxu0
  %v1954 = vadd.f32 %v1704, %v1912
  %v1955 = vadd.f32 %v1705, %v1925
  %v1956 = vadd.f32 %v1706, %v1938
  %v1957 = vadd.f32 %v1707, %v1951
  %v1958 = vmul.f32 %v1954, 0.5
  %v1959 = vtanh.pop %v1958
  %v1960 = vmul.f32 %v1959, 0.5
  %v1961 = vadd.f32 %v1960, 0.5
  %v1962 = vmul.f32 %v1955, 0.5
  %v1963 = vtanh.pop %v1962
  %v1964 = vmul.f32 %v1963, 0.5
  %v1965 = vadd.f32 %v1964, 0.5
  %v1966 = vtanh.pop %v1956
  %v1967 = vmul.f32 %v1957, 0.5
  %v1968 = vtanh.pop %v1967
  %v1969 = vmul.f32 %v1968, 0.5
  %v1970 = vadd.f32 %v1969, 0.5
  %v1971 = vld [vmem:[#allocation3] sm:$0xff]
  %v1972 = vmul.f32 %v1965, %v1971
  %v1973 = vmul.f32 %v1961, %v1966
  %v1974 = vadd.f32 %v1972, %v1973
  %v1975 = vtanh.pop %v1974
  %v1976 = vmul.f32 %v1970, %v1975
  %1977 = vst [vmem:[#allocation3] sm:$0xff] %v1974
  %1978 = vst [vmem:[#allocation2] sm:$0xff] %v1976
  %v1979 = vpack.c.bf16 %v1976, %v1976
  %s1980 = scalar_lea.vmem %s2, 24
  %1981 = vst [vmem:[%s1980] sm:$0xf] %v1979
  %s1982 = scalar_lea.vmem %s0, 112
  %v1983 = vld [vmem:[%s1982] sm:$0xff]
  %v1984 = vld [vmem:[%s1982 + $0x8] sm:$0xff]
  %v1985 = vunpack.c.l.bf16 %v1983
  %v1986 = vunpack.c.h.bf16 %v1983
  %v1987 = vunpack.c.l.bf16 %v1984
  %v1988 = vunpack.c.h.bf16 %v1984
  %v1989 = vld [vmem:[#allocation2] sm:$0xff]
  %v1990 = vpack.c.bf16 %v1989, %v1989
  %v1991 = vld [vmem:[%s1] sm:$0xff]
  %v1992 = vld [vmem:[%s1 + $0x8] sm:$0xff]
  %v1993 = vld [vmem:[%s1 + $0x10] sm:$0xff]
  %v1994 = vld [vmem:[%s1 + $0x18] sm:$0xff]
  %v1995 = vld [vmem:[%s1 + $0x20] sm:$0xff]
  %v1996 = vld [vmem:[%s1 + $0x28] sm:$0xff]
  %v1997 = vld [vmem:[%s1 + $0x30] sm:$0xff]
  %v1998 = vld [vmem:[%s1 + $0x38] sm:$0xff]
  %v1999 = vld [vmem:[%s1 + $0x40] sm:$0xff]
  %v2000 = vld [vmem:[%s1 + $0x48] sm:$0xff]
  %v2001 = vld [vmem:[%s1 + $0x50] sm:$0xff]
  %v2002 = vld [vmem:[%s1 + $0x58] sm:$0xff]
  %v2003 = vld [vmem:[%s1 + $0x60] sm:$0xff]
  %v2004 = vld [vmem:[%s1 + $0x68] sm:$0xff]
  %v2005 = vld [vmem:[%s1 + $0x70] sm:$0xff]
  %v2006 = vld [vmem:[%s1 + $0x78] sm:$0xff]
  %v2007 = vld [vmem:[%s1 + $0x80] sm:$0xff]
  %v2008 = vld [vmem:[%s1 + $0x88] sm:$0xff]
  %v2009 = vld [vmem:[%s1 + $0x90] sm:$0xff]
  %v2010 = vld [vmem:[%s1 + $0x98] sm:$0xff]
  %v2011 = vld [vmem:[%s1 + $0xa0] sm:$0xff]
  %v2012 = vld [vmem:[%s1 + $0xa8] sm:$0xff]
  %v2013 = vld [vmem:[%s1 + $0xb0] sm:$0xff]
  %v2014 = vld [vmem:[%s1 + $0xb8] sm:$0xff]
  %v2015 = vld [vmem:[%s1 + $0xc0] sm:$0xff]
  %v2016 = vld [vmem:[%s1 + $0xc8] sm:$0xff]
  %v2017 = vld [vmem:[%s1 + $0xd0] sm:$0xff]
  %v2018 = vld [vmem:[%s1 + $0xd8] sm:$0xff]
  %v2019 = vld [vmem:[%s1 + $0xe0] sm:$0xff]
  %v2020 = vld [vmem:[%s1 + $0xe8] sm:$0xff]
  %v2021 = vld [vmem:[%s1 + $0xf0] sm:$0xff]
  %v2022 = vld [vmem:[%s1 + $0xf8] sm:$0xff]
  %v2055 = vunpack.c.l.b16 %v1991
  %v2056 = vunpack.c.h.b16 %v1991
  %v2057 = vunpack.c.l.b16 %v1992
  %v2058 = vunpack.c.h.b16 %v1992
  %v2059 = vunpack.c.l.b16 %v1993
  %v2060 = vunpack.c.h.b16 %v1993
  %v2061 = vunpack.c.l.b16 %v1994
  %v2062 = vunpack.c.h.b16 %v1994
  %v2063 = vunpack.c.l.b16 %v1995
  %v2064 = vunpack.c.h.b16 %v1995
  %v2065 = vunpack.c.l.b16 %v1996
  %v2066 = vunpack.c.h.b16 %v1996
  %v2067 = vunpack.c.l.b16 %v1997
  %v2068 = vunpack.c.h.b16 %v1997
  %v2069 = vunpack.c.l.b16 %v1998
  %v2070 = vunpack.c.h.b16 %v1998
  %v2071 = vunpack.c.l.b16 %v1999
  %v2072 = vunpack.c.h.b16 %v1999
  %v2073 = vunpack.c.l.b16 %v2000
  %v2074 = vunpack.c.h.b16 %v2000
  %v2075 = vunpack.c.l.b16 %v2001
  %v2076 = vunpack.c.h.b16 %v2001
  %v2077 = vunpack.c.l.b16 %v2002
  %v2078 = vunpack.c.h.b16 %v2002
  %v2079 = vunpack.c.l.b16 %v2003
  %v2080 = vunpack.c.h.b16 %v2003
  %v2081 = vunpack.c.l.b16 %v2004
  %v2082 = vunpack.c.h.b16 %v2004
  %v2083 = vunpack.c.l.b16 %v2005
  %v2084 = vunpack.c.h.b16 %v2005
  %v2085 = vunpack.c.l.b16 %v2006
  %v2086 = vunpack.c.h.b16 %v2006
  %v2087 = vunpack.c.l.b16 %v2007
  %v2088 = vunpack.c.h.b16 %v2007
  %v2089 = vunpack.c.l.b16 %v2008
  %v2090 = vunpack.c.h.b16 %v2008
  %v2091 = vunpack.c.l.b16 %v2009
  %v2092 = vunpack.c.h.b16 %v2009
  %v2093 = vunpack.c.l.b16 %v2010
  %v2094 = vunpack.c.h.b16 %v2010
  %v2095 = vunpack.c.l.b16 %v2011
  %v2096 = vunpack.c.h.b16 %v2011
  %v2097 = vunpack.c.l.b16 %v2012
  %v2098 = vunpack.c.h.b16 %v2012
  %v2099 = vunpack.c.l.b16 %v2013
  %v2100 = vunpack.c.h.b16 %v2013
  %v2101 = vunpack.c.l.b16 %v2014
  %v2102 = vunpack.c.h.b16 %v2014
  %v2103 = vunpack.c.l.b16 %v2015
  %v2104 = vunpack.c.h.b16 %v2015
  %v2105 = vunpack.c.l.b16 %v2016
  %v2106 = vunpack.c.h.b16 %v2016
  %v2107 = vunpack.c.l.b16 %v2017
  %v2108 = vunpack.c.h.b16 %v2017
  %v2109 = vunpack.c.l.b16 %v2018
  %v2110 = vunpack.c.h.b16 %v2018
  %v2111 = vunpack.c.l.b16 %v2019
  %v2112 = vunpack.c.h.b16 %v2019
  %v2113 = vunpack.c.l.b16 %v2020
  %v2114 = vunpack.c.h.b16 %v2020
  %v2115 = vunpack.c.l.b16 %v2021
  %v2116 = vunpack.c.h.b16 %v2021
  %v2117 = vunpack.c.l.b16 %v2022
  %v2118 = vunpack.c.h.b16 %v2022
  %v2119 = vpack.c.b16 %v2059, %v2055
  %v2120 = vpack.c.b16 %v2060, %v2056
  %v2121 = vpack.c.b16 %v2061, %v2057
  %v2122 = vpack.c.b16 %v2062, %v2058
  %v2123 = vpack.c.b16 %v2067, %v2063
  %v2124 = vpack.c.b16 %v2068, %v2064
  %v2125 = vpack.c.b16 %v2069, %v2065
  %v2126 = vpack.c.b16 %v2070, %v2066
  %v2127 = vpack.c.b16 %v2075, %v2071
  %v2128 = vpack.c.b16 %v2076, %v2072
  %v2129 = vpack.c.b16 %v2077, %v2073
  %v2130 = vpack.c.b16 %v2078, %v2074
  %v2131 = vpack.c.b16 %v2083, %v2079
  %v2132 = vpack.c.b16 %v2084, %v2080
  %v2133 = vpack.c.b16 %v2085, %v2081
  %v2134 = vpack.c.b16 %v2086, %v2082
  %v2135 = vpack.c.b16 %v2091, %v2087
  %v2136 = vpack.c.b16 %v2092, %v2088
  %v2137 = vpack.c.b16 %v2093, %v2089
  %v2138 = vpack.c.b16 %v2094, %v2090
  %v2139 = vpack.c.b16 %v2099, %v2095
  %v2140 = vpack.c.b16 %v2100, %v2096
  %v2141 = vpack.c.b16 %v2101, %v2097
  %v2142 = vpack.c.b16 %v2102, %v2098
  %v2143 = vpack.c.b16 %v2107, %v2103
  %v2144 = vpack.c.b16 %v2108, %v2104
  %v2145 = vpack.c.b16 %v2109, %v2105
  %v2146 = vpack.c.b16 %v2110, %v2106
  %v2147 = vpack.c.b16 %v2115, %v2111
  %v2148 = vpack.c.b16 %v2116, %v2112
  %v2149 = vpack.c.b16 %v2117, %v2113
  %v2150 = vpack.c.b16 %v2118, %v2114
  %2183 = vmatpush.bf16.msra.mxu0 %v2147
  %2184 = vmatpush.bf16.msra.mxu0 %v2143
  %2185 = vmatpush.bf16.msra.mxu0 %v2139
  %2186 = vmatpush.bf16.msra.mxu0 %v2135
  %2187 = vmatpush.bf16.msra.mxu0 %v2131
  %2188 = vmatpush.bf16.msra.mxu0 %v2127
  %2189 = vmatpush.bf16.msra.mxu0 %v2123
  %2190 = vmatpush.bf16.msra.mxu0 %v2119
  %2191 = vmatmul.bf16.gmra.mxu0 %v1990
  %v2192 = vpop.f32.mrf.mxu0
  %v2193 = vadd.f32 0.0, %v2192
  %v2194 = vpop.f32.mrf.mxu0
  %2195 = vdwg.mxu0
  %2196 = vmatpush.bf16.msra.mxu0 %v2148
  %2197 = vmatpush.bf16.msra.mxu0 %v2144
  %2198 = vmatpush.bf16.msra.mxu0 %v2140
  %2199 = vmatpush.bf16.msra.mxu0 %v2136
  %2200 = vmatpush.bf16.msra.mxu0 %v2132
  %2201 = vmatpush.bf16.msra.mxu0 %v2128
  %2202 = vmatpush.bf16.msra.mxu0 %v2124
  %2203 = vmatpush.bf16.msra.mxu0 %v2120
  %2204 = vmatmul.bf16.gmra.mxu0 %v1990
  %v2205 = vpop.f32.mrf.mxu0
  %v2206 = vadd.f32 0.0, %v2205
  %v2207 = vpop.f32.mrf.mxu0
  %2208 = vdwg.mxu0
  %2209 = vmatpush.bf16.msra.mxu0 %v2149
  %2210 = vmatpush.bf16.msra.mxu0 %v2145
  %2211 = vmatpush.bf16.msra.mxu0 %v2141
  %2212 = vmatpush.bf16.msra.mxu0 %v2137
  %2213 = vmatpush.bf16.msra.mxu0 %v2133
  %2214 = vmatpush.bf16.msra.mxu0 %v2129
  %2215 = vmatpush.bf16.msra.mxu0 %v2125
  %2216 = vmatpush.bf16.msra.mxu0 %v2121
  %2217 = vmatmul.bf16.gmra.mxu0 %v1990
  %v2218 = vpop.f32.mrf.mxu0
  %v2219 = vadd.f32 0.0, %v2218
  %v2220 = vpop.f32.mrf.mxu0
  %2221 = vdwg.mxu0
  %2222 = vmatpush.bf16.msra.mxu0 %v2150
  %2223 = vmatpush.bf16.msra.mxu0 %v2146
  %2224 = vmatpush.bf16.msra.mxu0 %v2142
  %2225 = vmatpush.bf16.msra.mxu0 %v2138
  %2226 = vmatpush.bf16.msra.mxu0 %v2134
  %2227 = vmatpush.bf16.msra.mxu0 %v2130
  %2228 = vmatpush.bf16.msra.mxu0 %v2126
  %2229 = vmatpush.bf16.msra.mxu0 %v2122
  %2230 = vmatmul.bf16.gmra.mxu0 %v1990
  %v2231 = vpop.f32.mrf.mxu0
  %v2232 = vadd.f32 0.0, %v2231
  %v2233 = vpop.f32.mrf.mxu0
  %2234 = vdwg.mxu0
  %v2235 = vadd.f32 %v1985, %v2193
  %v2236 = vadd.f32 %v1986, %v2206
  %v2237 = vadd.f32 %v1987, %v2219
  %v2238 = vadd.f32 %v1988, %v2232
  %v2239 = vmul.f32 %v2235, 0.5
  %v2240 = vtanh.pop %v2239
  %v2241 = vmul.f32 %v2240, 0.5
  %v2242 = vadd.f32 %v2241, 0.5
  %v2243 = vmul.f32 %v2236, 0.5
  %v2244 = vtanh.pop %v2243
  %v2245 = vmul.f32 %v2244, 0.5
  %v2246 = vadd.f32 %v2245, 0.5
  %v2247 = vtanh.pop %v2237
  %v2248 = vmul.f32 %v2238, 0.5
  %v2249 = vtanh.pop %v2248
  %v2250 = vmul.f32 %v2249, 0.5
  %v2251 = vadd.f32 %v2250, 0.5
  %v2252 = vld [vmem:[#allocation3] sm:$0xff]
  %v2253 = vmul.f32 %v2246, %v2252
  %v2254 = vmul.f32 %v2242, %v2247
  %v2255 = vadd.f32 %v2253, %v2254
  %v2256 = vtanh.pop %v2255
  %v2257 = vmul.f32 %v2251, %v2256
  %2258 = vst [vmem:[#allocation3] sm:$0xff] %v2255
  %2259 = vst [vmem:[#allocation2] sm:$0xff] %v2257
  %v2260 = vpack.c.bf16 %v2257, %v2257
  %s2261 = scalar_lea.vmem %s2, 28
  %2262 = vst [vmem:[%s2261] sm:$0xf] %v2260
  %s2263 = scalar_lea.vmem %s0, 128
  %v2264 = vld [vmem:[%s2263] sm:$0xff]
  %v2265 = vld [vmem:[%s2263 + $0x8] sm:$0xff]
  %v2266 = vunpack.c.l.bf16 %v2264
  %v2267 = vunpack.c.h.bf16 %v2264
  %v2268 = vunpack.c.l.bf16 %v2265
  %v2269 = vunpack.c.h.bf16 %v2265
  %v2270 = vld [vmem:[#allocation2] sm:$0xff]
  %v2271 = vpack.c.bf16 %v2270, %v2270
  %v2272 = vld [vmem:[%s1] sm:$0xff]
  %v2273 = vld [vmem:[%s1 + $0x8] sm:$0xff]
  %v2274 = vld [vmem:[%s1 + $0x10] sm:$0xff]
  %v2275 = vld [vmem:[%s1 + $0x18] sm:$0xff]
  %v2276 = vld [vmem:[%s1 + $0x20] sm:$0xff]
  %v2277 = vld [vmem:[%s1 + $0x28] sm:$0xff]
  %v2278 = vld [vmem:[%s1 + $0x30] sm:$0xff]
  %v2279 = vld [vmem:[%s1 + $0x38] sm:$0xff]
  %v2280 = vld [vmem:[%s1 + $0x40] sm:$0xff]
  %v2281 = vld [vmem:[%s1 + $0x48] sm:$0xff]
  %v2282 = vld [vmem:[%s1 + $0x50] sm:$0xff]
  %v2283 = vld [vmem:[%s1 + $0x58] sm:$0xff]
  %v2284 = vld [vmem:[%s1 + $0x60] sm:$0xff]
  %v2285 = vld [vmem:[%s1 + $0x68] sm:$0xff]
  %v2286 = vld [vmem:[%s1 + $0x70] sm:$0xff]
  %v2287 = vld [vmem:[%s1 + $0x78] sm:$0xff]
  %v2288 = vld [vmem:[%s1 + $0x80] sm:$0xff]
  %v2289 = vld [vmem:[%s1 + $0x88] sm:$0xff]
  %v2290 = vld [vmem:[%s1 + $0x90] sm:$0xff]
  %v2291 = vld [vmem:[%s1 + $0x98] sm:$0xff]
  %v2292 = vld [vmem:[%s1 + $0xa0] sm:$0xff]
  %v2293 = vld [vmem:[%s1 + $0xa8] sm:$0xff]
  %v2294 = vld [vmem:[%s1 + $0xb0] sm:$0xff]
  %v2295 = vld [vmem:[%s1 + $0xb8] sm:$0xff]
  %v2296 = vld [vmem:[%s1 + $0xc0] sm:$0xff]
  %v2297 = vld [vmem:[%s1 + $0xc8] sm:$0xff]
  %v2298 = vld [vmem:[%s1 + $0xd0] sm:$0xff]
  %v2299 = vld [vmem:[%s1 + $0xd8] sm:$0xff]
  %v2300 = vld [vmem:[%s1 + $0xe0] sm:$0xff]
  %v2301 = vld [vmem:[%s1 + $0xe8] sm:$0xff]
  %v2302 = vld [vmem:[%s1 + $0xf0] sm:$0xff]
  %v2303 = vld [vmem:[%s1 + $0xf8] sm:$0xff]
  %v2336 = vunpack.c.l.b16 %v2272
  %v2337 = vunpack.c.h.b16 %v2272
  %v2338 = vunpack.c.l.b16 %v2273
  %v2339 = vunpack.c.h.b16 %v2273
  %v2340 = vunpack.c.l.b16 %v2274
  %v2341 = vunpack.c.h.b16 %v2274
  %v2342 = vunpack.c.l.b16 %v2275
  %v2343 = vunpack.c.h.b16 %v2275
  %v2344 = vunpack.c.l.b16 %v2276
  %v2345 = vunpack.c.h.b16 %v2276
  %v2346 = vunpack.c.l.b16 %v2277
  %v2347 = vunpack.c.h.b16 %v2277
  %v2348 = vunpack.c.l.b16 %v2278
  %v2349 = vunpack.c.h.b16 %v2278
  %v2350 = vunpack.c.l.b16 %v2279
  %v2351 = vunpack.c.h.b16 %v2279
  %v2352 = vunpack.c.l.b16 %v2280
  %v2353 = vunpack.c.h.b16 %v2280
  %v2354 = vunpack.c.l.b16 %v2281
  %v2355 = vunpack.c.h.b16 %v2281
  %v2356 = vunpack.c.l.b16 %v2282
  %v2357 = vunpack.c.h.b16 %v2282
  %v2358 = vunpack.c.l.b16 %v2283
  %v2359 = vunpack.c.h.b16 %v2283
  %v2360 = vunpack.c.l.b16 %v2284
  %v2361 = vunpack.c.h.b16 %v2284
  %v2362 = vunpack.c.l.b16 %v2285
  %v2363 = vunpack.c.h.b16 %v2285
  %v2364 = vunpack.c.l.b16 %v2286
  %v2365 = vunpack.c.h.b16 %v2286
  %v2366 = vunpack.c.l.b16 %v2287
  %v2367 = vunpack.c.h.b16 %v2287
  %v2368 = vunpack.c.l.b16 %v2288
  %v2369 = vunpack.c.h.b16 %v2288
  %v2370 = vunpack.c.l.b16 %v2289
  %v2371 = vunpack.c.h.b16 %v2289
  %v2372 = vunpack.c.l.b16 %v2290
  %v2373 = vunpack.c.h.b16 %v2290
  %v2374 = vunpack.c.l.b16 %v2291
  %v2375 = vunpack.c.h.b16 %v2291
  %v2376 = vunpack.c.l.b16 %v2292
  %v2377 = vunpack.c.h.b16 %v2292
  %v2378 = vunpack.c.l.b16 %v2293
  %v2379 = vunpack.c.h.b16 %v2293
  %v2380 = vunpack.c.l.b16 %v2294
  %v2381 = vunpack.c.h.b16 %v2294
  %v2382 = vunpack.c.l.b16 %v2295
  %v2383 = vunpack.c.h.b16 %v2295
  %v2384 = vunpack.c.l.b16 %v2296
  %v2385 = vunpack.c.h.b16 %v2296
  %v2386 = vunpack.c.l.b16 %v2297
  %v2387 = vunpack.c.h.b16 %v2297
  %v2388 = vunpack.c.l.b16 %v2298
  %v2389 = vunpack.c.h.b16 %v2298
  %v2390 = vunpack.c.l.b16 %v2299
  %v2391 = vunpack.c.h.b16 %v2299
  %v2392 = vunpack.c.l.b16 %v2300
  %v2393 = vunpack.c.h.b16 %v2300
  %v2394 = vunpack.c.l.b16 %v2301
  %v2395 = vunpack.c.h.b16 %v2301
  %v2396 = vunpack.c.l.b16 %v2302
  %v2397 = vunpack.c.h.b16 %v2302
  %v2398 = vunpack.c.l.b16 %v2303
  %v2399 = vunpack.c.h.b16 %v2303
  %v2400 = vpack.c.b16 %v2340, %v2336
  %v2401 = vpack.c.b16 %v2341, %v2337
  %v2402 = vpack.c.b16 %v2342, %v2338
  %v2403 = vpack.c.b16 %v2343, %v2339
  %v2404 = vpack.c.b16 %v2348, %v2344
  %v2405 = vpack.c.b16 %v2349, %v2345
  %v2406 = vpack.c.b16 %v2350, %v2346
  %v2407 = vpack.c.b16 %v2351, %v2347
  %v2408 = vpack.c.b16 %v2356, %v2352
  %v2409 = vpack.c.b16 %v2357, %v2353
  %v2410 = vpack.c.b16 %v2358, %v2354
  %v2411 = vpack.c.b16 %v2359, %v2355
  %v2412 = vpack.c.b16 %v2364, %v2360
  %v2413 = vpack.c.b16 %v2365, %v2361
  %v2414 = vpack.c.b16 %v2366, %v2362
  %v2415 = vpack.c.b16 %v2367, %v2363
  %v2416 = vpack.c.b16 %v2372, %v2368
  %v2417 = vpack.c.b16 %v2373, %v2369
  %v2418 = vpack.c.b16 %v2374, %v2370
  %v2419 = vpack.c.b16 %v2375, %v2371
  %v2420 = vpack.c.b16 %v2380, %v2376
  %v2421 = vpack.c.b16 %v2381, %v2377
  %v2422 = vpack.c.b16 %v2382, %v2378
  %v2423 = vpack.c.b16 %v2383, %v2379
  %v2424 = vpack.c.b16 %v2388, %v2384
  %v2425 = vpack.c.b16 %v2389, %v2385
  %v2426 = vpack.c.b16 %v2390, %v2386
  %v2427 = vpack.c.b16 %v2391, %v2387
  %v2428 = vpack.c.b16 %v2396, %v2392
  %v2429 = vpack.c.b16 %v2397, %v2393
  %v2430 = vpack.c.b16 %v2398, %v2394
  %v2431 = vpack.c.b16 %v2399, %v2395
  %2464 = vmatpush.bf16.msra.mxu0 %v2428
  %2465 = vmatpush.bf16.msra.mxu0 %v2424
  %2466 = vmatpush.bf16.msra.mxu0 %v2420
  %2467 = vmatpush.bf16.msra.mxu0 %v2416
  %2468 = vmatpush.bf16.msra.mxu0 %v2412
  %2469 = vmatpush.bf16.msra.mxu0 %v2408
  %2470 = vmatpush.bf16.msra.mxu0 %v2404
  %2471 = vmatpush.bf16.msra.mxu0 %v2400
  %2472 = vmatmul.bf16.gmra.mxu0 %v2271
  %v2473 = vpop.f32.mrf.mxu0
  %v2474 = vadd.f32 0.0, %v2473
  %v2475 = vpop.f32.mrf.mxu0
  %2476 = vdwg.mxu0
  %2477 = vmatpush.bf16.msra.mxu0 %v2429
  %2478 = vmatpush.bf16.msra.mxu0 %v2425
  %2479 = vmatpush.bf16.msra.mxu0 %v2421
  %2480 = vmatpush.bf16.msra.mxu0 %v2417
  %2481 = vmatpush.bf16.msra.mxu0 %v2413
  %2482 = vmatpush.bf16.msra.mxu0 %v2409
  %2483 = vmatpush.bf16.msra.mxu0 %v2405
  %2484 = vmatpush.bf16.msra.mxu0 %v2401
  %2485 = vmatmul.bf16.gmra.mxu0 %v2271
  %v2486 = vpop.f32.mrf.mxu0
  %v2487 = vadd.f32 0.0, %v2486
  %v2488 = vpop.f32.mrf.mxu0
  %2489 = vdwg.mxu0
  %2490 = vmatpush.bf16.msra.mxu0 %v2430
  %2491 = vmatpush.bf16.msra.mxu0 %v2426
  %2492 = vmatpush.bf16.msra.mxu0 %v2422
  %2493 = vmatpush.bf16.msra.mxu0 %v2418
  %2494 = vmatpush.bf16.msra.mxu0 %v2414
  %2495 = vmatpush.bf16.msra.mxu0 %v2410
  %2496 = vmatpush.bf16.msra.mxu0 %v2406
  %2497 = vmatpush.bf16.msra.mxu0 %v2402
  %2498 = vmatmul.bf16.gmra.mxu0 %v2271
  %v2499 = vpop.f32.mrf.mxu0
  %v2500 = vadd.f32 0.0, %v2499
  %v2501 = vpop.f32.mrf.mxu0
  %2502 = vdwg.mxu0
  %2503 = vmatpush.bf16.msra.mxu0 %v2431
  %2504 = vmatpush.bf16.msra.mxu0 %v2427
  %2505 = vmatpush.bf16.msra.mxu0 %v2423
  %2506 = vmatpush.bf16.msra.mxu0 %v2419
  %2507 = vmatpush.bf16.msra.mxu0 %v2415
  %2508 = vmatpush.bf16.msra.mxu0 %v2411
  %2509 = vmatpush.bf16.msra.mxu0 %v2407
  %2510 = vmatpush.bf16.msra.mxu0 %v2403
  %2511 = vmatmul.bf16.gmra.mxu0 %v2271
  %v2512 = vpop.f32.mrf.mxu0
  %v2513 = vadd.f32 0.0, %v2512
  %v2514 = vpop.f32.mrf.mxu0
  %2515 = vdwg.mxu0
  %v2516 = vadd.f32 %v2266, %v2474
  %v2517 = vadd.f32 %v2267, %v2487
  %v2518 = vadd.f32 %v2268, %v2500
  %v2519 = vadd.f32 %v2269, %v2513
  %v2520 = vmul.f32 %v2516, 0.5
  %v2521 = vtanh.pop %v2520
  %v2522 = vmul.f32 %v2521, 0.5
  %v2523 = vadd.f32 %v2522, 0.5
  %v2524 = vmul.f32 %v2517, 0.5
  %v2525 = vtanh.pop %v2524
  %v2526 = vmul.f32 %v2525, 0.5
  %v2527 = vadd.f32 %v2526, 0.5
  %v2528 = vtanh.pop %v2518
  %v2529 = vmul.f32 %v2519, 0.5
  %v2530 = vtanh.pop %v2529
  %v2531 = vmul.f32 %v2530, 0.5
  %v2532 = vadd.f32 %v2531, 0.5
  %v2533 = vld [vmem:[#allocation3] sm:$0xff]
  %v2534 = vmul.f32 %v2527, %v2533
  %v2535 = vmul.f32 %v2523, %v2528
  %v2536 = vadd.f32 %v2534, %v2535
  %v2537 = vtanh.pop %v2536
  %v2538 = vmul.f32 %v2532, %v2537
  %2539 = vst [vmem:[#allocation3] sm:$0xff] %v2536
  %2540 = vst [vmem:[#allocation2] sm:$0xff] %v2538
  %v2541 = vpack.c.bf16 %v2538, %v2538
  %s2542 = scalar_lea.vmem %s2, 32
  %2543 = vst [vmem:[%s2542] sm:$0xf] %v2541
  %s2544 = scalar_lea.vmem %s0, 144
  %v2545 = vld [vmem:[%s2544] sm:$0xff]
  %v2546 = vld [vmem:[%s2544 + $0x8] sm:$0xff]
  %v2547 = vunpack.c.l.bf16 %v2545
  %v2548 = vunpack.c.h.bf16 %v2545
  %v2549 = vunpack.c.l.bf16 %v2546
  %v2550 = vunpack.c.h.bf16 %v2546
  %v2551 = vld [vmem:[#allocation2] sm:$0xff]
  %v2552 = vpack.c.bf16 %v2551, %v2551
  %v2553 = vld [vmem:[%s1] sm:$0xff]
  %v2554 = vld [vmem:[%s1 + $0x8] sm:$0xff]
  %v2555 = vld [vmem:[%s1 + $0x10] sm:$0xff]
  %v2556 = vld [vmem:[%s1 + $0x18] sm:$0xff]
  %v2557 = vld [vmem:[%s1 + $0x20] sm:$0xff]
  %v2558 = vld [vmem:[%s1 + $0x28] sm:$0xff]
  %v2559 = vld [vmem:[%s1 + $0x30] sm:$0xff]
  %v2560 = vld [vmem:[%s1 + $0x38] sm:$0xff]
  %v2561 = vld [vmem:[%s1 + $0x40] sm:$0xff]
  %v2562 = vld [vmem:[%s1 + $0x48] sm:$0xff]
  %v2563 = vld [vmem:[%s1 + $0x50] sm:$0xff]
  %v2564 = vld [vmem:[%s1 + $0x58] sm:$0xff]
  %v2565 = vld [vmem:[%s1 + $0x60] sm:$0xff]
  %v2566 = vld [vmem:[%s1 + $0x68] sm:$0xff]
  %v2567 = vld [vmem:[%s1 + $0x70] sm:$0xff]
  %v2568 = vld [vmem:[%s1 + $0x78] sm:$0xff]
  %v2569 = vld [vmem:[%s1 + $0x80] sm:$0xff]
  %v2570 = vld [vmem:[%s1 + $0x88] sm:$0xff]
  %v2571 = vld [vmem:[%s1 + $0x90] sm:$0xff]
  %v2572 = vld [vmem:[%s1 + $0x98] sm:$0xff]
  %v2573 = vld [vmem:[%s1 + $0xa0] sm:$0xff]
  %v2574 = vld [vmem:[%s1 + $0xa8] sm:$0xff]
  %v2575 = vld [vmem:[%s1 + $0xb0] sm:$0xff]
  %v2576 = vld [vmem:[%s1 + $0xb8] sm:$0xff]
  %v2577 = vld [vmem:[%s1 + $0xc0] sm:$0xff]
  %v2578 = vld [vmem:[%s1 + $0xc8] sm:$0xff]
  %v2579 = vld [vmem:[%s1 + $0xd0] sm:$0xff]
  %v2580 = vld [vmem:[%s1 + $0xd8] sm:$0xff]
  %v2581 = vld [vmem:[%s1 + $0xe0] sm:$0xff]
  %v2582 = vld [vmem:[%s1 + $0xe8] sm:$0xff]
  %v2583 = vld [vmem:[%s1 + $0xf0] sm:$0xff]
  %v2584 = vld [vmem:[%s1 + $0xf8] sm:$0xff]
  %v2617 = vunpack.c.l.b16 %v2553
  %v2618 = vunpack.c.h.b16 %v2553
  %v2619 = vunpack.c.l.b16 %v2554
  %v2620 = vunpack.c.h.b16 %v2554
  %v2621 = vunpack.c.l.b16 %v2555
  %v2622 = vunpack.c.h.b16 %v2555
  %v2623 = vunpack.c.l.b16 %v2556
  %v2624 = vunpack.c.h.b16 %v2556
  %v2625 = vunpack.c.l.b16 %v2557
  %v2626 = vunpack.c.h.b16 %v2557
  %v2627 = vunpack.c.l.b16 %v2558
  %v2628 = vunpack.c.h.b16 %v2558
  %v2629 = vunpack.c.l.b16 %v2559
  %v2630 = vunpack.c.h.b16 %v2559
  %v2631 = vunpack.c.l.b16 %v2560
  %v2632 = vunpack.c.h.b16 %v2560
  %v2633 = vunpack.c.l.b16 %v2561
  %v2634 = vunpack.c.h.b16 %v2561
  %v2635 = vunpack.c.l.b16 %v2562
  %v2636 = vunpack.c.h.b16 %v2562
  %v2637 = vunpack.c.l.b16 %v2563
  %v2638 = vunpack.c.h.b16 %v2563
  %v2639 = vunpack.c.l.b16 %v2564
  %v2640 = vunpack.c.h.b16 %v2564
  %v2641 = vunpack.c.l.b16 %v2565
  %v2642 = vunpack.c.h.b16 %v2565
  %v2643 = vunpack.c.l.b16 %v2566
  %v2644 = vunpack.c.h.b16 %v2566
  %v2645 = vunpack.c.l.b16 %v2567
  %v2646 = vunpack.c.h.b16 %v2567
  %v2647 = vunpack.c.l.b16 %v2568
  %v2648 = vunpack.c.h.b16 %v2568
  %v2649 = vunpack.c.l.b16 %v2569
  %v2650 = vunpack.c.h.b16 %v2569
  %v2651 = vunpack.c.l.b16 %v2570
  %v2652 = vunpack.c.h.b16 %v2570
  %v2653 = vunpack.c.l.b16 %v2571
  %v2654 = vunpack.c.h.b16 %v2571
  %v2655 = vunpack.c.l.b16 %v2572
  %v2656 = vunpack.c.h.b16 %v2572
  %v2657 = vunpack.c.l.b16 %v2573
  %v2658 = vunpack.c.h.b16 %v2573
  %v2659 = vunpack.c.l.b16 %v2574
  %v2660 = vunpack.c.h.b16 %v2574
  %v2661 = vunpack.c.l.b16 %v2575
  %v2662 = vunpack.c.h.b16 %v2575
  %v2663 = vunpack.c.l.b16 %v2576
  %v2664 = vunpack.c.h.b16 %v2576
  %v2665 = vunpack.c.l.b16 %v2577
  %v2666 = vunpack.c.h.b16 %v2577
  %v2667 = vunpack.c.l.b16 %v2578
  %v2668 = vunpack.c.h.b16 %v2578
  %v2669 = vunpack.c.l.b16 %v2579
  %v2670 = vunpack.c.h.b16 %v2579
  %v2671 = vunpack.c.l.b16 %v2580
  %v2672 = vunpack.c.h.b16 %v2580
  %v2673 = vunpack.c.l.b16 %v2581
  %v2674 = vunpack.c.h.b16 %v2581
  %v2675 = vunpack.c.l.b16 %v2582
  %v2676 = vunpack.c.h.b16 %v2582
  %v2677 = vunpack.c.l.b16 %v2583
  %v2678 = vunpack.c.h.b16 %v2583
  %v2679 = vunpack.c.l.b16 %v2584
  %v2680 = vunpack.c.h.b16 %v2584
  %v2681 = vpack.c.b16 %v2621, %v2617
  %v2682 = vpack.c.b16 %v2622, %v2618
  %v2683 = vpack.c.b16 %v2623, %v2619
  %v2684 = vpack.c.b16 %v2624, %v2620
  %v2685 = vpack.c.b16 %v2629, %v2625
  %v2686 = vpack.c.b16 %v2630, %v2626
  %v2687 = vpack.c.b16 %v2631, %v2627
  %v2688 = vpack.c.b16 %v2632, %v2628
  %v2689 = vpack.c.b16 %v2637, %v2633
  %v2690 = vpack.c.b16 %v2638, %v2634
  %v2691 = vpack.c.b16 %v2639, %v2635
  %v2692 = vpack.c.b16 %v2640, %v2636
  %v2693 = vpack.c.b16 %v2645, %v2641
  %v2694 = vpack.c.b16 %v2646, %v2642
  %v2695 = vpack.c.b16 %v2647, %v2643
  %v2696 = vpack.c.b16 %v2648, %v2644
  %v2697 = vpack.c.b16 %v2653, %v2649
  %v2698 = vpack.c.b16 %v2654, %v2650
  %v2699 = vpack.c.b16 %v2655, %v2651
  %v2700 = vpack.c.b16 %v2656, %v2652
  %v2701 = vpack.c.b16 %v2661, %v2657
  %v2702 = vpack.c.b16 %v2662, %v2658
  %v2703 = vpack.c.b16 %v2663, %v2659
  %v2704 = vpack.c.b16 %v2664, %v2660
  %v2705 = vpack.c.b16 %v2669, %v2665
  %v2706 = vpack.c.b16 %v2670, %v2666
  %v2707 = vpack.c.b16 %v2671, %v2667
  %v2708 = vpack.c.b16 %v2672, %v2668
  %v2709 = vpack.c.b16 %v2677, %v2673
  %v2710 = vpack.c.b16 %v2678, %v2674
  %v2711 = vpack.c.b16 %v2679, %v2675
  %v2712 = vpack.c.b16 %v2680, %v2676
  %2745 = vmatpush.bf16.msra.mxu0 %v2709
  %2746 = vmatpush.bf16.msra.mxu0 %v2705
  %2747 = vmatpush.bf16.msra.mxu0 %v2701
  %2748 = vmatpush.bf16.msra.mxu0 %v2697
  %2749 = vmatpush.bf16.msra.mxu0 %v2693
  %2750 = vmatpush.bf16.msra.mxu0 %v2689
  %2751 = vmatpush.bf16.msra.mxu0 %v2685
  %2752 = vmatpush.bf16.msra.mxu0 %v2681
  %2753 = vmatmul.bf16.gmra.mxu0 %v2552
  %v2754 = vpop.f32.mrf.mxu0
  %v2755 = vadd.f32 0.0, %v2754
  %v2756 = vpop.f32.mrf.mxu0
  %2757 = vdwg.mxu0
  %2758 = vmatpush.bf16.msra.mxu0 %v2710
  %2759 = vmatpush.bf16.msra.mxu0 %v2706
  %2760 = vmatpush.bf16.msra.mxu0 %v2702
  %2761 = vmatpush.bf16.msra.mxu0 %v2698
  %2762 = vmatpush.bf16.msra.mxu0 %v2694
  %2763 = vmatpush.bf16.msra.mxu0 %v2690
  %2764 = vmatpush.bf16.msra.mxu0 %v2686
  %2765 = vmatpush.bf16.msra.mxu0 %v2682
  %2766 = vmatmul.bf16.gmra.mxu0 %v2552
  %v2767 = vpop.f32.mrf.mxu0
  %v2768 = vadd.f32 0.0, %v2767
  %v2769 = vpop.f32.mrf.mxu0
  %2770 = vdwg.mxu0
  %2771 = vmatpush.bf16.msra.mxu0 %v2711
  %2772 = vmatpush.bf16.msra.mxu0 %v2707
  %2773 = vmatpush.bf16.msra.mxu0 %v2703
  %2774 = vmatpush.bf16.msra.mxu0 %v2699
  %2775 = vmatpush.bf16.msra.mxu0 %v2695
  %2776 = vmatpush.bf16.msra.mxu0 %v2691
  %2777 = vmatpush.bf16.msra.mxu0 %v2687
  %2778 = vmatpush.bf16.msra.mxu0 %v2683
  %2779 = vmatmul.bf16.gmra.mxu0 %v2552
  %v2780 = vpop.f32.mrf.mxu0
  %v2781 = vadd.f32 0.0, %v2780
  %v2782 = vpop.f32.mrf.mxu0
  %2783 = vdwg.mxu0
  %2784 = vmatpush.bf16.msra.mxu0 %v2712
  %2785 = vmatpush.bf16.msra.mxu0 %v2708
  %2786 = vmatpush.bf16.msra.mxu0 %v2704
  %2787 = vmatpush.bf16.msra.mxu0 %v2700
  %2788 = vmatpush.bf16.msra.mxu0 %v2696
  %2789 = vmatpush.bf16.msra.mxu0 %v2692
  %2790 = vmatpush.bf16.msra.mxu0 %v2688
  %2791 = vmatpush.bf16.msra.mxu0 %v2684
  %2792 = vmatmul.bf16.gmra.mxu0 %v2552
  %v2793 = vpop.f32.mrf.mxu0
  %v2794 = vadd.f32 0.0, %v2793
  %v2795 = vpop.f32.mrf.mxu0
  %2796 = vdwg.mxu0
  %v2797 = vadd.f32 %v2547, %v2755
  %v2798 = vadd.f32 %v2548, %v2768
  %v2799 = vadd.f32 %v2549, %v2781
  %v2800 = vadd.f32 %v2550, %v2794
  %v2801 = vmul.f32 %v2797, 0.5
  %v2802 = vtanh.pop %v2801
  %v2803 = vmul.f32 %v2802, 0.5
  %v2804 = vadd.f32 %v2803, 0.5
  %v2805 = vmul.f32 %v2798, 0.5
  %v2806 = vtanh.pop %v2805
  %v2807 = vmul.f32 %v2806, 0.5
  %v2808 = vadd.f32 %v2807, 0.5
  %v2809 = vtanh.pop %v2799
  %v2810 = vmul.f32 %v2800, 0.5
  %v2811 = vtanh.pop %v2810
  %v2812 = vmul.f32 %v2811, 0.5
  %v2813 = vadd.f32 %v2812, 0.5
  %v2814 = vld [vmem:[#allocation3] sm:$0xff]
  %v2815 = vmul.f32 %v2808, %v2814
  %v2816 = vmul.f32 %v2804, %v2809
  %v2817 = vadd.f32 %v2815, %v2816
  %v2818 = vtanh.pop %v2817
  %v2819 = vmul.f32 %v2813, %v2818
  %2820 = vst [vmem:[#allocation3] sm:$0xff] %v2817
  %2821 = vst [vmem:[#allocation2] sm:$0xff] %v2819
  %v2822 = vpack.c.bf16 %v2819, %v2819
  %s2823 = scalar_lea.vmem %s2, 36
  %2824 = vst [vmem:[%s2823] sm:$0xf] %v2822
  %s2825 = scalar_lea.vmem %s0, 160
  %v2826 = vld [vmem:[%s2825] sm:$0xff]
  %v2827 = vld [vmem:[%s2825 + $0x8] sm:$0xff]
  %v2828 = vunpack.c.l.bf16 %v2826
  %v2829 = vunpack.c.h.bf16 %v2826
  %v2830 = vunpack.c.l.bf16 %v2827
  %v2831 = vunpack.c.h.bf16 %v2827
  %v2832 = vld [vmem:[#allocation2] sm:$0xff]
  %v2833 = vpack.c.bf16 %v2832, %v2832
  %v2834 = vld [vmem:[%s1] sm:$0xff]
  %v2835 = vld [vmem:[%s1 + $0x8] sm:$0xff]
  %v2836 = vld [vmem:[%s1 + $0x10] sm:$0xff]
  %v2837 = vld [vmem:[%s1 + $0x18] sm:$0xff]
  %v2838 = vld [vmem:[%s1 + $0x20] sm:$0xff]
  %v2839 = vld [vmem:[%s1 + $0x28] sm:$0xff]
  %v2840 = vld [vmem:[%s1 + $0x30] sm:$0xff]
  %v2841 = vld [vmem:[%s1 + $0x38] sm:$0xff]
  %v2842 = vld [vmem:[%s1 + $0x40] sm:$0xff]
  %v2843 = vld [vmem:[%s1 + $0x48] sm:$0xff]
  %v2844 = vld [vmem:[%s1 + $0x50] sm:$0xff]
  %v2845 = vld [vmem:[%s1 + $0x58] sm:$0xff]
  %v2846 = vld [vmem:[%s1 + $0x60] sm:$0xff]
  %v2847 = vld [vmem:[%s1 + $0x68] sm:$0xff]
  %v2848 = vld [vmem:[%s1 + $0x70] sm:$0xff]
  %v2849 = vld [vmem:[%s1 + $0x78] sm:$0xff]
  %v2850 = vld [vmem:[%s1 + $0x80] sm:$0xff]
  %v2851 = vld [vmem:[%s1 + $0x88] sm:$0xff]
  %v2852 = vld [vmem:[%s1 + $0x90] sm:$0xff]
  %v2853 = vld [vmem:[%s1 + $0x98] sm:$0xff]
  %v2854 = vld [vmem:[%s1 + $0xa0] sm:$0xff]
  %v2855 = vld [vmem:[%s1 + $0xa8] sm:$0xff]
  %v2856 = vld [vmem:[%s1 + $0xb0] sm:$0xff]
  %v2857 = vld [vmem:[%s1 + $0xb8] sm:$0xff]
  %v2858 = vld [vmem:[%s1 + $0xc0] sm:$0xff]
  %v2859 = vld [vmem:[%s1 + $0xc8] sm:$0xff]
  %v2860 = vld [vmem:[%s1 + $0xd0] sm:$0xff]
  %v2861 = vld [vmem:[%s1 + $0xd8] sm:$0xff]
  %v2862 = vld [vmem:[%s1 + $0xe0] sm:$0xff]
  %v2863 = vld [vmem:[%s1 + $0xe8] sm:$0xff]
  %v2864 = vld [vmem:[%s1 + $0xf0] sm:$0xff]
  %v2865 = vld [vmem:[%s1 + $0xf8] sm:$0xff]
  %v2898 = vunpack.c.l.b16 %v2834
  %v2899 = vunpack.c.h.b16 %v2834
  %v2900 = vunpack.c.l.b16 %v2835
  %v2901 = vunpack.c.h.b16 %v2835
  %v2902 = vunpack.c.l.b16 %v2836
  %v2903 = vunpack.c.h.b16 %v2836
  %v2904 = vunpack.c.l.b16 %v2837
  %v2905 = vunpack.c.h.b16 %v2837
  %v2906 = vunpack.c.l.b16 %v2838
  %v2907 = vunpack.c.h.b16 %v2838
  %v2908 = vunpack.c.l.b16 %v2839
  %v2909 = vunpack.c.h.b16 %v2839
  %v2910 = vunpack.c.l.b16 %v2840
  %v2911 = vunpack.c.h.b16 %v2840
  %v2912 = vunpack.c.l.b16 %v2841
  %v2913 = vunpack.c.h.b16 %v2841
  %v2914 = vunpack.c.l.b16 %v2842
  %v2915 = vunpack.c.h.b16 %v2842
  %v2916 = vunpack.c.l.b16 %v2843
  %v2917 = vunpack.c.h.b16 %v2843
  %v2918 = vunpack.c.l.b16 %v2844
  %v2919 = vunpack.c.h.b16 %v2844
  %v2920 = vunpack.c.l.b16 %v2845
  %v2921 = vunpack.c.h.b16 %v2845
  %v2922 = vunpack.c.l.b16 %v2846
  %v2923 = vunpack.c.h.b16 %v2846
  %v2924 = vunpack.c.l.b16 %v2847
  %v2925 = vunpack.c.h.b16 %v2847
  %v2926 = vunpack.c.l.b16 %v2848
  %v2927 = vunpack.c.h.b16 %v2848
  %v2928 = vunpack.c.l.b16 %v2849
  %v2929 = vunpack.c.h.b16 %v2849
  %v2930 = vunpack.c.l.b16 %v2850
  %v2931 = vunpack.c.h.b16 %v2850
  %v2932 = vunpack.c.l.b16 %v2851
  %v2933 = vunpack.c.h.b16 %v2851
  %v2934 = vunpack.c.l.b16 %v2852
  %v2935 = vunpack.c.h.b16 %v2852
  %v2936 = vunpack.c.l.b16 %v2853
  %v2937 = vunpack.c.h.b16 %v2853
  %v2938 = vunpack.c.l.b16 %v2854
  %v2939 = vunpack.c.h.b16 %v2854
  %v2940 = vunpack.c.l.b16 %v2855
  %v2941 = vunpack.c.h.b16 %v2855
  %v2942 = vunpack.c.l.b16 %v2856
  %v2943 = vunpack.c.h.b16 %v2856
  %v2944 = vunpack.c.l.b16 %v2857
  %v2945 = vunpack.c.h.b16 %v2857
  %v2946 = vunpack.c.l.b16 %v2858
  %v2947 = vunpack.c.h.b16 %v2858
  %v2948 = vunpack.c.l.b16 %v2859
  %v2949 = vunpack.c.h.b16 %v2859
  %v2950 = vunpack.c.l.b16 %v2860
  %v2951 = vunpack.c.h.b16 %v2860
  %v2952 = vunpack.c.l.b16 %v2861
  %v2953 = vunpack.c.h.b16 %v2861
  %v2954 = vunpack.c.l.b16 %v2862
  %v2955 = vunpack.c.h.b16 %v2862
  %v2956 = vunpack.c.l.b16 %v2863
  %v2957 = vunpack.c.h.b16 %v2863
  %v2958 = vunpack.c.l.b16 %v2864
  %v2959 = vunpack.c.h.b16 %v2864
  %v2960 = vunpack.c.l.b16 %v2865
  %v2961 = vunpack.c.h.b16 %v2865
  %v2962 = vpack.c.b16 %v2902, %v2898
  %v2963 = vpack.c.b16 %v2903, %v2899
  %v2964 = vpack.c.b16 %v2904, %v2900
  %v2965 = vpack.c.b16 %v2905, %v2901
  %v2966 = vpack.c.b16 %v2910, %v2906
  %v2967 = vpack.c.b16 %v2911, %v2907
  %v2968 = vpack.c.b16 %v2912, %v2908
  %v2969 = vpack.c.b16 %v2913, %v2909
  %v2970 = vpack.c.b16 %v2918, %v2914
  %v2971 = vpack.c.b16 %v2919, %v2915
  %v2972 = vpack.c.b16 %v2920, %v2916
  %v2973 = vpack.c.b16 %v2921, %v2917
  %v2974 = vpack.c.b16 %v2926, %v2922
  %v2975 = vpack.c.b16 %v2927, %v2923
  %v2976 = vpack.c.b16 %v2928, %v2924
  %v2977 = vpack.c.b16 %v2929, %v2925
  %v2978 = vpack.c.b16 %v2934, %v2930
  %v2979 = vpack.c.b16 %v2935, %v2931
  %v2980 = vpack.c.b16 %v2936, %v2932
  %v2981 = vpack.c.b16 %v2937, %v2933
  %v2982 = vpack.c.b16 %v2942, %v2938
  %v2983 = vpack.c.b16 %v2943, %v2939
  %v2984 = vpack.c.b16 %v2944, %v2940
  %v2985 = vpack.c.b16 %v2945, %v2941
  %v2986 = vpack.c.b16 %v2950, %v2946
  %v2987 = vpack.c.b16 %v2951, %v2947
  %v2988 = vpack.c.b16 %v2952, %v2948
  %v2989 = vpack.c.b16 %v2953, %v2949
  %v2990 = vpack.c.b16 %v2958, %v2954
  %v2991 = vpack.c.b16 %v2959, %v2955
  %v2992 = vpack.c.b16 %v2960, %v2956
  %v2993 = vpack.c.b16 %v2961, %v2957
  %3026 = vmatpush.bf16.msra.mxu0 %v2990
  %3027 = vmatpush.bf16.msra.mxu0 %v2986
  %3028 = vmatpush.bf16.msra.mxu0 %v2982
  %3029 = vmatpush.bf16.msra.mxu0 %v2978
  %3030 = vmatpush.bf16.msra.mxu0 %v2974
  %3031 = vmatpush.bf16.msra.mxu0 %v2970
  %3032 = vmatpush.bf16.msra.mxu0 %v2966
  %3033 = vmatpush.bf16.msra.mxu0 %v2962
  %3034 = vmatmul.bf16.gmra.mxu0 %v2833
  %v3035 = vpop.f32.mrf.mxu0
  %v3036 = vadd.f32 0.0, %v3035
  %v3037 = vpop.f32.mrf.mxu0
  %3038 = vdwg.mxu0
  %3039 = vmatpush.bf16.msra.mxu0 %v2991
  %3040 = vmatpush.bf16.msra.mxu0 %v2987
  %3041 = vmatpush.bf16.msra.mxu0 %v2983
  %3042 = vmatpush.bf16.msra.mxu0 %v2979
  %3043 = vmatpush.bf16.msra.mxu0 %v2975
  %3044 = vmatpush.bf16.msra.mxu0 %v2971
  %3045 = vmatpush.bf16.msra.mxu0 %v2967
  %3046 = vmatpush.bf16.msra.mxu0 %v2963
  %3047 = vmatmul.bf16.gmra.mxu0 %v2833
  %v3048 = vpop.f32.mrf.mxu0
  %v3049 = vadd.f32 0.0, %v3048
  %v3050 = vpop.f32.mrf.mxu0
  %3051 = vdwg.mxu0
  %3052 = vmatpush.bf16.msra.mxu0 %v2992
  %3053 = vmatpush.bf16.msra.mxu0 %v2988
  %3054 = vmatpush.bf16.msra.mxu0 %v2984
  %3055 = vmatpush.bf16.msra.mxu0 %v2980
  %3056 = vmatpush.bf16.msra.mxu0 %v2976
  %3057 = vmatpush.bf16.msra.mxu0 %v2972
  %3058 = vmatpush.bf16.msra.mxu0 %v2968
  %3059 = vmatpush.bf16.msra.mxu0 %v2964
  %3060 = vmatmul.bf16.gmra.mxu0 %v2833
  %v3061 = vpop.f32.mrf.mxu0
  %v3062 = vadd.f32 0.0, %v3061
  %v3063 = vpop.f32.mrf.mxu0
  %3064 = vdwg.mxu0
  %3065 = vmatpush.bf16.msra.mxu0 %v2993
  %3066 = vmatpush.bf16.msra.mxu0 %v2989
  %3067 = vmatpush.bf16.msra.mxu0 %v2985
  %3068 = vmatpush.bf16.msra.mxu0 %v2981
  %3069 = vmatpush.bf16.msra.mxu0 %v2977
  %3070 = vmatpush.bf16.msra.mxu0 %v2973
  %3071 = vmatpush.bf16.msra.mxu0 %v2969
  %3072 = vmatpush.bf16.msra.mxu0 %v2965
  %3073 = vmatmul.bf16.gmra.mxu0 %v2833
  %v3074 = vpop.f32.mrf.mxu0
  %v3075 = vadd.f32 0.0, %v3074
  %v3076 = vpop.f32.mrf.mxu0
  %3077 = vdwg.mxu0
  %v3078 = vadd.f32 %v2828, %v3036
  %v3079 = vadd.f32 %v2829, %v3049
  %v3080 = vadd.f32 %v2830, %v3062
  %v3081 = vadd.f32 %v2831, %v3075
  %v3082 = vmul.f32 %v3078, 0.5
  %v3083 = vtanh.pop %v3082
  %v3084 = vmul.f32 %v3083, 0.5
  %v3085 = vadd.f32 %v3084, 0.5
  %v3086 = vmul.f32 %v3079, 0.5
  %v3087 = vtanh.pop %v3086
  %v3088 = vmul.f32 %v3087, 0.5
  %v3089 = vadd.f32 %v3088, 0.5
  %v3090 = vtanh.pop %v3080
  %v3091 = vmul.f32 %v3081, 0.5
  %v3092 = vtanh.pop %v3091
  %v3093 = vmul.f32 %v3092, 0.5
  %v3094 = vadd.f32 %v3093, 0.5
  %v3095 = vld [vmem:[#allocation3] sm:$0xff]
  %v3096 = vmul.f32 %v3089, %v3095
  %v3097 = vmul.f32 %v3085, %v3090
  %v3098 = vadd.f32 %v3096, %v3097
  %v3099 = vtanh.pop %v3098
  %v3100 = vmul.f32 %v3094, %v3099
  %3101 = vst [vmem:[#allocation3] sm:$0xff] %v3098
  %3102 = vst [vmem:[#allocation2] sm:$0xff] %v3100
  %v3103 = vpack.c.bf16 %v3100, %v3100
  %s3104 = scalar_lea.vmem %s2, 40
  %3105 = vst [vmem:[%s3104] sm:$0xf] %v3103
  %s3106 = scalar_lea.vmem %s0, 176
  %v3107 = vld [vmem:[%s3106] sm:$0xff]
  %v3108 = vld [vmem:[%s3106 + $0x8] sm:$0xff]
  %v3109 = vunpack.c.l.bf16 %v3107
  %v3110 = vunpack.c.h.bf16 %v3107
  %v3111 = vunpack.c.l.bf16 %v3108
  %v3112 = vunpack.c.h.bf16 %v3108
  %v3113 = vld [vmem:[#allocation2] sm:$0xff]
  %v3114 = vpack.c.bf16 %v3113, %v3113
  %v3115 = vld [vmem:[%s1] sm:$0xff]
  %v3116 = vld [vmem:[%s1 + $0x8] sm:$0xff]
  %v3117 = vld [vmem:[%s1 + $0x10] sm:$0xff]
  %v3118 = vld [vmem:[%s1 + $0x18] sm:$0xff]
  %v3119 = vld [vmem:[%s1 + $0x20] sm:$0xff]
  %v3120 = vld [vmem:[%s1 + $0x28] sm:$0xff]
  %v3121 = vld [vmem:[%s1 + $0x30] sm:$0xff]
  %v3122 = vld [vmem:[%s1 + $0x38] sm:$0xff]
  %v3123 = vld [vmem:[%s1 + $0x40] sm:$0xff]
  %v3124 = vld [vmem:[%s1 + $0x48] sm:$0xff]
  %v3125 = vld [vmem:[%s1 + $0x50] sm:$0xff]
  %v3126 = vld [vmem:[%s1 + $0x58] sm:$0xff]
  %v3127 = vld [vmem:[%s1 + $0x60] sm:$0xff]
  %v3128 = vld [vmem:[%s1 + $0x68] sm:$0xff]
  %v3129 = vld [vmem:[%s1 + $0x70] sm:$0xff]
  %v3130 = vld [vmem:[%s1 + $0x78] sm:$0xff]
  %v3131 = vld [vmem:[%s1 + $0x80] sm:$0xff]
  %v3132 = vld [vmem:[%s1 + $0x88] sm:$0xff]
  %v3133 = vld [vmem:[%s1 + $0x90] sm:$0xff]
  %v3134 = vld [vmem:[%s1 + $0x98] sm:$0xff]
  %v3135 = vld [vmem:[%s1 + $0xa0] sm:$0xff]
  %v3136 = vld [vmem:[%s1 + $0xa8] sm:$0xff]
  %v3137 = vld [vmem:[%s1 + $0xb0] sm:$0xff]
  %v3138 = vld [vmem:[%s1 + $0xb8] sm:$0xff]
  %v3139 = vld [vmem:[%s1 + $0xc0] sm:$0xff]
  %v3140 = vld [vmem:[%s1 + $0xc8] sm:$0xff]
  %v3141 = vld [vmem:[%s1 + $0xd0] sm:$0xff]
  %v3142 = vld [vmem:[%s1 + $0xd8] sm:$0xff]
  %v3143 = vld [vmem:[%s1 + $0xe0] sm:$0xff]
  %v3144 = vld [vmem:[%s1 + $0xe8] sm:$0xff]
  %v3145 = vld [vmem:[%s1 + $0xf0] sm:$0xff]
  %v3146 = vld [vmem:[%s1 + $0xf8] sm:$0xff]
  %v3179 = vunpack.c.l.b16 %v3115
  %v3180 = vunpack.c.h.b16 %v3115
  %v3181 = vunpack.c.l.b16 %v3116
  %v3182 = vunpack.c.h.b16 %v3116
  %v3183 = vunpack.c.l.b16 %v3117
  %v3184 = vunpack.c.h.b16 %v3117
  %v3185 = vunpack.c.l.b16 %v3118
  %v3186 = vunpack.c.h.b16 %v3118
  %v3187 = vunpack.c.l.b16 %v3119
  %v3188 = vunpack.c.h.b16 %v3119
  %v3189 = vunpack.c.l.b16 %v3120
  %v3190 = vunpack.c.h.b16 %v3120
  %v3191 = vunpack.c.l.b16 %v3121
  %v3192 = vunpack.c.h.b16 %v3121
  %v3193 = vunpack.c.l.b16 %v3122
  %v3194 = vunpack.c.h.b16 %v3122
  %v3195 = vunpack.c.l.b16 %v3123
  %v3196 = vunpack.c.h.b16 %v3123
  %v3197 = vunpack.c.l.b16 %v3124
  %v3198 = vunpack.c.h.b16 %v3124
  %v3199 = vunpack.c.l.b16 %v3125
  %v3200 = vunpack.c.h.b16 %v3125
  %v3201 = vunpack.c.l.b16 %v3126
  %v3202 = vunpack.c.h.b16 %v3126
  %v3203 = vunpack.c.l.b16 %v3127
  %v3204 = vunpack.c.h.b16 %v3127
  %v3205 = vunpack.c.l.b16 %v3128
  %v3206 = vunpack.c.h.b16 %v3128
  %v3207 = vunpack.c.l.b16 %v3129
  %v3208 = vunpack.c.h.b16 %v3129
  %v3209 = vunpack.c.l.b16 %v3130
  %v3210 = vunpack.c.h.b16 %v3130
  %v3211 = vunpack.c.l.b16 %v3131
  %v3212 = vunpack.c.h.b16 %v3131
  %v3213 = vunpack.c.l.b16 %v3132
  %v3214 = vunpack.c.h.b16 %v3132
  %v3215 = vunpack.c.l.b16 %v3133
  %v3216 = vunpack.c.h.b16 %v3133
  %v3217 = vunpack.c.l.b16 %v3134
  %v3218 = vunpack.c.h.b16 %v3134
  %v3219 = vunpack.c.l.b16 %v3135
  %v3220 = vunpack.c.h.b16 %v3135
  %v3221 = vunpack.c.l.b16 %v3136
  %v3222 = vunpack.c.h.b16 %v3136
  %v3223 = vunpack.c.l.b16 %v3137
  %v3224 = vunpack.c.h.b16 %v3137
  %v3225 = vunpack.c.l.b16 %v3138
  %v3226 = vunpack.c.h.b16 %v3138
  %v3227 = vunpack.c.l.b16 %v3139
  %v3228 = vunpack.c.h.b16 %v3139
  %v3229 = vunpack.c.l.b16 %v3140
  %v3230 = vunpack.c.h.b16 %v3140
  %v3231 = vunpack.c.l.b16 %v3141
  %v3232 = vunpack.c.h.b16 %v3141
  %v3233 = vunpack.c.l.b16 %v3142
  %v3234 = vunpack.c.h.b16 %v3142
  %v3235 = vunpack.c.l.b16 %v3143
  %v3236 = vunpack.c.h.b16 %v3143
  %v3237 = vunpack.c.l.b16 %v3144
  %v3238 = vunpack.c.h.b16 %v3144
  %v3239 = vunpack.c.l.b16 %v3145
  %v3240 = vunpack.c.h.b16 %v3145
  %v3241 = vunpack.c.l.b16 %v3146
  %v3242 = vunpack.c.h.b16 %v3146
  %v3243 = vpack.c.b16 %v3183, %v3179
  %v3244 = vpack.c.b16 %v3184, %v3180
  %v3245 = vpack.c.b16 %v3185, %v3181
  %v3246 = vpack.c.b16 %v3186, %v3182
  %v3247 = vpack.c.b16 %v3191, %v3187
  %v3248 = vpack.c.b16 %v3192, %v3188
  %v3249 = vpack.c.b16 %v3193, %v3189
  %v3250 = vpack.c.b16 %v3194, %v3190
  %v3251 = vpack.c.b16 %v3199, %v3195
  %v3252 = vpack.c.b16 %v3200, %v3196
  %v3253 = vpack.c.b16 %v3201, %v3197
  %v3254 = vpack.c.b16 %v3202, %v3198
  %v3255 = vpack.c.b16 %v3207, %v3203
  %v3256 = vpack.c.b16 %v3208, %v3204
  %v3257 = vpack.c.b16 %v3209, %v3205
  %v3258 = vpack.c.b16 %v3210, %v3206
  %v3259 = vpack.c.b16 %v3215, %v3211
  %v3260 = vpack.c.b16 %v3216, %v3212
  %v3261 = vpack.c.b16 %v3217, %v3213
  %v3262 = vpack.c.b16 %v3218, %v3214
  %v3263 = vpack.c.b16 %v3223, %v3219
  %v3264 = vpack.c.b16 %v3224, %v3220
  %v3265 = vpack.c.b16 %v3225, %v3221
  %v3266 = vpack.c.b16 %v3226, %v3222
  %v3267 = vpack.c.b16 %v3231, %v3227
  %v3268 = vpack.c.b16 %v3232, %v3228
  %v3269 = vpack.c.b16 %v3233, %v3229
  %v3270 = vpack.c.b16 %v3234, %v3230
  %v3271 = vpack.c.b16 %v3239, %v3235
  %v3272 = vpack.c.b16 %v3240, %v3236
  %v3273 = vpack.c.b16 %v3241, %v3237
  %v3274 = vpack.c.b16 %v3242, %v3238
  %3307 = vmatpush.bf16.msra.mxu0 %v3271
  %3308 = vmatpush.bf16.msra.mxu0 %v3267
  %3309 = vmatpush.bf16.msra.mxu0 %v3263
  %3310 = vmatpush.bf16.msra.mxu0 %v3259
  %3311 = vmatpush.bf16.msra.mxu0 %v3255
  %3312 = vmatpush.bf16.msra.mxu0 %v3251
  %3313 = vmatpush.bf16.msra.mxu0 %v3247
  %3314 = vmatpush.bf16.msra.mxu0 %v3243
  %3315 = vmatmul.bf16.gmra.mxu0 %v3114
  %v3316 = vpop.f32.mrf.mxu0
  %v3317 = vadd.f32 0.0, %v3316
  %v3318 = vpop.f32.mrf.mxu0
  %3319 = vdwg.mxu0
  %3320 = vmatpush.bf16.msra.mxu0 %v3272
  %3321 = vmatpush.bf16.msra.mxu0 %v3268
  %3322 = vmatpush.bf16.msra.mxu0 %v3264
  %3323 = vmatpush.bf16.msra.mxu0 %v3260
  %3324 = vmatpush.bf16.msra.mxu0 %v3256
  %3325 = vmatpush.bf16.msra.mxu0 %v3252
  %3326 = vmatpush.bf16.msra.mxu0 %v3248
  %3327 = vmatpush.bf16.msra.mxu0 %v3244
  %3328 = vmatmul.bf16.gmra.mxu0 %v3114
  %v3329 = vpop.f32.mrf.mxu0
  %v3330 = vadd.f32 0.0, %v3329
  %v3331 = vpop.f32.mrf.mxu0
  %3332 = vdwg.mxu0
  %3333 = vmatpush.bf16.msra.mxu0 %v3273
  %3334 = vmatpush.bf16.msra.mxu0 %v3269
  %3335 = vmatpush.bf16.msra.mxu0 %v3265
  %3336 = vmatpush.bf16.msra.mxu0 %v3261
  %3337 = vmatpush.bf16.msra.mxu0 %v3257
  %3338 = vmatpush.bf16.msra.mxu0 %v3253
  %3339 = vmatpush.bf16.msra.mxu0 %v3249
  %3340 = vmatpush.bf16.msra.mxu0 %v3245
  %3341 = vmatmul.bf16.gmra.mxu0 %v3114
  %v3342 = vpop.f32.mrf.mxu0
  %v3343 = vadd.f32 0.0, %v3342
  %v3344 = vpop.f32.mrf.mxu0
  %3345 = vdwg.mxu0
  %3346 = vmatpush.bf16.msra.mxu0 %v3274
  %3347 = vmatpush.bf16.msra.mxu0 %v3270
  %3348 = vmatpush.bf16.msra.mxu0 %v3266
  %3349 = vmatpush.bf16.msra.mxu0 %v3262
  %3350 = vmatpush.bf16.msra.mxu0 %v3258
  %3351 = vmatpush.bf16.msra.mxu0 %v3254
  %3352 = vmatpush.bf16.msra.mxu0 %v3250
  %3353 = vmatpush.bf16.msra.mxu0 %v3246
  %3354 = vmatmul.bf16.gmra.mxu0 %v3114
  %v3355 = vpop.f32.mrf.mxu0
  %v3356 = vadd.f32 0.0, %v3355
  %v3357 = vpop.f32.mrf.mxu0
  %3358 = vdwg.mxu0
  %v3359 = vadd.f32 %v3109, %v3317
  %v3360 = vadd.f32 %v3110, %v3330
  %v3361 = vadd.f32 %v3111, %v3343
  %v3362 = vadd.f32 %v3112, %v3356
  %v3363 = vmul.f32 %v3359, 0.5
  %v3364 = vtanh.pop %v3363
  %v3365 = vmul.f32 %v3364, 0.5
  %v3366 = vadd.f32 %v3365, 0.5
  %v3367 = vmul.f32 %v3360, 0.5
  %v3368 = vtanh.pop %v3367
  %v3369 = vmul.f32 %v3368, 0.5
  %v3370 = vadd.f32 %v3369, 0.5
  %v3371 = vtanh.pop %v3361
  %v3372 = vmul.f32 %v3362, 0.5
  %v3373 = vtanh.pop %v3372
  %v3374 = vmul.f32 %v3373, 0.5
  %v3375 = vadd.f32 %v3374, 0.5
  %v3376 = vld [vmem:[#allocation3] sm:$0xff]
  %v3377 = vmul.f32 %v3370, %v3376
  %v3378 = vmul.f32 %v3366, %v3371
  %v3379 = vadd.f32 %v3377, %v3378
  %v3380 = vtanh.pop %v3379
  %v3381 = vmul.f32 %v3375, %v3380
  %3382 = vst [vmem:[#allocation3] sm:$0xff] %v3379
  %3383 = vst [vmem:[#allocation2] sm:$0xff] %v3381
  %v3384 = vpack.c.bf16 %v3381, %v3381
  %s3385 = scalar_lea.vmem %s2, 44
  %3386 = vst [vmem:[%s3385] sm:$0xf] %v3384
  %s3387 = scalar_lea.vmem %s0, 192
  %v3388 = vld [vmem:[%s3387] sm:$0xff]
  %v3389 = vld [vmem:[%s3387 + $0x8] sm:$0xff]
  %v3390 = vunpack.c.l.bf16 %v3388
  %v3391 = vunpack.c.h.bf16 %v3388
  %v3392 = vunpack.c.l.bf16 %v3389
  %v3393 = vunpack.c.h.bf16 %v3389
  %v3394 = vld [vmem:[#allocation2] sm:$0xff]
  %v3395 = vpack.c.bf16 %v3394, %v3394
  %v3396 = vld [vmem:[%s1] sm:$0xff]
  %v3397 = vld [vmem:[%s1 + $0x8] sm:$0xff]
  %v3398 = vld [vmem:[%s1 + $0x10] sm:$0xff]
  %v3399 = vld [vmem:[%s1 + $0x18] sm:$0xff]
  %v3400 = vld [vmem:[%s1 + $0x20] sm:$0xff]
  %v3401 = vld [vmem:[%s1 + $0x28] sm:$0xff]
  %v3402 = vld [vmem:[%s1 + $0x30] sm:$0xff]
  %v3403 = vld [vmem:[%s1 + $0x38] sm:$0xff]
  %v3404 = vld [vmem:[%s1 + $0x40] sm:$0xff]
  %v3405 = vld [vmem:[%s1 + $0x48] sm:$0xff]
  %v3406 = vld [vmem:[%s1 + $0x50] sm:$0xff]
  %v3407 = vld [vmem:[%s1 + $0x58] sm:$0xff]
  %v3408 = vld [vmem:[%s1 + $0x60] sm:$0xff]
  %v3409 = vld [vmem:[%s1 + $0x68] sm:$0xff]
  %v3410 = vld [vmem:[%s1 + $0x70] sm:$0xff]
  %v3411 = vld [vmem:[%s1 + $0x78] sm:$0xff]
  %v3412 = vld [vmem:[%s1 + $0x80] sm:$0xff]
  %v3413 = vld [vmem:[%s1 + $0x88] sm:$0xff]
  %v3414 = vld [vmem:[%s1 + $0x90] sm:$0xff]
  %v3415 = vld [vmem:[%s1 + $0x98] sm:$0xff]
  %v3416 = vld [vmem:[%s1 + $0xa0] sm:$0xff]
  %v3417 = vld [vmem:[%s1 + $0xa8] sm:$0xff]
  %v3418 = vld [vmem:[%s1 + $0xb0] sm:$0xff]
  %v3419 = vld [vmem:[%s1 + $0xb8] sm:$0xff]
  %v3420 = vld [vmem:[%s1 + $0xc0] sm:$0xff]
  %v3421 = vld [vmem:[%s1 + $0xc8] sm:$0xff]
  %v3422 = vld [vmem:[%s1 + $0xd0] sm:$0xff]
  %v3423 = vld [vmem:[%s1 + $0xd8] sm:$0xff]
  %v3424 = vld [vmem:[%s1 + $0xe0] sm:$0xff]
  %v3425 = vld [vmem:[%s1 + $0xe8] sm:$0xff]
  %v3426 = vld [vmem:[%s1 + $0xf0] sm:$0xff]
  %v3427 = vld [vmem:[%s1 + $0xf8] sm:$0xff]
  %v3460 = vunpack.c.l.b16 %v3396
  %v3461 = vunpack.c.h.b16 %v3396
  %v3462 = vunpack.c.l.b16 %v3397
  %v3463 = vunpack.c.h.b16 %v3397
  %v3464 = vunpack.c.l.b16 %v3398
  %v3465 = vunpack.c.h.b16 %v3398
  %v3466 = vunpack.c.l.b16 %v3399
  %v3467 = vunpack.c.h.b16 %v3399
  %v3468 = vunpack.c.l.b16 %v3400
  %v3469 = vunpack.c.h.b16 %v3400
  %v3470 = vunpack.c.l.b16 %v3401
  %v3471 = vunpack.c.h.b16 %v3401
  %v3472 = vunpack.c.l.b16 %v3402
  %v3473 = vunpack.c.h.b16 %v3402
  %v3474 = vunpack.c.l.b16 %v3403
  %v3475 = vunpack.c.h.b16 %v3403
  %v3476 = vunpack.c.l.b16 %v3404
  %v3477 = vunpack.c.h.b16 %v3404
  %v3478 = vunpack.c.l.b16 %v3405
  %v3479 = vunpack.c.h.b16 %v3405
  %v3480 = vunpack.c.l.b16 %v3406
  %v3481 = vunpack.c.h.b16 %v3406
  %v3482 = vunpack.c.l.b16 %v3407
  %v3483 = vunpack.c.h.b16 %v3407
  %v3484 = vunpack.c.l.b16 %v3408
  %v3485 = vunpack.c.h.b16 %v3408
  %v3486 = vunpack.c.l.b16 %v3409
  %v3487 = vunpack.c.h.b16 %v3409
  %v3488 = vunpack.c.l.b16 %v3410
  %v3489 = vunpack.c.h.b16 %v3410
  %v3490 = vunpack.c.l.b16 %v3411
  %v3491 = vunpack.c.h.b16 %v3411
  %v3492 = vunpack.c.l.b16 %v3412
  %v3493 = vunpack.c.h.b16 %v3412
  %v3494 = vunpack.c.l.b16 %v3413
  %v3495 = vunpack.c.h.b16 %v3413
  %v3496 = vunpack.c.l.b16 %v3414
  %v3497 = vunpack.c.h.b16 %v3414
  %v3498 = vunpack.c.l.b16 %v3415
  %v3499 = vunpack.c.h.b16 %v3415
  %v3500 = vunpack.c.l.b16 %v3416
  %v3501 = vunpack.c.h.b16 %v3416
  %v3502 = vunpack.c.l.b16 %v3417
  %v3503 = vunpack.c.h.b16 %v3417
  %v3504 = vunpack.c.l.b16 %v3418
  %v3505 = vunpack.c.h.b16 %v3418
  %v3506 = vunpack.c.l.b16 %v3419
  %v3507 = vunpack.c.h.b16 %v3419
  %v3508 = vunpack.c.l.b16 %v3420
  %v3509 = vunpack.c.h.b16 %v3420
  %v3510 = vunpack.c.l.b16 %v3421
  %v3511 = vunpack.c.h.b16 %v3421
  %v3512 = vunpack.c.l.b16 %v3422
  %v3513 = vunpack.c.h.b16 %v3422
  %v3514 = vunpack.c.l.b16 %v3423
  %v3515 = vunpack.c.h.b16 %v3423
  %v3516 = vunpack.c.l.b16 %v3424
  %v3517 = vunpack.c.h.b16 %v3424
  %v3518 = vunpack.c.l.b16 %v3425
  %v3519 = vunpack.c.h.b16 %v3425
  %v3520 = vunpack.c.l.b16 %v3426
  %v3521 = vunpack.c.h.b16 %v3426
  %v3522 = vunpack.c.l.b16 %v3427
  %v3523 = vunpack.c.h.b16 %v3427
  %v3524 = vpack.c.b16 %v3464, %v3460
  %v3525 = vpack.c.b16 %v3465, %v3461
  %v3526 = vpack.c.b16 %v3466, %v3462
  %v3527 = vpack.c.b16 %v3467, %v3463
  %v3528 = vpack.c.b16 %v3472, %v3468
  %v3529 = vpack.c.b16 %v3473, %v3469
  %v3530 = vpack.c.b16 %v3474, %v3470
  %v3531 = vpack.c.b16 %v3475, %v3471
  %v3532 = vpack.c.b16 %v3480, %v3476
  %v3533 = vpack.c.b16 %v3481, %v3477
  %v3534 = vpack.c.b16 %v3482, %v3478
  %v3535 = vpack.c.b16 %v3483, %v3479
  %v3536 = vpack.c.b16 %v3488, %v3484
  %v3537 = vpack.c.b16 %v3489, %v3485
  %v3538 = vpack.c.b16 %v3490, %v3486
  %v3539 = vpack.c.b16 %v3491, %v3487
  %v3540 = vpack.c.b16 %v3496, %v3492
  %v3541 = vpack.c.b16 %v3497, %v3493
  %v3542 = vpack.c.b16 %v3498, %v3494
  %v3543 = vpack.c.b16 %v3499, %v3495
  %v3544 = vpack.c.b16 %v3504, %v3500
  %v3545 = vpack.c.b16 %v3505, %v3501
  %v3546 = vpack.c.b16 %v3506, %v3502
  %v3547 = vpack.c.b16 %v3507, %v3503
  %v3548 = vpack.c.b16 %v3512, %v3508
  %v3549 = vpack.c.b16 %v3513, %v3509
  %v3550 = vpack.c.b16 %v3514, %v3510
  %v3551 = vpack.c.b16 %v3515, %v3511
  %v3552 = vpack.c.b16 %v3520, %v3516
  %v3553 = vpack.c.b16 %v3521, %v3517
  %v3554 = vpack.c.b16 %v3522, %v3518
  %v3555 = vpack.c.b16 %v3523, %v3519
  %3588 = vmatpush.bf16.msra.mxu0 %v3552
  %3589 = vmatpush.bf16.msra.mxu0 %v3548
  %3590 = vmatpush.bf16.msra.mxu0 %v3544
  %3591 = vmatpush.bf16.msra.mxu0 %v3540
  %3592 = vmatpush.bf16.msra.mxu0 %v3536
  %3593 = vmatpush.bf16.msra.mxu0 %v3532
  %3594 = vmatpush.bf16.msra.mxu0 %v3528
  %3595 = vmatpush.bf16.msra.mxu0 %v3524
  %3596 = vmatmul.bf16.gmra.mxu0 %v3395
  %v3597 = vpop.f32.mrf.mxu0
  %v3598 = vadd.f32 0.0, %v3597
  %v3599 = vpop.f32.mrf.mxu0
  %3600 = vdwg.mxu0
  %3601 = vmatpush.bf16.msra.mxu0 %v3553
  %3602 = vmatpush.bf16.msra.mxu0 %v3549
  %3603 = vmatpush.bf16.msra.mxu0 %v3545
  %3604 = vmatpush.bf16.msra.mxu0 %v3541
  %3605 = vmatpush.bf16.msra.mxu0 %v3537
  %3606 = vmatpush.bf16.msra.mxu0 %v3533
  %3607 = vmatpush.bf16.msra.mxu0 %v3529
  %3608 = vmatpush.bf16.msra.mxu0 %v3525
  %3609 = vmatmul.bf16.gmra.mxu0 %v3395
  %v3610 = vpop.f32.mrf.mxu0
  %v3611 = vadd.f32 0.0, %v3610
  %v3612 = vpop.f32.mrf.mxu0
  %3613 = vdwg.mxu0
  %3614 = vmatpush.bf16.msra.mxu0 %v3554
  %3615 = vmatpush.bf16.msra.mxu0 %v3550
  %3616 = vmatpush.bf16.msra.mxu0 %v3546
  %3617 = vmatpush.bf16.msra.mxu0 %v3542
  %3618 = vmatpush.bf16.msra.mxu0 %v3538
  %3619 = vmatpush.bf16.msra.mxu0 %v3534
  %3620 = vmatpush.bf16.msra.mxu0 %v3530
  %3621 = vmatpush.bf16.msra.mxu0 %v3526
  %3622 = vmatmul.bf16.gmra.mxu0 %v3395
  %v3623 = vpop.f32.mrf.mxu0
  %v3624 = vadd.f32 0.0, %v3623
  %v3625 = vpop.f32.mrf.mxu0
  %3626 = vdwg.mxu0
  %3627 = vmatpush.bf16.msra.mxu0 %v3555
  %3628 = vmatpush.bf16.msra.mxu0 %v3551
  %3629 = vmatpush.bf16.msra.mxu0 %v3547
  %3630 = vmatpush.bf16.msra.mxu0 %v3543
  %3631 = vmatpush.bf16.msra.mxu0 %v3539
  %3632 = vmatpush.bf16.msra.mxu0 %v3535
  %3633 = vmatpush.bf16.msra.mxu0 %v3531
  %3634 = vmatpush.bf16.msra.mxu0 %v3527
  %3635 = vmatmul.bf16.gmra.mxu0 %v3395
  %v3636 = vpop.f32.mrf.mxu0
  %v3637 = vadd.f32 0.0, %v3636
  %v3638 = vpop.f32.mrf.mxu0
  %3639 = vdwg.mxu0
  %v3640 = vadd.f32 %v3390, %v3598
  %v3641 = vadd.f32 %v3391, %v3611
  %v3642 = vadd.f32 %v3392, %v3624
  %v3643 = vadd.f32 %v3393, %v3637
  %v3644 = vmul.f32 %v3640, 0.5
  %v3645 = vtanh.pop %v3644
  %v3646 = vmul.f32 %v3645, 0.5
  %v3647 = vadd.f32 %v3646, 0.5
  %v3648 = vmul.f32 %v3641, 0.5
  %v3649 = vtanh.pop %v3648
  %v3650 = vmul.f32 %v3649, 0.5
  %v3651 = vadd.f32 %v3650, 0.5
  %v3652 = vtanh.pop %v3642
  %v3653 = vmul.f32 %v3643, 0.5
  %v3654 = vtanh.pop %v3653
  %v3655 = vmul.f32 %v3654, 0.5
  %v3656 = vadd.f32 %v3655, 0.5
  %v3657 = vld [vmem:[#allocation3] sm:$0xff]
  %v3658 = vmul.f32 %v3651, %v3657
  %v3659 = vmul.f32 %v3647, %v3652
  %v3660 = vadd.f32 %v3658, %v3659
  %v3661 = vtanh.pop %v3660
  %v3662 = vmul.f32 %v3656, %v3661
  %3663 = vst [vmem:[#allocation3] sm:$0xff] %v3660
  %3664 = vst [vmem:[#allocation2] sm:$0xff] %v3662
  %v3665 = vpack.c.bf16 %v3662, %v3662
  %s3666 = scalar_lea.vmem %s2, 48
  %3667 = vst [vmem:[%s3666] sm:$0xf] %v3665
  %s3668 = scalar_lea.vmem %s0, 208
  %v3669 = vld [vmem:[%s3668] sm:$0xff]
  %v3670 = vld [vmem:[%s3668 + $0x8] sm:$0xff]
  %v3671 = vunpack.c.l.bf16 %v3669
  %v3672 = vunpack.c.h.bf16 %v3669
  %v3673 = vunpack.c.l.bf16 %v3670
  %v3674 = vunpack.c.h.bf16 %v3670
  %v3675 = vld [vmem:[#allocation2] sm:$0xff]
  %v3676 = vpack.c.bf16 %v3675, %v3675
  %v3677 = vld [vmem:[%s1] sm:$0xff]
  %v3678 = vld [vmem:[%s1 + $0x8] sm:$0xff]
  %v3679 = vld [vmem:[%s1 + $0x10] sm:$0xff]
  %v3680 = vld [vmem:[%s1 + $0x18] sm:$0xff]
  %v3681 = vld [vmem:[%s1 + $0x20] sm:$0xff]
  %v3682 = vld [vmem:[%s1 + $0x28] sm:$0xff]
  %v3683 = vld [vmem:[%s1 + $0x30] sm:$0xff]
  %v3684 = vld [vmem:[%s1 + $0x38] sm:$0xff]
  %v3685 = vld [vmem:[%s1 + $0x40] sm:$0xff]
  %v3686 = vld [vmem:[%s1 + $0x48] sm:$0xff]
  %v3687 = vld [vmem:[%s1 + $0x50] sm:$0xff]
  %v3688 = vld [vmem:[%s1 + $0x58] sm:$0xff]
  %v3689 = vld [vmem:[%s1 + $0x60] sm:$0xff]
  %v3690 = vld [vmem:[%s1 + $0x68] sm:$0xff]
  %v3691 = vld [vmem:[%s1 + $0x70] sm:$0xff]
  %v3692 = vld [vmem:[%s1 + $0x78] sm:$0xff]
  %v3693 = vld [vmem:[%s1 + $0x80] sm:$0xff]
  %v3694 = vld [vmem:[%s1 + $0x88] sm:$0xff]
  %v3695 = vld [vmem:[%s1 + $0x90] sm:$0xff]
  %v3696 = vld [vmem:[%s1 + $0x98] sm:$0xff]
  %v3697 = vld [vmem:[%s1 + $0xa0] sm:$0xff]
  %v3698 = vld [vmem:[%s1 + $0xa8] sm:$0xff]
  %v3699 = vld [vmem:[%s1 + $0xb0] sm:$0xff]
  %v3700 = vld [vmem:[%s1 + $0xb8] sm:$0xff]
  %v3701 = vld [vmem:[%s1 + $0xc0] sm:$0xff]
  %v3702 = vld [vmem:[%s1 + $0xc8] sm:$0xff]
  %v3703 = vld [vmem:[%s1 + $0xd0] sm:$0xff]
  %v3704 = vld [vmem:[%s1 + $0xd8] sm:$0xff]
  %v3705 = vld [vmem:[%s1 + $0xe0] sm:$0xff]
  %v3706 = vld [vmem:[%s1 + $0xe8] sm:$0xff]
  %v3707 = vld [vmem:[%s1 + $0xf0] sm:$0xff]
  %v3708 = vld [vmem:[%s1 + $0xf8] sm:$0xff]
  %v3741 = vunpack.c.l.b16 %v3677
  %v3742 = vunpack.c.h.b16 %v3677
  %v3743 = vunpack.c.l.b16 %v3678
  %v3744 = vunpack.c.h.b16 %v3678
  %v3745 = vunpack.c.l.b16 %v3679
  %v3746 = vunpack.c.h.b16 %v3679
  %v3747 = vunpack.c.l.b16 %v3680
  %v3748 = vunpack.c.h.b16 %v3680
  %v3749 = vunpack.c.l.b16 %v3681
  %v3750 = vunpack.c.h.b16 %v3681
  %v3751 = vunpack.c.l.b16 %v3682
  %v3752 = vunpack.c.h.b16 %v3682
  %v3753 = vunpack.c.l.b16 %v3683
  %v3754 = vunpack.c.h.b16 %v3683
  %v3755 = vunpack.c.l.b16 %v3684
  %v3756 = vunpack.c.h.b16 %v3684
  %v3757 = vunpack.c.l.b16 %v3685
  %v3758 = vunpack.c.h.b16 %v3685
  %v3759 = vunpack.c.l.b16 %v3686
  %v3760 = vunpack.c.h.b16 %v3686
  %v3761 = vunpack.c.l.b16 %v3687
  %v3762 = vunpack.c.h.b16 %v3687
  %v3763 = vunpack.c.l.b16 %v3688
  %v3764 = vunpack.c.h.b16 %v3688
  %v3765 = vunpack.c.l.b16 %v3689
  %v3766 = vunpack.c.h.b16 %v3689
  %v3767 = vunpack.c.l.b16 %v3690
  %v3768 = vunpack.c.h.b16 %v3690
  %v3769 = vunpack.c.l.b16 %v3691
  %v3770 = vunpack.c.h.b16 %v3691
  %v3771 = vunpack.c.l.b16 %v3692
  %v3772 = vunpack.c.h.b16 %v3692
  %v3773 = vunpack.c.l.b16 %v3693
  %v3774 = vunpack.c.h.b16 %v3693
  %v3775 = vunpack.c.l.b16 %v3694
  %v3776 = vunpack.c.h.b16 %v3694
  %v3777 = vunpack.c.l.b16 %v3695
  %v3778 = vunpack.c.h.b16 %v3695
  %v3779 = vunpack.c.l.b16 %v3696
  %v3780 = vunpack.c.h.b16 %v3696
  %v3781 = vunpack.c.l.b16 %v3697
  %v3782 = vunpack.c.h.b16 %v3697
  %v3783 = vunpack.c.l.b16 %v3698
  %v3784 = vunpack.c.h.b16 %v3698
  %v3785 = vunpack.c.l.b16 %v3699
  %v3786 = vunpack.c.h.b16 %v3699
  %v3787 = vunpack.c.l.b16 %v3700
  %v3788 = vunpack.c.h.b16 %v3700
  %v3789 = vunpack.c.l.b16 %v3701
  %v3790 = vunpack.c.h.b16 %v3701
  %v3791 = vunpack.c.l.b16 %v3702
  %v3792 = vunpack.c.h.b16 %v3702
  %v3793 = vunpack.c.l.b16 %v3703
  %v3794 = vunpack.c.h.b16 %v3703
  %v3795 = vunpack.c.l.b16 %v3704
  %v3796 = vunpack.c.h.b16 %v3704
  %v3797 = vunpack.c.l.b16 %v3705
  %v3798 = vunpack.c.h.b16 %v3705
  %v3799 = vunpack.c.l.b16 %v3706
  %v3800 = vunpack.c.h.b16 %v3706
  %v3801 = vunpack.c.l.b16 %v3707
  %v3802 = vunpack.c.h.b16 %v3707
  %v3803 = vunpack.c.l.b16 %v3708
  %v3804 = vunpack.c.h.b16 %v3708
  %v3805 = vpack.c.b16 %v3745, %v3741
  %v3806 = vpack.c.b16 %v3746, %v3742
  %v3807 = vpack.c.b16 %v3747, %v3743
  %v3808 = vpack.c.b16 %v3748, %v3744
  %v3809 = vpack.c.b16 %v3753, %v3749
  %v3810 = vpack.c.b16 %v3754, %v3750
  %v3811 = vpack.c.b16 %v3755, %v3751
  %v3812 = vpack.c.b16 %v3756, %v3752
  %v3813 = vpack.c.b16 %v3761, %v3757
  %v3814 = vpack.c.b16 %v3762, %v3758
  %v3815 = vpack.c.b16 %v3763, %v3759
  %v3816 = vpack.c.b16 %v3764, %v3760
  %v3817 = vpack.c.b16 %v3769, %v3765
  %v3818 = vpack.c.b16 %v3770, %v3766
  %v3819 = vpack.c.b16 %v3771, %v3767
  %v3820 = vpack.c.b16 %v3772, %v3768
  %v3821 = vpack.c.b16 %v3777, %v3773
  %v3822 = vpack.c.b16 %v3778, %v3774
  %v3823 = vpack.c.b16 %v3779, %v3775
  %v3824 = vpack.c.b16 %v3780, %v3776
  %v3825 = vpack.c.b16 %v3785, %v3781
  %v3826 = vpack.c.b16 %v3786, %v3782
  %v3827 = vpack.c.b16 %v3787, %v3783
  %v3828 = vpack.c.b16 %v3788, %v3784
  %v3829 = vpack.c.b16 %v3793, %v3789
  %v3830 = vpack.c.b16 %v3794, %v3790
  %v3831 = vpack.c.b16 %v3795, %v3791
  %v3832 = vpack.c.b16 %v3796, %v3792
  %v3833 = vpack.c.b16 %v3801, %v3797
  %v3834 = vpack.c.b16 %v3802, %v3798
  %v3835 = vpack.c.b16 %v3803, %v3799
  %v3836 = vpack.c.b16 %v3804, %v3800
  %3869 = vmatpush.bf16.msra.mxu0 %v3833
  %3870 = vmatpush.bf16.msra.mxu0 %v3829
  %3871 = vmatpush.bf16.msra.mxu0 %v3825
  %3872 = vmatpush.bf16.msra.mxu0 %v3821
  %3873 = vmatpush.bf16.msra.mxu0 %v3817
  %3874 = vmatpush.bf16.msra.mxu0 %v3813
  %3875 = vmatpush.bf16.msra.mxu0 %v3809
  %3876 = vmatpush.bf16.msra.mxu0 %v3805
  %3877 = vmatmul.bf16.gmra.mxu0 %v3676
  %v3878 = vpop.f32.mrf.mxu0
  %v3879 = vadd.f32 0.0, %v3878
  %v3880 = vpop.f32.mrf.mxu0
  %3881 = vdwg.mxu0
  %3882 = vmatpush.bf16.msra.mxu0 %v3834
  %3883 = vmatpush.bf16.msra.mxu0 %v3830
  %3884 = vmatpush.bf16.msra.mxu0 %v3826
  %3885 = vmatpush.bf16.msra.mxu0 %v3822
  %3886 = vmatpush.bf16.msra.mxu0 %v3818
  %3887 = vmatpush.bf16.msra.mxu0 %v3814
  %3888 = vmatpush.bf16.msra.mxu0 %v3810
  %3889 = vmatpush.bf16.msra.mxu0 %v3806
  %3890 = vmatmul.bf16.gmra.mxu0 %v3676
  %v3891 = vpop.f32.mrf.mxu0
  %v3892 = vadd.f32 0.0, %v3891
  %v3893 = vpop.f32.mrf.mxu0
  %3894 = vdwg.mxu0
  %3895 = vmatpush.bf16.msra.mxu0 %v3835
  %3896 = vmatpush.bf16.msra.mxu0 %v3831
  %3897 = vmatpush.bf16.msra.mxu0 %v3827
  %3898 = vmatpush.bf16.msra.mxu0 %v3823
  %3899 = vmatpush.bf16.msra.mxu0 %v3819
  %3900 = vmatpush.bf16.msra.mxu0 %v3815
  %3901 = vmatpush.bf16.msra.mxu0 %v3811
  %3902 = vmatpush.bf16.msra.mxu0 %v3807
  %3903 = vmatmul.bf16.gmra.mxu0 %v3676
  %v3904 = vpop.f32.mrf.mxu0
  %v3905 = vadd.f32 0.0, %v3904
  %v3906 = vpop.f32.mrf.mxu0
  %3907 = vdwg.mxu0
  %3908 = vmatpush.bf16.msra.mxu0 %v3836
  %3909 = vmatpush.bf16.msra.mxu0 %v3832
  %3910 = vmatpush.bf16.msra.mxu0 %v3828
  %3911 = vmatpush.bf16.msra.mxu0 %v3824
  %3912 = vmatpush.bf16.msra.mxu0 %v3820
  %3913 = vmatpush.bf16.msra.mxu0 %v3816
  %3914 = vmatpush.bf16.msra.mxu0 %v3812
  %3915 = vmatpush.bf16.msra.mxu0 %v3808
  %3916 = vmatmul.bf16.gmra.mxu0 %v3676
  %v3917 = vpop.f32.mrf.mxu0
  %v3918 = vadd.f32 0.0, %v3917
  %v3919 = vpop.f32.mrf.mxu0
  %3920 = vdwg.mxu0
  %v3921 = vadd.f32 %v3671, %v3879
  %v3922 = vadd.f32 %v3672, %v3892
  %v3923 = vadd.f32 %v3673, %v3905
  %v3924 = vadd.f32 %v3674, %v3918
  %v3925 = vmul.f32 %v3921, 0.5
  %v3926 = vtanh.pop %v3925
  %v3927 = vmul.f32 %v3926, 0.5
  %v3928 = vadd.f32 %v3927, 0.5
  %v3929 = vmul.f32 %v3922, 0.5
  %v3930 = vtanh.pop %v3929
  %v3931 = vmul.f32 %v3930, 0.5
  %v3932 = vadd.f32 %v3931, 0.5
  %v3933 = vtanh.pop %v3923
  %v3934 = vmul.f32 %v3924, 0.5
  %v3935 = vtanh.pop %v3934
  %v3936 = vmul.f32 %v3935, 0.5
  %v3937 = vadd.f32 %v3936, 0.5
  %v3938 = vld [vmem:[#allocation3] sm:$0xff]
  %v3939 = vmul.f32 %v3932, %v3938
  %v3940 = vmul.f32 %v3928, %v3933
  %v3941 = vadd.f32 %v3939, %v3940
  %v3942 = vtanh.pop %v3941
  %v3943 = vmul.f32 %v3937, %v3942
  %3944 = vst [vmem:[#allocation3] sm:$0xff] %v3941
  %3945 = vst [vmem:[#allocation2] sm:$0xff] %v3943
  %v3946 = vpack.c.bf16 %v3943, %v3943
  %s3947 = scalar_lea.vmem %s2, 52
  %3948 = vst [vmem:[%s3947] sm:$0xf] %v3946
  %s3949 = scalar_lea.vmem %s0, 224
  %v3950 = vld [vmem:[%s3949] sm:$0xff]
  %v3951 = vld [vmem:[%s3949 + $0x8] sm:$0xff]
  %v3952 = vunpack.c.l.bf16 %v3950
  %v3953 = vunpack.c.h.bf16 %v3950
  %v3954 = vunpack.c.l.bf16 %v3951
  %v3955 = vunpack.c.h.bf16 %v3951
  %v3956 = vld [vmem:[#allocation2] sm:$0xff]
  %v3957 = vpack.c.bf16 %v3956, %v3956
  %v3958 = vld [vmem:[%s1] sm:$0xff]
  %v3959 = vld [vmem:[%s1 + $0x8] sm:$0xff]
  %v3960 = vld [vmem:[%s1 + $0x10] sm:$0xff]
  %v3961 = vld [vmem:[%s1 + $0x18] sm:$0xff]
  %v3962 = vld [vmem:[%s1 + $0x20] sm:$0xff]
  %v3963 = vld [vmem:[%s1 + $0x28] sm:$0xff]
  %v3964 = vld [vmem:[%s1 + $0x30] sm:$0xff]
  %v3965 = vld [vmem:[%s1 + $0x38] sm:$0xff]
  %v3966 = vld [vmem:[%s1 + $0x40] sm:$0xff]
  %v3967 = vld [vmem:[%s1 + $0x48] sm:$0xff]
  %v3968 = vld [vmem:[%s1 + $0x50] sm:$0xff]
  %v3969 = vld [vmem:[%s1 + $0x58] sm:$0xff]
  %v3970 = vld [vmem:[%s1 + $0x60] sm:$0xff]
  %v3971 = vld [vmem:[%s1 + $0x68] sm:$0xff]
  %v3972 = vld [vmem:[%s1 + $0x70] sm:$0xff]
  %v3973 = vld [vmem:[%s1 + $0x78] sm:$0xff]
  %v3974 = vld [vmem:[%s1 + $0x80] sm:$0xff]
  %v3975 = vld [vmem:[%s1 + $0x88] sm:$0xff]
  %v3976 = vld [vmem:[%s1 + $0x90] sm:$0xff]
  %v3977 = vld [vmem:[%s1 + $0x98] sm:$0xff]
  %v3978 = vld [vmem:[%s1 + $0xa0] sm:$0xff]
  %v3979 = vld [vmem:[%s1 + $0xa8] sm:$0xff]
  %v3980 = vld [vmem:[%s1 + $0xb0] sm:$0xff]
  %v3981 = vld [vmem:[%s1 + $0xb8] sm:$0xff]
  %v3982 = vld [vmem:[%s1 + $0xc0] sm:$0xff]
  %v3983 = vld [vmem:[%s1 + $0xc8] sm:$0xff]
  %v3984 = vld [vmem:[%s1 + $0xd0] sm:$0xff]
  %v3985 = vld [vmem:[%s1 + $0xd8] sm:$0xff]
  %v3986 = vld [vmem:[%s1 + $0xe0] sm:$0xff]
  %v3987 = vld [vmem:[%s1 + $0xe8] sm:$0xff]
  %v3988 = vld [vmem:[%s1 + $0xf0] sm:$0xff]
  %v3989 = vld [vmem:[%s1 + $0xf8] sm:$0xff]
  %v4022 = vunpack.c.l.b16 %v3958
  %v4023 = vunpack.c.h.b16 %v3958
  %v4024 = vunpack.c.l.b16 %v3959
  %v4025 = vunpack.c.h.b16 %v3959
  %v4026 = vunpack.c.l.b16 %v3960
  %v4027 = vunpack.c.h.b16 %v3960
  %v4028 = vunpack.c.l.b16 %v3961
  %v4029 = vunpack.c.h.b16 %v3961
  %v4030 = vunpack.c.l.b16 %v3962
  %v4031 = vunpack.c.h.b16 %v3962
  %v4032 = vunpack.c.l.b16 %v3963
  %v4033 = vunpack.c.h.b16 %v3963
  %v4034 = vunpack.c.l.b16 %v3964
  %v4035 = vunpack.c.h.b16 %v3964
  %v4036 = vunpack.c.l.b16 %v3965
  %v4037 = vunpack.c.h.b16 %v3965
  %v4038 = vunpack.c.l.b16 %v3966
  %v4039 = vunpack.c.h.b16 %v3966
  %v4040 = vunpack.c.l.b16 %v3967
  %v4041 = vunpack.c.h.b16 %v3967
  %v4042 = vunpack.c.l.b16 %v3968
  %v4043 = vunpack.c.h.b16 %v3968
  %v4044 = vunpack.c.l.b16 %v3969
  %v4045 = vunpack.c.h.b16 %v3969
  %v4046 = vunpack.c.l.b16 %v3970
  %v4047 = vunpack.c.h.b16 %v3970
  %v4048 = vunpack.c.l.b16 %v3971
  %v4049 = vunpack.c.h.b16 %v3971
  %v4050 = vunpack.c.l.b16 %v3972
  %v4051 = vunpack.c.h.b16 %v3972
  %v4052 = vunpack.c.l.b16 %v3973
  %v4053 = vunpack.c.h.b16 %v3973
  %v4054 = vunpack.c.l.b16 %v3974
  %v4055 = vunpack.c.h.b16 %v3974
  %v4056 = vunpack.c.l.b16 %v3975
  %v4057 = vunpack.c.h.b16 %v3975
  %v4058 = vunpack.c.l.b16 %v3976
  %v4059 = vunpack.c.h.b16 %v3976
  %v4060 = vunpack.c.l.b16 %v3977
  %v4061 = vunpack.c.h.b16 %v3977
  %v4062 = vunpack.c.l.b16 %v3978
  %v4063 = vunpack.c.h.b16 %v3978
  %v4064 = vunpack.c.l.b16 %v3979
  %v4065 = vunpack.c.h.b16 %v3979
  %v4066 = vunpack.c.l.b16 %v3980
  %v4067 = vunpack.c.h.b16 %v3980
  %v4068 = vunpack.c.l.b16 %v3981
  %v4069 = vunpack.c.h.b16 %v3981
  %v4070 = vunpack.c.l.b16 %v3982
  %v4071 = vunpack.c.h.b16 %v3982
  %v4072 = vunpack.c.l.b16 %v3983
  %v4073 = vunpack.c.h.b16 %v3983
  %v4074 = vunpack.c.l.b16 %v3984
  %v4075 = vunpack.c.h.b16 %v3984
  %v4076 = vunpack.c.l.b16 %v3985
  %v4077 = vunpack.c.h.b16 %v3985
  %v4078 = vunpack.c.l.b16 %v3986
  %v4079 = vunpack.c.h.b16 %v3986
  %v4080 = vunpack.c.l.b16 %v3987
  %v4081 = vunpack.c.h.b16 %v3987
  %v4082 = vunpack.c.l.b16 %v3988
  %v4083 = vunpack.c.h.b16 %v3988
  %v4084 = vunpack.c.l.b16 %v3989
  %v4085 = vunpack.c.h.b16 %v3989
  %v4086 = vpack.c.b16 %v4026, %v4022
  %v4087 = vpack.c.b16 %v4027, %v4023
  %v4088 = vpack.c.b16 %v4028, %v4024
  %v4089 = vpack.c.b16 %v4029, %v4025
  %v4090 = vpack.c.b16 %v4034, %v4030
  %v4091 = vpack.c.b16 %v4035, %v4031
  %v4092 = vpack.c.b16 %v4036, %v4032
  %v4093 = vpack.c.b16 %v4037, %v4033
  %v4094 = vpack.c.b16 %v4042, %v4038
  %v4095 = vpack.c.b16 %v4043, %v4039
  %v4096 = vpack.c.b16 %v4044, %v4040
  %v4097 = vpack.c.b16 %v4045, %v4041
  %v4098 = vpack.c.b16 %v4050, %v4046
  %v4099 = vpack.c.b16 %v4051, %v4047
  %v4100 = vpack.c.b16 %v4052, %v4048
  %v4101 = vpack.c.b16 %v4053, %v4049
  %v4102 = vpack.c.b16 %v4058, %v4054
  %v4103 = vpack.c.b16 %v4059, %v4055
  %v4104 = vpack.c.b16 %v4060, %v4056
  %v4105 = vpack.c.b16 %v4061, %v4057
  %v4106 = vpack.c.b16 %v4066, %v4062
  %v4107 = vpack.c.b16 %v4067, %v4063
  %v4108 = vpack.c.b16 %v4068, %v4064
  %v4109 = vpack.c.b16 %v4069, %v4065
  %v4110 = vpack.c.b16 %v4074, %v4070
  %v4111 = vpack.c.b16 %v4075, %v4071
  %v4112 = vpack.c.b16 %v4076, %v4072
  %v4113 = vpack.c.b16 %v4077, %v4073
  %v4114 = vpack.c.b16 %v4082, %v4078
  %v4115 = vpack.c.b16 %v4083, %v4079
  %v4116 = vpack.c.b16 %v4084, %v4080
  %v4117 = vpack.c.b16 %v4085, %v4081
  %4150 = vmatpush.bf16.msra.mxu0 %v4114
  %4151 = vmatpush.bf16.msra.mxu0 %v4110
  %4152 = vmatpush.bf16.msra.mxu0 %v4106
  %4153 = vmatpush.bf16.msra.mxu0 %v4102
  %4154 = vmatpush.bf16.msra.mxu0 %v4098
  %4155 = vmatpush.bf16.msra.mxu0 %v4094
  %4156 = vmatpush.bf16.msra.mxu0 %v4090
  %4157 = vmatpush.bf16.msra.mxu0 %v4086
  %4158 = vmatmul.bf16.gmra.mxu0 %v3957
  %v4159 = vpop.f32.mrf.mxu0
  %v4160 = vadd.f32 0.0, %v4159
  %v4161 = vpop.f32.mrf.mxu0
  %4162 = vdwg.mxu0
  %4163 = vmatpush.bf16.msra.mxu0 %v4115
  %4164 = vmatpush.bf16.msra.mxu0 %v4111
  %4165 = vmatpush.bf16.msra.mxu0 %v4107
  %4166 = vmatpush.bf16.msra.mxu0 %v4103
  %4167 = vmatpush.bf16.msra.mxu0 %v4099
  %4168 = vmatpush.bf16.msra.mxu0 %v4095
  %4169 = vmatpush.bf16.msra.mxu0 %v4091
  %4170 = vmatpush.bf16.msra.mxu0 %v4087
  %4171 = vmatmul.bf16.gmra.mxu0 %v3957
  %v4172 = vpop.f32.mrf.mxu0
  %v4173 = vadd.f32 0.0, %v4172
  %v4174 = vpop.f32.mrf.mxu0
  %4175 = vdwg.mxu0
  %4176 = vmatpush.bf16.msra.mxu0 %v4116
  %4177 = vmatpush.bf16.msra.mxu0 %v4112
  %4178 = vmatpush.bf16.msra.mxu0 %v4108
  %4179 = vmatpush.bf16.msra.mxu0 %v4104
  %4180 = vmatpush.bf16.msra.mxu0 %v4100
  %4181 = vmatpush.bf16.msra.mxu0 %v4096
  %4182 = vmatpush.bf16.msra.mxu0 %v4092
  %4183 = vmatpush.bf16.msra.mxu0 %v4088
  %4184 = vmatmul.bf16.gmra.mxu0 %v3957
  %v4185 = vpop.f32.mrf.mxu0
  %v4186 = vadd.f32 0.0, %v4185
  %v4187 = vpop.f32.mrf.mxu0
  %4188 = vdwg.mxu0
  %4189 = vmatpush.bf16.msra.mxu0 %v4117
  %4190 = vmatpush.bf16.msra.mxu0 %v4113
  %4191 = vmatpush.bf16.msra.mxu0 %v4109
  %4192 = vmatpush.bf16.msra.mxu0 %v4105
  %4193 = vmatpush.bf16.msra.mxu0 %v4101
  %4194 = vmatpush.bf16.msra.mxu0 %v4097
  %4195 = vmatpush.bf16.msra.mxu0 %v4093
  %4196 = vmatpush.bf16.msra.mxu0 %v4089
  %4197 = vmatmul.bf16.gmra.mxu0 %v3957
  %v4198 = vpop.f32.mrf.mxu0
  %v4199 = vadd.f32 0.0, %v4198
  %v4200 = vpop.f32.mrf.mxu0
  %4201 = vdwg.mxu0
  %v4202 = vadd.f32 %v3952, %v4160
  %v4203 = vadd.f32 %v3953, %v4173
  %v4204 = vadd.f32 %v3954, %v4186
  %v4205 = vadd.f32 %v3955, %v4199
  %v4206 = vmul.f32 %v4202, 0.5
  %v4207 = vtanh.pop %v4206
  %v4208 = vmul.f32 %v4207, 0.5
  %v4209 = vadd.f32 %v4208, 0.5
  %v4210 = vmul.f32 %v4203, 0.5
  %v4211 = vtanh.pop %v4210
  %v4212 = vmul.f32 %v4211, 0.5
  %v4213 = vadd.f32 %v4212, 0.5
  %v4214 = vtanh.pop %v4204
  %v4215 = vmul.f32 %v4205, 0.5
  %v4216 = vtanh.pop %v4215
  %v4217 = vmul.f32 %v4216, 0.5
  %v4218 = vadd.f32 %v4217, 0.5
  %v4219 = vld [vmem:[#allocation3] sm:$0xff]
  %v4220 = vmul.f32 %v4213, %v4219
  %v4221 = vmul.f32 %v4209, %v4214
  %v4222 = vadd.f32 %v4220, %v4221
  %v4223 = vtanh.pop %v4222
  %v4224 = vmul.f32 %v4218, %v4223
  %4225 = vst [vmem:[#allocation3] sm:$0xff] %v4222
  %4226 = vst [vmem:[#allocation2] sm:$0xff] %v4224
  %v4227 = vpack.c.bf16 %v4224, %v4224
  %s4228 = scalar_lea.vmem %s2, 56
  %4229 = vst [vmem:[%s4228] sm:$0xf] %v4227
  %s4230 = scalar_lea.vmem %s0, 240
  %v4231 = vld [vmem:[%s4230] sm:$0xff]
  %v4232 = vld [vmem:[%s4230 + $0x8] sm:$0xff]
  %v4233 = vunpack.c.l.bf16 %v4231
  %v4234 = vunpack.c.h.bf16 %v4231
  %v4235 = vunpack.c.l.bf16 %v4232
  %v4236 = vunpack.c.h.bf16 %v4232
  %v4237 = vld [vmem:[#allocation2] sm:$0xff]
  %v4238 = vpack.c.bf16 %v4237, %v4237
  %v4239 = vld [vmem:[%s1] sm:$0xff]
  %v4240 = vld [vmem:[%s1 + $0x8] sm:$0xff]
  %v4241 = vld [vmem:[%s1 + $0x10] sm:$0xff]
  %v4242 = vld [vmem:[%s1 + $0x18] sm:$0xff]
  %v4243 = vld [vmem:[%s1 + $0x20] sm:$0xff]
  %v4244 = vld [vmem:[%s1 + $0x28] sm:$0xff]
  %v4245 = vld [vmem:[%s1 + $0x30] sm:$0xff]
  %v4246 = vld [vmem:[%s1 + $0x38] sm:$0xff]
  %v4247 = vld [vmem:[%s1 + $0x40] sm:$0xff]
  %v4248 = vld [vmem:[%s1 + $0x48] sm:$0xff]
  %v4249 = vld [vmem:[%s1 + $0x50] sm:$0xff]
  %v4250 = vld [vmem:[%s1 + $0x58] sm:$0xff]
  %v4251 = vld [vmem:[%s1 + $0x60] sm:$0xff]
  %v4252 = vld [vmem:[%s1 + $0x68] sm:$0xff]
  %v4253 = vld [vmem:[%s1 + $0x70] sm:$0xff]
  %v4254 = vld [vmem:[%s1 + $0x78] sm:$0xff]
  %v4255 = vld [vmem:[%s1 + $0x80] sm:$0xff]
  %v4256 = vld [vmem:[%s1 + $0x88] sm:$0xff]
  %v4257 = vld [vmem:[%s1 + $0x90] sm:$0xff]
  %v4258 = vld [vmem:[%s1 + $0x98] sm:$0xff]
  %v4259 = vld [vmem:[%s1 + $0xa0] sm:$0xff]
  %v4260 = vld [vmem:[%s1 + $0xa8] sm:$0xff]
  %v4261 = vld [vmem:[%s1 + $0xb0] sm:$0xff]
  %v4262 = vld [vmem:[%s1 + $0xb8] sm:$0xff]
  %v4263 = vld [vmem:[%s1 + $0xc0] sm:$0xff]
  %v4264 = vld [vmem:[%s1 + $0xc8] sm:$0xff]
  %v4265 = vld [vmem:[%s1 + $0xd0] sm:$0xff]
  %v4266 = vld [vmem:[%s1 + $0xd8] sm:$0xff]
  %v4267 = vld [vmem:[%s1 + $0xe0] sm:$0xff]
  %v4268 = vld [vmem:[%s1 + $0xe8] sm:$0xff]
  %v4269 = vld [vmem:[%s1 + $0xf0] sm:$0xff]
  %v4270 = vld [vmem:[%s1 + $0xf8] sm:$0xff]
  %v4303 = vunpack.c.l.b16 %v4239
  %v4304 = vunpack.c.h.b16 %v4239
  %v4305 = vunpack.c.l.b16 %v4240
  %v4306 = vunpack.c.h.b16 %v4240
  %v4307 = vunpack.c.l.b16 %v4241
  %v4308 = vunpack.c.h.b16 %v4241
  %v4309 = vunpack.c.l.b16 %v4242
  %v4310 = vunpack.c.h.b16 %v4242
  %v4311 = vunpack.c.l.b16 %v4243
  %v4312 = vunpack.c.h.b16 %v4243
  %v4313 = vunpack.c.l.b16 %v4244
  %v4314 = vunpack.c.h.b16 %v4244
  %v4315 = vunpack.c.l.b16 %v4245
  %v4316 = vunpack.c.h.b16 %v4245
  %v4317 = vunpack.c.l.b16 %v4246
  %v4318 = vunpack.c.h.b16 %v4246
  %v4319 = vunpack.c.l.b16 %v4247
  %v4320 = vunpack.c.h.b16 %v4247
  %v4321 = vunpack.c.l.b16 %v4248
  %v4322 = vunpack.c.h.b16 %v4248
  %v4323 = vunpack.c.l.b16 %v4249
  %v4324 = vunpack.c.h.b16 %v4249
  %v4325 = vunpack.c.l.b16 %v4250
  %v4326 = vunpack.c.h.b16 %v4250
  %v4327 = vunpack.c.l.b16 %v4251
  %v4328 = vunpack.c.h.b16 %v4251
  %v4329 = vunpack.c.l.b16 %v4252
  %v4330 = vunpack.c.h.b16 %v4252
  %v4331 = vunpack.c.l.b16 %v4253
  %v4332 = vunpack.c.h.b16 %v4253
  %v4333 = vunpack.c.l.b16 %v4254
  %v4334 = vunpack.c.h.b16 %v4254
  %v4335 = vunpack.c.l.b16 %v4255
  %v4336 = vunpack.c.h.b16 %v4255
  %v4337 = vunpack.c.l.b16 %v4256
  %v4338 = vunpack.c.h.b16 %v4256
  %v4339 = vunpack.c.l.b16 %v4257
  %v4340 = vunpack.c.h.b16 %v4257
  %v4341 = vunpack.c.l.b16 %v4258
  %v4342 = vunpack.c.h.b16 %v4258
  %v4343 = vunpack.c.l.b16 %v4259
  %v4344 = vunpack.c.h.b16 %v4259
  %v4345 = vunpack.c.l.b16 %v4260
  %v4346 = vunpack.c.h.b16 %v4260
  %v4347 = vunpack.c.l.b16 %v4261
  %v4348 = vunpack.c.h.b16 %v4261
  %v4349 = vunpack.c.l.b16 %v4262
  %v4350 = vunpack.c.h.b16 %v4262
  %v4351 = vunpack.c.l.b16 %v4263
  %v4352 = vunpack.c.h.b16 %v4263
  %v4353 = vunpack.c.l.b16 %v4264
  %v4354 = vunpack.c.h.b16 %v4264
  %v4355 = vunpack.c.l.b16 %v4265
  %v4356 = vunpack.c.h.b16 %v4265
  %v4357 = vunpack.c.l.b16 %v4266
  %v4358 = vunpack.c.h.b16 %v4266
  %v4359 = vunpack.c.l.b16 %v4267
  %v4360 = vunpack.c.h.b16 %v4267
  %v4361 = vunpack.c.l.b16 %v4268
  %v4362 = vunpack.c.h.b16 %v4268
  %v4363 = vunpack.c.l.b16 %v4269
  %v4364 = vunpack.c.h.b16 %v4269
  %v4365 = vunpack.c.l.b16 %v4270
  %v4366 = vunpack.c.h.b16 %v4270
  %v4367 = vpack.c.b16 %v4307, %v4303
  %v4368 = vpack.c.b16 %v4308, %v4304
  %v4369 = vpack.c.b16 %v4309, %v4305
  %v4370 = vpack.c.b16 %v4310, %v4306
  %v4371 = vpack.c.b16 %v4315, %v4311
  %v4372 = vpack.c.b16 %v4316, %v4312
  %v4373 = vpack.c.b16 %v4317, %v4313
  %v4374 = vpack.c.b16 %v4318, %v4314
  %v4375 = vpack.c.b16 %v4323, %v4319
  %v4376 = vpack.c.b16 %v4324, %v4320
  %v4377 = vpack.c.b16 %v4325, %v4321
  %v4378 = vpack.c.b16 %v4326, %v4322
  %v4379 = vpack.c.b16 %v4331, %v4327
  %v4380 = vpack.c.b16 %v4332, %v4328
  %v4381 = vpack.c.b16 %v4333, %v4329
  %v4382 = vpack.c.b16 %v4334, %v4330
  %v4383 = vpack.c.b16 %v4339, %v4335
  %v4384 = vpack.c.b16 %v4340, %v4336
  %v4385 = vpack.c.b16 %v4341, %v4337
  %v4386 = vpack.c.b16 %v4342, %v4338
  %v4387 = vpack.c.b16 %v4347, %v4343
  %v4388 = vpack.c.b16 %v4348, %v4344
  %v4389 = vpack.c.b16 %v4349, %v4345
  %v4390 = vpack.c.b16 %v4350, %v4346
  %v4391 = vpack.c.b16 %v4355, %v4351
  %v4392 = vpack.c.b16 %v4356, %v4352
  %v4393 = vpack.c.b16 %v4357, %v4353
  %v4394 = vpack.c.b16 %v4358, %v4354
  %v4395 = vpack.c.b16 %v4363, %v4359
  %v4396 = vpack.c.b16 %v4364, %v4360
  %v4397 = vpack.c.b16 %v4365, %v4361
  %v4398 = vpack.c.b16 %v4366, %v4362
  %4431 = vmatpush.bf16.msra.mxu0 %v4395
  %4432 = vmatpush.bf16.msra.mxu0 %v4391
  %4433 = vmatpush.bf16.msra.mxu0 %v4387
  %4434 = vmatpush.bf16.msra.mxu0 %v4383
  %4435 = vmatpush.bf16.msra.mxu0 %v4379
  %4436 = vmatpush.bf16.msra.mxu0 %v4375
  %4437 = vmatpush.bf16.msra.mxu0 %v4371
  %4438 = vmatpush.bf16.msra.mxu0 %v4367
  %4439 = vmatmul.bf16.gmra.mxu0 %v4238
  %v4440 = vpop.f32.mrf.mxu0
  %v4441 = vadd.f32 0.0, %v4440
  %v4442 = vpop.f32.mrf.mxu0
  %4443 = vdwg.mxu0
  %4444 = vmatpush.bf16.msra.mxu0 %v4396
  %4445 = vmatpush.bf16.msra.mxu0 %v4392
  %4446 = vmatpush.bf16.msra.mxu0 %v4388
  %4447 = vmatpush.bf16.msra.mxu0 %v4384
  %4448 = vmatpush.bf16.msra.mxu0 %v4380
  %4449 = vmatpush.bf16.msra.mxu0 %v4376
  %4450 = vmatpush.bf16.msra.mxu0 %v4372
  %4451 = vmatpush.bf16.msra.mxu0 %v4368
  %4452 = vmatmul.bf16.gmra.mxu0 %v4238
  %v4453 = vpop.f32.mrf.mxu0
  %v4454 = vadd.f32 0.0, %v4453
  %v4455 = vpop.f32.mrf.mxu0
  %4456 = vdwg.mxu0
  %4457 = vmatpush.bf16.msra.mxu0 %v4397
  %4458 = vmatpush.bf16.msra.mxu0 %v4393
  %4459 = vmatpush.bf16.msra.mxu0 %v4389
  %4460 = vmatpush.bf16.msra.mxu0 %v4385
  %4461 = vmatpush.bf16.msra.mxu0 %v4381
  %4462 = vmatpush.bf16.msra.mxu0 %v4377
  %4463 = vmatpush.bf16.msra.mxu0 %v4373
  %4464 = vmatpush.bf16.msra.mxu0 %v4369
  %4465 = vmatmul.bf16.gmra.mxu0 %v4238
  %v4466 = vpop.f32.mrf.mxu0
  %v4467 = vadd.f32 0.0, %v4466
  %v4468 = vpop.f32.mrf.mxu0
  %4469 = vdwg.mxu0
  %4470 = vmatpush.bf16.msra.mxu0 %v4398
  %4471 = vmatpush.bf16.msra.mxu0 %v4394
  %4472 = vmatpush.bf16.msra.mxu0 %v4390
  %4473 = vmatpush.bf16.msra.mxu0 %v4386
  %4474 = vmatpush.bf16.msra.mxu0 %v4382
  %4475 = vmatpush.bf16.msra.mxu0 %v4378
  %4476 = vmatpush.bf16.msra.mxu0 %v4374
  %4477 = vmatpush.bf16.msra.mxu0 %v4370
  %4478 = vmatmul.bf16.gmra.mxu0 %v4238
  %v4479 = vpop.f32.mrf.mxu0
  %v4480 = vadd.f32 0.0, %v4479
  %v4481 = vpop.f32.mrf.mxu0
  %4482 = vdwg.mxu0
  %v4483 = vadd.f32 %v4233, %v4441
  %v4484 = vadd.f32 %v4234, %v4454
  %v4485 = vadd.f32 %v4235, %v4467
  %v4486 = vadd.f32 %v4236, %v4480
  %v4487 = vmul.f32 %v4483, 0.5
  %v4488 = vtanh.pop %v4487
  %v4489 = vmul.f32 %v4488, 0.5
  %v4490 = vadd.f32 %v4489, 0.5
  %v4491 = vmul.f32 %v4484, 0.5
  %v4492 = vtanh.pop %v4491
  %v4493 = vmul.f32 %v4492, 0.5
  %v4494 = vadd.f32 %v4493, 0.5
  %v4495 = vtanh.pop %v4485
  %v4496 = vmul.f32 %v4486, 0.5
  %v4497 = vtanh.pop %v4496
  %v4498 = vmul.f32 %v4497, 0.5
  %v4499 = vadd.f32 %v4498, 0.5
  %v4500 = vld [vmem:[#allocation3] sm:$0xff]
  %v4501 = vmul.f32 %v4494, %v4500
  %v4502 = vmul.f32 %v4490, %v4495
  %v4503 = vadd.f32 %v4501, %v4502
  %v4504 = vtanh.pop %v4503
  %v4505 = vmul.f32 %v4499, %v4504
  %4506 = vst [vmem:[#allocation3] sm:$0xff] %v4503
  %4507 = vst [vmem:[#allocation2] sm:$0xff] %v4505
  %v4508 = vpack.c.bf16 %v4505, %v4505
  %s4509 = scalar_lea.vmem %s2, 60
  %4510 = vst [vmem:[%s4509] sm:$0xf] %v4508
  // Predicated region
  $region14: #{decoder_rnn_forward.4} parent=0 // pred_check
    _
  $region15: #{decoder_rnn_forward.4} parent=0 // pred_check_branch
    %4512 = sbr.rel (0) target = $region17
  $region16: #{decoder_rnn_forward.4} parent=0 // pred_region
    _
  $region17: #{decoder_rnn_forward.4} parent=0 // pred_fallthru
    _
  // Predicated region
  $region18: #{decoder_rnn_forward.4} parent=0 // pred_check
    _
  $region19: #{decoder_rnn_forward.4} parent=0 // pred_check_branch
    %4514 = sbr.rel (0) target = $region21
  $region20: #{decoder_rnn_forward.4} parent=0 // pred_region
    _
  $region21: #{decoder_rnn_forward.4} parent=0 // pred_fallthru
    _

</llo_original>
